<compile_context>
chip_gen: v5e
topology: v5e:2x2
jax: 0.10.0
libtpu: 0.0.40
codegen_flags: <defaults>
</compile_context>

<pallas_src>
import functools

import jax
import jax.numpy as jnp
from jax.experimental import pallas as pl
from jax.experimental.pallas import tpu as pltpu

NEG_SLOPE = 0.01  # PyTorch nn.LeakyReLU() default


def _round_up(x, m):
    return ((x + m - 1) // m) * m


# ----------------------------------------------------------------------------
# Pallas kernel 1: per-(B,C) mean subtraction * (1/rgb_max)   (rgb_mean path)
# ----------------------------------------------------------------------------
def _normalize_kernel(x_ref, o_ref, *, inv_rgb_max):
    x = x_ref[...]                                    # (TR, F*H*W)
    mean = jnp.mean(x, axis=-1, keepdims=True)        # mean over frames*H*W
    o_ref[...] = (x - mean) * inv_rgb_max


def normalize_pallas(flat, rgb_max):
    R, L = flat.shape
    TR = 8
    Rp = _round_up(R, TR)
    xp = jnp.pad(flat, ((0, Rp - R), (0, 0)))
    out = pl.pallas_call(
        functools.partial(_normalize_kernel, inv_rgb_max=float(1.0 / rgb_max)),
        out_shape=jax.ShapeDtypeStruct((Rp, L), jnp.float32),
        grid=(Rp // TR,),
        in_specs=[pl.BlockSpec((TR, L), lambda i: (i, 0))],
        out_specs=pl.BlockSpec((TR, L), lambda i: (i, 0)),
        compiler_params=pltpu.CompilerParams(
            dimension_semantics=("parallel",)),
    )(xp)
    return out[:R] if Rp != R else out


# ----------------------------------------------------------------------------
# Pallas kernel 2: tiled matmul (bf16 operands, f32 acc) + bias + LeakyReLU
# ----------------------------------------------------------------------------
def _mm_bias_act_kernel(x_ref, w_ref, b_ref, o_ref, acc_ref, *, apply_act,
                        neg_slope):
    k = pl.program_id(2)

    @pl.when(k == 0)
    def _init():
        acc_ref[...] = jnp.zeros_like(acc_ref)

    acc_ref[...] += jnp.dot(x_ref[...], w_ref[...],
                            preferred_element_type=jnp.float32)

    @pl.when(k == pl.num_programs(2) - 1)
    def _finalize():
        out = acc_ref[...] + b_ref[...]               # (1, TN) broadcast, f32
        if apply_act:
            out = jnp.where(out >= 0.0, out, out * neg_slope)
        o_ref[...] = out.astype(o_ref.dtype)


_TK_CANDIDATES = (2048, 1536, 1280, 1152, 1024, 896, 768, 640, 512, 384, 256,
                  128)


def _pick_tk(kp):
    # kp is a multiple of 128; pick a K tile that divides it exactly.
    if kp <= 2048:
        return kp
    for cand in _TK_CANDIDATES:
        if kp % cand == 0:
            return cand
    return 128


def matmul_bias_act(x, w, b, apply_act=True, out_dtype=jnp.bfloat16):
    """out = act(x @ w + b). x:(M,K), w:(K,N), b:(N,). bf16 MXU, f32 acc."""
    M, K = x.shape
    K2, N = w.shape
    assert K == K2
    TM = min(128, _round_up(M, 16))
    TN = min(256, _round_up(N, 128))
    Mp = _round_up(M, TM)
    Np = _round_up(N, TN)
    Kp = _round_up(K, 128)
    TK = _pick_tk(Kp)

    xp = jnp.pad(x.astype(jnp.bfloat16), ((0, Mp - M), (0, Kp - K)))
    wp = jnp.pad(w.astype(jnp.bfloat16), ((0, Kp - K), (0, Np - N)))
    bp = jnp.pad(b.astype(jnp.float32), (0, Np - N)).reshape(1, Np)

    out = pl.pallas_call(
        functools.partial(_mm_bias_act_kernel, apply_act=apply_act,
                          neg_slope=NEG_SLOPE),
        out_shape=jax.ShapeDtypeStruct((Mp, Np), out_dtype),
        grid_spec=pltpu.PrefetchScalarGridSpec(
            num_scalar_prefetch=0,
            grid=(Mp // TM, Np // TN, Kp // TK),
            in_specs=[pl.BlockSpec((TM, TK), lambda i, j, k: (i, k)),
                      pl.BlockSpec((TK, TN), lambda i, j, k: (k, j)),
                      pl.BlockSpec((1, TN), lambda i, j, k: (0, j))],
            out_specs=pl.BlockSpec((TM, TN), lambda i, j, k: (i, j)),
            scratch_shapes=[pltpu.VMEM((TM, TN), jnp.float32)]),
        compiler_params=pltpu.CompilerParams(
            dimension_semantics=("parallel", "parallel", "arbitrary"),
            vmem_limit_bytes=32 * 1024 * 1024),
    )(xp, wp, bp)
    if (Mp, Np) != (M, N):
        out = out[:M, :N]
    return out


# ----------------------------------------------------------------------------
# JAX glue: im2col, conv / conv-transpose wrappers (matmuls stay in Pallas)
# ----------------------------------------------------------------------------
def _extract_patches(x_nhwc, ksize, stride, pad):
    N, H, W, C = x_nhwc.shape
    xp = jnp.pad(x_nhwc, ((0, 0), (pad, pad), (pad, pad), (0, 0)))
    Ho = (H + 2 * pad - ksize) // stride + 1
    Wo = (W + 2 * pad - ksize) // stride + 1
    cols = []
    for dy in range(ksize):
        for dx in range(ksize):
            sl = xp[:, dy:dy + stride * (Ho - 1) + 1:stride,
                    dx:dx + stride * (Wo - 1) + 1:stride, :]
            cols.append(sl)
    patches = jnp.concatenate(cols, axis=-1)          # (N, Ho, Wo, k*k*C)
    return patches.reshape(N * Ho * Wo, ksize * ksize * C), (N, Ho, Wo)


def conv2d(x_nhwc, w_oihw, b, stride, pad, apply_act=True,
           out_dtype=jnp.bfloat16):
    Cout, Cin, kH, kW = w_oihw.shape
    patches, (N, Ho, Wo) = _extract_patches(x_nhwc.astype(jnp.bfloat16),
                                            kH, stride, pad)
    # Row ordering (dy, dx, cin) matches the patch channel ordering above.
    wmat = jnp.transpose(w_oihw.astype(jnp.bfloat16),
                         (2, 3, 1, 0)).reshape(kH * kW * Cin, Cout)
    out = matmul_bias_act(patches, wmat, b, apply_act=apply_act,
                          out_dtype=out_dtype)
    return out.reshape(N, Ho, Wo, Cout)


def _deconv_as_conv_weight(w_iohw):
    """ConvTranspose2d(k=4,s=2,p=1) weight (Cin,Cout,4,4) -> (9*Cin, 4*Cout).

    out[2m+py] = sum over the 3x3 neighborhood of input position m (pad=1):
      py=0 (even): in[m-1]*w[3] + in[m]*w[1]
      py=1 (odd) : in[m]  *w[2] + in[m+1]*w[0]
    Columns are ordered (py, px, cout); rows are (dy, dx, cin) to match im2col.
    """
    Cin, Cout, _, _ = w_iohw.shape
    zero = jnp.zeros((Cin, Cout), w_iohw.dtype)
    sel = {(0, 0): 3, (0, 1): 1, (1, 1): 2, (1, 2): 0}  # (phase, tap) -> k idx
    rows = []
    for dy in range(3):
        for dx in range(3):
            phase_blocks = []
            for py in range(2):
                for px in range(2):
                    ky = sel.get((py, dy))
                    kx = sel.get((px, dx))
                    if ky is None or kx is None:
                        phase_blocks.append(zero)
                    else:
                        phase_blocks.append(w_iohw[:, :, ky, kx])
            rows.append(jnp.concatenate(phase_blocks, axis=1))  # (Cin, 4*Cout)
    return jnp.concatenate(rows, axis=0)                        # (9*Cin, 4*Cout)


def conv_transpose2d(x_nhwc, w_iohw, b, apply_act=True,
                     out_dtype=jnp.bfloat16):
    # Sub-pixel decomposition: one 3x3/s1/p1 conv producing 4*Cout phase
    # channels, then a pixel shuffle -> (N, 2H, 2W, Cout).  No zero-dilated
    # input, K = 9*Cin instead of 16*Cin, lane-dense N = 4*Cout.
    Cin, Cout, kH, kW = w_iohw.shape
    assert (kH, kW) == (4, 4)
    wmat = _deconv_as_conv_weight(w_iohw.astype(jnp.bfloat16))
    b4 = jnp.tile(b, 4)                                          # (4*Cout,)
    patches, (N, Ho, Wo) = _extract_patches(x_nhwc.astype(jnp.bfloat16),
                                            3, 1, 1)
    out4 = matmul_bias_act(patches, wmat, b4, apply_act=apply_act,
                           out_dtype=out_dtype)
    out4 = out4.reshape(N, Ho, Wo, 2, 2, Cout)
    return out4.transpose(0, 1, 3, 2, 4, 5).reshape(N, 2 * Ho, 2 * Wo, Cout)


# ----------------------------------------------------------------------------
# Deterministic parameter init (synthetic; matches the module's shapes)
# ----------------------------------------------------------------------------
def init_params(key):
    def conv_p(key, cout, cin, k):
        k1, k2 = jax.random.split(key)
        scale = 1.0 / jnp.sqrt(cin * k * k)
        w = jax.random.uniform(k1, (cout, cin, k, k), jnp.float32, -scale, scale)
        b = jax.random.uniform(k2, (cout,), jnp.float32, -scale, scale)
        return w, b

    def deconv_p(key, cin, cout, k):
        k1, k2 = jax.random.split(key)
        scale = 1.0 / jnp.sqrt(cin * k * k)
        w = jax.random.uniform(k1, (cin, cout, k, k), jnp.float32, -scale, scale)
        b = jax.random.uniform(k2, (cout,), jnp.float32, -scale, scale)
        return w, b

    keys = jax.random.split(key, 9)
    p = {}
    p["conv1_w"], p["conv1_b"] = conv_p(keys[0], 64, 12, 3)
    p["conv2_w"], p["conv2_b"] = conv_p(keys[1], 128, 64, 3)
    p["conv3_w"], p["conv3_b"] = conv_p(keys[2], 256, 128, 3)
    p["conv4a_w"], p["conv4a_b"] = conv_p(keys[3], 256, 256, 3)
    p["conv4b_w"], p["conv4b_b"] = conv_p(keys[4], 512, 256, 3)
    p["deconv1_w"], p["deconv1_b"] = deconv_p(keys[5], 512, 256, 4)
    p["deconv2_w"], p["deconv2_b"] = deconv_p(keys[6], 512, 256, 4)
    p["conv5_w"], p["conv5_b"] = conv_p(keys[7], 2, 384, 3)
    return p


# ----------------------------------------------------------------------------
# Full forward pass (mirrors FlowNetEncoderRefine.forward)
# ----------------------------------------------------------------------------
def flownet_er_forward(inputs, params, *, rgb_max=255.0, div_flow=20.0,
                       training=True):
    B, C, F, H, W = inputs.shape                      # F == 2 frames
    # rgb_mean over (frames, H, W) per (B, C); normalize by rgb_max.
    flat = inputs.reshape(B * C, F * H * W).astype(jnp.float32)
    normed = normalize_pallas(flat, rgb_max).reshape(B, C, F, H, W)

    # cat the two frames along channels -> (B, 2C, H, W), then go NHWC.
    x = jnp.concatenate([normed[:, :, 0], normed[:, :, 1]], axis=1)
    x = jnp.transpose(x, (0, 2, 3, 1))                # NHWC

    c1 = conv2d(x, params["conv1_w"], params["conv1_b"], stride=2, pad=1)
    c2 = conv2d(c1, params["conv2_w"], params["conv2_b"], stride=2, pad=1)
    c3 = conv2d(c2, params["conv3_w"], params["conv3_b"], stride=2, pad=1)
    c4a = conv2d(c3, params["conv4a_w"], params["conv4a_b"], stride=1, pad=1)
    c4 = conv2d(c4a, params["conv4b_w"], params["conv4b_b"], stride=2, pad=1)

    d1 = conv_transpose2d(c4, params["deconv1_w"], params["deconv1_b"])
    dc1 = jnp.concatenate([c3, d1], axis=-1)          # torch.cat((conv3, .), 1)

    d2 = conv_transpose2d(dc1, params["deconv2_w"], params["deconv2_b"])
    dc2 = jnp.concatenate([c2, d2], axis=-1)          # torch.cat((conv2, .), 1)

    flow = conv2d(dc2, params["conv5_w"], params["conv5_b"], stride=1, pad=1,
                  apply_act=False, out_dtype=jnp.float32)   # (B, H/4, W/4, 2)
    # nn.Upsample(scale_factor=4), default mode='nearest'
    flow = jnp.repeat(jnp.repeat(flow, 4, axis=1), 4, axis=2)
    flow = jnp.transpose(flow, (0, 3, 1, 2))          # back to NCHW (B, 2, H, W)

    if not training:
        flow = flow * div_flow
    return flow


if __name__ == "__main__":
    key = jax.random.PRNGKey(0)
    k_in, k_param = jax.random.split(key)

    # inputs: (B=2, C=6, frames=2, H=16, W=16) -> after frame-cat: 12 channels,
    # matching input_channels=12 of the module.
    inputs = jax.random.uniform(k_in, (2, 6, 2, 16, 16), jnp.float32) * 255.0
    params = init_params(k_param)

    fwd = jax.jit(functools.partial(flownet_er_forward, rgb_max=255.0,
                                    div_flow=20.0, training=False))
    out = fwd(inputs, params)
    out = jax.block_until_ready(out)

    assert out.shape == (2, 2, 16, 16), out.shape
    assert out.dtype == jnp.float32
    print("KERNEL_OK")
</pallas_src>

<mosaic_0001>
module attributes {stable_mosaic.version = 11 : i64} {
  func.func @_normalize_kernel(%arg0: i32, %arg1: memref<8x512xf32, #tpu.memory_space<vmem>>, %arg2: memref<8x512xf32, #tpu.memory_space<vmem>>) attributes {dimension_semantics = [#tpu.dimension_semantics<parallel>], iteration_bounds = array<i64: 2>, scalar_prefetch = 0 : i64, scratch_operands = 0 : i64, tpu.core_type = #tpu.core_type<tc>, window_params = [{transform_indices = @transform_0, window_bounds = array<i64: 8, 512>}, {transform_indices = @transform_1, window_bounds = array<i64: 8, 512>}]} {
    %c0 = arith.constant 0 : index
    %c0_0 = arith.constant 0 : index
    %0 = vector.load %arg1[%c0, %c0_0] : memref<8x512xf32, #tpu.memory_space<vmem>>, vector<8x512xf32>
    %cst = arith.constant dense<0.000000e+00> : vector<8xf32>
    %1 = vector.multi_reduction <add>, %0, %cst [1] : vector<8x512xf32> to vector<8xf32>
    %2 = vector.shape_cast %1 : vector<8xf32> to vector<8x1xf32>
    %cst_1 = arith.constant 5.120000e+02 : f32
    %3 = vector.broadcast %cst_1 : f32 to vector<8x1xf32>
    %4 = arith.divf %2, %3 : vector<8x1xf32>
    %5 = vector.broadcast %4 : vector<8x1xf32> to vector<8x512xf32>
    %6 = arith.subf %0, %5 : vector<8x512xf32>
    %cst_2 = arith.constant 0.00392156886 : f32
    %7 = vector.broadcast %cst_2 : f32 to vector<8x512xf32>
    %8 = arith.mulf %6, %7 : vector<8x512xf32>
    %c0_3 = arith.constant 0 : index
    %c0_4 = arith.constant 0 : index
    %9 = vector.load %arg2[%c0_3, %c0_4] : memref<8x512xf32, #tpu.memory_space<vmem>>, vector<8x512xf32>
    tpu.vector_store %arg2[%c0_3, %c0_4], %8 {strides = array<i32>} : memref<8x512xf32, #tpu.memory_space<vmem>>, vector<8x512xf32>,
    return
  }
  func.func @transform_0(%arg0: i32) -> (i32, i32) {
    %c0_i32 = arith.constant 0 : i32
    %c0_i32_0 = arith.constant 0 : i32
    return %arg0, %c0_i32 : i32, i32
  }
  func.func @transform_1(%arg0: i32) -> (i32, i32) {
    %c0_i32 = arith.constant 0 : i32
    %c0_i32_0 = arith.constant 0 : i32
    return %arg0, %c0_i32 : i32, i32
  }
}

module attributes {stable_mosaic.version = 11 : i64} {
  func.func @_mm_bias_act_kernel(%arg0: i32, %arg1: i32, %arg2: i32, %arg3: memref<128x128xbf16, #tpu.memory_space<vmem>>, %arg4: memref<128x128xbf16, #tpu.memory_space<vmem>>, %arg5: memref<1x128xf32, #tpu.memory_space<vmem>>, %arg6: memref<128x128xbf16, #tpu.memory_space<vmem>>, %arg7: memref<128x128xf32, #tpu.memory_space<vmem>>) attributes {dimension_semantics = [#tpu.dimension_semantics<parallel>, #tpu.dimension_semantics<parallel>, #tpu.dimension_semantics<arbitrary>], iteration_bounds = array<i64: 1, 1, 1>, scalar_prefetch = 0 : i64, scratch_operands = 1 : i64, tpu.core_type = #tpu.core_type<tc>, window_params = [{transform_indices = @transform_0, window_bounds = array<i64: 128, 128>}, {transform_indices = @transform_1, window_bounds = array<i64: 128, 128>}, {transform_indices = @transform_2, window_bounds = array<i64: 1, 128>}, {transform_indices = @transform_3, window_bounds = array<i64: 128, 128>}]} {
    %c0_i32 = arith.constant 0 : i32
    %0 = arith.cmpi eq, %arg2, %c0_i32 : i32
    %1 = arith.extui %0 : i1 to i32
    %c0_i32_0 = arith.constant 0 : i32
    %2 = arith.cmpi ne, %1, %c0_i32_0 : i32
    scf.if %2 {
      %cst_10 = arith.constant 0.000000e+00 : f32
      %12 = vector.broadcast %cst_10 : f32 to vector<128x128xf32>
      %c0_11 = arith.constant 0 : index
      %c0_12 = arith.constant 0 : index
      %13 = vector.load %arg7[%c0_11, %c0_12] : memref<128x128xf32, #tpu.memory_space<vmem>>, vector<128x128xf32>
      tpu.vector_store %arg7[%c0_11, %c0_12], %12 {strides = array<i32>} : memref<128x128xf32, #tpu.memory_space<vmem>>, vector<128x128xf32>,
    } else {
    }
    %c0 = arith.constant 0 : index
    %c0_1 = arith.constant 0 : index
    %3 = vector.load %arg7[%c0, %c0_1] : memref<128x128xf32, #tpu.memory_space<vmem>>, vector<128x128xf32>
    %c0_2 = arith.constant 0 : index
    %c0_3 = arith.constant 0 : index
    %4 = vector.load %arg3[%c0_2, %c0_3] : memref<128x128xbf16, #tpu.memory_space<vmem>>, vector<128x128xbf16>
    %c0_4 = arith.constant 0 : index
    %c0_5 = arith.constant 0 : index
    %5 = vector.load %arg4[%c0_4, %c0_5] : memref<128x128xbf16, #tpu.memory_space<vmem>>, vector<128x128xbf16>
    %cst = arith.constant dense<0.000000e+00> : vector<128x128xf32>
    %6 = tpu.matmul %4, %5, %cst {dimension_numbers = #tpu.dot_dimension_numbers<[1], [0], [0], [1], [0, 0, 1, 1], [], []>} : vector<128x128xbf16>, vector<128x128xbf16>, vector<128x128xf32> -> vector<128x128xf32>
    %7 = arith.addf %3, %6 : vector<128x128xf32>
    %c0_6 = arith.constant 0 : index
    %c0_7 = arith.constant 0 : index
    %8 = vector.load %arg7[%c0_6, %c0_7] : memref<128x128xf32, #tpu.memory_space<vmem>>, vector<128x128xf32>
    tpu.vector_store %arg7[%c0_6, %c0_7], %7 {strides = array<i32>} : memref<128x128xf32, #tpu.memory_space<vmem>>, vector<128x128xf32>,
    %c0_i32_8 = arith.constant 0 : i32
    %9 = arith.cmpi eq, %arg2, %c0_i32_8 : i32
    %10 = arith.extui %9 : i1 to i32
    %c0_i32_9 = arith.constant 0 : i32
    %11 = arith.cmpi ne, %10, %c0_i32_9 : i32
    scf.if %11 {
      %c0_10 = arith.constant 0 : index
      %c0_11 = arith.constant 0 : index
      %12 = vector.load %arg7[%c0_10, %c0_11] : memref<128x128xf32, #tpu.memory_space<vmem>>, vector<128x128xf32>
      %c0_12 = arith.constant 0 : index
      %c0_13 = arith.constant 0 : index
      %13 = vector.load %arg5[%c0_12, %c0_13] : memref<1x128xf32, #tpu.memory_space<vmem>>, vector<1x128xf32>
      %14 = vector.broadcast %13 : vector<1x128xf32> to vector<128x128xf32>
      %15 = arith.addf %12, %14 : vector<128x128xf32>
      %cst_14 = arith.constant 0.000000e+00 : f32
      %16 = vector.broadcast %cst_14 : f32 to vector<128x128xf32>
      %17 = arith.cmpf oge, %15, %16 : vector<128x128xf32>
      %cst_15 = arith.constant 0.00999999977 : f32
      %18 = vector.broadcast %cst_15 : f32 to vector<128x128xf32>
      %19 = arith.mulf %15, %18 : vector<128x128xf32>
      %20 = arith.select %17, %15, %19 : vector<128x128xi1>, vector<128x128xf32>
      %21 = arith.truncf %20 : vector<128x128xf32> to vector<128x128xbf16>
      %c0_16 = arith.constant 0 : index
      %c0_17 = arith.constant 0 : index
      %22 = vector.load %arg6[%c0_16, %c0_17] : memref<128x128xbf16, #tpu.memory_space<vmem>>, vector<128x128xbf16>
      tpu.vector_store %arg6[%c0_16, %c0_17], %21 {strides = array<i32>} : memref<128x128xbf16, #tpu.memory_space<vmem>>, vector<128x128xbf16>,
    } else {
    }
    return
  }
  func.func @transform_0(%arg0: i32, %arg1: i32, %arg2: i32) -> (i32, i32) {
    %c0_i32 = arith.constant 0 : i32
    return %arg0, %arg2 : i32, i32
  }
  func.func @transform_1(%arg0: i32, %arg1: i32, %arg2: i32) -> (i32, i32) {
    %c0_i32 = arith.constant 0 : i32
    return %arg2, %arg1 : i32, i32
  }
  func.func @transform_2(%arg0: i32, %arg1: i32, %arg2: i32) -> (i32, i32) {
    %c0_i32 = arith.constant 0 : i32
    %c0_i32_0 = arith.constant 0 : i32
    return %c0_i32, %arg1 : i32, i32
  }
  func.func @transform_3(%arg0: i32, %arg1: i32, %arg2: i32) -> (i32, i32) {
    %c0_i32 = arith.constant 0 : i32
    return %arg0, %arg1 : i32, i32
  }
}

module attributes {stable_mosaic.version = 11 : i64} {
  func.func @_mm_bias_act_kernel(%arg0: i32, %arg1: i32, %arg2: i32, %arg3: memref<32x640xbf16, #tpu.memory_space<vmem>>, %arg4: memref<640x128xbf16, #tpu.memory_space<vmem>>, %arg5: memref<1x128xf32, #tpu.memory_space<vmem>>, %arg6: memref<32x128xbf16, #tpu.memory_space<vmem>>, %arg7: memref<32x128xf32, #tpu.memory_space<vmem>>) attributes {dimension_semantics = [#tpu.dimension_semantics<parallel>, #tpu.dimension_semantics<parallel>, #tpu.dimension_semantics<arbitrary>], iteration_bounds = array<i64: 1, 1, 1>, scalar_prefetch = 0 : i64, scratch_operands = 1 : i64, tpu.core_type = #tpu.core_type<tc>, window_params = [{transform_indices = @transform_0, window_bounds = array<i64: 32, 640>}, {transform_indices = @transform_1, window_bounds = array<i64: 640, 128>}, {transform_indices = @transform_2, window_bounds = array<i64: 1, 128>}, {transform_indices = @transform_3, window_bounds = array<i64: 32, 128>}]} {
    %c0_i32 = arith.constant 0 : i32
    %0 = arith.cmpi eq, %arg2, %c0_i32 : i32
    %1 = arith.extui %0 : i1 to i32
    %c0_i32_0 = arith.constant 0 : i32
    %2 = arith.cmpi ne, %1, %c0_i32_0 : i32
    scf.if %2 {
      %cst_10 = arith.constant 0.000000e+00 : f32
      %12 = vector.broadcast %cst_10 : f32 to vector<32x128xf32>
      %c0_11 = arith.constant 0 : index
      %c0_12 = arith.constant 0 : index
      %13 = vector.load %arg7[%c0_11, %c0_12] : memref<32x128xf32, #tpu.memory_space<vmem>>, vector<32x128xf32>
      tpu.vector_store %arg7[%c0_11, %c0_12], %12 {strides = array<i32>} : memref<32x128xf32, #tpu.memory_space<vmem>>, vector<32x128xf32>,
    } else {
    }
    %c0 = arith.constant 0 : index
    %c0_1 = arith.constant 0 : index
    %3 = vector.load %arg7[%c0, %c0_1] : memref<32x128xf32, #tpu.memory_space<vmem>>, vector<32x128xf32>
    %c0_2 = arith.constant 0 : index
    %c0_3 = arith.constant 0 : index
    %4 = vector.load %arg3[%c0_2, %c0_3] : memref<32x640xbf16, #tpu.memory_space<vmem>>, vector<32x640xbf16>
    %c0_4 = arith.constant 0 : index
    %c0_5 = arith.constant 0 : index
    %5 = vector.load %arg4[%c0_4, %c0_5] : memref<640x128xbf16, #tpu.memory_space<vmem>>, vector<640x128xbf16>
    %cst = arith.constant dense<0.000000e+00> : vector<32x128xf32>
    %6 = tpu.matmul %4, %5, %cst {dimension_numbers = #tpu.dot_dimension_numbers<[1], [0], [0], [1], [0, 0, 1, 1], [], []>} : vector<32x640xbf16>, vector<640x128xbf16>, vector<32x128xf32> -> vector<32x128xf32>
    %7 = arith.addf %3, %6 : vector<32x128xf32>
    %c0_6 = arith.constant 0 : index
    %c0_7 = arith.constant 0 : index
    %8 = vector.load %arg7[%c0_6, %c0_7] : memref<32x128xf32, #tpu.memory_space<vmem>>, vector<32x128xf32>
    tpu.vector_store %arg7[%c0_6, %c0_7], %7 {strides = array<i32>} : memref<32x128xf32, #tpu.memory_space<vmem>>, vector<32x128xf32>,
    %c0_i32_8 = arith.constant 0 : i32
    %9 = arith.cmpi eq, %arg2, %c0_i32_8 : i32
    %10 = arith.extui %9 : i1 to i32
    %c0_i32_9 = arith.constant 0 : i32
    %11 = arith.cmpi ne, %10, %c0_i32_9 : i32
    scf.if %11 {
      %c0_10 = arith.constant 0 : index
      %c0_11 = arith.constant 0 : index
      %12 = vector.load %arg7[%c0_10, %c0_11] : memref<32x128xf32, #tpu.memory_space<vmem>>, vector<32x128xf32>
      %c0_12 = arith.constant 0 : index
      %c0_13 = arith.constant 0 : index
      %13 = vector.load %arg5[%c0_12, %c0_13] : memref<1x128xf32, #tpu.memory_space<vmem>>, vector<1x128xf32>
      %14 = vector.broadcast %13 : vector<1x128xf32> to vector<32x128xf32>
      %15 = arith.addf %12, %14 : vector<32x128xf32>
      %cst_14 = arith.constant 0.000000e+00 : f32
      %16 = vector.broadcast %cst_14 : f32 to vector<32x128xf32>
      %17 = arith.cmpf oge, %15, %16 : vector<32x128xf32>
      %cst_15 = arith.constant 0.00999999977 : f32
      %18 = vector.broadcast %cst_15 : f32 to vector<32x128xf32>
      %19 = arith.mulf %15, %18 : vector<32x128xf32>
      %20 = arith.select %17, %15, %19 : vector<32x128xi1>, vector<32x128xf32>
      %21 = arith.truncf %20 : vector<32x128xf32> to vector<32x128xbf16>
      %c0_16 = arith.constant 0 : index
      %c0_17 = arith.constant 0 : index
      %22 = vector.load %arg6[%c0_16, %c0_17] : memref<32x128xbf16, #tpu.memory_space<vmem>>, vector<32x128xbf16>
      tpu.vector_store %arg6[%c0_16, %c0_17], %21 {strides = array<i32>} : memref<32x128xbf16, #tpu.memory_space<vmem>>, vector<32x128xbf16>,
    } else {
    }
    return
  }
  func.func @transform_0(%arg0: i32, %arg1: i32, %arg2: i32) -> (i32, i32) {
    %c0_i32 = arith.constant 0 : i32
    return %arg0, %arg2 : i32, i32
  }
  func.func @transform_1(%arg0: i32, %arg1: i32, %arg2: i32) -> (i32, i32) {
    %c0_i32 = arith.constant 0 : i32
    return %arg2, %arg1 : i32, i32
  }
  func.func @transform_2(%arg0: i32, %arg1: i32, %arg2: i32) -> (i32, i32) {
    %c0_i32 = arith.constant 0 : i32
    %c0_i32_0 = arith.constant 0 : i32
    return %c0_i32, %arg1 : i32, i32
  }
  func.func @transform_3(%arg0: i32, %arg1: i32, %arg2: i32) -> (i32, i32) {
    %c0_i32 = arith.constant 0 : i32
    return %arg0, %arg1 : i32, i32
  }
}

module attributes {stable_mosaic.version = 11 : i64} {
  func.func @_mm_bias_act_kernel(%arg0: i32, %arg1: i32, %arg2: i32, %arg3: memref<16x1152xbf16, #tpu.memory_space<vmem>>, %arg4: memref<1152x256xbf16, #tpu.memory_space<vmem>>, %arg5: memref<1x256xf32, #tpu.memory_space<vmem>>, %arg6: memref<16x256xbf16, #tpu.memory_space<vmem>>, %arg7: memref<16x256xf32, #tpu.memory_space<vmem>>) attributes {dimension_semantics = [#tpu.dimension_semantics<parallel>, #tpu.dimension_semantics<parallel>, #tpu.dimension_semantics<arbitrary>], iteration_bounds = array<i64: 1, 1, 1>, scalar_prefetch = 0 : i64, scratch_operands = 1 : i64, tpu.core_type = #tpu.core_type<tc>, window_params = [{transform_indices = @transform_0, window_bounds = array<i64: 16, 1152>}, {transform_indices = @transform_1, window_bounds = array<i64: 1152, 256>}, {transform_indices = @transform_2, window_bounds = array<i64: 1, 256>}, {transform_indices = @transform_3, window_bounds = array<i64: 16, 256>}]} {
    %c0_i32 = arith.constant 0 : i32
    %0 = arith.cmpi eq, %arg2, %c0_i32 : i32
    %1 = arith.extui %0 : i1 to i32
    %c0_i32_0 = arith.constant 0 : i32
    %2 = arith.cmpi ne, %1, %c0_i32_0 : i32
    scf.if %2 {
      %cst_10 = arith.constant 0.000000e+00 : f32
      %12 = vector.broadcast %cst_10 : f32 to vector<16x256xf32>
      %c0_11 = arith.constant 0 : index
      %c0_12 = arith.constant 0 : index
      %13 = vector.load %arg7[%c0_11, %c0_12] : memref<16x256xf32, #tpu.memory_space<vmem>>, vector<16x256xf32>
      tpu.vector_store %arg7[%c0_11, %c0_12], %12 {strides = array<i32>} : memref<16x256xf32, #tpu.memory_space<vmem>>, vector<16x256xf32>,
    } else {
    }
    %c0 = arith.constant 0 : index
    %c0_1 = arith.constant 0 : index
    %3 = vector.load %arg7[%c0, %c0_1] : memref<16x256xf32, #tpu.memory_space<vmem>>, vector<16x256xf32>
    %c0_2 = arith.constant 0 : index
    %c0_3 = arith.constant 0 : index
    %4 = vector.load %arg3[%c0_2, %c0_3] : memref<16x1152xbf16, #tpu.memory_space<vmem>>, vector<16x1152xbf16>
    %c0_4 = arith.constant 0 : index
    %c0_5 = arith.constant 0 : index
    %5 = vector.load %arg4[%c0_4, %c0_5] : memref<1152x256xbf16, #tpu.memory_space<vmem>>, vector<1152x256xbf16>
    %cst = arith.constant dense<0.000000e+00> : vector<16x256xf32>
    %6 = tpu.matmul %4, %5, %cst {dimension_numbers = #tpu.dot_dimension_numbers<[1], [0], [0], [1], [0, 0, 1, 1], [], []>} : vector<16x1152xbf16>, vector<1152x256xbf16>, vector<16x256xf32> -> vector<16x256xf32>
    %7 = arith.addf %3, %6 : vector<16x256xf32>
    %c0_6 = arith.constant 0 : index
    %c0_7 = arith.constant 0 : index
    %8 = vector.load %arg7[%c0_6, %c0_7] : memref<16x256xf32, #tpu.memory_space<vmem>>, vector<16x256xf32>
    tpu.vector_store %arg7[%c0_6, %c0_7], %7 {strides = array<i32>} : memref<16x256xf32, #tpu.memory_space<vmem>>, vector<16x256xf32>,
    %c0_i32_8 = arith.constant 0 : i32
    %9 = arith.cmpi eq, %arg2, %c0_i32_8 : i32
    %10 = arith.extui %9 : i1 to i32
    %c0_i32_9 = arith.constant 0 : i32
    %11 = arith.cmpi ne, %10, %c0_i32_9 : i32
    scf.if %11 {
      %c0_10 = arith.constant 0 : index
      %c0_11 = arith.constant 0 : index
      %12 = vector.load %arg7[%c0_10, %c0_11] : memref<16x256xf32, #tpu.memory_space<vmem>>, vector<16x256xf32>
      %c0_12 = arith.constant 0 : index
      %c0_13 = arith.constant 0 : index
      %13 = vector.load %arg5[%c0_12, %c0_13] : memref<1x256xf32, #tpu.memory_space<vmem>>, vector<1x256xf32>
      %14 = vector.broadcast %13 : vector<1x256xf32> to vector<16x256xf32>
      %15 = arith.addf %12, %14 : vector<16x256xf32>
      %cst_14 = arith.constant 0.000000e+00 : f32
      %16 = vector.broadcast %cst_14 : f32 to vector<16x256xf32>
      %17 = arith.cmpf oge, %15, %16 : vector<16x256xf32>
      %cst_15 = arith.constant 0.00999999977 : f32
      %18 = vector.broadcast %cst_15 : f32 to vector<16x256xf32>
      %19 = arith.mulf %15, %18 : vector<16x256xf32>
      %20 = arith.select %17, %15, %19 : vector<16x256xi1>, vector<16x256xf32>
      %21 = arith.truncf %20 : vector<16x256xf32> to vector<16x256xbf16>
      %c0_16 = arith.constant 0 : index
      %c0_17 = arith.constant 0 : index
      %22 = vector.load %arg6[%c0_16, %c0_17] : memref<16x256xbf16, #tpu.memory_space<vmem>>, vector<16x256xbf16>
      tpu.vector_store %arg6[%c0_16, %c0_17], %21 {strides = array<i32>} : memref<16x256xbf16, #tpu.memory_space<vmem>>, vector<16x256xbf16>,
    } else {
    }
    return
  }
  func.func @transform_0(%arg0: i32, %arg1: i32, %arg2: i32) -> (i32, i32) {
    %c0_i32 = arith.constant 0 : i32
    return %arg0, %arg2 : i32, i32
  }
  func.func @transform_1(%arg0: i32, %arg1: i32, %arg2: i32) -> (i32, i32) {
    %c0_i32 = arith.constant 0 : i32
    return %arg2, %arg1 : i32, i32
  }
  func.func @transform_2(%arg0: i32, %arg1: i32, %arg2: i32) -> (i32, i32) {
    %c0_i32 = arith.constant 0 : i32
    %c0_i32_0 = arith.constant 0 : i32
    return %c0_i32, %arg1 : i32, i32
  }
  func.func @transform_3(%arg0: i32, %arg1: i32, %arg2: i32) -> (i32, i32) {
    %c0_i32 = arith.constant 0 : i32
    return %arg0, %arg1 : i32, i32
  }
}

module attributes {stable_mosaic.version = 11 : i64} {
  func.func @_mm_bias_act_kernel(%arg0: i32, %arg1: i32, %arg2: i32, %arg3: memref<16x1152xbf16, #tpu.memory_space<vmem>>, %arg4: memref<1152x256xbf16, #tpu.memory_space<vmem>>, %arg5: memref<1x256xf32, #tpu.memory_space<vmem>>, %arg6: memref<16x256xbf16, #tpu.memory_space<vmem>>, %arg7: memref<16x256xf32, #tpu.memory_space<vmem>>) attributes {dimension_semantics = [#tpu.dimension_semantics<parallel>, #tpu.dimension_semantics<parallel>, #tpu.dimension_semantics<arbitrary>], iteration_bounds = array<i64: 1, 1, 2>, scalar_prefetch = 0 : i64, scratch_operands = 1 : i64, tpu.core_type = #tpu.core_type<tc>, window_params = [{transform_indices = @transform_0, window_bounds = array<i64: 16, 1152>}, {transform_indices = @transform_1, window_bounds = array<i64: 1152, 256>}, {transform_indices = @transform_2, window_bounds = array<i64: 1, 256>}, {transform_indices = @transform_3, window_bounds = array<i64: 16, 256>}]} {
    %c0_i32 = arith.constant 0 : i32
    %0 = arith.cmpi eq, %arg2, %c0_i32 : i32
    %1 = arith.extui %0 : i1 to i32
    %c0_i32_0 = arith.constant 0 : i32
    %2 = arith.cmpi ne, %1, %c0_i32_0 : i32
    scf.if %2 {
      %cst_9 = arith.constant 0.000000e+00 : f32
      %12 = vector.broadcast %cst_9 : f32 to vector<16x256xf32>
      %c0_10 = arith.constant 0 : index
      %c0_11 = arith.constant 0 : index
      %13 = vector.load %arg7[%c0_10, %c0_11] : memref<16x256xf32, #tpu.memory_space<vmem>>, vector<16x256xf32>
      tpu.vector_store %arg7[%c0_10, %c0_11], %12 {strides = array<i32>} : memref<16x256xf32, #tpu.memory_space<vmem>>, vector<16x256xf32>,
    } else {
    }
    %c0 = arith.constant 0 : index
    %c0_1 = arith.constant 0 : index
    %3 = vector.load %arg7[%c0, %c0_1] : memref<16x256xf32, #tpu.memory_space<vmem>>, vector<16x256xf32>
    %c0_2 = arith.constant 0 : index
    %c0_3 = arith.constant 0 : index
    %4 = vector.load %arg3[%c0_2, %c0_3] : memref<16x1152xbf16, #tpu.memory_space<vmem>>, vector<16x1152xbf16>
    %c0_4 = arith.constant 0 : index
    %c0_5 = arith.constant 0 : index
    %5 = vector.load %arg4[%c0_4, %c0_5] : memref<1152x256xbf16, #tpu.memory_space<vmem>>, vector<1152x256xbf16>
    %cst = arith.constant dense<0.000000e+00> : vector<16x256xf32>
    %6 = tpu.matmul %4, %5, %cst {dimension_numbers = #tpu.dot_dimension_numbers<[1], [0], [0], [1], [0, 0, 1, 1], [], []>} : vector<16x1152xbf16>, vector<1152x256xbf16>, vector<16x256xf32> -> vector<16x256xf32>
    %7 = arith.addf %3, %6 : vector<16x256xf32>
    %c0_6 = arith.constant 0 : index
    %c0_7 = arith.constant 0 : index
    %8 = vector.load %arg7[%c0_6, %c0_7] : memref<16x256xf32, #tpu.memory_space<vmem>>, vector<16x256xf32>
    tpu.vector_store %arg7[%c0_6, %c0_7], %7 {strides = array<i32>} : memref<16x256xf32, #tpu.memory_space<vmem>>, vector<16x256xf32>,
    %c1_i32 = arith.constant 1 : i32
    %9 = arith.cmpi eq, %arg2, %c1_i32 : i32
    %10 = arith.extui %9 : i1 to i32
    %c0_i32_8 = arith.constant 0 : i32
    %11 = arith.cmpi ne, %10, %c0_i32_8 : i32
    scf.if %11 {
      %c0_9 = arith.constant 0 : index
      %c0_10 = arith.constant 0 : index
      %12 = vector.load %arg7[%c0_9, %c0_10] : memref<16x256xf32, #tpu.memory_space<vmem>>, vector<16x256xf32>
      %c0_11 = arith.constant 0 : index
      %c0_12 = arith.constant 0 : index
      %13 = vector.load %arg5[%c0_11, %c0_12] : memref<1x256xf32, #tpu.memory_space<vmem>>, vector<1x256xf32>
      %14 = vector.broadcast %13 : vector<1x256xf32> to vector<16x256xf32>
      %15 = arith.addf %12, %14 : vector<16x256xf32>
      %cst_13 = arith.constant 0.000000e+00 : f32
      %16 = vector.broadcast %cst_13 : f32 to vector<16x256xf32>
      %17 = arith.cmpf oge, %15, %16 : vector<16x256xf32>
      %cst_14 = arith.constant 0.00999999977 : f32
      %18 = vector.broadcast %cst_14 : f32 to vector<16x256xf32>
      %19 = arith.mulf %15, %18 : vector<16x256xf32>
      %20 = arith.select %17, %15, %19 : vector<16x256xi1>, vector<16x256xf32>
      %21 = arith.truncf %20 : vector<16x256xf32> to vector<16x256xbf16>
      %c0_15 = arith.constant 0 : index
      %c0_16 = arith.constant 0 : index
      %22 = vector.load %arg6[%c0_15, %c0_16] : memref<16x256xbf16, #tpu.memory_space<vmem>>, vector<16x256xbf16>
      tpu.vector_store %arg6[%c0_15, %c0_16], %21 {strides = array<i32>} : memref<16x256xbf16, #tpu.memory_space<vmem>>, vector<16x256xbf16>,
    } else {
    }
    return
  }
  func.func @transform_0(%arg0: i32, %arg1: i32, %arg2: i32) -> (i32, i32) {
    %c0_i32 = arith.constant 0 : i32
    return %arg0, %arg2 : i32, i32
  }
  func.func @transform_1(%arg0: i32, %arg1: i32, %arg2: i32) -> (i32, i32) {
    %c0_i32 = arith.constant 0 : i32
    return %arg2, %arg1 : i32, i32
  }
  func.func @transform_2(%arg0: i32, %arg1: i32, %arg2: i32) -> (i32, i32) {
    %c0_i32 = arith.constant 0 : i32
    %c0_i32_0 = arith.constant 0 : i32
    return %c0_i32, %arg1 : i32, i32
  }
  func.func @transform_3(%arg0: i32, %arg1: i32, %arg2: i32) -> (i32, i32) {
    %c0_i32 = arith.constant 0 : i32
    return %arg0, %arg1 : i32, i32
  }
}

module attributes {stable_mosaic.version = 11 : i64} {
  func.func @_mm_bias_act_kernel(%arg0: i32, %arg1: i32, %arg2: i32, %arg3: memref<16x1152xbf16, #tpu.memory_space<vmem>>, %arg4: memref<1152x256xbf16, #tpu.memory_space<vmem>>, %arg5: memref<1x256xf32, #tpu.memory_space<vmem>>, %arg6: memref<16x256xbf16, #tpu.memory_space<vmem>>, %arg7: memref<16x256xf32, #tpu.memory_space<vmem>>) attributes {dimension_semantics = [#tpu.dimension_semantics<parallel>, #tpu.dimension_semantics<parallel>, #tpu.dimension_semantics<arbitrary>], iteration_bounds = array<i64: 1, 2, 2>, scalar_prefetch = 0 : i64, scratch_operands = 1 : i64, tpu.core_type = #tpu.core_type<tc>, window_params = [{transform_indices = @transform_0, window_bounds = array<i64: 16, 1152>}, {transform_indices = @transform_1, window_bounds = array<i64: 1152, 256>}, {transform_indices = @transform_2, window_bounds = array<i64: 1, 256>}, {transform_indices = @transform_3, window_bounds = array<i64: 16, 256>}]} {
    %c0_i32 = arith.constant 0 : i32
    %0 = arith.cmpi eq, %arg2, %c0_i32 : i32
    %1 = arith.extui %0 : i1 to i32
    %c0_i32_0 = arith.constant 0 : i32
    %2 = arith.cmpi ne, %1, %c0_i32_0 : i32
    scf.if %2 {
      %cst_9 = arith.constant 0.000000e+00 : f32
      %12 = vector.broadcast %cst_9 : f32 to vector<16x256xf32>
      %c0_10 = arith.constant 0 : index
      %c0_11 = arith.constant 0 : index
      %13 = vector.load %arg7[%c0_10, %c0_11] : memref<16x256xf32, #tpu.memory_space<vmem>>, vector<16x256xf32>
      tpu.vector_store %arg7[%c0_10, %c0_11], %12 {strides = array<i32>} : memref<16x256xf32, #tpu.memory_space<vmem>>, vector<16x256xf32>,
    } else {
    }
    %c0 = arith.constant 0 : index
    %c0_1 = arith.constant 0 : index
    %3 = vector.load %arg7[%c0, %c0_1] : memref<16x256xf32, #tpu.memory_space<vmem>>, vector<16x256xf32>
    %c0_2 = arith.constant 0 : index
    %c0_3 = arith.constant 0 : index
    %4 = vector.load %arg3[%c0_2, %c0_3] : memref<16x1152xbf16, #tpu.memory_space<vmem>>, vector<16x1152xbf16>
    %c0_4 = arith.constant 0 : index
    %c0_5 = arith.constant 0 : index
    %5 = vector.load %arg4[%c0_4, %c0_5] : memref<1152x256xbf16, #tpu.memory_space<vmem>>, vector<1152x256xbf16>
    %cst = arith.constant dense<0.000000e+00> : vector<16x256xf32>
    %6 = tpu.matmul %4, %5, %cst {dimension_numbers = #tpu.dot_dimension_numbers<[1], [0], [0], [1], [0, 0, 1, 1], [], []>} : vector<16x1152xbf16>, vector<1152x256xbf16>, vector<16x256xf32> -> vector<16x256xf32>
    %7 = arith.addf %3, %6 : vector<16x256xf32>
    %c0_6 = arith.constant 0 : index
    %c0_7 = arith.constant 0 : index
    %8 = vector.load %arg7[%c0_6, %c0_7] : memref<16x256xf32, #tpu.memory_space<vmem>>, vector<16x256xf32>
    tpu.vector_store %arg7[%c0_6, %c0_7], %7 {strides = array<i32>} : memref<16x256xf32, #tpu.memory_space<vmem>>, vector<16x256xf32>,
    %c1_i32 = arith.constant 1 : i32
    %9 = arith.cmpi eq, %arg2, %c1_i32 : i32
    %10 = arith.extui %9 : i1 to i32
    %c0_i32_8 = arith.constant 0 : i32
    %11 = arith.cmpi ne, %10, %c0_i32_8 : i32
    scf.if %11 {
      %c0_9 = arith.constant 0 : index
      %c0_10 = arith.constant 0 : index
      %12 = vector.load %arg7[%c0_9, %c0_10] : memref<16x256xf32, #tpu.memory_space<vmem>>, vector<16x256xf32>
      %c0_11 = arith.constant 0 : index
      %c0_12 = arith.constant 0 : index
      %13 = vector.load %arg5[%c0_11, %c0_12] : memref<1x256xf32, #tpu.memory_space<vmem>>, vector<1x256xf32>
      %14 = vector.broadcast %13 : vector<1x256xf32> to vector<16x256xf32>
      %15 = arith.addf %12, %14 : vector<16x256xf32>
      %cst_13 = arith.constant 0.000000e+00 : f32
      %16 = vector.broadcast %cst_13 : f32 to vector<16x256xf32>
      %17 = arith.cmpf oge, %15, %16 : vector<16x256xf32>
      %cst_14 = arith.constant 0.00999999977 : f32
      %18 = vector.broadcast %cst_14 : f32 to vector<16x256xf32>
      %19 = arith.mulf %15, %18 : vector<16x256xf32>
      %20 = arith.select %17, %15, %19 : vector<16x256xi1>, vector<16x256xf32>
      %21 = arith.truncf %20 : vector<16x256xf32> to vector<16x256xbf16>
      %c0_15 = arith.constant 0 : index
      %c0_16 = arith.constant 0 : index
      %22 = vector.load %arg6[%c0_15, %c0_16] : memref<16x256xbf16, #tpu.memory_space<vmem>>, vector<16x256xbf16>
      tpu.vector_store %arg6[%c0_15, %c0_16], %21 {strides = array<i32>} : memref<16x256xbf16, #tpu.memory_space<vmem>>, vector<16x256xbf16>,
    } else {
    }
    return
  }
  func.func @transform_0(%arg0: i32, %arg1: i32, %arg2: i32) -> (i32, i32) {
    %c0_i32 = arith.constant 0 : i32
    return %arg0, %arg2 : i32, i32
  }
  func.func @transform_1(%arg0: i32, %arg1: i32, %arg2: i32) -> (i32, i32) {
    %c0_i32 = arith.constant 0 : i32
    return %arg2, %arg1 : i32, i32
  }
  func.func @transform_2(%arg0: i32, %arg1: i32, %arg2: i32) -> (i32, i32) {
    %c0_i32 = arith.constant 0 : i32
    %c0_i32_0 = arith.constant 0 : i32
    return %c0_i32, %arg1 : i32, i32
  }
  func.func @transform_3(%arg0: i32, %arg1: i32, %arg2: i32) -> (i32, i32) {
    %c0_i32 = arith.constant 0 : i32
    return %arg0, %arg1 : i32, i32
  }
}

module attributes {stable_mosaic.version = 11 : i64} {
  func.func @_mm_bias_act_kernel(%arg0: i32, %arg1: i32, %arg2: i32, %arg3: memref<16x1536xbf16, #tpu.memory_space<vmem>>, %arg4: memref<1536x256xbf16, #tpu.memory_space<vmem>>, %arg5: memref<1x256xf32, #tpu.memory_space<vmem>>, %arg6: memref<16x256xbf16, #tpu.memory_space<vmem>>, %arg7: memref<16x256xf32, #tpu.memory_space<vmem>>) attributes {dimension_semantics = [#tpu.dimension_semantics<parallel>, #tpu.dimension_semantics<parallel>, #tpu.dimension_semantics<arbitrary>], iteration_bounds = array<i64: 1, 4, 3>, scalar_prefetch = 0 : i64, scratch_operands = 1 : i64, tpu.core_type = #tpu.core_type<tc>, window_params = [{transform_indices = @transform_0, window_bounds = array<i64: 16, 1536>}, {transform_indices = @transform_1, window_bounds = array<i64: 1536, 256>}, {transform_indices = @transform_2, window_bounds = array<i64: 1, 256>}, {transform_indices = @transform_3, window_bounds = array<i64: 16, 256>}]} {
    %c0_i32 = arith.constant 0 : i32
    %0 = arith.cmpi eq, %arg2, %c0_i32 : i32
    %1 = arith.extui %0 : i1 to i32
    %c0_i32_0 = arith.constant 0 : i32
    %2 = arith.cmpi ne, %1, %c0_i32_0 : i32
    scf.if %2 {
      %cst_9 = arith.constant 0.000000e+00 : f32
      %12 = vector.broadcast %cst_9 : f32 to vector<16x256xf32>
      %c0_10 = arith.constant 0 : index
      %c0_11 = arith.constant 0 : index
      %13 = vector.load %arg7[%c0_10, %c0_11] : memref<16x256xf32, #tpu.memory_space<vmem>>, vector<16x256xf32>
      tpu.vector_store %arg7[%c0_10, %c0_11], %12 {strides = array<i32>} : memref<16x256xf32, #tpu.memory_space<vmem>>, vector<16x256xf32>,
    } else {
    }
    %c0 = arith.constant 0 : index
    %c0_1 = arith.constant 0 : index
    %3 = vector.load %arg7[%c0, %c0_1] : memref<16x256xf32, #tpu.memory_space<vmem>>, vector<16x256xf32>
    %c0_2 = arith.constant 0 : index
    %c0_3 = arith.constant 0 : index
    %4 = vector.load %arg3[%c0_2, %c0_3] : memref<16x1536xbf16, #tpu.memory_space<vmem>>, vector<16x1536xbf16>
    %c0_4 = arith.constant 0 : index
    %c0_5 = arith.constant 0 : index
    %5 = vector.load %arg4[%c0_4, %c0_5] : memref<1536x256xbf16, #tpu.memory_space<vmem>>, vector<1536x256xbf16>
    %cst = arith.constant dense<0.000000e+00> : vector<16x256xf32>
    %6 = tpu.matmul %4, %5, %cst {dimension_numbers = #tpu.dot_dimension_numbers<[1], [0], [0], [1], [0, 0, 1, 1], [], []>} : vector<16x1536xbf16>, vector<1536x256xbf16>, vector<16x256xf32> -> vector<16x256xf32>
    %7 = arith.addf %3, %6 : vector<16x256xf32>
    %c0_6 = arith.constant 0 : index
    %c0_7 = arith.constant 0 : index
    %8 = vector.load %arg7[%c0_6, %c0_7] : memref<16x256xf32, #tpu.memory_space<vmem>>, vector<16x256xf32>
    tpu.vector_store %arg7[%c0_6, %c0_7], %7 {strides = array<i32>} : memref<16x256xf32, #tpu.memory_space<vmem>>, vector<16x256xf32>,
    %c2_i32 = arith.constant 2 : i32
    %9 = arith.cmpi eq, %arg2, %c2_i32 : i32
    %10 = arith.extui %9 : i1 to i32
    %c0_i32_8 = arith.constant 0 : i32
    %11 = arith.cmpi ne, %10, %c0_i32_8 : i32
    scf.if %11 {
      %c0_9 = arith.constant 0 : index
      %c0_10 = arith.constant 0 : index
      %12 = vector.load %arg7[%c0_9, %c0_10] : memref<16x256xf32, #tpu.memory_space<vmem>>, vector<16x256xf32>
      %c0_11 = arith.constant 0 : index
      %c0_12 = arith.constant 0 : index
      %13 = vector.load %arg5[%c0_11, %c0_12] : memref<1x256xf32, #tpu.memory_space<vmem>>, vector<1x256xf32>
      %14 = vector.broadcast %13 : vector<1x256xf32> to vector<16x256xf32>
      %15 = arith.addf %12, %14 : vector<16x256xf32>
      %cst_13 = arith.constant 0.000000e+00 : f32
      %16 = vector.broadcast %cst_13 : f32 to vector<16x256xf32>
      %17 = arith.cmpf oge, %15, %16 : vector<16x256xf32>
      %cst_14 = arith.constant 0.00999999977 : f32
      %18 = vector.broadcast %cst_14 : f32 to vector<16x256xf32>
      %19 = arith.mulf %15, %18 : vector<16x256xf32>
      %20 = arith.select %17, %15, %19 : vector<16x256xi1>, vector<16x256xf32>
      %21 = arith.truncf %20 : vector<16x256xf32> to vector<16x256xbf16>
      %c0_15 = arith.constant 0 : index
      %c0_16 = arith.constant 0 : index
      %22 = vector.load %arg6[%c0_15, %c0_16] : memref<16x256xbf16, #tpu.memory_space<vmem>>, vector<16x256xbf16>
      tpu.vector_store %arg6[%c0_15, %c0_16], %21 {strides = array<i32>} : memref<16x256xbf16, #tpu.memory_space<vmem>>, vector<16x256xbf16>,
    } else {
    }
    return
  }
  func.func @transform_0(%arg0: i32, %arg1: i32, %arg2: i32) -> (i32, i32) {
    %c0_i32 = arith.constant 0 : i32
    return %arg0, %arg2 : i32, i32
  }
  func.func @transform_1(%arg0: i32, %arg1: i32, %arg2: i32) -> (i32, i32) {
    %c0_i32 = arith.constant 0 : i32
    return %arg2, %arg1 : i32, i32
  }
  func.func @transform_2(%arg0: i32, %arg1: i32, %arg2: i32) -> (i32, i32) {
    %c0_i32 = arith.constant 0 : i32
    %c0_i32_0 = arith.constant 0 : i32
    return %c0_i32, %arg1 : i32, i32
  }
  func.func @transform_3(%arg0: i32, %arg1: i32, %arg2: i32) -> (i32, i32) {
    %c0_i32 = arith.constant 0 : i32
    return %arg0, %arg1 : i32, i32
  }
}

module attributes {stable_mosaic.version = 11 : i64} {
  func.func @_mm_bias_act_kernel(%arg0: i32, %arg1: i32, %arg2: i32, %arg3: memref<32x1152xbf16, #tpu.memory_space<vmem>>, %arg4: memref<1152x128xbf16, #tpu.memory_space<vmem>>, %arg5: memref<1x128xf32, #tpu.memory_space<vmem>>, %arg6: memref<32x128xf32, #tpu.memory_space<vmem>>, %arg7: memref<32x128xf32, #tpu.memory_space<vmem>>) attributes {dimension_semantics = [#tpu.dimension_semantics<parallel>, #tpu.dimension_semantics<parallel>, #tpu.dimension_semantics<arbitrary>], iteration_bounds = array<i64: 1, 1, 3>, scalar_prefetch = 0 : i64, scratch_operands = 1 : i64, tpu.core_type = #tpu.core_type<tc>, window_params = [{transform_indices = @transform_0, window_bounds = array<i64: 32, 1152>}, {transform_indices = @transform_1, window_bounds = array<i64: 1152, 128>}, {transform_indices = @transform_2, window_bounds = array<i64: 1, 128>}, {transform_indices = @transform_3, window_bounds = array<i64: 32, 128>}]} {
    %c0_i32 = arith.constant 0 : i32
    %0 = arith.cmpi eq, %arg2, %c0_i32 : i32
    %1 = arith.extui %0 : i1 to i32
    %c0_i32_0 = arith.constant 0 : i32
    %2 = arith.cmpi ne, %1, %c0_i32_0 : i32
    scf.if %2 {
      %cst_9 = arith.constant 0.000000e+00 : f32
      %12 = vector.broadcast %cst_9 : f32 to vector<32x128xf32>
      %c0_10 = arith.constant 0 : index
      %c0_11 = arith.constant 0 : index
      %13 = vector.load %arg7[%c0_10, %c0_11] : memref<32x128xf32, #tpu.memory_space<vmem>>, vector<32x128xf32>
      tpu.vector_store %arg7[%c0_10, %c0_11], %12 {strides = array<i32>} : memref<32x128xf32, #tpu.memory_space<vmem>>, vector<32x128xf32>,
    } else {
    }
    %c0 = arith.constant 0 : index
    %c0_1 = arith.constant 0 : index
    %3 = vector.load %arg7[%c0, %c0_1] : memref<32x128xf32, #tpu.memory_space<vmem>>, vector<32x128xf32>
    %c0_2 = arith.constant 0 : index
    %c0_3 = arith.constant 0 : index
    %4 = vector.load %arg3[%c0_2, %c0_3] : memref<32x1152xbf16, #tpu.memory_space<vmem>>, vector<32x1152xbf16>
    %c0_4 = arith.constant 0 : index
    %c0_5 = arith.constant 0 : index
    %5 = vector.load %arg4[%c0_4, %c0_5] : memref<1152x128xbf16, #tpu.memory_space<vmem>>, vector<1152x128xbf16>
    %cst = arith.constant dense<0.000000e+00> : vector<32x128xf32>
    %6 = tpu.matmul %4, %5, %cst {dimension_numbers = #tpu.dot_dimension_numbers<[1], [0], [0], [1], [0, 0, 1, 1], [], []>} : vector<32x1152xbf16>, vector<1152x128xbf16>, vector<32x128xf32> -> vector<32x128xf32>
    %7 = arith.addf %3, %6 : vector<32x128xf32>
    %c0_6 = arith.constant 0 : index
    %c0_7 = arith.constant 0 : index
    %8 = vector.load %arg7[%c0_6, %c0_7] : memref<32x128xf32, #tpu.memory_space<vmem>>, vector<32x128xf32>
    tpu.vector_store %arg7[%c0_6, %c0_7], %7 {strides = array<i32>} : memref<32x128xf32, #tpu.memory_space<vmem>>, vector<32x128xf32>,
    %c2_i32 = arith.constant 2 : i32
    %9 = arith.cmpi eq, %arg2, %c2_i32 : i32
    %10 = arith.extui %9 : i1 to i32
    %c0_i32_8 = arith.constant 0 : i32
    %11 = arith.cmpi ne, %10, %c0_i32_8 : i32
    scf.if %11 {
      %c0_9 = arith.constant 0 : index
      %c0_10 = arith.constant 0 : index
      %12 = vector.load %arg7[%c0_9, %c0_10] : memref<32x128xf32, #tpu.memory_space<vmem>>, vector<32x128xf32>
      %c0_11 = arith.constant 0 : index
      %c0_12 = arith.constant 0 : index
      %13 = vector.load %arg5[%c0_11, %c0_12] : memref<1x128xf32, #tpu.memory_space<vmem>>, vector<1x128xf32>
      %14 = vector.broadcast %13 : vector<1x128xf32> to vector<32x128xf32>
      %15 = arith.addf %12, %14 : vector<32x128xf32>
      %c0_13 = arith.constant 0 : index
      %c0_14 = arith.constant 0 : index
      %16 = vector.load %arg6[%c0_13, %c0_14] : memref<32x128xf32, #tpu.memory_space<vmem>>, vector<32x128xf32>
      tpu.vector_store %arg6[%c0_13, %c0_14], %15 {strides = array<i32>} : memref<32x128xf32, #tpu.memory_space<vmem>>, vector<32x128xf32>,
    } else {
    }
    return
  }
  func.func @transform_0(%arg0: i32, %arg1: i32, %arg2: i32) -> (i32, i32) {
    %c0_i32 = arith.constant 0 : i32
    return %arg0, %arg2 : i32, i32
  }
  func.func @transform_1(%arg0: i32, %arg1: i32, %arg2: i32) -> (i32, i32) {
    %c0_i32 = arith.constant 0 : i32
    return %arg2, %arg1 : i32, i32
  }
  func.func @transform_2(%arg0: i32, %arg1: i32, %arg2: i32) -> (i32, i32) {
    %c0_i32 = arith.constant 0 : i32
    %c0_i32_0 = arith.constant 0 : i32
    return %c0_i32, %arg1 : i32, i32
  }
  func.func @transform_3(%arg0: i32, %arg1: i32, %arg2: i32) -> (i32, i32) {
    %c0_i32 = arith.constant 0 : i32
    return %arg0, %arg1 : i32, i32
  }
}

</mosaic_0001>

<llo_original>
// kernel: flownet_er_forward.9
$region0: #{flownet_er_forward.9}
  #allocation0 [shape = 'u32[]', space=smem, size = 0x4, offset = 0x4, fixed_abs, tag = 'smem constant byte address 0x4 - core index']
  #allocation1 [shape = 'u32[72,128]{1,0:T(1,128)}', space=vmem, size = 0x9000, scoped, tag = 'internal scratch']
  %s0 = inlined_call_operand.vmem [shape: f32[16,512], index: 0, kind: input, shape index: {}]
  %s1 = inlined_call_operand.vmem [shape: f32[16,512], index: 1, kind: output, shape index: {}]
  %s2 = sld [smem:[#allocation0]]
  $region37: #{flownet_er_forward.9} parent=0
    _
  %s4 = ssub.s32 1, %s2
  %s5 = scalar_select 0, %s4, %s2
  loop: start=0, step=1, limit=4
  $region2: #{flownet_er_forward.9} parent=0 // loop_pre_header
    _
  $region3: #{flownet_er_forward.9} parent=0 // loop_header
    %s7 = sphi 0, %s11
    %p8 = scmp.ge.s32.totalorder %s7, 4
    %s17 = sphi 0, %s19
    %s20 = sphi 0, %s17
    %s21 = sphi 0, %s20
    %s37 = sphi 0, %s21
    %s43 = sphi 0, %s45
    %s46 = sphi 0, %s43
    %s47 = sphi 0, %s46
    %s63 = sphi 0, %s47
  $region4: #{flownet_er_forward.9} parent=0 // loop_header_branch
    %10 = sbr.rel (%p8) target = $region8
  $region5: #{flownet_er_forward.9} parent=0 // loop_body
    %s12 = ssub.s32 %s7, 1
    %s13 = ssub.s32 %s7, 2
    %s14 = sadd.s32 %s7, 1
    %s15 = ssub.s32 %s7, %s14
    %p16 = scmp.eq.s32.totalorder %s15, 0
    %s18 = sadd.s32 %s17, 1
    %s19 = scalar_select %p16, %s17, %s18
    %p22 = pneg %p16
    %p23 = scmp.eq.s32.totalorder %s7, 1
    %p24 = por %p22, %p23
    %p25 = scmp.ne.s32.totalorder %s17, %s20
    %p26 = scmp.eq.s32.totalorder %s7, 0
    %p27 = por %p25, %p26
    %p28 = scmp.ne.s32.totalorder %s17, %s20
    %p29 = scmp.eq.s32.totalorder %s12, 1
    %p30 = por %p28, %p29
    %p31 = scmp.ne.s32.totalorder %s20, %s21
    %p32 = scmp.eq.s32.totalorder %s12, 0
    %p33 = por %p31, %p32
    %p34 = scmp.ne.s32.totalorder %s20, %s21
    %p35 = scmp.eq.s32.totalorder %s13, 1
    %p36 = por %p34, %p35
    %p38 = scmp.ne.s32.totalorder %s21, %s37
    %p39 = scmp.eq.s32.totalorder %s13, 0
    %p40 = por %p38, %p39
    %s41 = ssub.s32 %s7, %s14
    %p42 = scmp.eq.s32.totalorder %s41, 0
    %s44 = sadd.s32 %s43, 1
    %s45 = scalar_select %p42, %s43, %s44
    %p48 = pneg %p42
    %p49 = scmp.eq.s32.totalorder %s7, 1
    %p50 = por %p48, %p49
    %p51 = scmp.ne.s32.totalorder %s43, %s46
    %p52 = scmp.eq.s32.totalorder %s7, 0
    %p53 = por %p51, %p52
    %p54 = scmp.ne.s32.totalorder %s43, %s46
    %p55 = scmp.eq.s32.totalorder %s12, 1
    %p56 = por %p54, %p55
    %p57 = scmp.ne.s32.totalorder %s46, %s47
    %p58 = scmp.eq.s32.totalorder %s12, 0
    %p59 = por %p57, %p58
    %p60 = scmp.ne.s32.totalorder %s46, %s47
    %p61 = scmp.eq.s32.totalorder %s13, 1
    %p62 = por %p60, %p61
    %p64 = scmp.ne.s32.totalorder %s47, %s63
    %p65 = scmp.eq.s32.totalorder %s13, 0
    %p66 = por %p64, %p65
    %p67 = scmp.le.s32.totalorder 1, %s7
    %p68 = scmp.lt.s32.totalorder %s7, 3
    %p69 = pnand %p67, %p68
    %p70 = pneg %p69
    // Predicated region
    $region9: #{flownet_er_forward.9} parent=5 // pred_check
      _
    $region10: #{flownet_er_forward.9} parent=5 // pred_check_branch
      %72 = sbr.rel (%p69) target = $region12
    $region11: #{flownet_er_forward.9} parent=5 // pred_region
      %s73 = ssub.s32 %s7, 1
    $region12: #{flownet_er_forward.9} parent=5 // pred_fallthru
      _
    %p74 = scmp.lt.s32.totalorder %s7, 2
    // Predicated region
    $region13: #{flownet_er_forward.9} parent=5 // pred_check
      %p75 = pneg %p74
    $region14: #{flownet_er_forward.9} parent=5 // pred_check_branch
      %77 = sbr.rel (%p75) target = $region16
    $region15: #{flownet_er_forward.9} parent=5 // pred_region
      // Predicated region
      $region17: #{flownet_er_forward.9} parent=15 // pred_check
        %p78 = pneg %p27
      $region18: #{flownet_er_forward.9} parent=15 // pred_check_branch
        %80 = sbr.rel (%p78) target = $region20
      $region19: #{flownet_er_forward.9} parent=15 // pred_region
        %p81 = scmp.lt.s32.totalorder %s7, 1
        %s82 = scalar_select %p81, %s7, 1
        %s83 = smul.addr %s82, 4
        %s84 = smul.addr %s83, 8
        %s85 = scalar_lea.vmem %s0, %s84
      $region20: #{flownet_er_forward.9} parent=15 // pred_fallthru
        _
    $region16: #{flownet_er_forward.9} parent=5 // pred_fallthru
      _
    %p86 = scmp.le.s32.totalorder 1, %s7
    %p87 = scmp.lt.s32.totalorder %s7, 3
    %p88 = pnand %p86, %p87
    %p89 = pneg %p88
    // Predicated region
    $region21: #{flownet_er_forward.9} parent=5 // pred_check
      _
    $region22: #{flownet_er_forward.9} parent=5 // pred_check_branch
      %91 = sbr.rel (%p88) target = $region24
    $region23: #{flownet_er_forward.9} parent=5 // pred_region
      %s92 = ssub.s32 %s7, 1
      %p93 = scmp.lt.s32.totalorder %s12, 1
      %s94 = scalar_select %p93, %s12, 1
      %s95 = smul.addr %s94, 4
      %s96 = smul.addr %s95, 8
      %s97 = scalar_lea.vmem %s0, %s96
      %p98 = pneg %p33
      %p99 = pneg %p30
      %p100 = pneg %p59
      %p101 = pneg %p56
      %p102 = scmp.lt.s32.totalorder %s12, 1
      %s103 = scalar_select %p102, %s12, 1
      %s104 = smul.addr %s103, 4
      %s105 = smul.addr %s104, 8
      %s106 = scalar_lea.vmem %s1, %s105
      %p107 = scmp.lt.s32.totalorder %s12, 1
      %s108 = scalar_select %p107, %s12, 1
      %s109 = smul.addr %s108, 4
      %s110 = smul.addr %s109, 8
      %s111 = scalar_lea.vmem %s0, %s110
      %p112 = scmp.lt.s32.totalorder %s12, 1
      %s113 = scalar_select %p112, %s12, 1
      %s114 = smul.addr %s113, 4
      %s115 = smul.addr %s114, 8
      %s116 = scalar_lea.vmem %s1, %s115
      %v117 = vld [vmem:[%s111] sm:$0xff]
      %v118 = vld [vmem:[%s111 + $0x8] sm:$0xff]
      %v119 = vld [vmem:[%s111 + $0x10] sm:$0xff]
      %v120 = vld [vmem:[%s111 + $0x18] sm:$0xff]
      %v121 = vadd.f32 %v117, %v118
      %v122 = vadd.f32 %v121, %v119
      %v123 = vadd.f32 %v122, %v120
      %124 = vadd.xlane.f32.xlu0 %v123
      %v125 = vpop.xlane.xlu0 %124
      %v126 = vrcp.pop 512.0
      %v127 = vmul.f32 512.0, %v126
      %v128 = vsub.f32 1.0, %v127
      %v129 = vmul.f32 %v126, %v128
      %v130 = vadd.f32 %v126, %v129
      %vm131 = vweird.f32 %v126
      %v132 = vsel %vm131, %v126, %v130
      %v133 = vmul.f32 %v125, %v132
      %v134 = vsub.f32 %v117, %v133
      %v135 = vsub.f32 %v118, %v133
      %v136 = vsub.f32 %v119, %v133
      %v137 = vsub.f32 %v120, %v133
      %v138 = vmul.f32 %v134, 0.003921569
      %v139 = vmul.f32 %v135, 0.003921569
      %v140 = vmul.f32 %v136, 0.003921569
      %v141 = vmul.f32 %v137, 0.003921569
      %142 = vst [vmem:[%s116] sm:$0xff] %v138
      %143 = vst [vmem:[%s116 + $0x8] sm:$0xff] %v139
      %144 = vst [vmem:[%s116 + $0x10] sm:$0xff] %v140
      %145 = vst [vmem:[%s116 + $0x18] sm:$0xff] %v141
      %p146 = scmp.lt.s32.totalorder %s12, 1
      %s147 = scalar_select %p146, %s12, 1
      %s148 = smul.addr %s147, 4
      %s149 = smul.addr %s148, 8
      %s150 = scalar_lea.vmem %s1, %s149
      // Predicated region
      $region25: #{flownet_er_forward.9} parent=23 // pred_check
        %p151 = pneg %p56
      $region26: #{flownet_er_forward.9} parent=23 // pred_check_branch
        %153 = sbr.rel (%p151) target = $region28
      $region27: #{flownet_er_forward.9} parent=23 // pred_region
        _
      $region28: #{flownet_er_forward.9} parent=23 // pred_fallthru
        _
    $region24: #{flownet_er_forward.9} parent=5 // pred_fallthru
      _
    %p154 = scmp.le.s32.totalorder 2, %s7
    // Predicated region
    $region29: #{flownet_er_forward.9} parent=5 // pred_check
      %p155 = pneg %p154
    $region30: #{flownet_er_forward.9} parent=5 // pred_check_branch
      %157 = sbr.rel (%p155) target = $region32
    $region31: #{flownet_er_forward.9} parent=5 // pred_region
      %s158 = ssub.s32 %s7, 2
      // Predicated region
      $region33: #{flownet_er_forward.9} parent=31 // pred_check
        %p159 = pneg %p62
      $region34: #{flownet_er_forward.9} parent=31 // pred_check_branch
        %161 = sbr.rel (%p159) target = $region36
      $region35: #{flownet_er_forward.9} parent=31 // pred_region
        %p162 = scmp.lt.s32.totalorder %s13, 1
        %s163 = scalar_select %p162, %s13, 1
        %s164 = smul.addr %s163, 4
        %s165 = smul.addr %s164, 8
        %s166 = scalar_lea.vmem %s1, %s165
      $region36: #{flownet_er_forward.9} parent=31 // pred_fallthru
        _
    $region32: #{flownet_er_forward.9} parent=5 // pred_fallthru
      _
  $region6: #{flownet_er_forward.9} parent=0 // loop_footer
    %s11 = sadd.s32 1, %s7
  $region7: #{flownet_er_forward.9} parent=0 // loop_footer_branch
    %6 = sbr.rel target = $region3
  $region8: #{flownet_er_forward.9} parent=0 // loop_exit
    _

// kernel: flownet_er_forward.10
$region0: #{flownet_er_forward.10}
  #allocation0 [shape = 'u32[]', space=smem, size = 0x4, offset = 0x4, fixed_abs, tag = 'smem constant byte address 0x4 - core index']
  #allocation1 [shape = 'u32[72,128]{1,0:T(1,128)}', space=vmem, size = 0x9000, scoped, tag = 'internal scratch']
  #allocation2 [shape = 'f32[128,128]{1,0:T(8,128)}', space=vmem, size = 0x10000, scoped, tag = 'scratch operand']
  %s0 = inlined_call_operand.vmem [shape: bf16[128,128], index: 0, kind: input, shape index: {}]
  %s1 = inlined_call_operand.vmem [shape: bf16[128,128], index: 1, kind: input, shape index: {}]
  %s2 = inlined_call_operand.vmem [shape: f32[1,128], index: 2, kind: input, shape index: {}]
  %s3 = inlined_call_operand.vmem [shape: bf16[128,128], index: 3, kind: output, shape index: {}]
  %s4 = sld [smem:[#allocation0]]
  $region30: #{flownet_er_forward.10} parent=0
    _
  %s6 = ssub.s32 1, %s4
  %s7 = scalar_select 0, %s6, %s4
  // Predicated region
  $region2: #{flownet_er_forward.10} parent=0 // pred_check
    _
  $region3: #{flownet_er_forward.10} parent=0 // pred_check_branch
    %9 = sbr.rel (0) target = $region5
  $region4: #{flownet_er_forward.10} parent=0 // pred_region
    _
  $region5: #{flownet_er_forward.10} parent=0 // pred_fallthru
    _
  // Predicated region
  $region6: #{flownet_er_forward.10} parent=0 // pred_check
    _
  $region7: #{flownet_er_forward.10} parent=0 // pred_check_branch
    %11 = sbr.rel (0) target = $region9
  $region8: #{flownet_er_forward.10} parent=0 // pred_region
    _
  $region9: #{flownet_er_forward.10} parent=0 // pred_fallthru
    _
  // Predicated region
  $region10: #{flownet_er_forward.10} parent=0 // pred_check
    _
  $region11: #{flownet_er_forward.10} parent=0 // pred_check_branch
    %13 = sbr.rel (0) target = $region13
  $region12: #{flownet_er_forward.10} parent=0 // pred_region
    _
  $region13: #{flownet_er_forward.10} parent=0 // pred_fallthru
    _
  %p14 = scmp.eq.s32.totalorder 0, 0
  // Predicated region
  $region14: #{flownet_er_forward.10} parent=0 // pred_check
    %p15 = pneg %p14
  $region15: #{flownet_er_forward.10} parent=0 // pred_check_branch
    %17 = sbr.rel (%p15) target = $region17
  $region16: #{flownet_er_forward.10} parent=0 // pred_region
    %18 = vst [vmem:[#allocation2] sm:$0xff] 0.0
    %19 = vst [vmem:[#allocation2 + $0x8] sm:$0xff] 0.0
    %20 = vst [vmem:[#allocation2 + $0x10] sm:$0xff] 0.0
    %21 = vst [vmem:[#allocation2 + $0x18] sm:$0xff] 0.0
    %22 = vst [vmem:[#allocation2 + $0x20] sm:$0xff] 0.0
    %23 = vst [vmem:[#allocation2 + $0x28] sm:$0xff] 0.0
    %24 = vst [vmem:[#allocation2 + $0x30] sm:$0xff] 0.0
    %25 = vst [vmem:[#allocation2 + $0x38] sm:$0xff] 0.0
    %26 = vst [vmem:[#allocation2 + $0x40] sm:$0xff] 0.0
    %27 = vst [vmem:[#allocation2 + $0x48] sm:$0xff] 0.0
    %28 = vst [vmem:[#allocation2 + $0x50] sm:$0xff] 0.0
    %29 = vst [vmem:[#allocation2 + $0x58] sm:$0xff] 0.0
    %30 = vst [vmem:[#allocation2 + $0x60] sm:$0xff] 0.0
    %31 = vst [vmem:[#allocation2 + $0x68] sm:$0xff] 0.0
    %32 = vst [vmem:[#allocation2 + $0x70] sm:$0xff] 0.0
    %33 = vst [vmem:[#allocation2 + $0x78] sm:$0xff] 0.0
  $region17: #{flownet_er_forward.10} parent=0 // pred_fallthru
    _
  %v34 = vld [vmem:[#allocation2] sm:$0xff]
  %v35 = vld [vmem:[#allocation2 + $0x8] sm:$0xff]
  %v36 = vld [vmem:[#allocation2 + $0x10] sm:$0xff]
  %v37 = vld [vmem:[#allocation2 + $0x18] sm:$0xff]
  %v38 = vld [vmem:[#allocation2 + $0x20] sm:$0xff]
  %v39 = vld [vmem:[#allocation2 + $0x28] sm:$0xff]
  %v40 = vld [vmem:[#allocation2 + $0x30] sm:$0xff]
  %v41 = vld [vmem:[#allocation2 + $0x38] sm:$0xff]
  %v42 = vld [vmem:[#allocation2 + $0x40] sm:$0xff]
  %v43 = vld [vmem:[#allocation2 + $0x48] sm:$0xff]
  %v44 = vld [vmem:[#allocation2 + $0x50] sm:$0xff]
  %v45 = vld [vmem:[#allocation2 + $0x58] sm:$0xff]
  %v46 = vld [vmem:[#allocation2 + $0x60] sm:$0xff]
  %v47 = vld [vmem:[#allocation2 + $0x68] sm:$0xff]
  %v48 = vld [vmem:[#allocation2 + $0x70] sm:$0xff]
  %v49 = vld [vmem:[#allocation2 + $0x78] sm:$0xff]
  %v50 = vld [vmem:[%s0] sm:$0xf]
  %v51 = vld [vmem:[%s0 + $0x4] sm:$0xf]
  %v52 = vld [vmem:[%s0 + $0x8] sm:$0xf]
  %v53 = vld [vmem:[%s0 + $0xc] sm:$0xf]
  %v54 = vld [vmem:[%s0 + $0x10] sm:$0xf]
  %v55 = vld [vmem:[%s0 + $0x14] sm:$0xf]
  %v56 = vld [vmem:[%s0 + $0x18] sm:$0xf]
  %v57 = vld [vmem:[%s0 + $0x1c] sm:$0xf]
  %v58 = vld [vmem:[%s0 + $0x20] sm:$0xf]
  %v59 = vld [vmem:[%s0 + $0x24] sm:$0xf]
  %v60 = vld [vmem:[%s0 + $0x28] sm:$0xf]
  %v61 = vld [vmem:[%s0 + $0x2c] sm:$0xf]
  %v62 = vld [vmem:[%s0 + $0x30] sm:$0xf]
  %v63 = vld [vmem:[%s0 + $0x34] sm:$0xf]
  %v64 = vld [vmem:[%s0 + $0x38] sm:$0xf]
  %v65 = vld [vmem:[%s0 + $0x3c] sm:$0xf]
  %v66 = vld [vmem:[%s1] sm:$0xf]
  %v67 = vld [vmem:[%s1 + $0x4] sm:$0xf]
  %v68 = vld [vmem:[%s1 + $0x8] sm:$0xf]
  %v69 = vld [vmem:[%s1 + $0xc] sm:$0xf]
  %v70 = vld [vmem:[%s1 + $0x10] sm:$0xf]
  %v71 = vld [vmem:[%s1 + $0x14] sm:$0xf]
  %v72 = vld [vmem:[%s1 + $0x18] sm:$0xf]
  %v73 = vld [vmem:[%s1 + $0x1c] sm:$0xf]
  %v74 = vld [vmem:[%s1 + $0x20] sm:$0xf]
  %v75 = vld [vmem:[%s1 + $0x24] sm:$0xf]
  %v76 = vld [vmem:[%s1 + $0x28] sm:$0xf]
  %v77 = vld [vmem:[%s1 + $0x2c] sm:$0xf]
  %v78 = vld [vmem:[%s1 + $0x30] sm:$0xf]
  %v79 = vld [vmem:[%s1 + $0x34] sm:$0xf]
  %v80 = vld [vmem:[%s1 + $0x38] sm:$0xf]
  %v81 = vld [vmem:[%s1 + $0x3c] sm:$0xf]
  %v98 = vunpack.c.l.b16 %v50
  %v99 = vunpack.c.l.b16 %v51
  %v100 = vunpack.c.l.b16 %v52
  %v101 = vunpack.c.l.b16 %v53
  %v102 = vunpack.c.l.b16 %v54
  %v103 = vunpack.c.l.b16 %v55
  %v104 = vunpack.c.l.b16 %v56
  %v105 = vunpack.c.l.b16 %v57
  %v106 = vunpack.c.l.b16 %v58
  %v107 = vunpack.c.l.b16 %v59
  %v108 = vunpack.c.l.b16 %v60
  %v109 = vunpack.c.l.b16 %v61
  %v110 = vunpack.c.l.b16 %v62
  %v111 = vunpack.c.l.b16 %v63
  %v112 = vunpack.c.l.b16 %v64
  %v113 = vunpack.c.l.b16 %v65
  %v114 = vpack.c.b16 %v99, %v98
  %v115 = vpack.c.b16 %v101, %v100
  %v116 = vpack.c.b16 %v103, %v102
  %v117 = vpack.c.b16 %v105, %v104
  %v118 = vpack.c.b16 %v107, %v106
  %v119 = vpack.c.b16 %v109, %v108
  %v120 = vpack.c.b16 %v111, %v110
  %v121 = vpack.c.b16 %v113, %v112
  %v146 = vunpack.c.l.b16 %v66
  %v147 = vunpack.c.l.b16 %v67
  %v148 = vunpack.c.l.b16 %v68
  %v149 = vunpack.c.l.b16 %v69
  %v150 = vunpack.c.l.b16 %v70
  %v151 = vunpack.c.l.b16 %v71
  %v152 = vunpack.c.l.b16 %v72
  %v153 = vunpack.c.l.b16 %v73
  %v154 = vunpack.c.l.b16 %v74
  %v155 = vunpack.c.l.b16 %v75
  %v156 = vunpack.c.l.b16 %v76
  %v157 = vunpack.c.l.b16 %v77
  %v158 = vunpack.c.l.b16 %v78
  %v159 = vunpack.c.l.b16 %v79
  %v160 = vunpack.c.l.b16 %v80
  %v161 = vunpack.c.l.b16 %v81
  %v162 = vpack.c.b16 %v147, %v146
  %v163 = vpack.c.b16 %v149, %v148
  %v164 = vpack.c.b16 %v151, %v150
  %v165 = vpack.c.b16 %v153, %v152
  %v166 = vpack.c.b16 %v155, %v154
  %v167 = vpack.c.b16 %v157, %v156
  %v168 = vpack.c.b16 %v159, %v158
  %v169 = vpack.c.b16 %v161, %v160
  %178 = vmatpush.bf16.msra.mxu0 %v169
  %179 = vmatpush.bf16.msra.mxu0 %v168
  %180 = vmatpush.bf16.msra.mxu0 %v167
  %181 = vmatpush.bf16.msra.mxu0 %v166
  %182 = vmatpush.bf16.msra.mxu0 %v165
  %183 = vmatpush.bf16.msra.mxu0 %v164
  %184 = vmatpush.bf16.msra.mxu0 %v163
  %185 = vmatpush.bf16.msra.mxu0 %v162
  %186 = vmatmul.bf16.gmra.mxu0 %v114
  %v187 = vpop.f32.mrf.mxu0
  %v188 = vadd.f32 0.0, %v187
  %v189 = vpop.f32.mrf.mxu0
  %v190 = vadd.f32 0.0, %v189
  %191 = vmatmul.bf16.gmra.mxu0 %v115
  %v192 = vpop.f32.mrf.mxu0
  %v193 = vadd.f32 0.0, %v192
  %v194 = vpop.f32.mrf.mxu0
  %v195 = vadd.f32 0.0, %v194
  %196 = vmatmul.bf16.gmra.mxu0 %v116
  %v197 = vpop.f32.mrf.mxu0
  %v198 = vadd.f32 0.0, %v197
  %v199 = vpop.f32.mrf.mxu0
  %v200 = vadd.f32 0.0, %v199
  %201 = vmatmul.bf16.gmra.mxu0 %v117
  %v202 = vpop.f32.mrf.mxu0
  %v203 = vadd.f32 0.0, %v202
  %v204 = vpop.f32.mrf.mxu0
  %v205 = vadd.f32 0.0, %v204
  %206 = vmatmul.bf16.gmra.mxu0 %v118
  %v207 = vpop.f32.mrf.mxu0
  %v208 = vadd.f32 0.0, %v207
  %v209 = vpop.f32.mrf.mxu0
  %v210 = vadd.f32 0.0, %v209
  %211 = vmatmul.bf16.gmra.mxu0 %v119
  %v212 = vpop.f32.mrf.mxu0
  %v213 = vadd.f32 0.0, %v212
  %v214 = vpop.f32.mrf.mxu0
  %v215 = vadd.f32 0.0, %v214
  %216 = vmatmul.bf16.gmra.mxu0 %v120
  %v217 = vpop.f32.mrf.mxu0
  %v218 = vadd.f32 0.0, %v217
  %v219 = vpop.f32.mrf.mxu0
  %v220 = vadd.f32 0.0, %v219
  %221 = vmatmul.bf16.gmra.mxu0 %v121
  %v222 = vpop.f32.mrf.mxu0
  %v223 = vadd.f32 0.0, %v222
  %v224 = vpop.f32.mrf.mxu0
  %v225 = vadd.f32 0.0, %v224
  %226 = vdwg.mxu0
  %v227 = vadd.f32 %v34, %v188
  %v228 = vadd.f32 %v35, %v190
  %v229 = vadd.f32 %v36, %v193
  %v230 = vadd.f32 %v37, %v195
  %v231 = vadd.f32 %v38, %v198
  %v232 = vadd.f32 %v39, %v200
  %v233 = vadd.f32 %v40, %v203
  %v234 = vadd.f32 %v41, %v205
  %v235 = vadd.f32 %v42, %v208
  %v236 = vadd.f32 %v43, %v210
  %v237 = vadd.f32 %v44, %v213
  %v238 = vadd.f32 %v45, %v215
  %v239 = vadd.f32 %v46, %v218
  %v240 = vadd.f32 %v47, %v220
  %v241 = vadd.f32 %v48, %v223
  %v242 = vadd.f32 %v49, %v225
  %243 = vst [vmem:[#allocation2] sm:$0xff] %v227
  %244 = vst [vmem:[#allocation2 + $0x8] sm:$0xff] %v228
  %245 = vst [vmem:[#allocation2 + $0x10] sm:$0xff] %v229
  %246 = vst [vmem:[#allocation2 + $0x18] sm:$0xff] %v230
  %247 = vst [vmem:[#allocation2 + $0x20] sm:$0xff] %v231
  %248 = vst [vmem:[#allocation2 + $0x28] sm:$0xff] %v232
  %249 = vst [vmem:[#allocation2 + $0x30] sm:$0xff] %v233
  %250 = vst [vmem:[#allocation2 + $0x38] sm:$0xff] %v234
  %251 = vst [vmem:[#allocation2 + $0x40] sm:$0xff] %v235
  %252 = vst [vmem:[#allocation2 + $0x48] sm:$0xff] %v236
  %253 = vst [vmem:[#allocation2 + $0x50] sm:$0xff] %v237
  %254 = vst [vmem:[#allocation2 + $0x58] sm:$0xff] %v238
  %255 = vst [vmem:[#allocation2 + $0x60] sm:$0xff] %v239
  %256 = vst [vmem:[#allocation2 + $0x68] sm:$0xff] %v240
  %257 = vst [vmem:[#allocation2 + $0x70] sm:$0xff] %v241
  %258 = vst [vmem:[#allocation2 + $0x78] sm:$0xff] %v242
  // Predicated region
  $region18: #{flownet_er_forward.10} parent=0 // pred_check
    %p259 = pneg %p14
  $region19: #{flownet_er_forward.10} parent=0 // pred_check_branch
    %261 = sbr.rel (%p259) target = $region21
  $region20: #{flownet_er_forward.10} parent=0 // pred_region
    %v262 = vld [vmem:[#allocation2] sm:$0xff]
    %v263 = vld [vmem:[#allocation2 + $0x8] sm:$0xff]
    %v264 = vld [vmem:[#allocation2 + $0x10] sm:$0xff]
    %v265 = vld [vmem:[#allocation2 + $0x18] sm:$0xff]
    %v266 = vld [vmem:[#allocation2 + $0x20] sm:$0xff]
    %v267 = vld [vmem:[#allocation2 + $0x28] sm:$0xff]
    %v268 = vld [vmem:[#allocation2 + $0x30] sm:$0xff]
    %v269 = vld [vmem:[#allocation2 + $0x38] sm:$0xff]
    %v270 = vld [vmem:[#allocation2 + $0x40] sm:$0xff]
    %v271 = vld [vmem:[#allocation2 + $0x48] sm:$0xff]
    %v272 = vld [vmem:[#allocation2 + $0x50] sm:$0xff]
    %v273 = vld [vmem:[#allocation2 + $0x58] sm:$0xff]
    %v274 = vld [vmem:[#allocation2 + $0x60] sm:$0xff]
    %v275 = vld [vmem:[#allocation2 + $0x68] sm:$0xff]
    %v276 = vld [vmem:[#allocation2 + $0x70] sm:$0xff]
    %v277 = vld [vmem:[#allocation2 + $0x78] sm:$0xff]
    %v278 = vld [vmem:[%s2] sm:$0x1]
    %v280 = vperm.slane %v278, 0
    %v282 = vadd.f32 %v262, %v280
    %v283 = vadd.f32 %v263, %v280
    %v284 = vadd.f32 %v264, %v280
    %v285 = vadd.f32 %v265, %v280
    %v286 = vadd.f32 %v266, %v280
    %v287 = vadd.f32 %v267, %v280
    %v288 = vadd.f32 %v268, %v280
    %v289 = vadd.f32 %v269, %v280
    %v290 = vadd.f32 %v270, %v280
    %v291 = vadd.f32 %v271, %v280
    %v292 = vadd.f32 %v272, %v280
    %v293 = vadd.f32 %v273, %v280
    %v294 = vadd.f32 %v274, %v280
    %v295 = vadd.f32 %v275, %v280
    %v296 = vadd.f32 %v276, %v280
    %v297 = vadd.f32 %v277, %v280
    %vm298 = vcmp.ge.f32.partialorder %v282, 0.0
    %vm299 = vcmp.ge.f32.partialorder %v283, 0.0
    %vm300 = vcmp.ge.f32.partialorder %v284, 0.0
    %vm301 = vcmp.ge.f32.partialorder %v285, 0.0
    %vm302 = vcmp.ge.f32.partialorder %v286, 0.0
    %vm303 = vcmp.ge.f32.partialorder %v287, 0.0
    %vm304 = vcmp.ge.f32.partialorder %v288, 0.0
    %vm305 = vcmp.ge.f32.partialorder %v289, 0.0
    %vm306 = vcmp.ge.f32.partialorder %v290, 0.0
    %vm307 = vcmp.ge.f32.partialorder %v291, 0.0
    %vm308 = vcmp.ge.f32.partialorder %v292, 0.0
    %vm309 = vcmp.ge.f32.partialorder %v293, 0.0
    %vm310 = vcmp.ge.f32.partialorder %v294, 0.0
    %vm311 = vcmp.ge.f32.partialorder %v295, 0.0
    %vm312 = vcmp.ge.f32.partialorder %v296, 0.0
    %vm313 = vcmp.ge.f32.partialorder %v297, 0.0
    %v314 = vmul.f32 %v282, 0.01
    %v315 = vmul.f32 %v283, 0.01
    %v316 = vmul.f32 %v284, 0.01
    %v317 = vmul.f32 %v285, 0.01
    %v318 = vmul.f32 %v286, 0.01
    %v319 = vmul.f32 %v287, 0.01
    %v320 = vmul.f32 %v288, 0.01
    %v321 = vmul.f32 %v289, 0.01
    %v322 = vmul.f32 %v290, 0.01
    %v323 = vmul.f32 %v291, 0.01
    %v324 = vmul.f32 %v292, 0.01
    %v325 = vmul.f32 %v293, 0.01
    %v326 = vmul.f32 %v294, 0.01
    %v327 = vmul.f32 %v295, 0.01
    %v328 = vmul.f32 %v296, 0.01
    %v329 = vmul.f32 %v297, 0.01
    %v330 = vsel %vm298, %v282, %v314
    %v331 = vsel %vm299, %v283, %v315
    %v332 = vsel %vm300, %v284, %v316
    %v333 = vsel %vm301, %v285, %v317
    %v334 = vsel %vm302, %v286, %v318
    %v335 = vsel %vm303, %v287, %v319
    %v336 = vsel %vm304, %v288, %v320
    %v337 = vsel %vm305, %v289, %v321
    %v338 = vsel %vm306, %v290, %v322
    %v339 = vsel %vm307, %v291, %v323
    %v340 = vsel %vm308, %v292, %v324
    %v341 = vsel %vm309, %v293, %v325
    %v342 = vsel %vm310, %v294, %v326
    %v343 = vsel %vm311, %v295, %v327
    %v344 = vsel %vm312, %v296, %v328
    %v345 = vsel %vm313, %v297, %v329
    %v346 = vpack.c.bf16 %v330, %v330
    %v347 = vpack.c.bf16 %v331, %v331
    %v348 = vpack.c.bf16 %v332, %v332
    %v349 = vpack.c.bf16 %v333, %v333
    %v350 = vpack.c.bf16 %v334, %v334
    %v351 = vpack.c.bf16 %v335, %v335
    %v352 = vpack.c.bf16 %v336, %v336
    %v353 = vpack.c.bf16 %v337, %v337
    %v354 = vpack.c.bf16 %v338, %v338
    %v355 = vpack.c.bf16 %v339, %v339
    %v356 = vpack.c.bf16 %v340, %v340
    %v357 = vpack.c.bf16 %v341, %v341
    %v358 = vpack.c.bf16 %v342, %v342
    %v359 = vpack.c.bf16 %v343, %v343
    %v360 = vpack.c.bf16 %v344, %v344
    %v361 = vpack.c.bf16 %v345, %v345
    %362 = vst [vmem:[%s3] sm:$0xf] %v346
    %363 = vst [vmem:[%s3 + $0x4] sm:$0xf] %v347
    %364 = vst [vmem:[%s3 + $0x8] sm:$0xf] %v348
    %365 = vst [vmem:[%s3 + $0xc] sm:$0xf] %v349
    %366 = vst [vmem:[%s3 + $0x10] sm:$0xf] %v350
    %367 = vst [vmem:[%s3 + $0x14] sm:$0xf] %v351
    %368 = vst [vmem:[%s3 + $0x18] sm:$0xf] %v352
    %369 = vst [vmem:[%s3 + $0x1c] sm:$0xf] %v353
    %370 = vst [vmem:[%s3 + $0x20] sm:$0xf] %v354
    %371 = vst [vmem:[%s3 + $0x24] sm:$0xf] %v355
    %372 = vst [vmem:[%s3 + $0x28] sm:$0xf] %v356
    %373 = vst [vmem:[%s3 + $0x2c] sm:$0xf] %v357
    %374 = vst [vmem:[%s3 + $0x30] sm:$0xf] %v358
    %375 = vst [vmem:[%s3 + $0x34] sm:$0xf] %v359
    %376 = vst [vmem:[%s3 + $0x38] sm:$0xf] %v360
    %377 = vst [vmem:[%s3 + $0x3c] sm:$0xf] %v361
  $region21: #{flownet_er_forward.10} parent=0 // pred_fallthru
    _
  // Predicated region
  $region22: #{flownet_er_forward.10} parent=0 // pred_check
    _
  $region23: #{flownet_er_forward.10} parent=0 // pred_check_branch
    %379 = sbr.rel (0) target = $region25
  $region24: #{flownet_er_forward.10} parent=0 // pred_region
    _
  $region25: #{flownet_er_forward.10} parent=0 // pred_fallthru
    _
  // Predicated region
  $region26: #{flownet_er_forward.10} parent=0 // pred_check
    _
  $region27: #{flownet_er_forward.10} parent=0 // pred_check_branch
    %381 = sbr.rel (0) target = $region29
  $region28: #{flownet_er_forward.10} parent=0 // pred_region
    _
  $region29: #{flownet_er_forward.10} parent=0 // pred_fallthru
    _

// kernel: flownet_er_forward.11
$region0: #{flownet_er_forward.11}
  #allocation0 [shape = 'u32[]', space=smem, size = 0x4, offset = 0x4, fixed_abs, tag = 'smem constant byte address 0x4 - core index']
  #allocation1 [shape = 'u32[72,128]{1,0:T(1,128)}', space=vmem, size = 0x9000, scoped, tag = 'internal scratch']
  #allocation2 [shape = 'f32[32,128]{1,0:T(8,128)}', space=vmem, size = 0x4000, scoped, tag = 'scratch operand']
  %s0 = inlined_call_operand.vmem [shape: bf16[32,640], index: 0, kind: input, shape index: {}]
  %s1 = inlined_call_operand.vmem [shape: bf16[640,128], index: 1, kind: input, shape index: {}]
  %s2 = inlined_call_operand.vmem [shape: f32[1,128], index: 2, kind: input, shape index: {}]
  %s3 = inlined_call_operand.vmem [shape: bf16[32,128], index: 3, kind: output, shape index: {}]
  %s4 = sld [smem:[#allocation0]]
  $region30: #{flownet_er_forward.11} parent=0
    _
  %s6 = ssub.s32 1, %s4
  %s7 = scalar_select 0, %s6, %s4
  // Predicated region
  $region2: #{flownet_er_forward.11} parent=0 // pred_check
    _
  $region3: #{flownet_er_forward.11} parent=0 // pred_check_branch
    %9 = sbr.rel (0) target = $region5
  $region4: #{flownet_er_forward.11} parent=0 // pred_region
    _
  $region5: #{flownet_er_forward.11} parent=0 // pred_fallthru
    _
  // Predicated region
  $region6: #{flownet_er_forward.11} parent=0 // pred_check
    _
  $region7: #{flownet_er_forward.11} parent=0 // pred_check_branch
    %11 = sbr.rel (0) target = $region9
  $region8: #{flownet_er_forward.11} parent=0 // pred_region
    _
  $region9: #{flownet_er_forward.11} parent=0 // pred_fallthru
    _
  // Predicated region
  $region10: #{flownet_er_forward.11} parent=0 // pred_check
    _
  $region11: #{flownet_er_forward.11} parent=0 // pred_check_branch
    %13 = sbr.rel (0) target = $region13
  $region12: #{flownet_er_forward.11} parent=0 // pred_region
    _
  $region13: #{flownet_er_forward.11} parent=0 // pred_fallthru
    _
  %p14 = scmp.eq.s32.totalorder 0, 0
  // Predicated region
  $region14: #{flownet_er_forward.11} parent=0 // pred_check
    %p15 = pneg %p14
  $region15: #{flownet_er_forward.11} parent=0 // pred_check_branch
    %17 = sbr.rel (%p15) target = $region17
  $region16: #{flownet_er_forward.11} parent=0 // pred_region
    %18 = vst [vmem:[#allocation2] sm:$0xff] 0.0
    %19 = vst [vmem:[#allocation2 + $0x8] sm:$0xff] 0.0
    %20 = vst [vmem:[#allocation2 + $0x10] sm:$0xff] 0.0
    %21 = vst [vmem:[#allocation2 + $0x18] sm:$0xff] 0.0
  $region17: #{flownet_er_forward.11} parent=0 // pred_fallthru
    _
  %v22 = vld [vmem:[#allocation2] sm:$0xff]
  %v23 = vld [vmem:[#allocation2 + $0x8] sm:$0xff]
  %v24 = vld [vmem:[#allocation2 + $0x10] sm:$0xff]
  %v25 = vld [vmem:[#allocation2 + $0x18] sm:$0xff]
  %v26 = vld [vmem:[%s0] sm:$0xff]
  %v27 = vld [vmem:[%s0 + $0x8] sm:$0xff]
  %v28 = vld [vmem:[%s0 + $0x10] sm:$0xf]
  %v29 = vld [vmem:[%s0 + $0x14] sm:$0xff]
  %v30 = vld [vmem:[%s0 + $0x1c] sm:$0xff]
  %v31 = vld [vmem:[%s0 + $0x24] sm:$0xf]
  %v32 = vld [vmem:[%s0 + $0x28] sm:$0xff]
  %v33 = vld [vmem:[%s0 + $0x30] sm:$0xff]
  %v34 = vld [vmem:[%s0 + $0x38] sm:$0xf]
  %v35 = vld [vmem:[%s0 + $0x3c] sm:$0xff]
  %v36 = vld [vmem:[%s0 + $0x44] sm:$0xff]
  %v37 = vld [vmem:[%s0 + $0x4c] sm:$0xf]
  %v38 = vld [vmem:[%s1] sm:$0xf]
  %v39 = vld [vmem:[%s1 + $0x4] sm:$0xf]
  %v40 = vld [vmem:[%s1 + $0x8] sm:$0xf]
  %v41 = vld [vmem:[%s1 + $0xc] sm:$0xf]
  %v42 = vld [vmem:[%s1 + $0x10] sm:$0xf]
  %v43 = vld [vmem:[%s1 + $0x14] sm:$0xf]
  %v44 = vld [vmem:[%s1 + $0x18] sm:$0xf]
  %v45 = vld [vmem:[%s1 + $0x1c] sm:$0xf]
  %v46 = vld [vmem:[%s1 + $0x20] sm:$0xf]
  %v47 = vld [vmem:[%s1 + $0x24] sm:$0xf]
  %v48 = vld [vmem:[%s1 + $0x28] sm:$0xf]
  %v49 = vld [vmem:[%s1 + $0x2c] sm:$0xf]
  %v50 = vld [vmem:[%s1 + $0x30] sm:$0xf]
  %v51 = vld [vmem:[%s1 + $0x34] sm:$0xf]
  %v52 = vld [vmem:[%s1 + $0x38] sm:$0xf]
  %v53 = vld [vmem:[%s1 + $0x3c] sm:$0xf]
  %v54 = vld [vmem:[%s1 + $0x40] sm:$0xf]
  %v55 = vld [vmem:[%s1 + $0x44] sm:$0xf]
  %v56 = vld [vmem:[%s1 + $0x48] sm:$0xf]
  %v57 = vld [vmem:[%s1 + $0x4c] sm:$0xf]
  %v58 = vld [vmem:[%s1 + $0x50] sm:$0xf]
  %v59 = vld [vmem:[%s1 + $0x54] sm:$0xf]
  %v60 = vld [vmem:[%s1 + $0x58] sm:$0xf]
  %v61 = vld [vmem:[%s1 + $0x5c] sm:$0xf]
  %v62 = vld [vmem:[%s1 + $0x60] sm:$0xf]
  %v63 = vld [vmem:[%s1 + $0x64] sm:$0xf]
  %v64 = vld [vmem:[%s1 + $0x68] sm:$0xf]
  %v65 = vld [vmem:[%s1 + $0x6c] sm:$0xf]
  %v66 = vld [vmem:[%s1 + $0x70] sm:$0xf]
  %v67 = vld [vmem:[%s1 + $0x74] sm:$0xf]
  %v68 = vld [vmem:[%s1 + $0x78] sm:$0xf]
  %v69 = vld [vmem:[%s1 + $0x7c] sm:$0xf]
  %v70 = vld [vmem:[%s1 + $0x80] sm:$0xf]
  %v71 = vld [vmem:[%s1 + $0x84] sm:$0xf]
  %v72 = vld [vmem:[%s1 + $0x88] sm:$0xf]
  %v73 = vld [vmem:[%s1 + $0x8c] sm:$0xf]
  %v74 = vld [vmem:[%s1 + $0x90] sm:$0xf]
  %v75 = vld [vmem:[%s1 + $0x94] sm:$0xf]
  %v76 = vld [vmem:[%s1 + $0x98] sm:$0xf]
  %v77 = vld [vmem:[%s1 + $0x9c] sm:$0xf]
  %v78 = vld [vmem:[%s1 + $0xa0] sm:$0xf]
  %v79 = vld [vmem:[%s1 + $0xa4] sm:$0xf]
  %v80 = vld [vmem:[%s1 + $0xa8] sm:$0xf]
  %v81 = vld [vmem:[%s1 + $0xac] sm:$0xf]
  %v82 = vld [vmem:[%s1 + $0xb0] sm:$0xf]
  %v83 = vld [vmem:[%s1 + $0xb4] sm:$0xf]
  %v84 = vld [vmem:[%s1 + $0xb8] sm:$0xf]
  %v85 = vld [vmem:[%s1 + $0xbc] sm:$0xf]
  %v86 = vld [vmem:[%s1 + $0xc0] sm:$0xf]
  %v87 = vld [vmem:[%s1 + $0xc4] sm:$0xf]
  %v88 = vld [vmem:[%s1 + $0xc8] sm:$0xf]
  %v89 = vld [vmem:[%s1 + $0xcc] sm:$0xf]
  %v90 = vld [vmem:[%s1 + $0xd0] sm:$0xf]
  %v91 = vld [vmem:[%s1 + $0xd4] sm:$0xf]
  %v92 = vld [vmem:[%s1 + $0xd8] sm:$0xf]
  %v93 = vld [vmem:[%s1 + $0xdc] sm:$0xf]
  %v94 = vld [vmem:[%s1 + $0xe0] sm:$0xf]
  %v95 = vld [vmem:[%s1 + $0xe4] sm:$0xf]
  %v96 = vld [vmem:[%s1 + $0xe8] sm:$0xf]
  %v97 = vld [vmem:[%s1 + $0xec] sm:$0xf]
  %v98 = vld [vmem:[%s1 + $0xf0] sm:$0xf]
  %v99 = vld [vmem:[%s1 + $0xf4] sm:$0xf]
  %v100 = vld [vmem:[%s1 + $0xf8] sm:$0xf]
  %v101 = vld [vmem:[%s1 + $0xfc] sm:$0xf]
  %v102 = vld [vmem:[%s1 + $0x100] sm:$0xf]
  %v103 = vld [vmem:[%s1 + $0x104] sm:$0xf]
  %v104 = vld [vmem:[%s1 + $0x108] sm:$0xf]
  %v105 = vld [vmem:[%s1 + $0x10c] sm:$0xf]
  %v106 = vld [vmem:[%s1 + $0x110] sm:$0xf]
  %v107 = vld [vmem:[%s1 + $0x114] sm:$0xf]
  %v108 = vld [vmem:[%s1 + $0x118] sm:$0xf]
  %v109 = vld [vmem:[%s1 + $0x11c] sm:$0xf]
  %v110 = vld [vmem:[%s1 + $0x120] sm:$0xf]
  %v111 = vld [vmem:[%s1 + $0x124] sm:$0xf]
  %v112 = vld [vmem:[%s1 + $0x128] sm:$0xf]
  %v113 = vld [vmem:[%s1 + $0x12c] sm:$0xf]
  %v114 = vld [vmem:[%s1 + $0x130] sm:$0xf]
  %v115 = vld [vmem:[%s1 + $0x134] sm:$0xf]
  %v116 = vld [vmem:[%s1 + $0x138] sm:$0xf]
  %v117 = vld [vmem:[%s1 + $0x13c] sm:$0xf]
  %v130 = vunpack.c.l.b16 %v26
  %v131 = vunpack.c.h.b16 %v26
  %v132 = vunpack.c.l.b16 %v27
  %v133 = vunpack.c.h.b16 %v27
  %v134 = vunpack.c.l.b16 %v28
  %v135 = vunpack.c.l.b16 %v29
  %v136 = vunpack.c.h.b16 %v29
  %v137 = vunpack.c.l.b16 %v30
  %v138 = vunpack.c.h.b16 %v30
  %v139 = vunpack.c.l.b16 %v31
  %v140 = vunpack.c.l.b16 %v32
  %v141 = vunpack.c.h.b16 %v32
  %v142 = vunpack.c.l.b16 %v33
  %v143 = vunpack.c.h.b16 %v33
  %v144 = vunpack.c.l.b16 %v34
  %v145 = vunpack.c.l.b16 %v35
  %v146 = vunpack.c.h.b16 %v35
  %v147 = vunpack.c.l.b16 %v36
  %v148 = vunpack.c.h.b16 %v36
  %v149 = vunpack.c.l.b16 %v37
  %v150 = vpack.c.b16 %v135, %v130
  %v151 = vpack.c.b16 %v136, %v131
  %v152 = vpack.c.b16 %v137, %v132
  %v153 = vpack.c.b16 %v138, %v133
  %v154 = vpack.c.b16 %v139, %v134
  %v155 = vpack.c.b16 %v145, %v140
  %v156 = vpack.c.b16 %v146, %v141
  %v157 = vpack.c.b16 %v147, %v142
  %v158 = vpack.c.b16 %v148, %v143
  %v159 = vpack.c.b16 %v149, %v144
  %v250 = vunpack.c.l.b16 %v38
  %v251 = vunpack.c.l.b16 %v39
  %v252 = vunpack.c.l.b16 %v40
  %v253 = vunpack.c.l.b16 %v41
  %v254 = vunpack.c.l.b16 %v42
  %v255 = vunpack.c.l.b16 %v43
  %v256 = vunpack.c.l.b16 %v44
  %v257 = vunpack.c.l.b16 %v45
  %v258 = vunpack.c.l.b16 %v46
  %v259 = vunpack.c.l.b16 %v47
  %v260 = vunpack.c.l.b16 %v48
  %v261 = vunpack.c.l.b16 %v49
  %v262 = vunpack.c.l.b16 %v50
  %v263 = vunpack.c.l.b16 %v51
  %v264 = vunpack.c.l.b16 %v52
  %v265 = vunpack.c.l.b16 %v53
  %v266 = vunpack.c.l.b16 %v54
  %v267 = vunpack.c.l.b16 %v55
  %v268 = vunpack.c.l.b16 %v56
  %v269 = vunpack.c.l.b16 %v57
  %v270 = vunpack.c.l.b16 %v58
  %v271 = vunpack.c.l.b16 %v59
  %v272 = vunpack.c.l.b16 %v60
  %v273 = vunpack.c.l.b16 %v61
  %v274 = vunpack.c.l.b16 %v62
  %v275 = vunpack.c.l.b16 %v63
  %v276 = vunpack.c.l.b16 %v64
  %v277 = vunpack.c.l.b16 %v65
  %v278 = vunpack.c.l.b16 %v66
  %v279 = vunpack.c.l.b16 %v67
  %v280 = vunpack.c.l.b16 %v68
  %v281 = vunpack.c.l.b16 %v69
  %v282 = vunpack.c.l.b16 %v70
  %v283 = vunpack.c.l.b16 %v71
  %v284 = vunpack.c.l.b16 %v72
  %v285 = vunpack.c.l.b16 %v73
  %v286 = vunpack.c.l.b16 %v74
  %v287 = vunpack.c.l.b16 %v75
  %v288 = vunpack.c.l.b16 %v76
  %v289 = vunpack.c.l.b16 %v77
  %v290 = vunpack.c.l.b16 %v78
  %v291 = vunpack.c.l.b16 %v79
  %v292 = vunpack.c.l.b16 %v80
  %v293 = vunpack.c.l.b16 %v81
  %v294 = vunpack.c.l.b16 %v82
  %v295 = vunpack.c.l.b16 %v83
  %v296 = vunpack.c.l.b16 %v84
  %v297 = vunpack.c.l.b16 %v85
  %v298 = vunpack.c.l.b16 %v86
  %v299 = vunpack.c.l.b16 %v87
  %v300 = vunpack.c.l.b16 %v88
  %v301 = vunpack.c.l.b16 %v89
  %v302 = vunpack.c.l.b16 %v90
  %v303 = vunpack.c.l.b16 %v91
  %v304 = vunpack.c.l.b16 %v92
  %v305 = vunpack.c.l.b16 %v93
  %v306 = vunpack.c.l.b16 %v94
  %v307 = vunpack.c.l.b16 %v95
  %v308 = vunpack.c.l.b16 %v96
  %v309 = vunpack.c.l.b16 %v97
  %v310 = vunpack.c.l.b16 %v98
  %v311 = vunpack.c.l.b16 %v99
  %v312 = vunpack.c.l.b16 %v100
  %v313 = vunpack.c.l.b16 %v101
  %v314 = vunpack.c.l.b16 %v102
  %v315 = vunpack.c.l.b16 %v103
  %v316 = vunpack.c.l.b16 %v104
  %v317 = vunpack.c.l.b16 %v105
  %v318 = vunpack.c.l.b16 %v106
  %v319 = vunpack.c.l.b16 %v107
  %v320 = vunpack.c.l.b16 %v108
  %v321 = vunpack.c.l.b16 %v109
  %v322 = vunpack.c.l.b16 %v110
  %v323 = vunpack.c.l.b16 %v111
  %v324 = vunpack.c.l.b16 %v112
  %v325 = vunpack.c.l.b16 %v113
  %v326 = vunpack.c.l.b16 %v114
  %v327 = vunpack.c.l.b16 %v115
  %v328 = vunpack.c.l.b16 %v116
  %v329 = vunpack.c.l.b16 %v117
  %v330 = vpack.c.b16 %v251, %v250
  %v331 = vpack.c.b16 %v253, %v252
  %v332 = vpack.c.b16 %v255, %v254
  %v333 = vpack.c.b16 %v257, %v256
  %v334 = vpack.c.b16 %v259, %v258
  %v335 = vpack.c.b16 %v261, %v260
  %v336 = vpack.c.b16 %v263, %v262
  %v337 = vpack.c.b16 %v265, %v264
  %v338 = vpack.c.b16 %v267, %v266
  %v339 = vpack.c.b16 %v269, %v268
  %v340 = vpack.c.b16 %v271, %v270
  %v341 = vpack.c.b16 %v273, %v272
  %v342 = vpack.c.b16 %v275, %v274
  %v343 = vpack.c.b16 %v277, %v276
  %v344 = vpack.c.b16 %v279, %v278
  %v345 = vpack.c.b16 %v281, %v280
  %v346 = vpack.c.b16 %v283, %v282
  %v347 = vpack.c.b16 %v285, %v284
  %v348 = vpack.c.b16 %v287, %v286
  %v349 = vpack.c.b16 %v289, %v288
  %v350 = vpack.c.b16 %v291, %v290
  %v351 = vpack.c.b16 %v293, %v292
  %v352 = vpack.c.b16 %v295, %v294
  %v353 = vpack.c.b16 %v297, %v296
  %v354 = vpack.c.b16 %v299, %v298
  %v355 = vpack.c.b16 %v301, %v300
  %v356 = vpack.c.b16 %v303, %v302
  %v357 = vpack.c.b16 %v305, %v304
  %v358 = vpack.c.b16 %v307, %v306
  %v359 = vpack.c.b16 %v309, %v308
  %v360 = vpack.c.b16 %v311, %v310
  %v361 = vpack.c.b16 %v313, %v312
  %v362 = vpack.c.b16 %v315, %v314
  %v363 = vpack.c.b16 %v317, %v316
  %v364 = vpack.c.b16 %v319, %v318
  %v365 = vpack.c.b16 %v321, %v320
  %v366 = vpack.c.b16 %v323, %v322
  %v367 = vpack.c.b16 %v325, %v324
  %v368 = vpack.c.b16 %v327, %v326
  %v369 = vpack.c.b16 %v329, %v328
  %410 = vmatpush.bf16.msra.mxu0 %v337
  %411 = vmatpush.bf16.msra.mxu0 %v336
  %412 = vmatpush.bf16.msra.mxu0 %v335
  %413 = vmatpush.bf16.msra.mxu0 %v334
  %414 = vmatpush.bf16.msra.mxu0 %v333
  %415 = vmatpush.bf16.msra.mxu0 %v332
  %416 = vmatpush.bf16.msra.mxu0 %v331
  %417 = vmatpush.bf16.msra.mxu0 %v330
  %418 = vmatmul.bf16.gmra.mxu0 %v150
  %v419 = vpop.f32.mrf.mxu0
  %v420 = vadd.f32 0.0, %v419
  %v421 = vpop.f32.mrf.mxu0
  %v422 = vadd.f32 0.0, %v421
  %423 = vmatmul.bf16.gmra.mxu0 %v155
  %v424 = vpop.f32.mrf.mxu0
  %v425 = vadd.f32 0.0, %v424
  %v426 = vpop.f32.mrf.mxu0
  %v427 = vadd.f32 0.0, %v426
  %428 = vdwg.mxu0
  %429 = vmatpush.bf16.msra.mxu0 %v345
  %430 = vmatpush.bf16.msra.mxu0 %v344
  %431 = vmatpush.bf16.msra.mxu0 %v343
  %432 = vmatpush.bf16.msra.mxu0 %v342
  %433 = vmatpush.bf16.msra.mxu0 %v341
  %434 = vmatpush.bf16.msra.mxu0 %v340
  %435 = vmatpush.bf16.msra.mxu0 %v339
  %436 = vmatpush.bf16.msra.mxu0 %v338
  %437 = vmatmul.bf16.gmra.mxu0 %v151
  %v438 = vpop.f32.mrf.mxu0
  %v439 = vadd.f32 %v420, %v438
  %v440 = vpop.f32.mrf.mxu0
  %v441 = vadd.f32 %v422, %v440
  %442 = vmatmul.bf16.gmra.mxu0 %v156
  %v443 = vpop.f32.mrf.mxu0
  %v444 = vadd.f32 %v425, %v443
  %v445 = vpop.f32.mrf.mxu0
  %v446 = vadd.f32 %v427, %v445
  %447 = vdwg.mxu0
  %448 = vmatpush.bf16.msra.mxu0 %v353
  %449 = vmatpush.bf16.msra.mxu0 %v352
  %450 = vmatpush.bf16.msra.mxu0 %v351
  %451 = vmatpush.bf16.msra.mxu0 %v350
  %452 = vmatpush.bf16.msra.mxu0 %v349
  %453 = vmatpush.bf16.msra.mxu0 %v348
  %454 = vmatpush.bf16.msra.mxu0 %v347
  %455 = vmatpush.bf16.msra.mxu0 %v346
  %456 = vmatmul.bf16.gmra.mxu0 %v152
  %v457 = vpop.f32.mrf.mxu0
  %v458 = vadd.f32 %v439, %v457
  %v459 = vpop.f32.mrf.mxu0
  %v460 = vadd.f32 %v441, %v459
  %461 = vmatmul.bf16.gmra.mxu0 %v157
  %v462 = vpop.f32.mrf.mxu0
  %v463 = vadd.f32 %v444, %v462
  %v464 = vpop.f32.mrf.mxu0
  %v465 = vadd.f32 %v446, %v464
  %466 = vdwg.mxu0
  %467 = vmatpush.bf16.msra.mxu0 %v361
  %468 = vmatpush.bf16.msra.mxu0 %v360
  %469 = vmatpush.bf16.msra.mxu0 %v359
  %470 = vmatpush.bf16.msra.mxu0 %v358
  %471 = vmatpush.bf16.msra.mxu0 %v357
  %472 = vmatpush.bf16.msra.mxu0 %v356
  %473 = vmatpush.bf16.msra.mxu0 %v355
  %474 = vmatpush.bf16.msra.mxu0 %v354
  %475 = vmatmul.bf16.gmra.mxu0 %v153
  %v476 = vpop.f32.mrf.mxu0
  %v477 = vadd.f32 %v458, %v476
  %v478 = vpop.f32.mrf.mxu0
  %v479 = vadd.f32 %v460, %v478
  %480 = vmatmul.bf16.gmra.mxu0 %v158
  %v481 = vpop.f32.mrf.mxu0
  %v482 = vadd.f32 %v463, %v481
  %v483 = vpop.f32.mrf.mxu0
  %v484 = vadd.f32 %v465, %v483
  %485 = vdwg.mxu0
  %486 = vmatpush.bf16.msra.mxu0 %v369
  %487 = vmatpush.bf16.msra.mxu0 %v368
  %488 = vmatpush.bf16.msra.mxu0 %v367
  %489 = vmatpush.bf16.msra.mxu0 %v366
  %490 = vmatpush.bf16.msra.mxu0 %v365
  %491 = vmatpush.bf16.msra.mxu0 %v364
  %492 = vmatpush.bf16.msra.mxu0 %v363
  %493 = vmatpush.bf16.msra.mxu0 %v362
  %494 = vmatmul.bf16.gmra.mxu0 %v154
  %v495 = vpop.f32.mrf.mxu0
  %v496 = vadd.f32 %v477, %v495
  %v497 = vpop.f32.mrf.mxu0
  %v498 = vadd.f32 %v479, %v497
  %499 = vmatmul.bf16.gmra.mxu0 %v159
  %v500 = vpop.f32.mrf.mxu0
  %v501 = vadd.f32 %v482, %v500
  %v502 = vpop.f32.mrf.mxu0
  %v503 = vadd.f32 %v484, %v502
  %504 = vdwg.mxu0
  %v505 = vadd.f32 %v22, %v496
  %v506 = vadd.f32 %v23, %v498
  %v507 = vadd.f32 %v24, %v501
  %v508 = vadd.f32 %v25, %v503
  %509 = vst [vmem:[#allocation2] sm:$0xff] %v505
  %510 = vst [vmem:[#allocation2 + $0x8] sm:$0xff] %v506
  %511 = vst [vmem:[#allocation2 + $0x10] sm:$0xff] %v507
  %512 = vst [vmem:[#allocation2 + $0x18] sm:$0xff] %v508
  // Predicated region
  $region18: #{flownet_er_forward.11} parent=0 // pred_check
    %p513 = pneg %p14
  $region19: #{flownet_er_forward.11} parent=0 // pred_check_branch
    %515 = sbr.rel (%p513) target = $region21
  $region20: #{flownet_er_forward.11} parent=0 // pred_region
    %v516 = vld [vmem:[#allocation2] sm:$0xff]
    %v517 = vld [vmem:[#allocation2 + $0x8] sm:$0xff]
    %v518 = vld [vmem:[#allocation2 + $0x10] sm:$0xff]
    %v519 = vld [vmem:[#allocation2 + $0x18] sm:$0xff]
    %v520 = vld [vmem:[%s2] sm:$0x1]
    %v522 = vperm.slane %v520, 0
    %v524 = vadd.f32 %v516, %v522
    %v525 = vadd.f32 %v517, %v522
    %v526 = vadd.f32 %v518, %v522
    %v527 = vadd.f32 %v519, %v522
    %vm528 = vcmp.ge.f32.partialorder %v524, 0.0
    %vm529 = vcmp.ge.f32.partialorder %v525, 0.0
    %vm530 = vcmp.ge.f32.partialorder %v526, 0.0
    %vm531 = vcmp.ge.f32.partialorder %v527, 0.0
    %v532 = vmul.f32 %v524, 0.01
    %v533 = vmul.f32 %v525, 0.01
    %v534 = vmul.f32 %v526, 0.01
    %v535 = vmul.f32 %v527, 0.01
    %v536 = vsel %vm528, %v524, %v532
    %v537 = vsel %vm529, %v525, %v533
    %v538 = vsel %vm530, %v526, %v534
    %v539 = vsel %vm531, %v527, %v535
    %v540 = vpack.c.bf16 %v536, %v536
    %v541 = vpack.c.bf16 %v537, %v537
    %v542 = vpack.c.bf16 %v538, %v538
    %v543 = vpack.c.bf16 %v539, %v539
    %544 = vst [vmem:[%s3] sm:$0xf] %v540
    %545 = vst [vmem:[%s3 + $0x4] sm:$0xf] %v541
    %546 = vst [vmem:[%s3 + $0x8] sm:$0xf] %v542
    %547 = vst [vmem:[%s3 + $0xc] sm:$0xf] %v543
  $region21: #{flownet_er_forward.11} parent=0 // pred_fallthru
    _
  // Predicated region
  $region22: #{flownet_er_forward.11} parent=0 // pred_check
    _
  $region23: #{flownet_er_forward.11} parent=0 // pred_check_branch
    %549 = sbr.rel (0) target = $region25
  $region24: #{flownet_er_forward.11} parent=0 // pred_region
    _
  $region25: #{flownet_er_forward.11} parent=0 // pred_fallthru
    _
  // Predicated region
  $region26: #{flownet_er_forward.11} parent=0 // pred_check
    _
  $region27: #{flownet_er_forward.11} parent=0 // pred_check_branch
    %551 = sbr.rel (0) target = $region29
  $region28: #{flownet_er_forward.11} parent=0 // pred_region
    _
  $region29: #{flownet_er_forward.11} parent=0 // pred_fallthru
    _

// kernel: flownet_er_forward.12
$region0: #{flownet_er_forward.12}
  #allocation0 [shape = 'u32[]', space=smem, size = 0x4, offset = 0x4, fixed_abs, tag = 'smem constant byte address 0x4 - core index']
  #allocation1 [shape = 'u32[72,128]{1,0:T(1,128)}', space=vmem, size = 0x9000, scoped, tag = 'internal scratch']
  #allocation2 [shape = 'f32[16,256]{1,0:T(8,128)}', space=vmem, size = 0x4000, scoped, tag = 'scratch operand']
  %s0 = inlined_call_operand.vmem [shape: bf16[16,1152], index: 0, kind: input, shape index: {}]
  %s1 = inlined_call_operand.vmem [shape: bf16[1152,256], index: 1, kind: input, shape index: {}]
  %s2 = inlined_call_operand.vmem [shape: f32[1,256], index: 2, kind: input, shape index: {}]
  %s3 = inlined_call_operand.vmem [shape: bf16[16,256], index: 3, kind: output, shape index: {}]
  %s4 = sld [smem:[#allocation0]]
  $region30: #{flownet_er_forward.12} parent=0
    _
  %s6 = ssub.s32 1, %s4
  %s7 = scalar_select 0, %s6, %s4
  // Predicated region
  $region2: #{flownet_er_forward.12} parent=0 // pred_check
    _
  $region3: #{flownet_er_forward.12} parent=0 // pred_check_branch
    %9 = sbr.rel (0) target = $region5
  $region4: #{flownet_er_forward.12} parent=0 // pred_region
    _
  $region5: #{flownet_er_forward.12} parent=0 // pred_fallthru
    _
  // Predicated region
  $region6: #{flownet_er_forward.12} parent=0 // pred_check
    _
  $region7: #{flownet_er_forward.12} parent=0 // pred_check_branch
    %11 = sbr.rel (0) target = $region9
  $region8: #{flownet_er_forward.12} parent=0 // pred_region
    _
  $region9: #{flownet_er_forward.12} parent=0 // pred_fallthru
    _
  // Predicated region
  $region10: #{flownet_er_forward.12} parent=0 // pred_check
    _
  $region11: #{flownet_er_forward.12} parent=0 // pred_check_branch
    %13 = sbr.rel (0) target = $region13
  $region12: #{flownet_er_forward.12} parent=0 // pred_region
    _
  $region13: #{flownet_er_forward.12} parent=0 // pred_fallthru
    _
  %p14 = scmp.eq.s32.totalorder 0, 0
  // Predicated region
  $region14: #{flownet_er_forward.12} parent=0 // pred_check
    %p15 = pneg %p14
  $region15: #{flownet_er_forward.12} parent=0 // pred_check_branch
    %17 = sbr.rel (%p15) target = $region17
  $region16: #{flownet_er_forward.12} parent=0 // pred_region
    %18 = vst [vmem:[#allocation2] sm:$0xff] 0.0
    %19 = vst [vmem:[#allocation2 + $0x8] sm:$0xff] 0.0
    %20 = vst [vmem:[#allocation2 + $0x10] sm:$0xff] 0.0
    %21 = vst [vmem:[#allocation2 + $0x18] sm:$0xff] 0.0
  $region17: #{flownet_er_forward.12} parent=0 // pred_fallthru
    _
  %v22 = vld [vmem:[#allocation2] sm:$0xff]
  %v23 = vld [vmem:[#allocation2 + $0x8] sm:$0xff]
  %v24 = vld [vmem:[#allocation2 + $0x10] sm:$0xff]
  %v25 = vld [vmem:[#allocation2 + $0x18] sm:$0xff]
  %v26 = vld [vmem:[%s0] sm:$0xff]
  %v27 = vld [vmem:[%s0 + $0x8] sm:$0xff]
  %v28 = vld [vmem:[%s0 + $0x10] sm:$0xff]
  %v29 = vld [vmem:[%s0 + $0x18] sm:$0xff]
  %v30 = vld [vmem:[%s0 + $0x20] sm:$0xf]
  %v31 = vld [vmem:[%s0 + $0x24] sm:$0xff]
  %v32 = vld [vmem:[%s0 + $0x2c] sm:$0xff]
  %v33 = vld [vmem:[%s0 + $0x34] sm:$0xff]
  %v34 = vld [vmem:[%s0 + $0x3c] sm:$0xff]
  %v35 = vld [vmem:[%s0 + $0x44] sm:$0xf]
  %v36 = vld [vmem:[%s1] sm:$0xff]
  %v37 = vld [vmem:[%s1 + $0x8] sm:$0xff]
  %v38 = vld [vmem:[%s1 + $0x10] sm:$0xff]
  %v39 = vld [vmem:[%s1 + $0x18] sm:$0xff]
  %v40 = vld [vmem:[%s1 + $0x20] sm:$0xff]
  %v41 = vld [vmem:[%s1 + $0x28] sm:$0xff]
  %v42 = vld [vmem:[%s1 + $0x30] sm:$0xff]
  %v43 = vld [vmem:[%s1 + $0x38] sm:$0xff]
  %v44 = vld [vmem:[%s1 + $0x40] sm:$0xff]
  %v45 = vld [vmem:[%s1 + $0x48] sm:$0xff]
  %v46 = vld [vmem:[%s1 + $0x50] sm:$0xff]
  %v47 = vld [vmem:[%s1 + $0x58] sm:$0xff]
  %v48 = vld [vmem:[%s1 + $0x60] sm:$0xff]
  %v49 = vld [vmem:[%s1 + $0x68] sm:$0xff]
  %v50 = vld [vmem:[%s1 + $0x70] sm:$0xff]
  %v51 = vld [vmem:[%s1 + $0x78] sm:$0xff]
  %v52 = vld [vmem:[%s1 + $0x80] sm:$0xff]
  %v53 = vld [vmem:[%s1 + $0x88] sm:$0xff]
  %v54 = vld [vmem:[%s1 + $0x90] sm:$0xff]
  %v55 = vld [vmem:[%s1 + $0x98] sm:$0xff]
  %v56 = vld [vmem:[%s1 + $0xa0] sm:$0xff]
  %v57 = vld [vmem:[%s1 + $0xa8] sm:$0xff]
  %v58 = vld [vmem:[%s1 + $0xb0] sm:$0xff]
  %v59 = vld [vmem:[%s1 + $0xb8] sm:$0xff]
  %v60 = vld [vmem:[%s1 + $0xc0] sm:$0xff]
  %v61 = vld [vmem:[%s1 + $0xc8] sm:$0xff]
  %v62 = vld [vmem:[%s1 + $0xd0] sm:$0xff]
  %v63 = vld [vmem:[%s1 + $0xd8] sm:$0xff]
  %v64 = vld [vmem:[%s1 + $0xe0] sm:$0xff]
  %v65 = vld [vmem:[%s1 + $0xe8] sm:$0xff]
  %v66 = vld [vmem:[%s1 + $0xf0] sm:$0xff]
  %v67 = vld [vmem:[%s1 + $0xf8] sm:$0xff]
  %v68 = vld [vmem:[%s1 + $0x100] sm:$0xff]
  %v69 = vld [vmem:[%s1 + $0x108] sm:$0xff]
  %v70 = vld [vmem:[%s1 + $0x110] sm:$0xff]
  %v71 = vld [vmem:[%s1 + $0x118] sm:$0xff]
  %v72 = vld [vmem:[%s1 + $0x120] sm:$0xff]
  %v73 = vld [vmem:[%s1 + $0x128] sm:$0xff]
  %v74 = vld [vmem:[%s1 + $0x130] sm:$0xff]
  %v75 = vld [vmem:[%s1 + $0x138] sm:$0xff]
  %v76 = vld [vmem:[%s1 + $0x140] sm:$0xff]
  %v77 = vld [vmem:[%s1 + $0x148] sm:$0xff]
  %v78 = vld [vmem:[%s1 + $0x150] sm:$0xff]
  %v79 = vld [vmem:[%s1 + $0x158] sm:$0xff]
  %v80 = vld [vmem:[%s1 + $0x160] sm:$0xff]
  %v81 = vld [vmem:[%s1 + $0x168] sm:$0xff]
  %v82 = vld [vmem:[%s1 + $0x170] sm:$0xff]
  %v83 = vld [vmem:[%s1 + $0x178] sm:$0xff]
  %v84 = vld [vmem:[%s1 + $0x180] sm:$0xff]
  %v85 = vld [vmem:[%s1 + $0x188] sm:$0xff]
  %v86 = vld [vmem:[%s1 + $0x190] sm:$0xff]
  %v87 = vld [vmem:[%s1 + $0x198] sm:$0xff]
  %v88 = vld [vmem:[%s1 + $0x1a0] sm:$0xff]
  %v89 = vld [vmem:[%s1 + $0x1a8] sm:$0xff]
  %v90 = vld [vmem:[%s1 + $0x1b0] sm:$0xff]
  %v91 = vld [vmem:[%s1 + $0x1b8] sm:$0xff]
  %v92 = vld [vmem:[%s1 + $0x1c0] sm:$0xff]
  %v93 = vld [vmem:[%s1 + $0x1c8] sm:$0xff]
  %v94 = vld [vmem:[%s1 + $0x1d0] sm:$0xff]
  %v95 = vld [vmem:[%s1 + $0x1d8] sm:$0xff]
  %v96 = vld [vmem:[%s1 + $0x1e0] sm:$0xff]
  %v97 = vld [vmem:[%s1 + $0x1e8] sm:$0xff]
  %v98 = vld [vmem:[%s1 + $0x1f0] sm:$0xff]
  %v99 = vld [vmem:[%s1 + $0x1f8] sm:$0xff]
  %v100 = vld [vmem:[%s1 + $0x200] sm:$0xff]
  %v101 = vld [vmem:[%s1 + $0x208] sm:$0xff]
  %v102 = vld [vmem:[%s1 + $0x210] sm:$0xff]
  %v103 = vld [vmem:[%s1 + $0x218] sm:$0xff]
  %v104 = vld [vmem:[%s1 + $0x220] sm:$0xff]
  %v105 = vld [vmem:[%s1 + $0x228] sm:$0xff]
  %v106 = vld [vmem:[%s1 + $0x230] sm:$0xff]
  %v107 = vld [vmem:[%s1 + $0x238] sm:$0xff]
  %v108 = vld [vmem:[%s1 + $0x240] sm:$0xff]
  %v109 = vld [vmem:[%s1 + $0x248] sm:$0xff]
  %v110 = vld [vmem:[%s1 + $0x250] sm:$0xff]
  %v111 = vld [vmem:[%s1 + $0x258] sm:$0xff]
  %v112 = vld [vmem:[%s1 + $0x260] sm:$0xff]
  %v113 = vld [vmem:[%s1 + $0x268] sm:$0xff]
  %v114 = vld [vmem:[%s1 + $0x270] sm:$0xff]
  %v115 = vld [vmem:[%s1 + $0x278] sm:$0xff]
  %v116 = vld [vmem:[%s1 + $0x280] sm:$0xff]
  %v117 = vld [vmem:[%s1 + $0x288] sm:$0xff]
  %v118 = vld [vmem:[%s1 + $0x290] sm:$0xff]
  %v119 = vld [vmem:[%s1 + $0x298] sm:$0xff]
  %v120 = vld [vmem:[%s1 + $0x2a0] sm:$0xff]
  %v121 = vld [vmem:[%s1 + $0x2a8] sm:$0xff]
  %v122 = vld [vmem:[%s1 + $0x2b0] sm:$0xff]
  %v123 = vld [vmem:[%s1 + $0x2b8] sm:$0xff]
  %v124 = vld [vmem:[%s1 + $0x2c0] sm:$0xff]
  %v125 = vld [vmem:[%s1 + $0x2c8] sm:$0xff]
  %v126 = vld [vmem:[%s1 + $0x2d0] sm:$0xff]
  %v127 = vld [vmem:[%s1 + $0x2d8] sm:$0xff]
  %v128 = vld [vmem:[%s1 + $0x2e0] sm:$0xff]
  %v129 = vld [vmem:[%s1 + $0x2e8] sm:$0xff]
  %v130 = vld [vmem:[%s1 + $0x2f0] sm:$0xff]
  %v131 = vld [vmem:[%s1 + $0x2f8] sm:$0xff]
  %v132 = vld [vmem:[%s1 + $0x300] sm:$0xff]
  %v133 = vld [vmem:[%s1 + $0x308] sm:$0xff]
  %v134 = vld [vmem:[%s1 + $0x310] sm:$0xff]
  %v135 = vld [vmem:[%s1 + $0x318] sm:$0xff]
  %v136 = vld [vmem:[%s1 + $0x320] sm:$0xff]
  %v137 = vld [vmem:[%s1 + $0x328] sm:$0xff]
  %v138 = vld [vmem:[%s1 + $0x330] sm:$0xff]
  %v139 = vld [vmem:[%s1 + $0x338] sm:$0xff]
  %v140 = vld [vmem:[%s1 + $0x340] sm:$0xff]
  %v141 = vld [vmem:[%s1 + $0x348] sm:$0xff]
  %v142 = vld [vmem:[%s1 + $0x350] sm:$0xff]
  %v143 = vld [vmem:[%s1 + $0x358] sm:$0xff]
  %v144 = vld [vmem:[%s1 + $0x360] sm:$0xff]
  %v145 = vld [vmem:[%s1 + $0x368] sm:$0xff]
  %v146 = vld [vmem:[%s1 + $0x370] sm:$0xff]
  %v147 = vld [vmem:[%s1 + $0x378] sm:$0xff]
  %v148 = vld [vmem:[%s1 + $0x380] sm:$0xff]
  %v149 = vld [vmem:[%s1 + $0x388] sm:$0xff]
  %v150 = vld [vmem:[%s1 + $0x390] sm:$0xff]
  %v151 = vld [vmem:[%s1 + $0x398] sm:$0xff]
  %v152 = vld [vmem:[%s1 + $0x3a0] sm:$0xff]
  %v153 = vld [vmem:[%s1 + $0x3a8] sm:$0xff]
  %v154 = vld [vmem:[%s1 + $0x3b0] sm:$0xff]
  %v155 = vld [vmem:[%s1 + $0x3b8] sm:$0xff]
  %v156 = vld [vmem:[%s1 + $0x3c0] sm:$0xff]
  %v157 = vld [vmem:[%s1 + $0x3c8] sm:$0xff]
  %v158 = vld [vmem:[%s1 + $0x3d0] sm:$0xff]
  %v159 = vld [vmem:[%s1 + $0x3d8] sm:$0xff]
  %v160 = vld [vmem:[%s1 + $0x3e0] sm:$0xff]
  %v161 = vld [vmem:[%s1 + $0x3e8] sm:$0xff]
  %v162 = vld [vmem:[%s1 + $0x3f0] sm:$0xff]
  %v163 = vld [vmem:[%s1 + $0x3f8] sm:$0xff]
  %v164 = vld [vmem:[%s1 + $0x400] sm:$0xff]
  %v165 = vld [vmem:[%s1 + $0x408] sm:$0xff]
  %v166 = vld [vmem:[%s1 + $0x410] sm:$0xff]
  %v167 = vld [vmem:[%s1 + $0x418] sm:$0xff]
  %v168 = vld [vmem:[%s1 + $0x420] sm:$0xff]
  %v169 = vld [vmem:[%s1 + $0x428] sm:$0xff]
  %v170 = vld [vmem:[%s1 + $0x430] sm:$0xff]
  %v171 = vld [vmem:[%s1 + $0x438] sm:$0xff]
  %v172 = vld [vmem:[%s1 + $0x440] sm:$0xff]
  %v173 = vld [vmem:[%s1 + $0x448] sm:$0xff]
  %v174 = vld [vmem:[%s1 + $0x450] sm:$0xff]
  %v175 = vld [vmem:[%s1 + $0x458] sm:$0xff]
  %v176 = vld [vmem:[%s1 + $0x460] sm:$0xff]
  %v177 = vld [vmem:[%s1 + $0x468] sm:$0xff]
  %v178 = vld [vmem:[%s1 + $0x470] sm:$0xff]
  %v179 = vld [vmem:[%s1 + $0x478] sm:$0xff]
  %v190 = vunpack.c.l.b16 %v26
  %v191 = vunpack.c.h.b16 %v26
  %v192 = vunpack.c.l.b16 %v27
  %v193 = vunpack.c.h.b16 %v27
  %v194 = vunpack.c.l.b16 %v28
  %v195 = vunpack.c.h.b16 %v28
  %v196 = vunpack.c.l.b16 %v29
  %v197 = vunpack.c.h.b16 %v29
  %v198 = vunpack.c.l.b16 %v30
  %v199 = vunpack.c.l.b16 %v31
  %v200 = vunpack.c.h.b16 %v31
  %v201 = vunpack.c.l.b16 %v32
  %v202 = vunpack.c.h.b16 %v32
  %v203 = vunpack.c.l.b16 %v33
  %v204 = vunpack.c.h.b16 %v33
  %v205 = vunpack.c.l.b16 %v34
  %v206 = vunpack.c.h.b16 %v34
  %v207 = vunpack.c.l.b16 %v35
  %v208 = vpack.c.b16 %v199, %v190
  %v209 = vpack.c.b16 %v200, %v191
  %v210 = vpack.c.b16 %v201, %v192
  %v211 = vpack.c.b16 %v202, %v193
  %v212 = vpack.c.b16 %v203, %v194
  %v213 = vpack.c.b16 %v204, %v195
  %v214 = vpack.c.b16 %v205, %v196
  %v215 = vpack.c.b16 %v206, %v197
  %v216 = vpack.c.b16 %v207, %v198
  %v370 = vunpack.c.l.b16 %v36
  %v371 = vunpack.c.h.b16 %v36
  %v372 = vunpack.c.l.b16 %v37
  %v373 = vunpack.c.h.b16 %v37
  %v374 = vunpack.c.l.b16 %v38
  %v375 = vunpack.c.h.b16 %v38
  %v376 = vunpack.c.l.b16 %v39
  %v377 = vunpack.c.h.b16 %v39
  %v378 = vunpack.c.l.b16 %v40
  %v379 = vunpack.c.h.b16 %v40
  %v380 = vunpack.c.l.b16 %v41
  %v381 = vunpack.c.h.b16 %v41
  %v382 = vunpack.c.l.b16 %v42
  %v383 = vunpack.c.h.b16 %v42
  %v384 = vunpack.c.l.b16 %v43
  %v385 = vunpack.c.h.b16 %v43
  %v386 = vunpack.c.l.b16 %v44
  %v387 = vunpack.c.h.b16 %v44
  %v388 = vunpack.c.l.b16 %v45
  %v389 = vunpack.c.h.b16 %v45
  %v390 = vunpack.c.l.b16 %v46
  %v391 = vunpack.c.h.b16 %v46
  %v392 = vunpack.c.l.b16 %v47
  %v393 = vunpack.c.h.b16 %v47
  %v394 = vunpack.c.l.b16 %v48
  %v395 = vunpack.c.h.b16 %v48
  %v396 = vunpack.c.l.b16 %v49
  %v397 = vunpack.c.h.b16 %v49
  %v398 = vunpack.c.l.b16 %v50
  %v399 = vunpack.c.h.b16 %v50
  %v400 = vunpack.c.l.b16 %v51
  %v401 = vunpack.c.h.b16 %v51
  %v402 = vunpack.c.l.b16 %v52
  %v403 = vunpack.c.h.b16 %v52
  %v404 = vunpack.c.l.b16 %v53
  %v405 = vunpack.c.h.b16 %v53
  %v406 = vunpack.c.l.b16 %v54
  %v407 = vunpack.c.h.b16 %v54
  %v408 = vunpack.c.l.b16 %v55
  %v409 = vunpack.c.h.b16 %v55
  %v410 = vunpack.c.l.b16 %v56
  %v411 = vunpack.c.h.b16 %v56
  %v412 = vunpack.c.l.b16 %v57
  %v413 = vunpack.c.h.b16 %v57
  %v414 = vunpack.c.l.b16 %v58
  %v415 = vunpack.c.h.b16 %v58
  %v416 = vunpack.c.l.b16 %v59
  %v417 = vunpack.c.h.b16 %v59
  %v418 = vunpack.c.l.b16 %v60
  %v419 = vunpack.c.h.b16 %v60
  %v420 = vunpack.c.l.b16 %v61
  %v421 = vunpack.c.h.b16 %v61
  %v422 = vunpack.c.l.b16 %v62
  %v423 = vunpack.c.h.b16 %v62
  %v424 = vunpack.c.l.b16 %v63
  %v425 = vunpack.c.h.b16 %v63
  %v426 = vunpack.c.l.b16 %v64
  %v427 = vunpack.c.h.b16 %v64
  %v428 = vunpack.c.l.b16 %v65
  %v429 = vunpack.c.h.b16 %v65
  %v430 = vunpack.c.l.b16 %v66
  %v431 = vunpack.c.h.b16 %v66
  %v432 = vunpack.c.l.b16 %v67
  %v433 = vunpack.c.h.b16 %v67
  %v434 = vunpack.c.l.b16 %v68
  %v435 = vunpack.c.h.b16 %v68
  %v436 = vunpack.c.l.b16 %v69
  %v437 = vunpack.c.h.b16 %v69
  %v438 = vunpack.c.l.b16 %v70
  %v439 = vunpack.c.h.b16 %v70
  %v440 = vunpack.c.l.b16 %v71
  %v441 = vunpack.c.h.b16 %v71
  %v442 = vunpack.c.l.b16 %v72
  %v443 = vunpack.c.h.b16 %v72
  %v444 = vunpack.c.l.b16 %v73
  %v445 = vunpack.c.h.b16 %v73
  %v446 = vunpack.c.l.b16 %v74
  %v447 = vunpack.c.h.b16 %v74
  %v448 = vunpack.c.l.b16 %v75
  %v449 = vunpack.c.h.b16 %v75
  %v450 = vunpack.c.l.b16 %v76
  %v451 = vunpack.c.h.b16 %v76
  %v452 = vunpack.c.l.b16 %v77
  %v453 = vunpack.c.h.b16 %v77
  %v454 = vunpack.c.l.b16 %v78
  %v455 = vunpack.c.h.b16 %v78
  %v456 = vunpack.c.l.b16 %v79
  %v457 = vunpack.c.h.b16 %v79
  %v458 = vunpack.c.l.b16 %v80
  %v459 = vunpack.c.h.b16 %v80
  %v460 = vunpack.c.l.b16 %v81
  %v461 = vunpack.c.h.b16 %v81
  %v462 = vunpack.c.l.b16 %v82
  %v463 = vunpack.c.h.b16 %v82
  %v464 = vunpack.c.l.b16 %v83
  %v465 = vunpack.c.h.b16 %v83
  %v466 = vunpack.c.l.b16 %v84
  %v467 = vunpack.c.h.b16 %v84
  %v468 = vunpack.c.l.b16 %v85
  %v469 = vunpack.c.h.b16 %v85
  %v470 = vunpack.c.l.b16 %v86
  %v471 = vunpack.c.h.b16 %v86
  %v472 = vunpack.c.l.b16 %v87
  %v473 = vunpack.c.h.b16 %v87
  %v474 = vunpack.c.l.b16 %v88
  %v475 = vunpack.c.h.b16 %v88
  %v476 = vunpack.c.l.b16 %v89
  %v477 = vunpack.c.h.b16 %v89
  %v478 = vunpack.c.l.b16 %v90
  %v479 = vunpack.c.h.b16 %v90
  %v480 = vunpack.c.l.b16 %v91
  %v481 = vunpack.c.h.b16 %v91
  %v482 = vunpack.c.l.b16 %v92
  %v483 = vunpack.c.h.b16 %v92
  %v484 = vunpack.c.l.b16 %v93
  %v485 = vunpack.c.h.b16 %v93
  %v486 = vunpack.c.l.b16 %v94
  %v487 = vunpack.c.h.b16 %v94
  %v488 = vunpack.c.l.b16 %v95
  %v489 = vunpack.c.h.b16 %v95
  %v490 = vunpack.c.l.b16 %v96
  %v491 = vunpack.c.h.b16 %v96
  %v492 = vunpack.c.l.b16 %v97
  %v493 = vunpack.c.h.b16 %v97
  %v494 = vunpack.c.l.b16 %v98
  %v495 = vunpack.c.h.b16 %v98
  %v496 = vunpack.c.l.b16 %v99
  %v497 = vunpack.c.h.b16 %v99
  %v498 = vunpack.c.l.b16 %v100
  %v499 = vunpack.c.h.b16 %v100
  %v500 = vunpack.c.l.b16 %v101
  %v501 = vunpack.c.h.b16 %v101
  %v502 = vunpack.c.l.b16 %v102
  %v503 = vunpack.c.h.b16 %v102
  %v504 = vunpack.c.l.b16 %v103
  %v505 = vunpack.c.h.b16 %v103
  %v506 = vunpack.c.l.b16 %v104
  %v507 = vunpack.c.h.b16 %v104
  %v508 = vunpack.c.l.b16 %v105
  %v509 = vunpack.c.h.b16 %v105
  %v510 = vunpack.c.l.b16 %v106
  %v511 = vunpack.c.h.b16 %v106
  %v512 = vunpack.c.l.b16 %v107
  %v513 = vunpack.c.h.b16 %v107
  %v514 = vunpack.c.l.b16 %v108
  %v515 = vunpack.c.h.b16 %v108
  %v516 = vunpack.c.l.b16 %v109
  %v517 = vunpack.c.h.b16 %v109
  %v518 = vunpack.c.l.b16 %v110
  %v519 = vunpack.c.h.b16 %v110
  %v520 = vunpack.c.l.b16 %v111
  %v521 = vunpack.c.h.b16 %v111
  %v522 = vunpack.c.l.b16 %v112
  %v523 = vunpack.c.h.b16 %v112
  %v524 = vunpack.c.l.b16 %v113
  %v525 = vunpack.c.h.b16 %v113
  %v526 = vunpack.c.l.b16 %v114
  %v527 = vunpack.c.h.b16 %v114
  %v528 = vunpack.c.l.b16 %v115
  %v529 = vunpack.c.h.b16 %v115
  %v530 = vunpack.c.l.b16 %v116
  %v531 = vunpack.c.h.b16 %v116
  %v532 = vunpack.c.l.b16 %v117
  %v533 = vunpack.c.h.b16 %v117
  %v534 = vunpack.c.l.b16 %v118
  %v535 = vunpack.c.h.b16 %v118
  %v536 = vunpack.c.l.b16 %v119
  %v537 = vunpack.c.h.b16 %v119
  %v538 = vunpack.c.l.b16 %v120
  %v539 = vunpack.c.h.b16 %v120
  %v540 = vunpack.c.l.b16 %v121
  %v541 = vunpack.c.h.b16 %v121
  %v542 = vunpack.c.l.b16 %v122
  %v543 = vunpack.c.h.b16 %v122
  %v544 = vunpack.c.l.b16 %v123
  %v545 = vunpack.c.h.b16 %v123
  %v546 = vunpack.c.l.b16 %v124
  %v547 = vunpack.c.h.b16 %v124
  %v548 = vunpack.c.l.b16 %v125
  %v549 = vunpack.c.h.b16 %v125
  %v550 = vunpack.c.l.b16 %v126
  %v551 = vunpack.c.h.b16 %v126
  %v552 = vunpack.c.l.b16 %v127
  %v553 = vunpack.c.h.b16 %v127
  %v554 = vunpack.c.l.b16 %v128
  %v555 = vunpack.c.h.b16 %v128
  %v556 = vunpack.c.l.b16 %v129
  %v557 = vunpack.c.h.b16 %v129
  %v558 = vunpack.c.l.b16 %v130
  %v559 = vunpack.c.h.b16 %v130
  %v560 = vunpack.c.l.b16 %v131
  %v561 = vunpack.c.h.b16 %v131
  %v562 = vunpack.c.l.b16 %v132
  %v563 = vunpack.c.h.b16 %v132
  %v564 = vunpack.c.l.b16 %v133
  %v565 = vunpack.c.h.b16 %v133
  %v566 = vunpack.c.l.b16 %v134
  %v567 = vunpack.c.h.b16 %v134
  %v568 = vunpack.c.l.b16 %v135
  %v569 = vunpack.c.h.b16 %v135
  %v570 = vunpack.c.l.b16 %v136
  %v571 = vunpack.c.h.b16 %v136
  %v572 = vunpack.c.l.b16 %v137
  %v573 = vunpack.c.h.b16 %v137
  %v574 = vunpack.c.l.b16 %v138
  %v575 = vunpack.c.h.b16 %v138
  %v576 = vunpack.c.l.b16 %v139
  %v577 = vunpack.c.h.b16 %v139
  %v578 = vunpack.c.l.b16 %v140
  %v579 = vunpack.c.h.b16 %v140
  %v580 = vunpack.c.l.b16 %v141
  %v581 = vunpack.c.h.b16 %v141
  %v582 = vunpack.c.l.b16 %v142
  %v583 = vunpack.c.h.b16 %v142
  %v584 = vunpack.c.l.b16 %v143
  %v585 = vunpack.c.h.b16 %v143
  %v586 = vunpack.c.l.b16 %v144
  %v587 = vunpack.c.h.b16 %v144
  %v588 = vunpack.c.l.b16 %v145
  %v589 = vunpack.c.h.b16 %v145
  %v590 = vunpack.c.l.b16 %v146
  %v591 = vunpack.c.h.b16 %v146
  %v592 = vunpack.c.l.b16 %v147
  %v593 = vunpack.c.h.b16 %v147
  %v594 = vunpack.c.l.b16 %v148
  %v595 = vunpack.c.h.b16 %v148
  %v596 = vunpack.c.l.b16 %v149
  %v597 = vunpack.c.h.b16 %v149
  %v598 = vunpack.c.l.b16 %v150
  %v599 = vunpack.c.h.b16 %v150
  %v600 = vunpack.c.l.b16 %v151
  %v601 = vunpack.c.h.b16 %v151
  %v602 = vunpack.c.l.b16 %v152
  %v603 = vunpack.c.h.b16 %v152
  %v604 = vunpack.c.l.b16 %v153
  %v605 = vunpack.c.h.b16 %v153
  %v606 = vunpack.c.l.b16 %v154
  %v607 = vunpack.c.h.b16 %v154
  %v608 = vunpack.c.l.b16 %v155
  %v609 = vunpack.c.h.b16 %v155
  %v610 = vunpack.c.l.b16 %v156
  %v611 = vunpack.c.h.b16 %v156
  %v612 = vunpack.c.l.b16 %v157
  %v613 = vunpack.c.h.b16 %v157
  %v614 = vunpack.c.l.b16 %v158
  %v615 = vunpack.c.h.b16 %v158
  %v616 = vunpack.c.l.b16 %v159
  %v617 = vunpack.c.h.b16 %v159
  %v618 = vunpack.c.l.b16 %v160
  %v619 = vunpack.c.h.b16 %v160
  %v620 = vunpack.c.l.b16 %v161
  %v621 = vunpack.c.h.b16 %v161
  %v622 = vunpack.c.l.b16 %v162
  %v623 = vunpack.c.h.b16 %v162
  %v624 = vunpack.c.l.b16 %v163
  %v625 = vunpack.c.h.b16 %v163
  %v626 = vunpack.c.l.b16 %v164
  %v627 = vunpack.c.h.b16 %v164
  %v628 = vunpack.c.l.b16 %v165
  %v629 = vunpack.c.h.b16 %v165
  %v630 = vunpack.c.l.b16 %v166
  %v631 = vunpack.c.h.b16 %v166
  %v632 = vunpack.c.l.b16 %v167
  %v633 = vunpack.c.h.b16 %v167
  %v634 = vunpack.c.l.b16 %v168
  %v635 = vunpack.c.h.b16 %v168
  %v636 = vunpack.c.l.b16 %v169
  %v637 = vunpack.c.h.b16 %v169
  %v638 = vunpack.c.l.b16 %v170
  %v639 = vunpack.c.h.b16 %v170
  %v640 = vunpack.c.l.b16 %v171
  %v641 = vunpack.c.h.b16 %v171
  %v642 = vunpack.c.l.b16 %v172
  %v643 = vunpack.c.h.b16 %v172
  %v644 = vunpack.c.l.b16 %v173
  %v645 = vunpack.c.h.b16 %v173
  %v646 = vunpack.c.l.b16 %v174
  %v647 = vunpack.c.h.b16 %v174
  %v648 = vunpack.c.l.b16 %v175
  %v649 = vunpack.c.h.b16 %v175
  %v650 = vunpack.c.l.b16 %v176
  %v651 = vunpack.c.h.b16 %v176
  %v652 = vunpack.c.l.b16 %v177
  %v653 = vunpack.c.h.b16 %v177
  %v654 = vunpack.c.l.b16 %v178
  %v655 = vunpack.c.h.b16 %v178
  %v656 = vunpack.c.l.b16 %v179
  %v657 = vunpack.c.h.b16 %v179
  %v658 = vpack.c.b16 %v372, %v370
  %v659 = vpack.c.b16 %v373, %v371
  %v660 = vpack.c.b16 %v376, %v374
  %v661 = vpack.c.b16 %v377, %v375
  %v662 = vpack.c.b16 %v380, %v378
  %v663 = vpack.c.b16 %v381, %v379
  %v664 = vpack.c.b16 %v384, %v382
  %v665 = vpack.c.b16 %v385, %v383
  %v666 = vpack.c.b16 %v388, %v386
  %v667 = vpack.c.b16 %v389, %v387
  %v668 = vpack.c.b16 %v392, %v390
  %v669 = vpack.c.b16 %v393, %v391
  %v670 = vpack.c.b16 %v396, %v394
  %v671 = vpack.c.b16 %v397, %v395
  %v672 = vpack.c.b16 %v400, %v398
  %v673 = vpack.c.b16 %v401, %v399
  %v674 = vpack.c.b16 %v404, %v402
  %v675 = vpack.c.b16 %v405, %v403
  %v676 = vpack.c.b16 %v408, %v406
  %v677 = vpack.c.b16 %v409, %v407
  %v678 = vpack.c.b16 %v412, %v410
  %v679 = vpack.c.b16 %v413, %v411
  %v680 = vpack.c.b16 %v416, %v414
  %v681 = vpack.c.b16 %v417, %v415
  %v682 = vpack.c.b16 %v420, %v418
  %v683 = vpack.c.b16 %v421, %v419
  %v684 = vpack.c.b16 %v424, %v422
  %v685 = vpack.c.b16 %v425, %v423
  %v686 = vpack.c.b16 %v428, %v426
  %v687 = vpack.c.b16 %v429, %v427
  %v688 = vpack.c.b16 %v432, %v430
  %v689 = vpack.c.b16 %v433, %v431
  %v690 = vpack.c.b16 %v436, %v434
  %v691 = vpack.c.b16 %v437, %v435
  %v692 = vpack.c.b16 %v440, %v438
  %v693 = vpack.c.b16 %v441, %v439
  %v694 = vpack.c.b16 %v444, %v442
  %v695 = vpack.c.b16 %v445, %v443
  %v696 = vpack.c.b16 %v448, %v446
  %v697 = vpack.c.b16 %v449, %v447
  %v698 = vpack.c.b16 %v452, %v450
  %v699 = vpack.c.b16 %v453, %v451
  %v700 = vpack.c.b16 %v456, %v454
  %v701 = vpack.c.b16 %v457, %v455
  %v702 = vpack.c.b16 %v460, %v458
  %v703 = vpack.c.b16 %v461, %v459
  %v704 = vpack.c.b16 %v464, %v462
  %v705 = vpack.c.b16 %v465, %v463
  %v706 = vpack.c.b16 %v468, %v466
  %v707 = vpack.c.b16 %v469, %v467
  %v708 = vpack.c.b16 %v472, %v470
  %v709 = vpack.c.b16 %v473, %v471
  %v710 = vpack.c.b16 %v476, %v474
  %v711 = vpack.c.b16 %v477, %v475
  %v712 = vpack.c.b16 %v480, %v478
  %v713 = vpack.c.b16 %v481, %v479
  %v714 = vpack.c.b16 %v484, %v482
  %v715 = vpack.c.b16 %v485, %v483
  %v716 = vpack.c.b16 %v488, %v486
  %v717 = vpack.c.b16 %v489, %v487
  %v718 = vpack.c.b16 %v492, %v490
  %v719 = vpack.c.b16 %v493, %v491
  %v720 = vpack.c.b16 %v496, %v494
  %v721 = vpack.c.b16 %v497, %v495
  %v722 = vpack.c.b16 %v500, %v498
  %v723 = vpack.c.b16 %v501, %v499
  %v724 = vpack.c.b16 %v504, %v502
  %v725 = vpack.c.b16 %v505, %v503
  %v726 = vpack.c.b16 %v508, %v506
  %v727 = vpack.c.b16 %v509, %v507
  %v728 = vpack.c.b16 %v512, %v510
  %v729 = vpack.c.b16 %v513, %v511
  %v730 = vpack.c.b16 %v516, %v514
  %v731 = vpack.c.b16 %v517, %v515
  %v732 = vpack.c.b16 %v520, %v518
  %v733 = vpack.c.b16 %v521, %v519
  %v734 = vpack.c.b16 %v524, %v522
  %v735 = vpack.c.b16 %v525, %v523
  %v736 = vpack.c.b16 %v528, %v526
  %v737 = vpack.c.b16 %v529, %v527
  %v738 = vpack.c.b16 %v532, %v530
  %v739 = vpack.c.b16 %v533, %v531
  %v740 = vpack.c.b16 %v536, %v534
  %v741 = vpack.c.b16 %v537, %v535
  %v742 = vpack.c.b16 %v540, %v538
  %v743 = vpack.c.b16 %v541, %v539
  %v744 = vpack.c.b16 %v544, %v542
  %v745 = vpack.c.b16 %v545, %v543
  %v746 = vpack.c.b16 %v548, %v546
  %v747 = vpack.c.b16 %v549, %v547
  %v748 = vpack.c.b16 %v552, %v550
  %v749 = vpack.c.b16 %v553, %v551
  %v750 = vpack.c.b16 %v556, %v554
  %v751 = vpack.c.b16 %v557, %v555
  %v752 = vpack.c.b16 %v560, %v558
  %v753 = vpack.c.b16 %v561, %v559
  %v754 = vpack.c.b16 %v564, %v562
  %v755 = vpack.c.b16 %v565, %v563
  %v756 = vpack.c.b16 %v568, %v566
  %v757 = vpack.c.b16 %v569, %v567
  %v758 = vpack.c.b16 %v572, %v570
  %v759 = vpack.c.b16 %v573, %v571
  %v760 = vpack.c.b16 %v576, %v574
  %v761 = vpack.c.b16 %v577, %v575
  %v762 = vpack.c.b16 %v580, %v578
  %v763 = vpack.c.b16 %v581, %v579
  %v764 = vpack.c.b16 %v584, %v582
  %v765 = vpack.c.b16 %v585, %v583
  %v766 = vpack.c.b16 %v588, %v586
  %v767 = vpack.c.b16 %v589, %v587
  %v768 = vpack.c.b16 %v592, %v590
  %v769 = vpack.c.b16 %v593, %v591
  %v770 = vpack.c.b16 %v596, %v594
  %v771 = vpack.c.b16 %v597, %v595
  %v772 = vpack.c.b16 %v600, %v598
  %v773 = vpack.c.b16 %v601, %v599
  %v774 = vpack.c.b16 %v604, %v602
  %v775 = vpack.c.b16 %v605, %v603
  %v776 = vpack.c.b16 %v608, %v606
  %v777 = vpack.c.b16 %v609, %v607
  %v778 = vpack.c.b16 %v612, %v610
  %v779 = vpack.c.b16 %v613, %v611
  %v780 = vpack.c.b16 %v616, %v614
  %v781 = vpack.c.b16 %v617, %v615
  %v782 = vpack.c.b16 %v620, %v618
  %v783 = vpack.c.b16 %v621, %v619
  %v784 = vpack.c.b16 %v624, %v622
  %v785 = vpack.c.b16 %v625, %v623
  %v786 = vpack.c.b16 %v628, %v626
  %v787 = vpack.c.b16 %v629, %v627
  %v788 = vpack.c.b16 %v632, %v630
  %v789 = vpack.c.b16 %v633, %v631
  %v790 = vpack.c.b16 %v636, %v634
  %v791 = vpack.c.b16 %v637, %v635
  %v792 = vpack.c.b16 %v640, %v638
  %v793 = vpack.c.b16 %v641, %v639
  %v794 = vpack.c.b16 %v644, %v642
  %v795 = vpack.c.b16 %v645, %v643
  %v796 = vpack.c.b16 %v648, %v646
  %v797 = vpack.c.b16 %v649, %v647
  %v798 = vpack.c.b16 %v652, %v650
  %v799 = vpack.c.b16 %v653, %v651
  %v800 = vpack.c.b16 %v656, %v654
  %v801 = vpack.c.b16 %v657, %v655
  %946 = vmatpush.bf16.msra.mxu0 %v672
  %947 = vmatpush.bf16.msra.mxu0 %v670
  %948 = vmatpush.bf16.msra.mxu0 %v668
  %949 = vmatpush.bf16.msra.mxu0 %v666
  %950 = vmatpush.bf16.msra.mxu0 %v664
  %951 = vmatpush.bf16.msra.mxu0 %v662
  %952 = vmatpush.bf16.msra.mxu0 %v660
  %953 = vmatpush.bf16.msra.mxu0 %v658
  %954 = vmatmul.bf16.gmra.mxu0 %v208
  %v955 = vpop.f32.mrf.mxu0
  %v956 = vadd.f32 0.0, %v955
  %v957 = vpop.f32.mrf.mxu0
  %v958 = vadd.f32 0.0, %v957
  %959 = vdwg.mxu0
  %960 = vmatpush.bf16.msra.mxu0 %v688
  %961 = vmatpush.bf16.msra.mxu0 %v686
  %962 = vmatpush.bf16.msra.mxu0 %v684
  %963 = vmatpush.bf16.msra.mxu0 %v682
  %964 = vmatpush.bf16.msra.mxu0 %v680
  %965 = vmatpush.bf16.msra.mxu0 %v678
  %966 = vmatpush.bf16.msra.mxu0 %v676
  %967 = vmatpush.bf16.msra.mxu0 %v674
  %968 = vmatmul.bf16.gmra.mxu0 %v209
  %v969 = vpop.f32.mrf.mxu0
  %v970 = vadd.f32 %v956, %v969
  %v971 = vpop.f32.mrf.mxu0
  %v972 = vadd.f32 %v958, %v971
  %973 = vdwg.mxu0
  %974 = vmatpush.bf16.msra.mxu0 %v704
  %975 = vmatpush.bf16.msra.mxu0 %v702
  %976 = vmatpush.bf16.msra.mxu0 %v700
  %977 = vmatpush.bf16.msra.mxu0 %v698
  %978 = vmatpush.bf16.msra.mxu0 %v696
  %979 = vmatpush.bf16.msra.mxu0 %v694
  %980 = vmatpush.bf16.msra.mxu0 %v692
  %981 = vmatpush.bf16.msra.mxu0 %v690
  %982 = vmatmul.bf16.gmra.mxu0 %v210
  %v983 = vpop.f32.mrf.mxu0
  %v984 = vadd.f32 %v970, %v983
  %v985 = vpop.f32.mrf.mxu0
  %v986 = vadd.f32 %v972, %v985
  %987 = vdwg.mxu0
  %988 = vmatpush.bf16.msra.mxu0 %v720
  %989 = vmatpush.bf16.msra.mxu0 %v718
  %990 = vmatpush.bf16.msra.mxu0 %v716
  %991 = vmatpush.bf16.msra.mxu0 %v714
  %992 = vmatpush.bf16.msra.mxu0 %v712
  %993 = vmatpush.bf16.msra.mxu0 %v710
  %994 = vmatpush.bf16.msra.mxu0 %v708
  %995 = vmatpush.bf16.msra.mxu0 %v706
  %996 = vmatmul.bf16.gmra.mxu0 %v211
  %v997 = vpop.f32.mrf.mxu0
  %v998 = vadd.f32 %v984, %v997
  %v999 = vpop.f32.mrf.mxu0
  %v1000 = vadd.f32 %v986, %v999
  %1001 = vdwg.mxu0
  %1002 = vmatpush.bf16.msra.mxu0 %v736
  %1003 = vmatpush.bf16.msra.mxu0 %v734
  %1004 = vmatpush.bf16.msra.mxu0 %v732
  %1005 = vmatpush.bf16.msra.mxu0 %v730
  %1006 = vmatpush.bf16.msra.mxu0 %v728
  %1007 = vmatpush.bf16.msra.mxu0 %v726
  %1008 = vmatpush.bf16.msra.mxu0 %v724
  %1009 = vmatpush.bf16.msra.mxu0 %v722
  %1010 = vmatmul.bf16.gmra.mxu0 %v212
  %v1011 = vpop.f32.mrf.mxu0
  %v1012 = vadd.f32 %v998, %v1011
  %v1013 = vpop.f32.mrf.mxu0
  %v1014 = vadd.f32 %v1000, %v1013
  %1015 = vdwg.mxu0
  %1016 = vmatpush.bf16.msra.mxu0 %v752
  %1017 = vmatpush.bf16.msra.mxu0 %v750
  %1018 = vmatpush.bf16.msra.mxu0 %v748
  %1019 = vmatpush.bf16.msra.mxu0 %v746
  %1020 = vmatpush.bf16.msra.mxu0 %v744
  %1021 = vmatpush.bf16.msra.mxu0 %v742
  %1022 = vmatpush.bf16.msra.mxu0 %v740
  %1023 = vmatpush.bf16.msra.mxu0 %v738
  %1024 = vmatmul.bf16.gmra.mxu0 %v213
  %v1025 = vpop.f32.mrf.mxu0
  %v1026 = vadd.f32 %v1012, %v1025
  %v1027 = vpop.f32.mrf.mxu0
  %v1028 = vadd.f32 %v1014, %v1027
  %1029 = vdwg.mxu0
  %1030 = vmatpush.bf16.msra.mxu0 %v768
  %1031 = vmatpush.bf16.msra.mxu0 %v766
  %1032 = vmatpush.bf16.msra.mxu0 %v764
  %1033 = vmatpush.bf16.msra.mxu0 %v762
  %1034 = vmatpush.bf16.msra.mxu0 %v760
  %1035 = vmatpush.bf16.msra.mxu0 %v758
  %1036 = vmatpush.bf16.msra.mxu0 %v756
  %1037 = vmatpush.bf16.msra.mxu0 %v754
  %1038 = vmatmul.bf16.gmra.mxu0 %v214
  %v1039 = vpop.f32.mrf.mxu0
  %v1040 = vadd.f32 %v1026, %v1039
  %v1041 = vpop.f32.mrf.mxu0
  %v1042 = vadd.f32 %v1028, %v1041
  %1043 = vdwg.mxu0
  %1044 = vmatpush.bf16.msra.mxu0 %v784
  %1045 = vmatpush.bf16.msra.mxu0 %v782
  %1046 = vmatpush.bf16.msra.mxu0 %v780
  %1047 = vmatpush.bf16.msra.mxu0 %v778
  %1048 = vmatpush.bf16.msra.mxu0 %v776
  %1049 = vmatpush.bf16.msra.mxu0 %v774
  %1050 = vmatpush.bf16.msra.mxu0 %v772
  %1051 = vmatpush.bf16.msra.mxu0 %v770
  %1052 = vmatmul.bf16.gmra.mxu0 %v215
  %v1053 = vpop.f32.mrf.mxu0
  %v1054 = vadd.f32 %v1040, %v1053
  %v1055 = vpop.f32.mrf.mxu0
  %v1056 = vadd.f32 %v1042, %v1055
  %1057 = vdwg.mxu0
  %1058 = vmatpush.bf16.msra.mxu0 %v800
  %1059 = vmatpush.bf16.msra.mxu0 %v798
  %1060 = vmatpush.bf16.msra.mxu0 %v796
  %1061 = vmatpush.bf16.msra.mxu0 %v794
  %1062 = vmatpush.bf16.msra.mxu0 %v792
  %1063 = vmatpush.bf16.msra.mxu0 %v790
  %1064 = vmatpush.bf16.msra.mxu0 %v788
  %1065 = vmatpush.bf16.msra.mxu0 %v786
  %1066 = vmatmul.bf16.gmra.mxu0 %v216
  %v1067 = vpop.f32.mrf.mxu0
  %v1068 = vadd.f32 %v1054, %v1067
  %v1069 = vpop.f32.mrf.mxu0
  %v1070 = vadd.f32 %v1056, %v1069
  %1071 = vdwg.mxu0
  %1072 = vmatpush.bf16.msra.mxu0 %v673
  %1073 = vmatpush.bf16.msra.mxu0 %v671
  %1074 = vmatpush.bf16.msra.mxu0 %v669
  %1075 = vmatpush.bf16.msra.mxu0 %v667
  %1076 = vmatpush.bf16.msra.mxu0 %v665
  %1077 = vmatpush.bf16.msra.mxu0 %v663
  %1078 = vmatpush.bf16.msra.mxu0 %v661
  %1079 = vmatpush.bf16.msra.mxu0 %v659
  %1080 = vmatmul.bf16.gmra.mxu0 %v208
  %v1081 = vpop.f32.mrf.mxu0
  %v1082 = vadd.f32 0.0, %v1081
  %v1083 = vpop.f32.mrf.mxu0
  %v1084 = vadd.f32 0.0, %v1083
  %1085 = vdwg.mxu0
  %1086 = vmatpush.bf16.msra.mxu0 %v689
  %1087 = vmatpush.bf16.msra.mxu0 %v687
  %1088 = vmatpush.bf16.msra.mxu0 %v685
  %1089 = vmatpush.bf16.msra.mxu0 %v683
  %1090 = vmatpush.bf16.msra.mxu0 %v681
  %1091 = vmatpush.bf16.msra.mxu0 %v679
  %1092 = vmatpush.bf16.msra.mxu0 %v677
  %1093 = vmatpush.bf16.msra.mxu0 %v675
  %1094 = vmatmul.bf16.gmra.mxu0 %v209
  %v1095 = vpop.f32.mrf.mxu0
  %v1096 = vadd.f32 %v1082, %v1095
  %v1097 = vpop.f32.mrf.mxu0
  %v1098 = vadd.f32 %v1084, %v1097
  %1099 = vdwg.mxu0
  %1100 = vmatpush.bf16.msra.mxu0 %v705
  %1101 = vmatpush.bf16.msra.mxu0 %v703
  %1102 = vmatpush.bf16.msra.mxu0 %v701
  %1103 = vmatpush.bf16.msra.mxu0 %v699
  %1104 = vmatpush.bf16.msra.mxu0 %v697
  %1105 = vmatpush.bf16.msra.mxu0 %v695
  %1106 = vmatpush.bf16.msra.mxu0 %v693
  %1107 = vmatpush.bf16.msra.mxu0 %v691
  %1108 = vmatmul.bf16.gmra.mxu0 %v210
  %v1109 = vpop.f32.mrf.mxu0
  %v1110 = vadd.f32 %v1096, %v1109
  %v1111 = vpop.f32.mrf.mxu0
  %v1112 = vadd.f32 %v1098, %v1111
  %1113 = vdwg.mxu0
  %1114 = vmatpush.bf16.msra.mxu0 %v721
  %1115 = vmatpush.bf16.msra.mxu0 %v719
  %1116 = vmatpush.bf16.msra.mxu0 %v717
  %1117 = vmatpush.bf16.msra.mxu0 %v715
  %1118 = vmatpush.bf16.msra.mxu0 %v713
  %1119 = vmatpush.bf16.msra.mxu0 %v711
  %1120 = vmatpush.bf16.msra.mxu0 %v709
  %1121 = vmatpush.bf16.msra.mxu0 %v707
  %1122 = vmatmul.bf16.gmra.mxu0 %v211
  %v1123 = vpop.f32.mrf.mxu0
  %v1124 = vadd.f32 %v1110, %v1123
  %v1125 = vpop.f32.mrf.mxu0
  %v1126 = vadd.f32 %v1112, %v1125
  %1127 = vdwg.mxu0
  %1128 = vmatpush.bf16.msra.mxu0 %v737
  %1129 = vmatpush.bf16.msra.mxu0 %v735
  %1130 = vmatpush.bf16.msra.mxu0 %v733
  %1131 = vmatpush.bf16.msra.mxu0 %v731
  %1132 = vmatpush.bf16.msra.mxu0 %v729
  %1133 = vmatpush.bf16.msra.mxu0 %v727
  %1134 = vmatpush.bf16.msra.mxu0 %v725
  %1135 = vmatpush.bf16.msra.mxu0 %v723
  %1136 = vmatmul.bf16.gmra.mxu0 %v212
  %v1137 = vpop.f32.mrf.mxu0
  %v1138 = vadd.f32 %v1124, %v1137
  %v1139 = vpop.f32.mrf.mxu0
  %v1140 = vadd.f32 %v1126, %v1139
  %1141 = vdwg.mxu0
  %1142 = vmatpush.bf16.msra.mxu0 %v753
  %1143 = vmatpush.bf16.msra.mxu0 %v751
  %1144 = vmatpush.bf16.msra.mxu0 %v749
  %1145 = vmatpush.bf16.msra.mxu0 %v747
  %1146 = vmatpush.bf16.msra.mxu0 %v745
  %1147 = vmatpush.bf16.msra.mxu0 %v743
  %1148 = vmatpush.bf16.msra.mxu0 %v741
  %1149 = vmatpush.bf16.msra.mxu0 %v739
  %1150 = vmatmul.bf16.gmra.mxu0 %v213
  %v1151 = vpop.f32.mrf.mxu0
  %v1152 = vadd.f32 %v1138, %v1151
  %v1153 = vpop.f32.mrf.mxu0
  %v1154 = vadd.f32 %v1140, %v1153
  %1155 = vdwg.mxu0
  %1156 = vmatpush.bf16.msra.mxu0 %v769
  %1157 = vmatpush.bf16.msra.mxu0 %v767
  %1158 = vmatpush.bf16.msra.mxu0 %v765
  %1159 = vmatpush.bf16.msra.mxu0 %v763
  %1160 = vmatpush.bf16.msra.mxu0 %v761
  %1161 = vmatpush.bf16.msra.mxu0 %v759
  %1162 = vmatpush.bf16.msra.mxu0 %v757
  %1163 = vmatpush.bf16.msra.mxu0 %v755
  %1164 = vmatmul.bf16.gmra.mxu0 %v214
  %v1165 = vpop.f32.mrf.mxu0
  %v1166 = vadd.f32 %v1152, %v1165
  %v1167 = vpop.f32.mrf.mxu0
  %v1168 = vadd.f32 %v1154, %v1167
  %1169 = vdwg.mxu0
  %1170 = vmatpush.bf16.msra.mxu0 %v785
  %1171 = vmatpush.bf16.msra.mxu0 %v783
  %1172 = vmatpush.bf16.msra.mxu0 %v781
  %1173 = vmatpush.bf16.msra.mxu0 %v779
  %1174 = vmatpush.bf16.msra.mxu0 %v777
  %1175 = vmatpush.bf16.msra.mxu0 %v775
  %1176 = vmatpush.bf16.msra.mxu0 %v773
  %1177 = vmatpush.bf16.msra.mxu0 %v771
  %1178 = vmatmul.bf16.gmra.mxu0 %v215
  %v1179 = vpop.f32.mrf.mxu0
  %v1180 = vadd.f32 %v1166, %v1179
  %v1181 = vpop.f32.mrf.mxu0
  %v1182 = vadd.f32 %v1168, %v1181
  %1183 = vdwg.mxu0
  %1184 = vmatpush.bf16.msra.mxu0 %v801
  %1185 = vmatpush.bf16.msra.mxu0 %v799
  %1186 = vmatpush.bf16.msra.mxu0 %v797
  %1187 = vmatpush.bf16.msra.mxu0 %v795
  %1188 = vmatpush.bf16.msra.mxu0 %v793
  %1189 = vmatpush.bf16.msra.mxu0 %v791
  %1190 = vmatpush.bf16.msra.mxu0 %v789
  %1191 = vmatpush.bf16.msra.mxu0 %v787
  %1192 = vmatmul.bf16.gmra.mxu0 %v216
  %v1193 = vpop.f32.mrf.mxu0
  %v1194 = vadd.f32 %v1180, %v1193
  %v1195 = vpop.f32.mrf.mxu0
  %v1196 = vadd.f32 %v1182, %v1195
  %1197 = vdwg.mxu0
  %v1198 = vadd.f32 %v22, %v1068
  %v1199 = vadd.f32 %v23, %v1194
  %v1200 = vadd.f32 %v24, %v1070
  %v1201 = vadd.f32 %v25, %v1196
  %1202 = vst [vmem:[#allocation2] sm:$0xff] %v1198
  %1203 = vst [vmem:[#allocation2 + $0x8] sm:$0xff] %v1199
  %1204 = vst [vmem:[#allocation2 + $0x10] sm:$0xff] %v1200
  %1205 = vst [vmem:[#allocation2 + $0x18] sm:$0xff] %v1201
  // Predicated region
  $region18: #{flownet_er_forward.12} parent=0 // pred_check
    %p1206 = pneg %p14
  $region19: #{flownet_er_forward.12} parent=0 // pred_check_branch
    %1208 = sbr.rel (%p1206) target = $region21
  $region20: #{flownet_er_forward.12} parent=0 // pred_region
    %v1209 = vld [vmem:[#allocation2] sm:$0xff]
    %v1210 = vld [vmem:[#allocation2 + $0x8] sm:$0xff]
    %v1211 = vld [vmem:[#allocation2 + $0x10] sm:$0xff]
    %v1212 = vld [vmem:[#allocation2 + $0x18] sm:$0xff]
    %v1213 = vld [vmem:[%s2] sm:$0x3]
    %v1215 = vperm.slane %v1213, 0
    %v1216 = vperm.slane %v1213, 1
    %v1219 = vadd.f32 %v1209, %v1215
    %v1220 = vadd.f32 %v1210, %v1216
    %v1221 = vadd.f32 %v1211, %v1215
    %v1222 = vadd.f32 %v1212, %v1216
    %vm1223 = vcmp.ge.f32.partialorder %v1219, 0.0
    %vm1224 = vcmp.ge.f32.partialorder %v1220, 0.0
    %vm1225 = vcmp.ge.f32.partialorder %v1221, 0.0
    %vm1226 = vcmp.ge.f32.partialorder %v1222, 0.0
    %v1227 = vmul.f32 %v1219, 0.01
    %v1228 = vmul.f32 %v1220, 0.01
    %v1229 = vmul.f32 %v1221, 0.01
    %v1230 = vmul.f32 %v1222, 0.01
    %v1231 = vsel %vm1223, %v1219, %v1227
    %v1232 = vsel %vm1224, %v1220, %v1228
    %v1233 = vsel %vm1225, %v1221, %v1229
    %v1234 = vsel %vm1226, %v1222, %v1230
    %v1235 = vpack.c.bf16 %v1232, %v1231
    %v1236 = vpack.c.bf16 %v1234, %v1233
    %1237 = vst [vmem:[%s3] sm:$0xff] %v1235
    %1238 = vst [vmem:[%s3 + $0x8] sm:$0xff] %v1236
  $region21: #{flownet_er_forward.12} parent=0 // pred_fallthru
    _
  // Predicated region
  $region22: #{flownet_er_forward.12} parent=0 // pred_check
    _
  $region23: #{flownet_er_forward.12} parent=0 // pred_check_branch
    %1240 = sbr.rel (0) target = $region25
  $region24: #{flownet_er_forward.12} parent=0 // pred_region
    _
  $region25: #{flownet_er_forward.12} parent=0 // pred_fallthru
    _
  // Predicated region
  $region26: #{flownet_er_forward.12} parent=0 // pred_check
    _
  $region27: #{flownet_er_forward.12} parent=0 // pred_check_branch
    %1242 = sbr.rel (0) target = $region29
  $region28: #{flownet_er_forward.12} parent=0 // pred_region
    _
  $region29: #{flownet_er_forward.12} parent=0 // pred_fallthru
    _

// kernel: flownet_er_forward.13
$region0: #{flownet_er_forward.13}
  #allocation0 [shape = 'u32[]', space=smem, size = 0x4, offset = 0x4, fixed_abs, tag = 'smem constant byte address 0x4 - core index']
  #allocation1 [shape = 'u32[72,128]{1,0:T(1,128)}', space=vmem, size = 0x9000, scoped, tag = 'internal scratch']
  #allocation2 [shape = 'f32[16,256]{1,0:T(8,128)}', space=vmem, size = 0x4000, scoped, tag = 'scratch operand']
  %s0 = inlined_call_operand.vmem [shape: bf16[16,2304], index: 0, kind: input, shape index: {}]
  %s1 = inlined_call_operand.vmem [shape: bf16[2304,256], index: 1, kind: input, shape index: {}]
  %s2 = inlined_call_operand.vmem [shape: f32[1,256], index: 2, kind: input, shape index: {}]
  %s3 = inlined_call_operand.vmem [shape: bf16[16,256], index: 3, kind: output, shape index: {}]
  %s4 = sld [smem:[#allocation0]]
  $region79: #{flownet_er_forward.13} parent=0
    _
  %s6 = ssub.s32 1, %s4
  %s7 = scalar_select 0, %s6, %s4
  $region1: #{flownet_er_forward.13} parent=0
    #allocation3 [shape = 'u8[73728]{0}', space=vmem, size = 0x12000, scoped, tag = 'input window, operand 0']
    loop: start=0, step=1, limit=4
    $region2: #{flownet_er_forward.13} parent=1 // loop_pre_header
      _
    $region3: #{flownet_er_forward.13} parent=1 // loop_header
      %s9 = sphi 0, %s13
      %p10 = scmp.ge.s32.totalorder %s9, 4
      %s16 = sphi 0, %s35
      %s17 = sphi 0, %s31
      %s18 = sphi 0, %s27
      %s19 = sphi 0, %s16
      %s20 = sphi 0, %s17
      %s21 = sphi 0, %s18
      %s22 = sphi 0, %s19
      %s23 = sphi 0, %s20
      %s24 = sphi 0, %s21
      %s40 = sphi 0, %s42
      %s43 = sphi 0, %s40
      %s44 = sphi 0, %s43
      %s60 = sphi 0, %s44
      %s68 = sphi 0, %s70
      %s71 = sphi 0, %s68
      %s72 = sphi 0, %s71
      %s88 = sphi 0, %s72
      %s94 = sphi 0, %s96
      %s97 = sphi 0, %s94
      %s98 = sphi 0, %s97
      %s114 = sphi 0, %s98
      %s122 = sphi 0, %s124
      %s125 = sphi 0, %s122
      %s126 = sphi 0, %s125
      %s142 = sphi 0, %s126
    $region4: #{flownet_er_forward.13} parent=1 // loop_header_branch
      %12 = sbr.rel (%p10) target = $region8
    $region5: #{flownet_er_forward.13} parent=1 // loop_body
      %s14 = ssub.s32 %s9, 1
      %s15 = ssub.s32 %s9, 2
      %s25 = sadd.s32 1, %s18
      %p26 = scmp.ge.s32.totalorder %s25, 2
      %s27 = scalar_select %p26, 0, %s25
      %s28 = sadd.s32 1, %s17
      %s29 = scalar_select %p26, %s28, %s17
      %p30 = scmp.ge.s32.totalorder %s29, 1
      %s31 = scalar_select %p30, 0, %s29
      %s32 = sadd.s32 1, %s16
      %s33 = scalar_select %p30, %s32, %s16
      %p34 = scmp.ge.s32.totalorder %s33, 1
      %s35 = scalar_select %p34, 0, %s33
      %s36 = ssub.s32 %s16, %s35
      %s37 = ssub.s32 %s18, %s27
      %s38 = sor.u32 %s36, %s37
      %p39 = scmp.eq.s32.totalorder %s38, 0
      %s41 = sadd.s32 %s40, 1
      %s42 = scalar_select %p39, %s40, %s41
      %p45 = pneg %p39
      %p46 = scmp.eq.s32.totalorder %s9, 1
      %p47 = por %p45, %p46
      %p48 = scmp.ne.s32.totalorder %s40, %s43
      %p49 = scmp.eq.s32.totalorder %s9, 0
      %p50 = por %p48, %p49
      %p51 = scmp.ne.s32.totalorder %s40, %s43
      %p52 = scmp.eq.s32.totalorder %s14, 1
      %p53 = por %p51, %p52
      %p54 = scmp.ne.s32.totalorder %s43, %s44
      %p55 = scmp.eq.s32.totalorder %s14, 0
      %p56 = por %p54, %p55
      %p57 = scmp.ne.s32.totalorder %s43, %s44
      %p58 = scmp.eq.s32.totalorder %s15, 1
      %p59 = por %p57, %p58
      %p61 = scmp.ne.s32.totalorder %s44, %s60
      %p62 = scmp.eq.s32.totalorder %s15, 0
      %p63 = por %p61, %p62
      %s64 = ssub.s32 %s18, %s27
      %s65 = ssub.s32 %s17, %s31
      %s66 = sor.u32 %s64, %s65
      %p67 = scmp.eq.s32.totalorder %s66, 0
      %s69 = sadd.s32 %s68, 1
      %s70 = scalar_select %p67, %s68, %s69
      %p73 = pneg %p67
      %p74 = scmp.eq.s32.totalorder %s9, 1
      %p75 = por %p73, %p74
      %p76 = scmp.ne.s32.totalorder %s68, %s71
      %p77 = scmp.eq.s32.totalorder %s9, 0
      %p78 = por %p76, %p77
      %p79 = scmp.ne.s32.totalorder %s68, %s71
      %p80 = scmp.eq.s32.totalorder %s14, 1
      %p81 = por %p79, %p80
      %p82 = scmp.ne.s32.totalorder %s71, %s72
      %p83 = scmp.eq.s32.totalorder %s14, 0
      %p84 = por %p82, %p83
      %p85 = scmp.ne.s32.totalorder %s71, %s72
      %p86 = scmp.eq.s32.totalorder %s15, 1
      %p87 = por %p85, %p86
      %p89 = scmp.ne.s32.totalorder %s72, %s88
      %p90 = scmp.eq.s32.totalorder %s15, 0
      %p91 = por %p89, %p90
      %s92 = ssub.s32 %s17, %s31
      %p93 = scmp.eq.s32.totalorder %s92, 0
      %s95 = sadd.s32 %s94, 1
      %s96 = scalar_select %p93, %s94, %s95
      %p99 = pneg %p93
      %p100 = scmp.eq.s32.totalorder %s9, 1
      %p101 = por %p99, %p100
      %p102 = scmp.ne.s32.totalorder %s94, %s97
      %p103 = scmp.eq.s32.totalorder %s9, 0
      %p104 = por %p102, %p103
      %p105 = scmp.ne.s32.totalorder %s94, %s97
      %p106 = scmp.eq.s32.totalorder %s14, 1
      %p107 = por %p105, %p106
      %p108 = scmp.ne.s32.totalorder %s97, %s98
      %p109 = scmp.eq.s32.totalorder %s14, 0
      %p110 = por %p108, %p109
      %p111 = scmp.ne.s32.totalorder %s97, %s98
      %p112 = scmp.eq.s32.totalorder %s15, 1
      %p113 = por %p111, %p112
      %p115 = scmp.ne.s32.totalorder %s98, %s114
      %p116 = scmp.eq.s32.totalorder %s15, 0
      %p117 = por %p115, %p116
      %s118 = ssub.s32 %s16, %s35
      %s119 = ssub.s32 %s17, %s31
      %s120 = sor.u32 %s118, %s119
      %p121 = scmp.eq.s32.totalorder %s120, 0
      %s123 = sadd.s32 %s122, 1
      %s124 = scalar_select %p121, %s122, %s123
      %p127 = pneg %p121
      %p128 = scmp.eq.s32.totalorder %s9, 1
      %p129 = por %p127, %p128
      %p130 = scmp.ne.s32.totalorder %s122, %s125
      %p131 = scmp.eq.s32.totalorder %s9, 0
      %p132 = por %p130, %p131
      %p133 = scmp.ne.s32.totalorder %s122, %s125
      %p134 = scmp.eq.s32.totalorder %s14, 1
      %p135 = por %p133, %p134
      %p136 = scmp.ne.s32.totalorder %s125, %s126
      %p137 = scmp.eq.s32.totalorder %s14, 0
      %p138 = por %p136, %p137
      %p139 = scmp.ne.s32.totalorder %s125, %s126
      %p140 = scmp.eq.s32.totalorder %s15, 1
      %p141 = por %p139, %p140
      %p143 = scmp.ne.s32.totalorder %s126, %s142
      %p144 = scmp.eq.s32.totalorder %s15, 0
      %p145 = por %p143, %p144
      %p146 = scmp.le.s32.totalorder 1, %s9
      %p147 = scmp.lt.s32.totalorder %s9, 3
      %p148 = pnand %p146, %p147
      %p149 = pneg %p148
      // Predicated region
      $region9: #{flownet_er_forward.13} parent=5 // pred_check
        _
      $region10: #{flownet_er_forward.13} parent=5 // pred_check_branch
        %151 = sbr.rel (%p148) target = $region12
      $region11: #{flownet_er_forward.13} parent=5 // pred_region
        %s152 = ssub.s32 %s9, 1
        // Predicated region
        $region13: #{flownet_er_forward.13} parent=11 // pred_check
          %p153 = pneg %p110
        $region14: #{flownet_er_forward.13} parent=11 // pred_check_branch
          %155 = sbr.rel (%p153) target = $region16
        $region15: #{flownet_er_forward.13} parent=11 // pred_region
          %s156 = smul.u32 2, %s20
          %p157 = scmp.lt.s32.totalorder %s156, 1
          %s158 = scalar_select %p157, %s156, 1
          %s159 = scalar_lea.vmem %s2, %s158
          %s160 = smul.u32 2, %s20
        $region16: #{flownet_er_forward.13} parent=11 // pred_fallthru
          _
      $region12: #{flownet_er_forward.13} parent=5 // pred_fallthru
        _
      %p161 = scmp.lt.s32.totalorder %s9, 2
      // Predicated region
      $region17: #{flownet_er_forward.13} parent=5 // pred_check
        %p162 = pneg %p161
      $region18: #{flownet_er_forward.13} parent=5 // pred_check_branch
        %164 = sbr.rel (%p162) target = $region20
      $region19: #{flownet_er_forward.13} parent=5 // pred_region
        // Predicated region
        $region21: #{flownet_er_forward.13} parent=19 // pred_check
          %p165 = pneg %p50
        $region22: #{flownet_er_forward.13} parent=19 // pred_check_branch
          %167 = sbr.rel (%p165) target = $region24
        $region23: #{flownet_er_forward.13} parent=19 // pred_region
          %s168 = sand.u32 %s40, 1
          %s169 = sand.u32 %s40, 1
          %s170 = smul.addr %s169, 72
          %s171 = scalar_lea.vmem [#allocation3], %s170
          %s172 = smul.u32 2, %s16
          %s173 = smul.u32 9, %s18
          %s174 = smul.addr %s172, 18
          %s175 = sadd.s32 %s173, %s174
          %s176 = smul.addr %s175, 4
          %s177 = scalar_lea.vmem %s0, %s176
          // Predicated region
          $region25: #{flownet_er_forward.13} parent=23 // pred_check
            _
          $region26: #{flownet_er_forward.13} parent=23 // pred_check_branch
            %179 = sbr.rel (0) target = $region28
          $region27: #{flownet_er_forward.13} parent=23 // pred_region
            // Predicated region
            $region29: #{flownet_er_forward.13} parent=27 // pred_check
              _
            $region30: #{flownet_er_forward.13} parent=27 // pred_check_branch
              %181 = sbr.rel (0) target = $region32
            $region31: #{flownet_er_forward.13} parent=27 // pred_region
              %s182 = scalar_lea.vmem %s177, 32
              %s183 = scalar_lea.vmem %s171, 32 [#allocation3]
              loop: start=0, step=1, limit=1
              $region33: #{flownet_er_forward.13} parent=31 // loop_pre_header
                _
              $region34: #{flownet_er_forward.13} parent=31 // loop_header
                %s185 = sphi 0, %s189
                %p186 = scmp.ge.s32.totalorder %s185, 1
                %s190 = sphi %s177, %s177
                %s191 = sphi %s171, %s171
              $region35: #{flownet_er_forward.13} parent=31 // loop_header_branch
                %188 = sbr.rel (%p186) target = $region39
              $region36: #{flownet_er_forward.13} parent=31 // loop_body
                %v192 = vld [vmem:[%s190] sm:$0xff]
                %193 = vst [vmem:[%s191] sm:$0xff] %v192
                %v194 = vld [vmem:[%s190 + $0x8] sm:$0xff]
                %195 = vst [vmem:[%s191 + $0x8] sm:$0xff] %v194
                %v196 = vld [vmem:[%s190 + $0x10] sm:$0xff]
                %197 = vst [vmem:[%s191 + $0x10] sm:$0xff] %v196
                %v198 = vld [vmem:[%s190 + $0x18] sm:$0xff]
                %199 = vst [vmem:[%s191 + $0x18] sm:$0xff] %v198
                %v200 = vld [vmem:[%s190 + $0x48] sm:$0xff]
                %201 = vst [vmem:[%s191 + $0x24] sm:$0xff] %v200
                %v202 = vld [vmem:[%s190 + $0x50] sm:$0xff]
                %203 = vst [vmem:[%s191 + $0x2c] sm:$0xff] %v202
                %v204 = vld [vmem:[%s190 + $0x58] sm:$0xff]
                %205 = vst [vmem:[%s191 + $0x34] sm:$0xff] %v204
                %v206 = vld [vmem:[%s190 + $0x60] sm:$0xff]
                %207 = vst [vmem:[%s191 + $0x3c] sm:$0xff] %v206
              $region37: #{flownet_er_forward.13} parent=31 // loop_footer
                %s189 = sadd.s32 1, %s185
              $region38: #{flownet_er_forward.13} parent=31 // loop_footer_branch
                %184 = sbr.rel target = $region34
              $region39: #{flownet_er_forward.13} parent=31 // loop_exit
                _
              %s209 = ssub.s32 16, 1
              loop: start=0, step=1, limit=1
              $region40: #{flownet_er_forward.13} parent=31 // loop_pre_header
                _
              $region41: #{flownet_er_forward.13} parent=31 // loop_header
                %s211 = sphi 0, %s215
                %p212 = scmp.ge.s32.totalorder %s211, 1
                %s216 = sphi %s182, %s182
                %s217 = sphi %s183, %s183
              $region42: #{flownet_er_forward.13} parent=31 // loop_header_branch
                %214 = sbr.rel (%p212) target = $region46
              $region43: #{flownet_er_forward.13} parent=31 // loop_body
                %v218 = vld [vmem:[%s216] sm:%s209]
                %219 = vst [vmem:[%s217] sm:%s209] %v218
                %v220 = vld [vmem:[%s216 + $0x48] sm:%s209]
                %221 = vst [vmem:[%s217 + $0x24] sm:%s209] %v220
              $region44: #{flownet_er_forward.13} parent=31 // loop_footer
                %s215 = sadd.s32 1, %s211
              $region45: #{flownet_er_forward.13} parent=31 // loop_footer_branch
                %210 = sbr.rel target = $region41
              $region46: #{flownet_er_forward.13} parent=31 // loop_exit
                _
            $region32: #{flownet_er_forward.13} parent=27 // pred_fallthru
              _
          $region28: #{flownet_er_forward.13} parent=23 // pred_fallthru
            _
          %222 = vnop
        $region24: #{flownet_er_forward.13} parent=19 // pred_fallthru
          _
        // Predicated region
        $region47: #{flownet_er_forward.13} parent=19 // pred_check
          %p223 = pneg %p78
        $region48: #{flownet_er_forward.13} parent=19 // pred_check_branch
          %225 = sbr.rel (%p223) target = $region50
        $region49: #{flownet_er_forward.13} parent=19 // pred_region
          %s226 = smul.u32 144, %s18
          %s227 = smul.u32 2, %s17
          %p228 = scmp.lt.s32.totalorder %s226, 287
          %s229 = scalar_select %p228, %s226, 287
          %p230 = scmp.lt.s32.totalorder %s227, 1
          %s231 = scalar_select %p230, %s227, 1
          %s232 = smul.addr %s229, 2
          %s233 = sadd.s32 %s231, %s232
          %s234 = smul.addr %s233, 4
          %s235 = scalar_lea.vmem %s1, %s234
          %s236 = smul.u32 144, %s18
          %s237 = smul.u32 2, %s17
        $region50: #{flownet_er_forward.13} parent=19 // pred_fallthru
          _
      $region20: #{flownet_er_forward.13} parent=5 // pred_fallthru
        _
      %p238 = scmp.le.s32.totalorder 1, %s9
      %p239 = scmp.lt.s32.totalorder %s9, 3
      %p240 = pnand %p238, %p239
      %p241 = pneg %p240
      // Predicated region
      $region51: #{flownet_er_forward.13} parent=5 // pred_check
        _
      $region52: #{flownet_er_forward.13} parent=5 // pred_check_branch
        %243 = sbr.rel (%p240) target = $region54
      $region53: #{flownet_er_forward.13} parent=5 // pred_region
        %s244 = ssub.s32 %s9, 1
        %s245 = sand.u32 %s43, 1
        %s246 = sand.u32 %s43, 1
        %s247 = smul.addr %s246, 72
        %s248 = scalar_lea.vmem [#allocation3], %s247
        // Predicated region
        $region55: #{flownet_er_forward.13} parent=53 // pred_check
          %p249 = pneg %p56
        $region56: #{flownet_er_forward.13} parent=53 // pred_check_branch
          %251 = sbr.rel (%p249) target = $region58
        $region57: #{flownet_er_forward.13} parent=53 // pred_region
          _
        $region58: #{flownet_er_forward.13} parent=53 // pred_fallthru
          _
        %s252 = sand.u32 %s43, 1
        %s253 = sand.u32 %s43, 1
        %s254 = smul.addr %s253, 72
        %s255 = scalar_lea.vmem [#allocation3], %s254
        %p256 = pneg %p56
        %p257 = pneg %p53
        %s258 = smul.u32 144, %s21
        %s259 = smul.u32 2, %s20
        %p260 = scmp.lt.s32.totalorder %s258, 287
        %s261 = scalar_select %p260, %s258, 287
        %p262 = scmp.lt.s32.totalorder %s259, 1
        %s263 = scalar_select %p262, %s259, 1
        %s264 = smul.addr %s261, 2
        %s265 = sadd.s32 %s263, %s264
        %s266 = smul.addr %s265, 4
        %s267 = scalar_lea.vmem %s1, %s266
        %p268 = pneg %p84
        %p269 = pneg %p81
        %s270 = smul.u32 2, %s20
        %p271 = scmp.lt.s32.totalorder %s270, 1
        %s272 = scalar_select %p271, %s270, 1
        %s273 = scalar_lea.vmem %s2, %s272
        %p274 = pneg %p110
        %p275 = pneg %p107
        %p276 = pneg %p138
        %p277 = pneg %p135
        %s278 = smul.u32 2, %s19
        %s279 = smul.u32 2, %s20
        %p280 = scmp.lt.s32.totalorder %s278, 1
        %s281 = scalar_select %p280, %s278, 1
        %p282 = scmp.lt.s32.totalorder %s279, 1
        %s283 = scalar_select %p282, %s279, 1
        %s284 = smul.addr %s281, 2
        %s285 = sadd.s32 %s283, %s284
        %s286 = smul.addr %s285, 4
        %s287 = scalar_lea.vmem %s3, %s286
        %s288 = smul.u32 2, %s19
        %s289 = smul.u32 9, %s21
        %s290 = smul.u32 144, %s21
        %s291 = smul.u32 2, %s20
        %p292 = scmp.lt.s32.totalorder %s290, 287
        %s293 = scalar_select %p292, %s290, 287
        %p294 = scmp.lt.s32.totalorder %s291, 1
        %s295 = scalar_select %p294, %s291, 1
        %s296 = smul.addr %s293, 2
        %s297 = sadd.s32 %s295, %s296
        %s298 = smul.addr %s297, 4
        %s299 = scalar_lea.vmem %s1, %s298
        %s300 = smul.u32 144, %s21
        %s301 = smul.u32 2, %s20
        %s302 = smul.u32 2, %s20
        %p303 = scmp.lt.s32.totalorder %s302, 1
        %s304 = scalar_select %p303, %s302, 1
        %s305 = scalar_lea.vmem %s2, %s304
        %s306 = smul.u32 2, %s20
        %s307 = smul.u32 2, %s19
        %s308 = smul.u32 2, %s20
        %p309 = scmp.lt.s32.totalorder %s307, 1
        %s310 = scalar_select %p309, %s307, 1
        %p311 = scmp.lt.s32.totalorder %s308, 1
        %s312 = scalar_select %p311, %s308, 1
        %s313 = smul.addr %s310, 2
        %s314 = sadd.s32 %s312, %s313
        %s315 = smul.addr %s314, 4
        %s316 = scalar_lea.vmem %s3, %s315
        %s317 = smul.u32 2, %s19
        %s318 = smul.u32 2, %s20
        %p319 = scmp.eq.s32.totalorder %s21, 0
        // Predicated region
        $region59: #{flownet_er_forward.13} parent=53 // pred_check
          %p320 = pneg %p319
        $region60: #{flownet_er_forward.13} parent=53 // pred_check_branch
          %322 = sbr.rel (%p320) target = $region62
        $region61: #{flownet_er_forward.13} parent=53 // pred_region
          %323 = vst [vmem:[#allocation2] sm:$0xff] 0.0
          %324 = vst [vmem:[#allocation2 + $0x8] sm:$0xff] 0.0
          %325 = vst [vmem:[#allocation2 + $0x10] sm:$0xff] 0.0
          %326 = vst [vmem:[#allocation2 + $0x18] sm:$0xff] 0.0
        $region62: #{flownet_er_forward.13} parent=53 // pred_fallthru
          _
        %v327 = vld [vmem:[#allocation2] sm:$0xff]
        %v328 = vld [vmem:[#allocation2 + $0x8] sm:$0xff]
        %v329 = vld [vmem:[#allocation2 + $0x10] sm:$0xff]
        %v330 = vld [vmem:[#allocation2 + $0x18] sm:$0xff]
        %v331 = vld [vmem:[%s248] sm:$0xff]
        %v332 = vld [vmem:[%s248 + $0x8] sm:$0xff]
        %v333 = vld [vmem:[%s248 + $0x10] sm:$0xff]
        %v334 = vld [vmem:[%s248 + $0x18] sm:$0xff]
        %v335 = vld [vmem:[%s248 + $0x20] sm:$0xf]
        %v336 = vld [vmem:[%s248 + $0x24] sm:$0xff]
        %v337 = vld [vmem:[%s248 + $0x2c] sm:$0xff]
        %v338 = vld [vmem:[%s248 + $0x34] sm:$0xff]
        %v339 = vld [vmem:[%s248 + $0x3c] sm:$0xff]
        %v340 = vld [vmem:[%s248 + $0x44] sm:$0xf]
        %v341 = vld [vmem:[%s299] sm:$0xff]
        %v342 = vld [vmem:[%s299 + $0x8] sm:$0xff]
        %v343 = vld [vmem:[%s299 + $0x10] sm:$0xff]
        %v344 = vld [vmem:[%s299 + $0x18] sm:$0xff]
        %v345 = vld [vmem:[%s299 + $0x20] sm:$0xff]
        %v346 = vld [vmem:[%s299 + $0x28] sm:$0xff]
        %v347 = vld [vmem:[%s299 + $0x30] sm:$0xff]
        %v348 = vld [vmem:[%s299 + $0x38] sm:$0xff]
        %v349 = vld [vmem:[%s299 + $0x40] sm:$0xff]
        %v350 = vld [vmem:[%s299 + $0x48] sm:$0xff]
        %v351 = vld [vmem:[%s299 + $0x50] sm:$0xff]
        %v352 = vld [vmem:[%s299 + $0x58] sm:$0xff]
        %v353 = vld [vmem:[%s299 + $0x60] sm:$0xff]
        %v354 = vld [vmem:[%s299 + $0x68] sm:$0xff]
        %v355 = vld [vmem:[%s299 + $0x70] sm:$0xff]
        %v356 = vld [vmem:[%s299 + $0x78] sm:$0xff]
        %v357 = vld [vmem:[%s299 + $0x80] sm:$0xff]
        %v358 = vld [vmem:[%s299 + $0x88] sm:$0xff]
        %v359 = vld [vmem:[%s299 + $0x90] sm:$0xff]
        %v360 = vld [vmem:[%s299 + $0x98] sm:$0xff]
        %v361 = vld [vmem:[%s299 + $0xa0] sm:$0xff]
        %v362 = vld [vmem:[%s299 + $0xa8] sm:$0xff]
        %v363 = vld [vmem:[%s299 + $0xb0] sm:$0xff]
        %v364 = vld [vmem:[%s299 + $0xb8] sm:$0xff]
        %v365 = vld [vmem:[%s299 + $0xc0] sm:$0xff]
        %v366 = vld [vmem:[%s299 + $0xc8] sm:$0xff]
        %v367 = vld [vmem:[%s299 + $0xd0] sm:$0xff]
        %v368 = vld [vmem:[%s299 + $0xd8] sm:$0xff]
        %v369 = vld [vmem:[%s299 + $0xe0] sm:$0xff]
        %v370 = vld [vmem:[%s299 + $0xe8] sm:$0xff]
        %v371 = vld [vmem:[%s299 + $0xf0] sm:$0xff]
        %v372 = vld [vmem:[%s299 + $0xf8] sm:$0xff]
        %v373 = vld [vmem:[%s299 + $0x100] sm:$0xff]
        %v374 = vld [vmem:[%s299 + $0x108] sm:$0xff]
        %v375 = vld [vmem:[%s299 + $0x110] sm:$0xff]
        %v376 = vld [vmem:[%s299 + $0x118] sm:$0xff]
        %v377 = vld [vmem:[%s299 + $0x120] sm:$0xff]
        %v378 = vld [vmem:[%s299 + $0x128] sm:$0xff]
        %v379 = vld [vmem:[%s299 + $0x130] sm:$0xff]
        %v380 = vld [vmem:[%s299 + $0x138] sm:$0xff]
        %v381 = vld [vmem:[%s299 + $0x140] sm:$0xff]
        %v382 = vld [vmem:[%s299 + $0x148] sm:$0xff]
        %v383 = vld [vmem:[%s299 + $0x150] sm:$0xff]
        %v384 = vld [vmem:[%s299 + $0x158] sm:$0xff]
        %v385 = vld [vmem:[%s299 + $0x160] sm:$0xff]
        %v386 = vld [vmem:[%s299 + $0x168] sm:$0xff]
        %v387 = vld [vmem:[%s299 + $0x170] sm:$0xff]
        %v388 = vld [vmem:[%s299 + $0x178] sm:$0xff]
        %v389 = vld [vmem:[%s299 + $0x180] sm:$0xff]
        %v390 = vld [vmem:[%s299 + $0x188] sm:$0xff]
        %v391 = vld [vmem:[%s299 + $0x190] sm:$0xff]
        %v392 = vld [vmem:[%s299 + $0x198] sm:$0xff]
        %v393 = vld [vmem:[%s299 + $0x1a0] sm:$0xff]
        %v394 = vld [vmem:[%s299 + $0x1a8] sm:$0xff]
        %v395 = vld [vmem:[%s299 + $0x1b0] sm:$0xff]
        %v396 = vld [vmem:[%s299 + $0x1b8] sm:$0xff]
        %v397 = vld [vmem:[%s299 + $0x1c0] sm:$0xff]
        %v398 = vld [vmem:[%s299 + $0x1c8] sm:$0xff]
        %v399 = vld [vmem:[%s299 + $0x1d0] sm:$0xff]
        %v400 = vld [vmem:[%s299 + $0x1d8] sm:$0xff]
        %v401 = vld [vmem:[%s299 + $0x1e0] sm:$0xff]
        %v402 = vld [vmem:[%s299 + $0x1e8] sm:$0xff]
        %v403 = vld [vmem:[%s299 + $0x1f0] sm:$0xff]
        %v404 = vld [vmem:[%s299 + $0x1f8] sm:$0xff]
        %v405 = vld [vmem:[%s299 + $0x200] sm:$0xff]
        %v406 = vld [vmem:[%s299 + $0x208] sm:$0xff]
        %v407 = vld [vmem:[%s299 + $0x210] sm:$0xff]
        %v408 = vld [vmem:[%s299 + $0x218] sm:$0xff]
        %v409 = vld [vmem:[%s299 + $0x220] sm:$0xff]
        %v410 = vld [vmem:[%s299 + $0x228] sm:$0xff]
        %v411 = vld [vmem:[%s299 + $0x230] sm:$0xff]
        %v412 = vld [vmem:[%s299 + $0x238] sm:$0xff]
        %v413 = vld [vmem:[%s299 + $0x240] sm:$0xff]
        %v414 = vld [vmem:[%s299 + $0x248] sm:$0xff]
        %v415 = vld [vmem:[%s299 + $0x250] sm:$0xff]
        %v416 = vld [vmem:[%s299 + $0x258] sm:$0xff]
        %v417 = vld [vmem:[%s299 + $0x260] sm:$0xff]
        %v418 = vld [vmem:[%s299 + $0x268] sm:$0xff]
        %v419 = vld [vmem:[%s299 + $0x270] sm:$0xff]
        %v420 = vld [vmem:[%s299 + $0x278] sm:$0xff]
        %v421 = vld [vmem:[%s299 + $0x280] sm:$0xff]
        %v422 = vld [vmem:[%s299 + $0x288] sm:$0xff]
        %v423 = vld [vmem:[%s299 + $0x290] sm:$0xff]
        %v424 = vld [vmem:[%s299 + $0x298] sm:$0xff]
        %v425 = vld [vmem:[%s299 + $0x2a0] sm:$0xff]
        %v426 = vld [vmem:[%s299 + $0x2a8] sm:$0xff]
        %v427 = vld [vmem:[%s299 + $0x2b0] sm:$0xff]
        %v428 = vld [vmem:[%s299 + $0x2b8] sm:$0xff]
        %v429 = vld [vmem:[%s299 + $0x2c0] sm:$0xff]
        %v430 = vld [vmem:[%s299 + $0x2c8] sm:$0xff]
        %v431 = vld [vmem:[%s299 + $0x2d0] sm:$0xff]
        %v432 = vld [vmem:[%s299 + $0x2d8] sm:$0xff]
        %v433 = vld [vmem:[%s299 + $0x2e0] sm:$0xff]
        %v434 = vld [vmem:[%s299 + $0x2e8] sm:$0xff]
        %v435 = vld [vmem:[%s299 + $0x2f0] sm:$0xff]
        %v436 = vld [vmem:[%s299 + $0x2f8] sm:$0xff]
        %v437 = vld [vmem:[%s299 + $0x300] sm:$0xff]
        %v438 = vld [vmem:[%s299 + $0x308] sm:$0xff]
        %v439 = vld [vmem:[%s299 + $0x310] sm:$0xff]
        %v440 = vld [vmem:[%s299 + $0x318] sm:$0xff]
        %v441 = vld [vmem:[%s299 + $0x320] sm:$0xff]
        %v442 = vld [vmem:[%s299 + $0x328] sm:$0xff]
        %v443 = vld [vmem:[%s299 + $0x330] sm:$0xff]
        %v444 = vld [vmem:[%s299 + $0x338] sm:$0xff]
        %v445 = vld [vmem:[%s299 + $0x340] sm:$0xff]
        %v446 = vld [vmem:[%s299 + $0x348] sm:$0xff]
        %v447 = vld [vmem:[%s299 + $0x350] sm:$0xff]
        %v448 = vld [vmem:[%s299 + $0x358] sm:$0xff]
        %v449 = vld [vmem:[%s299 + $0x360] sm:$0xff]
        %v450 = vld [vmem:[%s299 + $0x368] sm:$0xff]
        %v451 = vld [vmem:[%s299 + $0x370] sm:$0xff]
        %v452 = vld [vmem:[%s299 + $0x378] sm:$0xff]
        %v453 = vld [vmem:[%s299 + $0x380] sm:$0xff]
        %v454 = vld [vmem:[%s299 + $0x388] sm:$0xff]
        %v455 = vld [vmem:[%s299 + $0x390] sm:$0xff]
        %v456 = vld [vmem:[%s299 + $0x398] sm:$0xff]
        %v457 = vld [vmem:[%s299 + $0x3a0] sm:$0xff]
        %v458 = vld [vmem:[%s299 + $0x3a8] sm:$0xff]
        %v459 = vld [vmem:[%s299 + $0x3b0] sm:$0xff]
        %v460 = vld [vmem:[%s299 + $0x3b8] sm:$0xff]
        %v461 = vld [vmem:[%s299 + $0x3c0] sm:$0xff]
        %v462 = vld [vmem:[%s299 + $0x3c8] sm:$0xff]
        %v463 = vld [vmem:[%s299 + $0x3d0] sm:$0xff]
        %v464 = vld [vmem:[%s299 + $0x3d8] sm:$0xff]
        %v465 = vld [vmem:[%s299 + $0x3e0] sm:$0xff]
        %v466 = vld [vmem:[%s299 + $0x3e8] sm:$0xff]
        %v467 = vld [vmem:[%s299 + $0x3f0] sm:$0xff]
        %v468 = vld [vmem:[%s299 + $0x3f8] sm:$0xff]
        %v469 = vld [vmem:[%s299 + $0x400] sm:$0xff]
        %v470 = vld [vmem:[%s299 + $0x408] sm:$0xff]
        %v471 = vld [vmem:[%s299 + $0x410] sm:$0xff]
        %v472 = vld [vmem:[%s299 + $0x418] sm:$0xff]
        %v473 = vld [vmem:[%s299 + $0x420] sm:$0xff]
        %v474 = vld [vmem:[%s299 + $0x428] sm:$0xff]
        %v475 = vld [vmem:[%s299 + $0x430] sm:$0xff]
        %v476 = vld [vmem:[%s299 + $0x438] sm:$0xff]
        %v477 = vld [vmem:[%s299 + $0x440] sm:$0xff]
        %v478 = vld [vmem:[%s299 + $0x448] sm:$0xff]
        %v479 = vld [vmem:[%s299 + $0x450] sm:$0xff]
        %v480 = vld [vmem:[%s299 + $0x458] sm:$0xff]
        %v481 = vld [vmem:[%s299 + $0x460] sm:$0xff]
        %v482 = vld [vmem:[%s299 + $0x468] sm:$0xff]
        %v483 = vld [vmem:[%s299 + $0x470] sm:$0xff]
        %v484 = vld [vmem:[%s299 + $0x478] sm:$0xff]
        %v495 = vunpack.c.l.b16 %v331
        %v496 = vunpack.c.h.b16 %v331
        %v497 = vunpack.c.l.b16 %v332
        %v498 = vunpack.c.h.b16 %v332
        %v499 = vunpack.c.l.b16 %v333
        %v500 = vunpack.c.h.b16 %v333
        %v501 = vunpack.c.l.b16 %v334
        %v502 = vunpack.c.h.b16 %v334
        %v503 = vunpack.c.l.b16 %v335
        %v504 = vunpack.c.l.b16 %v336
        %v505 = vunpack.c.h.b16 %v336
        %v506 = vunpack.c.l.b16 %v337
        %v507 = vunpack.c.h.b16 %v337
        %v508 = vunpack.c.l.b16 %v338
        %v509 = vunpack.c.h.b16 %v338
        %v510 = vunpack.c.l.b16 %v339
        %v511 = vunpack.c.h.b16 %v339
        %v512 = vunpack.c.l.b16 %v340
        %v513 = vpack.c.b16 %v504, %v495
        %v514 = vpack.c.b16 %v505, %v496
        %v515 = vpack.c.b16 %v506, %v497
        %v516 = vpack.c.b16 %v507, %v498
        %v517 = vpack.c.b16 %v508, %v499
        %v518 = vpack.c.b16 %v509, %v500
        %v519 = vpack.c.b16 %v510, %v501
        %v520 = vpack.c.b16 %v511, %v502
        %v521 = vpack.c.b16 %v512, %v503
        %v675 = vunpack.c.l.b16 %v341
        %v676 = vunpack.c.h.b16 %v341
        %v677 = vunpack.c.l.b16 %v342
        %v678 = vunpack.c.h.b16 %v342
        %v679 = vunpack.c.l.b16 %v343
        %v680 = vunpack.c.h.b16 %v343
        %v681 = vunpack.c.l.b16 %v344
        %v682 = vunpack.c.h.b16 %v344
        %v683 = vunpack.c.l.b16 %v345
        %v684 = vunpack.c.h.b16 %v345
        %v685 = vunpack.c.l.b16 %v346
        %v686 = vunpack.c.h.b16 %v346
        %v687 = vunpack.c.l.b16 %v347
        %v688 = vunpack.c.h.b16 %v347
        %v689 = vunpack.c.l.b16 %v348
        %v690 = vunpack.c.h.b16 %v348
        %v691 = vunpack.c.l.b16 %v349
        %v692 = vunpack.c.h.b16 %v349
        %v693 = vunpack.c.l.b16 %v350
        %v694 = vunpack.c.h.b16 %v350
        %v695 = vunpack.c.l.b16 %v351
        %v696 = vunpack.c.h.b16 %v351
        %v697 = vunpack.c.l.b16 %v352
        %v698 = vunpack.c.h.b16 %v352
        %v699 = vunpack.c.l.b16 %v353
        %v700 = vunpack.c.h.b16 %v353
        %v701 = vunpack.c.l.b16 %v354
        %v702 = vunpack.c.h.b16 %v354
        %v703 = vunpack.c.l.b16 %v355
        %v704 = vunpack.c.h.b16 %v355
        %v705 = vunpack.c.l.b16 %v356
        %v706 = vunpack.c.h.b16 %v356
        %v707 = vunpack.c.l.b16 %v357
        %v708 = vunpack.c.h.b16 %v357
        %v709 = vunpack.c.l.b16 %v358
        %v710 = vunpack.c.h.b16 %v358
        %v711 = vunpack.c.l.b16 %v359
        %v712 = vunpack.c.h.b16 %v359
        %v713 = vunpack.c.l.b16 %v360
        %v714 = vunpack.c.h.b16 %v360
        %v715 = vunpack.c.l.b16 %v361
        %v716 = vunpack.c.h.b16 %v361
        %v717 = vunpack.c.l.b16 %v362
        %v718 = vunpack.c.h.b16 %v362
        %v719 = vunpack.c.l.b16 %v363
        %v720 = vunpack.c.h.b16 %v363
        %v721 = vunpack.c.l.b16 %v364
        %v722 = vunpack.c.h.b16 %v364
        %v723 = vunpack.c.l.b16 %v365
        %v724 = vunpack.c.h.b16 %v365
        %v725 = vunpack.c.l.b16 %v366
        %v726 = vunpack.c.h.b16 %v366
        %v727 = vunpack.c.l.b16 %v367
        %v728 = vunpack.c.h.b16 %v367
        %v729 = vunpack.c.l.b16 %v368
        %v730 = vunpack.c.h.b16 %v368
        %v731 = vunpack.c.l.b16 %v369
        %v732 = vunpack.c.h.b16 %v369
        %v733 = vunpack.c.l.b16 %v370
        %v734 = vunpack.c.h.b16 %v370
        %v735 = vunpack.c.l.b16 %v371
        %v736 = vunpack.c.h.b16 %v371
        %v737 = vunpack.c.l.b16 %v372
        %v738 = vunpack.c.h.b16 %v372
        %v739 = vunpack.c.l.b16 %v373
        %v740 = vunpack.c.h.b16 %v373
        %v741 = vunpack.c.l.b16 %v374
        %v742 = vunpack.c.h.b16 %v374
        %v743 = vunpack.c.l.b16 %v375
        %v744 = vunpack.c.h.b16 %v375
        %v745 = vunpack.c.l.b16 %v376
        %v746 = vunpack.c.h.b16 %v376
        %v747 = vunpack.c.l.b16 %v377
        %v748 = vunpack.c.h.b16 %v377
        %v749 = vunpack.c.l.b16 %v378
        %v750 = vunpack.c.h.b16 %v378
        %v751 = vunpack.c.l.b16 %v379
        %v752 = vunpack.c.h.b16 %v379
        %v753 = vunpack.c.l.b16 %v380
        %v754 = vunpack.c.h.b16 %v380
        %v755 = vunpack.c.l.b16 %v381
        %v756 = vunpack.c.h.b16 %v381
        %v757 = vunpack.c.l.b16 %v382
        %v758 = vunpack.c.h.b16 %v382
        %v759 = vunpack.c.l.b16 %v383
        %v760 = vunpack.c.h.b16 %v383
        %v761 = vunpack.c.l.b16 %v384
        %v762 = vunpack.c.h.b16 %v384
        %v763 = vunpack.c.l.b16 %v385
        %v764 = vunpack.c.h.b16 %v385
        %v765 = vunpack.c.l.b16 %v386
        %v766 = vunpack.c.h.b16 %v386
        %v767 = vunpack.c.l.b16 %v387
        %v768 = vunpack.c.h.b16 %v387
        %v769 = vunpack.c.l.b16 %v388
        %v770 = vunpack.c.h.b16 %v388
        %v771 = vunpack.c.l.b16 %v389
        %v772 = vunpack.c.h.b16 %v389
        %v773 = vunpack.c.l.b16 %v390
        %v774 = vunpack.c.h.b16 %v390
        %v775 = vunpack.c.l.b16 %v391
        %v776 = vunpack.c.h.b16 %v391
        %v777 = vunpack.c.l.b16 %v392
        %v778 = vunpack.c.h.b16 %v392
        %v779 = vunpack.c.l.b16 %v393
        %v780 = vunpack.c.h.b16 %v393
        %v781 = vunpack.c.l.b16 %v394
        %v782 = vunpack.c.h.b16 %v394
        %v783 = vunpack.c.l.b16 %v395
        %v784 = vunpack.c.h.b16 %v395
        %v785 = vunpack.c.l.b16 %v396
        %v786 = vunpack.c.h.b16 %v396
        %v787 = vunpack.c.l.b16 %v397
        %v788 = vunpack.c.h.b16 %v397
        %v789 = vunpack.c.l.b16 %v398
        %v790 = vunpack.c.h.b16 %v398
        %v791 = vunpack.c.l.b16 %v399
        %v792 = vunpack.c.h.b16 %v399
        %v793 = vunpack.c.l.b16 %v400
        %v794 = vunpack.c.h.b16 %v400
        %v795 = vunpack.c.l.b16 %v401
        %v796 = vunpack.c.h.b16 %v401
        %v797 = vunpack.c.l.b16 %v402
        %v798 = vunpack.c.h.b16 %v402
        %v799 = vunpack.c.l.b16 %v403
        %v800 = vunpack.c.h.b16 %v403
        %v801 = vunpack.c.l.b16 %v404
        %v802 = vunpack.c.h.b16 %v404
        %v803 = vunpack.c.l.b16 %v405
        %v804 = vunpack.c.h.b16 %v405
        %v805 = vunpack.c.l.b16 %v406
        %v806 = vunpack.c.h.b16 %v406
        %v807 = vunpack.c.l.b16 %v407
        %v808 = vunpack.c.h.b16 %v407
        %v809 = vunpack.c.l.b16 %v408
        %v810 = vunpack.c.h.b16 %v408
        %v811 = vunpack.c.l.b16 %v409
        %v812 = vunpack.c.h.b16 %v409
        %v813 = vunpack.c.l.b16 %v410
        %v814 = vunpack.c.h.b16 %v410
        %v815 = vunpack.c.l.b16 %v411
        %v816 = vunpack.c.h.b16 %v411
        %v817 = vunpack.c.l.b16 %v412
        %v818 = vunpack.c.h.b16 %v412
        %v819 = vunpack.c.l.b16 %v413
        %v820 = vunpack.c.h.b16 %v413
        %v821 = vunpack.c.l.b16 %v414
        %v822 = vunpack.c.h.b16 %v414
        %v823 = vunpack.c.l.b16 %v415
        %v824 = vunpack.c.h.b16 %v415
        %v825 = vunpack.c.l.b16 %v416
        %v826 = vunpack.c.h.b16 %v416
        %v827 = vunpack.c.l.b16 %v417
        %v828 = vunpack.c.h.b16 %v417
        %v829 = vunpack.c.l.b16 %v418
        %v830 = vunpack.c.h.b16 %v418
        %v831 = vunpack.c.l.b16 %v419
        %v832 = vunpack.c.h.b16 %v419
        %v833 = vunpack.c.l.b16 %v420
        %v834 = vunpack.c.h.b16 %v420
        %v835 = vunpack.c.l.b16 %v421
        %v836 = vunpack.c.h.b16 %v421
        %v837 = vunpack.c.l.b16 %v422
        %v838 = vunpack.c.h.b16 %v422
        %v839 = vunpack.c.l.b16 %v423
        %v840 = vunpack.c.h.b16 %v423
        %v841 = vunpack.c.l.b16 %v424
        %v842 = vunpack.c.h.b16 %v424
        %v843 = vunpack.c.l.b16 %v425
        %v844 = vunpack.c.h.b16 %v425
        %v845 = vunpack.c.l.b16 %v426
        %v846 = vunpack.c.h.b16 %v426
        %v847 = vunpack.c.l.b16 %v427
        %v848 = vunpack.c.h.b16 %v427
        %v849 = vunpack.c.l.b16 %v428
        %v850 = vunpack.c.h.b16 %v428
        %v851 = vunpack.c.l.b16 %v429
        %v852 = vunpack.c.h.b16 %v429
        %v853 = vunpack.c.l.b16 %v430
        %v854 = vunpack.c.h.b16 %v430
        %v855 = vunpack.c.l.b16 %v431
        %v856 = vunpack.c.h.b16 %v431
        %v857 = vunpack.c.l.b16 %v432
        %v858 = vunpack.c.h.b16 %v432
        %v859 = vunpack.c.l.b16 %v433
        %v860 = vunpack.c.h.b16 %v433
        %v861 = vunpack.c.l.b16 %v434
        %v862 = vunpack.c.h.b16 %v434
        %v863 = vunpack.c.l.b16 %v435
        %v864 = vunpack.c.h.b16 %v435
        %v865 = vunpack.c.l.b16 %v436
        %v866 = vunpack.c.h.b16 %v436
        %v867 = vunpack.c.l.b16 %v437
        %v868 = vunpack.c.h.b16 %v437
        %v869 = vunpack.c.l.b16 %v438
        %v870 = vunpack.c.h.b16 %v438
        %v871 = vunpack.c.l.b16 %v439
        %v872 = vunpack.c.h.b16 %v439
        %v873 = vunpack.c.l.b16 %v440
        %v874 = vunpack.c.h.b16 %v440
        %v875 = vunpack.c.l.b16 %v441
        %v876 = vunpack.c.h.b16 %v441
        %v877 = vunpack.c.l.b16 %v442
        %v878 = vunpack.c.h.b16 %v442
        %v879 = vunpack.c.l.b16 %v443
        %v880 = vunpack.c.h.b16 %v443
        %v881 = vunpack.c.l.b16 %v444
        %v882 = vunpack.c.h.b16 %v444
        %v883 = vunpack.c.l.b16 %v445
        %v884 = vunpack.c.h.b16 %v445
        %v885 = vunpack.c.l.b16 %v446
        %v886 = vunpack.c.h.b16 %v446
        %v887 = vunpack.c.l.b16 %v447
        %v888 = vunpack.c.h.b16 %v447
        %v889 = vunpack.c.l.b16 %v448
        %v890 = vunpack.c.h.b16 %v448
        %v891 = vunpack.c.l.b16 %v449
        %v892 = vunpack.c.h.b16 %v449
        %v893 = vunpack.c.l.b16 %v450
        %v894 = vunpack.c.h.b16 %v450
        %v895 = vunpack.c.l.b16 %v451
        %v896 = vunpack.c.h.b16 %v451
        %v897 = vunpack.c.l.b16 %v452
        %v898 = vunpack.c.h.b16 %v452
        %v899 = vunpack.c.l.b16 %v453
        %v900 = vunpack.c.h.b16 %v453
        %v901 = vunpack.c.l.b16 %v454
        %v902 = vunpack.c.h.b16 %v454
        %v903 = vunpack.c.l.b16 %v455
        %v904 = vunpack.c.h.b16 %v455
        %v905 = vunpack.c.l.b16 %v456
        %v906 = vunpack.c.h.b16 %v456
        %v907 = vunpack.c.l.b16 %v457
        %v908 = vunpack.c.h.b16 %v457
        %v909 = vunpack.c.l.b16 %v458
        %v910 = vunpack.c.h.b16 %v458
        %v911 = vunpack.c.l.b16 %v459
        %v912 = vunpack.c.h.b16 %v459
        %v913 = vunpack.c.l.b16 %v460
        %v914 = vunpack.c.h.b16 %v460
        %v915 = vunpack.c.l.b16 %v461
        %v916 = vunpack.c.h.b16 %v461
        %v917 = vunpack.c.l.b16 %v462
        %v918 = vunpack.c.h.b16 %v462
        %v919 = vunpack.c.l.b16 %v463
        %v920 = vunpack.c.h.b16 %v463
        %v921 = vunpack.c.l.b16 %v464
        %v922 = vunpack.c.h.b16 %v464
        %v923 = vunpack.c.l.b16 %v465
        %v924 = vunpack.c.h.b16 %v465
        %v925 = vunpack.c.l.b16 %v466
        %v926 = vunpack.c.h.b16 %v466
        %v927 = vunpack.c.l.b16 %v467
        %v928 = vunpack.c.h.b16 %v467
        %v929 = vunpack.c.l.b16 %v468
        %v930 = vunpack.c.h.b16 %v468
        %v931 = vunpack.c.l.b16 %v469
        %v932 = vunpack.c.h.b16 %v469
        %v933 = vunpack.c.l.b16 %v470
        %v934 = vunpack.c.h.b16 %v470
        %v935 = vunpack.c.l.b16 %v471
        %v936 = vunpack.c.h.b16 %v471
        %v937 = vunpack.c.l.b16 %v472
        %v938 = vunpack.c.h.b16 %v472
        %v939 = vunpack.c.l.b16 %v473
        %v940 = vunpack.c.h.b16 %v473
        %v941 = vunpack.c.l.b16 %v474
        %v942 = vunpack.c.h.b16 %v474
        %v943 = vunpack.c.l.b16 %v475
        %v944 = vunpack.c.h.b16 %v475
        %v945 = vunpack.c.l.b16 %v476
        %v946 = vunpack.c.h.b16 %v476
        %v947 = vunpack.c.l.b16 %v477
        %v948 = vunpack.c.h.b16 %v477
        %v949 = vunpack.c.l.b16 %v478
        %v950 = vunpack.c.h.b16 %v478
        %v951 = vunpack.c.l.b16 %v479
        %v952 = vunpack.c.h.b16 %v479
        %v953 = vunpack.c.l.b16 %v480
        %v954 = vunpack.c.h.b16 %v480
        %v955 = vunpack.c.l.b16 %v481
        %v956 = vunpack.c.h.b16 %v481
        %v957 = vunpack.c.l.b16 %v482
        %v958 = vunpack.c.h.b16 %v482
        %v959 = vunpack.c.l.b16 %v483
        %v960 = vunpack.c.h.b16 %v483
        %v961 = vunpack.c.l.b16 %v484
        %v962 = vunpack.c.h.b16 %v484
        %v963 = vpack.c.b16 %v677, %v675
        %v964 = vpack.c.b16 %v678, %v676
        %v965 = vpack.c.b16 %v681, %v679
        %v966 = vpack.c.b16 %v682, %v680
        %v967 = vpack.c.b16 %v685, %v683
        %v968 = vpack.c.b16 %v686, %v684
        %v969 = vpack.c.b16 %v689, %v687
        %v970 = vpack.c.b16 %v690, %v688
        %v971 = vpack.c.b16 %v693, %v691
        %v972 = vpack.c.b16 %v694, %v692
        %v973 = vpack.c.b16 %v697, %v695
        %v974 = vpack.c.b16 %v698, %v696
        %v975 = vpack.c.b16 %v701, %v699
        %v976 = vpack.c.b16 %v702, %v700
        %v977 = vpack.c.b16 %v705, %v703
        %v978 = vpack.c.b16 %v706, %v704
        %v979 = vpack.c.b16 %v709, %v707
        %v980 = vpack.c.b16 %v710, %v708
        %v981 = vpack.c.b16 %v713, %v711
        %v982 = vpack.c.b16 %v714, %v712
        %v983 = vpack.c.b16 %v717, %v715
        %v984 = vpack.c.b16 %v718, %v716
        %v985 = vpack.c.b16 %v721, %v719
        %v986 = vpack.c.b16 %v722, %v720
        %v987 = vpack.c.b16 %v725, %v723
        %v988 = vpack.c.b16 %v726, %v724
        %v989 = vpack.c.b16 %v729, %v727
        %v990 = vpack.c.b16 %v730, %v728
        %v991 = vpack.c.b16 %v733, %v731
        %v992 = vpack.c.b16 %v734, %v732
        %v993 = vpack.c.b16 %v737, %v735
        %v994 = vpack.c.b16 %v738, %v736
        %v995 = vpack.c.b16 %v741, %v739
        %v996 = vpack.c.b16 %v742, %v740
        %v997 = vpack.c.b16 %v745, %v743
        %v998 = vpack.c.b16 %v746, %v744
        %v999 = vpack.c.b16 %v749, %v747
        %v1000 = vpack.c.b16 %v750, %v748
        %v1001 = vpack.c.b16 %v753, %v751
        %v1002 = vpack.c.b16 %v754, %v752
        %v1003 = vpack.c.b16 %v757, %v755
        %v1004 = vpack.c.b16 %v758, %v756
        %v1005 = vpack.c.b16 %v761, %v759
        %v1006 = vpack.c.b16 %v762, %v760
        %v1007 = vpack.c.b16 %v765, %v763
        %v1008 = vpack.c.b16 %v766, %v764
        %v1009 = vpack.c.b16 %v769, %v767
        %v1010 = vpack.c.b16 %v770, %v768
        %v1011 = vpack.c.b16 %v773, %v771
        %v1012 = vpack.c.b16 %v774, %v772
        %v1013 = vpack.c.b16 %v777, %v775
        %v1014 = vpack.c.b16 %v778, %v776
        %v1015 = vpack.c.b16 %v781, %v779
        %v1016 = vpack.c.b16 %v782, %v780
        %v1017 = vpack.c.b16 %v785, %v783
        %v1018 = vpack.c.b16 %v786, %v784
        %v1019 = vpack.c.b16 %v789, %v787
        %v1020 = vpack.c.b16 %v790, %v788
        %v1021 = vpack.c.b16 %v793, %v791
        %v1022 = vpack.c.b16 %v794, %v792
        %v1023 = vpack.c.b16 %v797, %v795
        %v1024 = vpack.c.b16 %v798, %v796
        %v1025 = vpack.c.b16 %v801, %v799
        %v1026 = vpack.c.b16 %v802, %v800
        %v1027 = vpack.c.b16 %v805, %v803
        %v1028 = vpack.c.b16 %v806, %v804
        %v1029 = vpack.c.b16 %v809, %v807
        %v1030 = vpack.c.b16 %v810, %v808
        %v1031 = vpack.c.b16 %v813, %v811
        %v1032 = vpack.c.b16 %v814, %v812
        %v1033 = vpack.c.b16 %v817, %v815
        %v1034 = vpack.c.b16 %v818, %v816
        %v1035 = vpack.c.b16 %v821, %v819
        %v1036 = vpack.c.b16 %v822, %v820
        %v1037 = vpack.c.b16 %v825, %v823
        %v1038 = vpack.c.b16 %v826, %v824
        %v1039 = vpack.c.b16 %v829, %v827
        %v1040 = vpack.c.b16 %v830, %v828
        %v1041 = vpack.c.b16 %v833, %v831
        %v1042 = vpack.c.b16 %v834, %v832
        %v1043 = vpack.c.b16 %v837, %v835
        %v1044 = vpack.c.b16 %v838, %v836
        %v1045 = vpack.c.b16 %v841, %v839
        %v1046 = vpack.c.b16 %v842, %v840
        %v1047 = vpack.c.b16 %v845, %v843
        %v1048 = vpack.c.b16 %v846, %v844
        %v1049 = vpack.c.b16 %v849, %v847
        %v1050 = vpack.c.b16 %v850, %v848
        %v1051 = vpack.c.b16 %v853, %v851
        %v1052 = vpack.c.b16 %v854, %v852
        %v1053 = vpack.c.b16 %v857, %v855
        %v1054 = vpack.c.b16 %v858, %v856
        %v1055 = vpack.c.b16 %v861, %v859
        %v1056 = vpack.c.b16 %v862, %v860
        %v1057 = vpack.c.b16 %v865, %v863
        %v1058 = vpack.c.b16 %v866, %v864
        %v1059 = vpack.c.b16 %v869, %v867
        %v1060 = vpack.c.b16 %v870, %v868
        %v1061 = vpack.c.b16 %v873, %v871
        %v1062 = vpack.c.b16 %v874, %v872
        %v1063 = vpack.c.b16 %v877, %v875
        %v1064 = vpack.c.b16 %v878, %v876
        %v1065 = vpack.c.b16 %v881, %v879
        %v1066 = vpack.c.b16 %v882, %v880
        %v1067 = vpack.c.b16 %v885, %v883
        %v1068 = vpack.c.b16 %v886, %v884
        %v1069 = vpack.c.b16 %v889, %v887
        %v1070 = vpack.c.b16 %v890, %v888
        %v1071 = vpack.c.b16 %v893, %v891
        %v1072 = vpack.c.b16 %v894, %v892
        %v1073 = vpack.c.b16 %v897, %v895
        %v1074 = vpack.c.b16 %v898, %v896
        %v1075 = vpack.c.b16 %v901, %v899
        %v1076 = vpack.c.b16 %v902, %v900
        %v1077 = vpack.c.b16 %v905, %v903
        %v1078 = vpack.c.b16 %v906, %v904
        %v1079 = vpack.c.b16 %v909, %v907
        %v1080 = vpack.c.b16 %v910, %v908
        %v1081 = vpack.c.b16 %v913, %v911
        %v1082 = vpack.c.b16 %v914, %v912
        %v1083 = vpack.c.b16 %v917, %v915
        %v1084 = vpack.c.b16 %v918, %v916
        %v1085 = vpack.c.b16 %v921, %v919
        %v1086 = vpack.c.b16 %v922, %v920
        %v1087 = vpack.c.b16 %v925, %v923
        %v1088 = vpack.c.b16 %v926, %v924
        %v1089 = vpack.c.b16 %v929, %v927
        %v1090 = vpack.c.b16 %v930, %v928
        %v1091 = vpack.c.b16 %v933, %v931
        %v1092 = vpack.c.b16 %v934, %v932
        %v1093 = vpack.c.b16 %v937, %v935
        %v1094 = vpack.c.b16 %v938, %v936
        %v1095 = vpack.c.b16 %v941, %v939
        %v1096 = vpack.c.b16 %v942, %v940
        %v1097 = vpack.c.b16 %v945, %v943
        %v1098 = vpack.c.b16 %v946, %v944
        %v1099 = vpack.c.b16 %v949, %v947
        %v1100 = vpack.c.b16 %v950, %v948
        %v1101 = vpack.c.b16 %v953, %v951
        %v1102 = vpack.c.b16 %v954, %v952
        %v1103 = vpack.c.b16 %v957, %v955
        %v1104 = vpack.c.b16 %v958, %v956
        %v1105 = vpack.c.b16 %v961, %v959
        %v1106 = vpack.c.b16 %v962, %v960
        %1251 = vmatpush.bf16.msra.mxu0 %v977
        %1252 = vmatpush.bf16.msra.mxu0 %v975
        %1253 = vmatpush.bf16.msra.mxu0 %v973
        %1254 = vmatpush.bf16.msra.mxu0 %v971
        %1255 = vmatpush.bf16.msra.mxu0 %v969
        %1256 = vmatpush.bf16.msra.mxu0 %v967
        %1257 = vmatpush.bf16.msra.mxu0 %v965
        %1258 = vmatpush.bf16.msra.mxu0 %v963
        %1259 = vmatmul.bf16.gmra.mxu0 %v513
        %v1260 = vpop.f32.mrf.mxu0
        %v1261 = vadd.f32 0.0, %v1260
        %v1262 = vpop.f32.mrf.mxu0
        %v1263 = vadd.f32 0.0, %v1262
        %1264 = vdwg.mxu0
        %1265 = vmatpush.bf16.msra.mxu0 %v993
        %1266 = vmatpush.bf16.msra.mxu0 %v991
        %1267 = vmatpush.bf16.msra.mxu0 %v989
        %1268 = vmatpush.bf16.msra.mxu0 %v987
        %1269 = vmatpush.bf16.msra.mxu0 %v985
        %1270 = vmatpush.bf16.msra.mxu0 %v983
        %1271 = vmatpush.bf16.msra.mxu0 %v981
        %1272 = vmatpush.bf16.msra.mxu0 %v979
        %1273 = vmatmul.bf16.gmra.mxu0 %v514
        %v1274 = vpop.f32.mrf.mxu0
        %v1275 = vadd.f32 %v1261, %v1274
        %v1276 = vpop.f32.mrf.mxu0
        %v1277 = vadd.f32 %v1263, %v1276
        %1278 = vdwg.mxu0
        %1279 = vmatpush.bf16.msra.mxu0 %v1009
        %1280 = vmatpush.bf16.msra.mxu0 %v1007
        %1281 = vmatpush.bf16.msra.mxu0 %v1005
        %1282 = vmatpush.bf16.msra.mxu0 %v1003
        %1283 = vmatpush.bf16.msra.mxu0 %v1001
        %1284 = vmatpush.bf16.msra.mxu0 %v999
        %1285 = vmatpush.bf16.msra.mxu0 %v997
        %1286 = vmatpush.bf16.msra.mxu0 %v995
        %1287 = vmatmul.bf16.gmra.mxu0 %v515
        %v1288 = vpop.f32.mrf.mxu0
        %v1289 = vadd.f32 %v1275, %v1288
        %v1290 = vpop.f32.mrf.mxu0
        %v1291 = vadd.f32 %v1277, %v1290
        %1292 = vdwg.mxu0
        %1293 = vmatpush.bf16.msra.mxu0 %v1025
        %1294 = vmatpush.bf16.msra.mxu0 %v1023
        %1295 = vmatpush.bf16.msra.mxu0 %v1021
        %1296 = vmatpush.bf16.msra.mxu0 %v1019
        %1297 = vmatpush.bf16.msra.mxu0 %v1017
        %1298 = vmatpush.bf16.msra.mxu0 %v1015
        %1299 = vmatpush.bf16.msra.mxu0 %v1013
        %1300 = vmatpush.bf16.msra.mxu0 %v1011
        %1301 = vmatmul.bf16.gmra.mxu0 %v516
        %v1302 = vpop.f32.mrf.mxu0
        %v1303 = vadd.f32 %v1289, %v1302
        %v1304 = vpop.f32.mrf.mxu0
        %v1305 = vadd.f32 %v1291, %v1304
        %1306 = vdwg.mxu0
        %1307 = vmatpush.bf16.msra.mxu0 %v1041
        %1308 = vmatpush.bf16.msra.mxu0 %v1039
        %1309 = vmatpush.bf16.msra.mxu0 %v1037
        %1310 = vmatpush.bf16.msra.mxu0 %v1035
        %1311 = vmatpush.bf16.msra.mxu0 %v1033
        %1312 = vmatpush.bf16.msra.mxu0 %v1031
        %1313 = vmatpush.bf16.msra.mxu0 %v1029
        %1314 = vmatpush.bf16.msra.mxu0 %v1027
        %1315 = vmatmul.bf16.gmra.mxu0 %v517
        %v1316 = vpop.f32.mrf.mxu0
        %v1317 = vadd.f32 %v1303, %v1316
        %v1318 = vpop.f32.mrf.mxu0
        %v1319 = vadd.f32 %v1305, %v1318
        %1320 = vdwg.mxu0
        %1321 = vmatpush.bf16.msra.mxu0 %v1057
        %1322 = vmatpush.bf16.msra.mxu0 %v1055
        %1323 = vmatpush.bf16.msra.mxu0 %v1053
        %1324 = vmatpush.bf16.msra.mxu0 %v1051
        %1325 = vmatpush.bf16.msra.mxu0 %v1049
        %1326 = vmatpush.bf16.msra.mxu0 %v1047
        %1327 = vmatpush.bf16.msra.mxu0 %v1045
        %1328 = vmatpush.bf16.msra.mxu0 %v1043
        %1329 = vmatmul.bf16.gmra.mxu0 %v518
        %v1330 = vpop.f32.mrf.mxu0
        %v1331 = vadd.f32 %v1317, %v1330
        %v1332 = vpop.f32.mrf.mxu0
        %v1333 = vadd.f32 %v1319, %v1332
        %1334 = vdwg.mxu0
        %1335 = vmatpush.bf16.msra.mxu0 %v1073
        %1336 = vmatpush.bf16.msra.mxu0 %v1071
        %1337 = vmatpush.bf16.msra.mxu0 %v1069
        %1338 = vmatpush.bf16.msra.mxu0 %v1067
        %1339 = vmatpush.bf16.msra.mxu0 %v1065
        %1340 = vmatpush.bf16.msra.mxu0 %v1063
        %1341 = vmatpush.bf16.msra.mxu0 %v1061
        %1342 = vmatpush.bf16.msra.mxu0 %v1059
        %1343 = vmatmul.bf16.gmra.mxu0 %v519
        %v1344 = vpop.f32.mrf.mxu0
        %v1345 = vadd.f32 %v1331, %v1344
        %v1346 = vpop.f32.mrf.mxu0
        %v1347 = vadd.f32 %v1333, %v1346
        %1348 = vdwg.mxu0
        %1349 = vmatpush.bf16.msra.mxu0 %v1089
        %1350 = vmatpush.bf16.msra.mxu0 %v1087
        %1351 = vmatpush.bf16.msra.mxu0 %v1085
        %1352 = vmatpush.bf16.msra.mxu0 %v1083
        %1353 = vmatpush.bf16.msra.mxu0 %v1081
        %1354 = vmatpush.bf16.msra.mxu0 %v1079
        %1355 = vmatpush.bf16.msra.mxu0 %v1077
        %1356 = vmatpush.bf16.msra.mxu0 %v1075
        %1357 = vmatmul.bf16.gmra.mxu0 %v520
        %v1358 = vpop.f32.mrf.mxu0
        %v1359 = vadd.f32 %v1345, %v1358
        %v1360 = vpop.f32.mrf.mxu0
        %v1361 = vadd.f32 %v1347, %v1360
        %1362 = vdwg.mxu0
        %1363 = vmatpush.bf16.msra.mxu0 %v1105
        %1364 = vmatpush.bf16.msra.mxu0 %v1103
        %1365 = vmatpush.bf16.msra.mxu0 %v1101
        %1366 = vmatpush.bf16.msra.mxu0 %v1099
        %1367 = vmatpush.bf16.msra.mxu0 %v1097
        %1368 = vmatpush.bf16.msra.mxu0 %v1095
        %1369 = vmatpush.bf16.msra.mxu0 %v1093
        %1370 = vmatpush.bf16.msra.mxu0 %v1091
        %1371 = vmatmul.bf16.gmra.mxu0 %v521
        %v1372 = vpop.f32.mrf.mxu0
        %v1373 = vadd.f32 %v1359, %v1372
        %v1374 = vpop.f32.mrf.mxu0
        %v1375 = vadd.f32 %v1361, %v1374
        %1376 = vdwg.mxu0
        %1377 = vmatpush.bf16.msra.mxu0 %v978
        %1378 = vmatpush.bf16.msra.mxu0 %v976
        %1379 = vmatpush.bf16.msra.mxu0 %v974
        %1380 = vmatpush.bf16.msra.mxu0 %v972
        %1381 = vmatpush.bf16.msra.mxu0 %v970
        %1382 = vmatpush.bf16.msra.mxu0 %v968
        %1383 = vmatpush.bf16.msra.mxu0 %v966
        %1384 = vmatpush.bf16.msra.mxu0 %v964
        %1385 = vmatmul.bf16.gmra.mxu0 %v513
        %v1386 = vpop.f32.mrf.mxu0
        %v1387 = vadd.f32 0.0, %v1386
        %v1388 = vpop.f32.mrf.mxu0
        %v1389 = vadd.f32 0.0, %v1388
        %1390 = vdwg.mxu0
        %1391 = vmatpush.bf16.msra.mxu0 %v994
        %1392 = vmatpush.bf16.msra.mxu0 %v992
        %1393 = vmatpush.bf16.msra.mxu0 %v990
        %1394 = vmatpush.bf16.msra.mxu0 %v988
        %1395 = vmatpush.bf16.msra.mxu0 %v986
        %1396 = vmatpush.bf16.msra.mxu0 %v984
        %1397 = vmatpush.bf16.msra.mxu0 %v982
        %1398 = vmatpush.bf16.msra.mxu0 %v980
        %1399 = vmatmul.bf16.gmra.mxu0 %v514
        %v1400 = vpop.f32.mrf.mxu0
        %v1401 = vadd.f32 %v1387, %v1400
        %v1402 = vpop.f32.mrf.mxu0
        %v1403 = vadd.f32 %v1389, %v1402
        %1404 = vdwg.mxu0
        %1405 = vmatpush.bf16.msra.mxu0 %v1010
        %1406 = vmatpush.bf16.msra.mxu0 %v1008
        %1407 = vmatpush.bf16.msra.mxu0 %v1006
        %1408 = vmatpush.bf16.msra.mxu0 %v1004
        %1409 = vmatpush.bf16.msra.mxu0 %v1002
        %1410 = vmatpush.bf16.msra.mxu0 %v1000
        %1411 = vmatpush.bf16.msra.mxu0 %v998
        %1412 = vmatpush.bf16.msra.mxu0 %v996
        %1413 = vmatmul.bf16.gmra.mxu0 %v515
        %v1414 = vpop.f32.mrf.mxu0
        %v1415 = vadd.f32 %v1401, %v1414
        %v1416 = vpop.f32.mrf.mxu0
        %v1417 = vadd.f32 %v1403, %v1416
        %1418 = vdwg.mxu0
        %1419 = vmatpush.bf16.msra.mxu0 %v1026
        %1420 = vmatpush.bf16.msra.mxu0 %v1024
        %1421 = vmatpush.bf16.msra.mxu0 %v1022
        %1422 = vmatpush.bf16.msra.mxu0 %v1020
        %1423 = vmatpush.bf16.msra.mxu0 %v1018
        %1424 = vmatpush.bf16.msra.mxu0 %v1016
        %1425 = vmatpush.bf16.msra.mxu0 %v1014
        %1426 = vmatpush.bf16.msra.mxu0 %v1012
        %1427 = vmatmul.bf16.gmra.mxu0 %v516
        %v1428 = vpop.f32.mrf.mxu0
        %v1429 = vadd.f32 %v1415, %v1428
        %v1430 = vpop.f32.mrf.mxu0
        %v1431 = vadd.f32 %v1417, %v1430
        %1432 = vdwg.mxu0
        %1433 = vmatpush.bf16.msra.mxu0 %v1042
        %1434 = vmatpush.bf16.msra.mxu0 %v1040
        %1435 = vmatpush.bf16.msra.mxu0 %v1038
        %1436 = vmatpush.bf16.msra.mxu0 %v1036
        %1437 = vmatpush.bf16.msra.mxu0 %v1034
        %1438 = vmatpush.bf16.msra.mxu0 %v1032
        %1439 = vmatpush.bf16.msra.mxu0 %v1030
        %1440 = vmatpush.bf16.msra.mxu0 %v1028
        %1441 = vmatmul.bf16.gmra.mxu0 %v517
        %v1442 = vpop.f32.mrf.mxu0
        %v1443 = vadd.f32 %v1429, %v1442
        %v1444 = vpop.f32.mrf.mxu0
        %v1445 = vadd.f32 %v1431, %v1444
        %1446 = vdwg.mxu0
        %1447 = vmatpush.bf16.msra.mxu0 %v1058
        %1448 = vmatpush.bf16.msra.mxu0 %v1056
        %1449 = vmatpush.bf16.msra.mxu0 %v1054
        %1450 = vmatpush.bf16.msra.mxu0 %v1052
        %1451 = vmatpush.bf16.msra.mxu0 %v1050
        %1452 = vmatpush.bf16.msra.mxu0 %v1048
        %1453 = vmatpush.bf16.msra.mxu0 %v1046
        %1454 = vmatpush.bf16.msra.mxu0 %v1044
        %1455 = vmatmul.bf16.gmra.mxu0 %v518
        %v1456 = vpop.f32.mrf.mxu0
        %v1457 = vadd.f32 %v1443, %v1456
        %v1458 = vpop.f32.mrf.mxu0
        %v1459 = vadd.f32 %v1445, %v1458
        %1460 = vdwg.mxu0
        %1461 = vmatpush.bf16.msra.mxu0 %v1074
        %1462 = vmatpush.bf16.msra.mxu0 %v1072
        %1463 = vmatpush.bf16.msra.mxu0 %v1070
        %1464 = vmatpush.bf16.msra.mxu0 %v1068
        %1465 = vmatpush.bf16.msra.mxu0 %v1066
        %1466 = vmatpush.bf16.msra.mxu0 %v1064
        %1467 = vmatpush.bf16.msra.mxu0 %v1062
        %1468 = vmatpush.bf16.msra.mxu0 %v1060
        %1469 = vmatmul.bf16.gmra.mxu0 %v519
        %v1470 = vpop.f32.mrf.mxu0
        %v1471 = vadd.f32 %v1457, %v1470
        %v1472 = vpop.f32.mrf.mxu0
        %v1473 = vadd.f32 %v1459, %v1472
        %1474 = vdwg.mxu0
        %1475 = vmatpush.bf16.msra.mxu0 %v1090
        %1476 = vmatpush.bf16.msra.mxu0 %v1088
        %1477 = vmatpush.bf16.msra.mxu0 %v1086
        %1478 = vmatpush.bf16.msra.mxu0 %v1084
        %1479 = vmatpush.bf16.msra.mxu0 %v1082
        %1480 = vmatpush.bf16.msra.mxu0 %v1080
        %1481 = vmatpush.bf16.msra.mxu0 %v1078
        %1482 = vmatpush.bf16.msra.mxu0 %v1076
        %1483 = vmatmul.bf16.gmra.mxu0 %v520
        %v1484 = vpop.f32.mrf.mxu0
        %v1485 = vadd.f32 %v1471, %v1484
        %v1486 = vpop.f32.mrf.mxu0
        %v1487 = vadd.f32 %v1473, %v1486
        %1488 = vdwg.mxu0
        %1489 = vmatpush.bf16.msra.mxu0 %v1106
        %1490 = vmatpush.bf16.msra.mxu0 %v1104
        %1491 = vmatpush.bf16.msra.mxu0 %v1102
        %1492 = vmatpush.bf16.msra.mxu0 %v1100
        %1493 = vmatpush.bf16.msra.mxu0 %v1098
        %1494 = vmatpush.bf16.msra.mxu0 %v1096
        %1495 = vmatpush.bf16.msra.mxu0 %v1094
        %1496 = vmatpush.bf16.msra.mxu0 %v1092
        %1497 = vmatmul.bf16.gmra.mxu0 %v521
        %v1498 = vpop.f32.mrf.mxu0
        %v1499 = vadd.f32 %v1485, %v1498
        %v1500 = vpop.f32.mrf.mxu0
        %v1501 = vadd.f32 %v1487, %v1500
        %1502 = vdwg.mxu0
        %v1503 = vadd.f32 %v327, %v1373
        %v1504 = vadd.f32 %v328, %v1499
        %v1505 = vadd.f32 %v329, %v1375
        %v1506 = vadd.f32 %v330, %v1501
        %1507 = vst [vmem:[#allocation2] sm:$0xff] %v1503
        %1508 = vst [vmem:[#allocation2 + $0x8] sm:$0xff] %v1504
        %1509 = vst [vmem:[#allocation2 + $0x10] sm:$0xff] %v1505
        %1510 = vst [vmem:[#allocation2 + $0x18] sm:$0xff] %v1506
        %p1511 = scmp.eq.s32.totalorder %s21, 1
        // Predicated region
        $region63: #{flownet_er_forward.13} parent=53 // pred_check
          %p1512 = pneg %p1511
        $region64: #{flownet_er_forward.13} parent=53 // pred_check_branch
          %1514 = sbr.rel (%p1512) target = $region66
        $region65: #{flownet_er_forward.13} parent=53 // pred_region
          %v1515 = vld [vmem:[#allocation2] sm:$0xff]
          %v1516 = vld [vmem:[#allocation2 + $0x8] sm:$0xff]
          %v1517 = vld [vmem:[#allocation2 + $0x10] sm:$0xff]
          %v1518 = vld [vmem:[#allocation2 + $0x18] sm:$0xff]
          %v1519 = vld [vmem:[%s305] sm:$0x3]
          %v1521 = vperm.slane %v1519, 0
          %v1522 = vperm.slane %v1519, 1
          %v1525 = vadd.f32 %v1515, %v1521
          %v1526 = vadd.f32 %v1516, %v1522
          %v1527 = vadd.f32 %v1517, %v1521
          %v1528 = vadd.f32 %v1518, %v1522
          %vm1529 = vcmp.ge.f32.partialorder %v1525, 0.0
          %vm1530 = vcmp.ge.f32.partialorder %v1526, 0.0
          %vm1531 = vcmp.ge.f32.partialorder %v1527, 0.0
          %vm1532 = vcmp.ge.f32.partialorder %v1528, 0.0
          %v1533 = vmul.f32 %v1525, 0.01
          %v1534 = vmul.f32 %v1526, 0.01
          %v1535 = vmul.f32 %v1527, 0.01
          %v1536 = vmul.f32 %v1528, 0.01
          %v1537 = vsel %vm1529, %v1525, %v1533
          %v1538 = vsel %vm1530, %v1526, %v1534
          %v1539 = vsel %vm1531, %v1527, %v1535
          %v1540 = vsel %vm1532, %v1528, %v1536
          %v1541 = vpack.c.bf16 %v1538, %v1537
          %v1542 = vpack.c.bf16 %v1540, %v1539
          %1543 = vst [vmem:[%s316] sm:$0xff] %v1541
          %1544 = vst [vmem:[%s316 + $0x8] sm:$0xff] %v1542
        $region66: #{flownet_er_forward.13} parent=53 // pred_fallthru
          _
        %s1545 = smul.u32 2, %s19
        %s1546 = smul.u32 2, %s20
        %p1547 = scmp.lt.s32.totalorder %s1545, 1
        %s1548 = scalar_select %p1547, %s1545, 1
        %p1549 = scmp.lt.s32.totalorder %s1546, 1
        %s1550 = scalar_select %p1549, %s1546, 1
        %s1551 = smul.addr %s1548, 2
        %s1552 = sadd.s32 %s1550, %s1551
        %s1553 = smul.addr %s1552, 4
        %s1554 = scalar_lea.vmem %s3, %s1553
        // Predicated region
        $region67: #{flownet_er_forward.13} parent=53 // pred_check
          %p1555 = pneg %p135
        $region68: #{flownet_er_forward.13} parent=53 // pred_check_branch
          %1557 = sbr.rel (%p1555) target = $region70
        $region69: #{flownet_er_forward.13} parent=53 // pred_region
          %s1558 = smul.u32 2, %s19
          %s1559 = smul.u32 2, %s20
        $region70: #{flownet_er_forward.13} parent=53 // pred_fallthru
          _
        // Predicated region
        $region71: #{flownet_er_forward.13} parent=53 // pred_check
          %p1560 = pneg %p135
        $region72: #{flownet_er_forward.13} parent=53 // pred_check_branch
          %1562 = sbr.rel (%p1560) target = $region74
        $region73: #{flownet_er_forward.13} parent=53 // pred_region
          %s1563 = smul.u32 2, %s19
          %s1564 = smul.u32 2, %s20
          %p1565 = scmp.lt.s32.totalorder %s1563, 1
          %s1566 = scalar_select %p1565, %s1563, 1
          %p1567 = scmp.lt.s32.totalorder %s1564, 1
          %s1568 = scalar_select %p1567, %s1564, 1
          %s1569 = smul.addr %s1566, 2
          %s1570 = sadd.s32 %s1568, %s1569
          %s1571 = smul.addr %s1570, 4
          %s1572 = scalar_lea.vmem %s3, %s1571
        $region74: #{flownet_er_forward.13} parent=53 // pred_fallthru
          _
      $region54: #{flownet_er_forward.13} parent=5 // pred_fallthru
        _
      %p1573 = scmp.le.s32.totalorder 2, %s9
      // Predicated region
      $region75: #{flownet_er_forward.13} parent=5 // pred_check
        %p1574 = pneg %p1573
      $region76: #{flownet_er_forward.13} parent=5 // pred_check_branch
        %1576 = sbr.rel (%p1574) target = $region78
      $region77: #{flownet_er_forward.13} parent=5 // pred_region
        %s1577 = ssub.s32 %s9, 2
      $region78: #{flownet_er_forward.13} parent=5 // pred_fallthru
        _
    $region6: #{flownet_er_forward.13} parent=1 // loop_footer
      %s13 = sadd.s32 1, %s9
    $region7: #{flownet_er_forward.13} parent=1 // loop_footer_branch
      %8 = sbr.rel target = $region3
    $region8: #{flownet_er_forward.13} parent=1 // loop_exit
      _

// kernel: flownet_er_forward.14
$region0: #{flownet_er_forward.14}
  #allocation0 [shape = 'u32[]', space=smem, size = 0x4, offset = 0x4, fixed_abs, tag = 'smem constant byte address 0x4 - core index']
  #allocation1 [shape = 'u32[72,128]{1,0:T(1,128)}', space=vmem, size = 0x9000, scoped, tag = 'internal scratch']
  #allocation2 [shape = 'f32[16,256]{1,0:T(8,128)}', space=vmem, size = 0x4000, scoped, tag = 'scratch operand']
  %s0 = inlined_call_operand.vmem [shape: bf16[16,2304], index: 0, kind: input, shape index: {}]
  %s1 = inlined_call_operand.vmem [shape: bf16[2304,512], index: 1, kind: input, shape index: {}]
  %s2 = inlined_call_operand.vmem [shape: f32[1,512], index: 2, kind: input, shape index: {}]
  %s3 = inlined_call_operand.vmem [shape: bf16[16,512], index: 3, kind: output, shape index: {}]
  %s4 = sld [smem:[#allocation0]]
  $region151: #{flownet_er_forward.14} parent=0
    _
  %s6 = ssub.s32 1, %s4
  %s7 = scalar_select 0, %s6, %s4
  $region1: #{flownet_er_forward.14} parent=0
    #allocation3 [shape = 'u8[73728]{0}', space=vmem, size = 0x12000, scoped, tag = 'input window, operand 0']
    #allocation4 [shape = 'u8[1179648]{0}', space=vmem, size = 0x120000, scoped, tag = 'input window, operand 1']
    #allocation5 [shape = 'u8[16384]{0}', space=vmem, size = 0x4000, scoped, tag = 'output window, operand 0']
    loop: start=0, step=1, limit=6
    $region2: #{flownet_er_forward.14} parent=1 // loop_pre_header
      _
    $region3: #{flownet_er_forward.14} parent=1 // loop_header
      %s9 = sphi 0, %s13
      %p10 = scmp.ge.s32.totalorder %s9, 6
      %s16 = sphi 0, %s35
      %s17 = sphi 0, %s31
      %s18 = sphi 0, %s27
      %s19 = sphi 0, %s16
      %s20 = sphi 0, %s17
      %s21 = sphi 0, %s18
      %s22 = sphi 0, %s19
      %s23 = sphi 0, %s20
      %s24 = sphi 0, %s21
      %s40 = sphi 0, %s42
      %s43 = sphi 0, %s40
      %s44 = sphi 0, %s43
      %s60 = sphi 0, %s44
      %s68 = sphi 0, %s70
      %s71 = sphi 0, %s68
      %s72 = sphi 0, %s71
      %s88 = sphi 0, %s72
      %s94 = sphi 0, %s96
      %s97 = sphi 0, %s94
      %s98 = sphi 0, %s97
      %s114 = sphi 0, %s98
      %s122 = sphi 0, %s124
      %s125 = sphi 0, %s122
      %s126 = sphi 0, %s125
      %s142 = sphi 0, %s126
    $region4: #{flownet_er_forward.14} parent=1 // loop_header_branch
      %12 = sbr.rel (%p10) target = $region8
    $region5: #{flownet_er_forward.14} parent=1 // loop_body
      %s14 = ssub.s32 %s9, 1
      %s15 = ssub.s32 %s9, 2
      %s25 = sadd.s32 1, %s18
      %p26 = scmp.ge.s32.totalorder %s25, 2
      %s27 = scalar_select %p26, 0, %s25
      %s28 = sadd.s32 1, %s17
      %s29 = scalar_select %p26, %s28, %s17
      %p30 = scmp.ge.s32.totalorder %s29, 2
      %s31 = scalar_select %p30, 0, %s29
      %s32 = sadd.s32 1, %s16
      %s33 = scalar_select %p30, %s32, %s16
      %p34 = scmp.ge.s32.totalorder %s33, 1
      %s35 = scalar_select %p34, 0, %s33
      %s36 = ssub.s32 %s16, %s35
      %s37 = ssub.s32 %s18, %s27
      %s38 = sor.u32 %s36, %s37
      %p39 = scmp.eq.s32.totalorder %s38, 0
      %s41 = sadd.s32 %s40, 1
      %s42 = scalar_select %p39, %s40, %s41
      %p45 = pneg %p39
      %p46 = scmp.eq.s32.totalorder %s9, 3
      %p47 = por %p45, %p46
      %p48 = scmp.ne.s32.totalorder %s40, %s43
      %p49 = scmp.eq.s32.totalorder %s9, 0
      %p50 = por %p48, %p49
      %p51 = scmp.ne.s32.totalorder %s40, %s43
      %p52 = scmp.eq.s32.totalorder %s14, 3
      %p53 = por %p51, %p52
      %p54 = scmp.ne.s32.totalorder %s43, %s44
      %p55 = scmp.eq.s32.totalorder %s14, 0
      %p56 = por %p54, %p55
      %p57 = scmp.ne.s32.totalorder %s43, %s44
      %p58 = scmp.eq.s32.totalorder %s15, 3
      %p59 = por %p57, %p58
      %p61 = scmp.ne.s32.totalorder %s44, %s60
      %p62 = scmp.eq.s32.totalorder %s15, 0
      %p63 = por %p61, %p62
      %s64 = ssub.s32 %s18, %s27
      %s65 = ssub.s32 %s17, %s31
      %s66 = sor.u32 %s64, %s65
      %p67 = scmp.eq.s32.totalorder %s66, 0
      %s69 = sadd.s32 %s68, 1
      %s70 = scalar_select %p67, %s68, %s69
      %p73 = pneg %p67
      %p74 = scmp.eq.s32.totalorder %s9, 3
      %p75 = por %p73, %p74
      %p76 = scmp.ne.s32.totalorder %s68, %s71
      %p77 = scmp.eq.s32.totalorder %s9, 0
      %p78 = por %p76, %p77
      %p79 = scmp.ne.s32.totalorder %s68, %s71
      %p80 = scmp.eq.s32.totalorder %s14, 3
      %p81 = por %p79, %p80
      %p82 = scmp.ne.s32.totalorder %s71, %s72
      %p83 = scmp.eq.s32.totalorder %s14, 0
      %p84 = por %p82, %p83
      %p85 = scmp.ne.s32.totalorder %s71, %s72
      %p86 = scmp.eq.s32.totalorder %s15, 3
      %p87 = por %p85, %p86
      %p89 = scmp.ne.s32.totalorder %s72, %s88
      %p90 = scmp.eq.s32.totalorder %s15, 0
      %p91 = por %p89, %p90
      %s92 = ssub.s32 %s17, %s31
      %p93 = scmp.eq.s32.totalorder %s92, 0
      %s95 = sadd.s32 %s94, 1
      %s96 = scalar_select %p93, %s94, %s95
      %p99 = pneg %p93
      %p100 = scmp.eq.s32.totalorder %s9, 3
      %p101 = por %p99, %p100
      %p102 = scmp.ne.s32.totalorder %s94, %s97
      %p103 = scmp.eq.s32.totalorder %s9, 0
      %p104 = por %p102, %p103
      %p105 = scmp.ne.s32.totalorder %s94, %s97
      %p106 = scmp.eq.s32.totalorder %s14, 3
      %p107 = por %p105, %p106
      %p108 = scmp.ne.s32.totalorder %s97, %s98
      %p109 = scmp.eq.s32.totalorder %s14, 0
      %p110 = por %p108, %p109
      %p111 = scmp.ne.s32.totalorder %s97, %s98
      %p112 = scmp.eq.s32.totalorder %s15, 3
      %p113 = por %p111, %p112
      %p115 = scmp.ne.s32.totalorder %s98, %s114
      %p116 = scmp.eq.s32.totalorder %s15, 0
      %p117 = por %p115, %p116
      %s118 = ssub.s32 %s16, %s35
      %s119 = ssub.s32 %s17, %s31
      %s120 = sor.u32 %s118, %s119
      %p121 = scmp.eq.s32.totalorder %s120, 0
      %s123 = sadd.s32 %s122, 1
      %s124 = scalar_select %p121, %s122, %s123
      %p127 = pneg %p121
      %p128 = scmp.eq.s32.totalorder %s9, 3
      %p129 = por %p127, %p128
      %p130 = scmp.ne.s32.totalorder %s122, %s125
      %p131 = scmp.eq.s32.totalorder %s9, 0
      %p132 = por %p130, %p131
      %p133 = scmp.ne.s32.totalorder %s122, %s125
      %p134 = scmp.eq.s32.totalorder %s14, 3
      %p135 = por %p133, %p134
      %p136 = scmp.ne.s32.totalorder %s125, %s126
      %p137 = scmp.eq.s32.totalorder %s14, 0
      %p138 = por %p136, %p137
      %p139 = scmp.ne.s32.totalorder %s125, %s126
      %p140 = scmp.eq.s32.totalorder %s15, 3
      %p141 = por %p139, %p140
      %p143 = scmp.ne.s32.totalorder %s126, %s142
      %p144 = scmp.eq.s32.totalorder %s15, 0
      %p145 = por %p143, %p144
      %p146 = scmp.le.s32.totalorder 1, %s9
      %p147 = scmp.lt.s32.totalorder %s9, 5
      %p148 = pnand %p146, %p147
      %p149 = pneg %p148
      // Predicated region
      $region9: #{flownet_er_forward.14} parent=5 // pred_check
        _
      $region10: #{flownet_er_forward.14} parent=5 // pred_check_branch
        %151 = sbr.rel (%p148) target = $region12
      $region11: #{flownet_er_forward.14} parent=5 // pred_region
        %s152 = ssub.s32 %s9, 1
      $region12: #{flownet_er_forward.14} parent=5 // pred_fallthru
        _
      %p153 = scmp.lt.s32.totalorder %s9, 4
      // Predicated region
      $region13: #{flownet_er_forward.14} parent=5 // pred_check
        %p154 = pneg %p153
      $region14: #{flownet_er_forward.14} parent=5 // pred_check_branch
        %156 = sbr.rel (%p154) target = $region16
      $region15: #{flownet_er_forward.14} parent=5 // pred_region
        // Predicated region
        $region17: #{flownet_er_forward.14} parent=15 // pred_check
          %p157 = pneg %p50
        $region18: #{flownet_er_forward.14} parent=15 // pred_check_branch
          %159 = sbr.rel (%p157) target = $region20
        $region19: #{flownet_er_forward.14} parent=15 // pred_region
          %s160 = sand.u32 %s40, 1
          %s161 = sand.u32 %s40, 1
          %s162 = smul.addr %s161, 72
          %s163 = scalar_lea.vmem [#allocation3], %s162
          %s164 = smul.u32 2, %s16
          %s165 = smul.u32 9, %s18
          %s166 = smul.addr %s164, 18
          %s167 = sadd.s32 %s165, %s166
          %s168 = smul.addr %s167, 4
          %s169 = scalar_lea.vmem %s0, %s168
          // Predicated region
          $region21: #{flownet_er_forward.14} parent=19 // pred_check
            _
          $region22: #{flownet_er_forward.14} parent=19 // pred_check_branch
            %171 = sbr.rel (0) target = $region24
          $region23: #{flownet_er_forward.14} parent=19 // pred_region
            // Predicated region
            $region25: #{flownet_er_forward.14} parent=23 // pred_check
              _
            $region26: #{flownet_er_forward.14} parent=23 // pred_check_branch
              %173 = sbr.rel (0) target = $region28
            $region27: #{flownet_er_forward.14} parent=23 // pred_region
              %s174 = scalar_lea.vmem %s169, 32
              %s175 = scalar_lea.vmem %s163, 32 [#allocation3]
              loop: start=0, step=1, limit=1
              $region29: #{flownet_er_forward.14} parent=27 // loop_pre_header
                _
              $region30: #{flownet_er_forward.14} parent=27 // loop_header
                %s177 = sphi 0, %s181
                %p178 = scmp.ge.s32.totalorder %s177, 1
                %s182 = sphi %s169, %s169
                %s183 = sphi %s163, %s163
              $region31: #{flownet_er_forward.14} parent=27 // loop_header_branch
                %180 = sbr.rel (%p178) target = $region35
              $region32: #{flownet_er_forward.14} parent=27 // loop_body
                %v184 = vld [vmem:[%s182] sm:$0xff]
                %185 = vst [vmem:[%s183] sm:$0xff] %v184
                %v186 = vld [vmem:[%s182 + $0x8] sm:$0xff]
                %187 = vst [vmem:[%s183 + $0x8] sm:$0xff] %v186
                %v188 = vld [vmem:[%s182 + $0x10] sm:$0xff]
                %189 = vst [vmem:[%s183 + $0x10] sm:$0xff] %v188
                %v190 = vld [vmem:[%s182 + $0x18] sm:$0xff]
                %191 = vst [vmem:[%s183 + $0x18] sm:$0xff] %v190
                %v192 = vld [vmem:[%s182 + $0x48] sm:$0xff]
                %193 = vst [vmem:[%s183 + $0x24] sm:$0xff] %v192
                %v194 = vld [vmem:[%s182 + $0x50] sm:$0xff]
                %195 = vst [vmem:[%s183 + $0x2c] sm:$0xff] %v194
                %v196 = vld [vmem:[%s182 + $0x58] sm:$0xff]
                %197 = vst [vmem:[%s183 + $0x34] sm:$0xff] %v196
                %v198 = vld [vmem:[%s182 + $0x60] sm:$0xff]
                %199 = vst [vmem:[%s183 + $0x3c] sm:$0xff] %v198
              $region33: #{flownet_er_forward.14} parent=27 // loop_footer
                %s181 = sadd.s32 1, %s177
              $region34: #{flownet_er_forward.14} parent=27 // loop_footer_branch
                %176 = sbr.rel target = $region30
              $region35: #{flownet_er_forward.14} parent=27 // loop_exit
                _
              %s201 = ssub.s32 16, 1
              loop: start=0, step=1, limit=1
              $region36: #{flownet_er_forward.14} parent=27 // loop_pre_header
                _
              $region37: #{flownet_er_forward.14} parent=27 // loop_header
                %s203 = sphi 0, %s207
                %p204 = scmp.ge.s32.totalorder %s203, 1
                %s208 = sphi %s174, %s174
                %s209 = sphi %s175, %s175
              $region38: #{flownet_er_forward.14} parent=27 // loop_header_branch
                %206 = sbr.rel (%p204) target = $region42
              $region39: #{flownet_er_forward.14} parent=27 // loop_body
                %v210 = vld [vmem:[%s208] sm:%s201]
                %211 = vst [vmem:[%s209] sm:%s201] %v210
                %v212 = vld [vmem:[%s208 + $0x48] sm:%s201]
                %213 = vst [vmem:[%s209 + $0x24] sm:%s201] %v212
              $region40: #{flownet_er_forward.14} parent=27 // loop_footer
                %s207 = sadd.s32 1, %s203
              $region41: #{flownet_er_forward.14} parent=27 // loop_footer_branch
                %202 = sbr.rel target = $region37
              $region42: #{flownet_er_forward.14} parent=27 // loop_exit
                _
            $region28: #{flownet_er_forward.14} parent=23 // pred_fallthru
              _
          $region24: #{flownet_er_forward.14} parent=19 // pred_fallthru
            _
          %214 = vnop
        $region20: #{flownet_er_forward.14} parent=15 // pred_fallthru
          _
        // Predicated region
        $region43: #{flownet_er_forward.14} parent=15 // pred_check
          %p215 = pneg %p78
        $region44: #{flownet_er_forward.14} parent=15 // pred_check_branch
          %217 = sbr.rel (%p215) target = $region46
        $region45: #{flownet_er_forward.14} parent=15 // pred_region
          %s218 = sand.u32 %s68, 1
          %s219 = sand.u32 %s68, 1
          %s220 = smul.addr %s219, 1152
          %s221 = scalar_lea.vmem [#allocation4], %s220
          %s222 = smul.u32 144, %s18
          %s223 = smul.u32 2, %s17
          %s224 = smul.addr %s222, 4
          %s225 = sadd.s32 %s223, %s224
          %s226 = smul.addr %s225, 4
          %s227 = scalar_lea.vmem %s1, %s226
          // Predicated region
          $region47: #{flownet_er_forward.14} parent=45 // pred_check
            _
          $region48: #{flownet_er_forward.14} parent=45 // pred_check_branch
            %229 = sbr.rel (0) target = $region50
          $region49: #{flownet_er_forward.14} parent=45 // pred_region
            // Predicated region
            $region51: #{flownet_er_forward.14} parent=49 // pred_check
              _
            $region52: #{flownet_er_forward.14} parent=49 // pred_check_branch
              %231 = sbr.rel (0) target = $region54
            $region53: #{flownet_er_forward.14} parent=49 // pred_region
              // Predicated region
              $region66: #{flownet_er_forward.14} parent=53 // pred_check
                _
              $region67: #{flownet_er_forward.14} parent=53 // pred_check_branch
                %533 = sbr.rel (0) target = $region69
              $region68: #{flownet_er_forward.14} parent=53 // pred_region
                loop: start=0, step=1, limit=1
                $region70: #{flownet_er_forward.14} parent=68 // loop_pre_header
                  _
                $region71: #{flownet_er_forward.14} parent=68 // loop_header
                  %s535 = sphi 0, %s539
                  %p536 = scmp.ge.s32.totalorder %s535, 1
                  %s540 = sphi %s227, %s227
                  %s541 = sphi %s221, %s221
                $region72: #{flownet_er_forward.14} parent=68 // loop_header_branch
                  %538 = sbr.rel (%p536) target = $region76
                $region73: #{flownet_er_forward.14} parent=68 // loop_body
                  %v542 = vld [vmem:[%s540] sm:$0xff]
                  %543 = vst [vmem:[%s541] sm:$0xff] %v542
                  %v544 = vld [vmem:[%s540 + $0x10] sm:$0xff]
                  %545 = vst [vmem:[%s541 + $0x8] sm:$0xff] %v544
                  %v546 = vld [vmem:[%s540 + $0x20] sm:$0xff]
                  %547 = vst [vmem:[%s541 + $0x10] sm:$0xff] %v546
                  %v548 = vld [vmem:[%s540 + $0x30] sm:$0xff]
                  %549 = vst [vmem:[%s541 + $0x18] sm:$0xff] %v548
                  %v550 = vld [vmem:[%s540 + $0x40] sm:$0xff]
                  %551 = vst [vmem:[%s541 + $0x20] sm:$0xff] %v550
                  %v552 = vld [vmem:[%s540 + $0x50] sm:$0xff]
                  %553 = vst [vmem:[%s541 + $0x28] sm:$0xff] %v552
                  %v554 = vld [vmem:[%s540 + $0x60] sm:$0xff]
                  %555 = vst [vmem:[%s541 + $0x30] sm:$0xff] %v554
                  %v556 = vld [vmem:[%s540 + $0x70] sm:$0xff]
                  %557 = vst [vmem:[%s541 + $0x38] sm:$0xff] %v556
                  %v558 = vld [vmem:[%s540 + $0x80] sm:$0xff]
                  %559 = vst [vmem:[%s541 + $0x40] sm:$0xff] %v558
                  %v560 = vld [vmem:[%s540 + $0x90] sm:$0xff]
                  %561 = vst [vmem:[%s541 + $0x48] sm:$0xff] %v560
                  %v562 = vld [vmem:[%s540 + $0xa0] sm:$0xff]
                  %563 = vst [vmem:[%s541 + $0x50] sm:$0xff] %v562
                  %v564 = vld [vmem:[%s540 + $0xb0] sm:$0xff]
                  %565 = vst [vmem:[%s541 + $0x58] sm:$0xff] %v564
                  %v566 = vld [vmem:[%s540 + $0xc0] sm:$0xff]
                  %567 = vst [vmem:[%s541 + $0x60] sm:$0xff] %v566
                  %v568 = vld [vmem:[%s540 + $0xd0] sm:$0xff]
                  %569 = vst [vmem:[%s541 + $0x68] sm:$0xff] %v568
                  %v570 = vld [vmem:[%s540 + $0xe0] sm:$0xff]
                  %571 = vst [vmem:[%s541 + $0x70] sm:$0xff] %v570
                  %v572 = vld [vmem:[%s540 + $0xf0] sm:$0xff]
                  %573 = vst [vmem:[%s541 + $0x78] sm:$0xff] %v572
                  %v574 = vld [vmem:[%s540 + $0x100] sm:$0xff]
                  %575 = vst [vmem:[%s541 + $0x80] sm:$0xff] %v574
                  %v576 = vld [vmem:[%s540 + $0x110] sm:$0xff]
                  %577 = vst [vmem:[%s541 + $0x88] sm:$0xff] %v576
                  %v578 = vld [vmem:[%s540 + $0x120] sm:$0xff]
                  %579 = vst [vmem:[%s541 + $0x90] sm:$0xff] %v578
                  %v580 = vld [vmem:[%s540 + $0x130] sm:$0xff]
                  %581 = vst [vmem:[%s541 + $0x98] sm:$0xff] %v580
                  %v582 = vld [vmem:[%s540 + $0x140] sm:$0xff]
                  %583 = vst [vmem:[%s541 + $0xa0] sm:$0xff] %v582
                  %v584 = vld [vmem:[%s540 + $0x150] sm:$0xff]
                  %585 = vst [vmem:[%s541 + $0xa8] sm:$0xff] %v584
                  %v586 = vld [vmem:[%s540 + $0x160] sm:$0xff]
                  %587 = vst [vmem:[%s541 + $0xb0] sm:$0xff] %v586
                  %v588 = vld [vmem:[%s540 + $0x170] sm:$0xff]
                  %589 = vst [vmem:[%s541 + $0xb8] sm:$0xff] %v588
                  %v590 = vld [vmem:[%s540 + $0x180] sm:$0xff]
                  %591 = vst [vmem:[%s541 + $0xc0] sm:$0xff] %v590
                  %v592 = vld [vmem:[%s540 + $0x190] sm:$0xff]
                  %593 = vst [vmem:[%s541 + $0xc8] sm:$0xff] %v592
                  %v594 = vld [vmem:[%s540 + $0x1a0] sm:$0xff]
                  %595 = vst [vmem:[%s541 + $0xd0] sm:$0xff] %v594
                  %v596 = vld [vmem:[%s540 + $0x1b0] sm:$0xff]
                  %597 = vst [vmem:[%s541 + $0xd8] sm:$0xff] %v596
                  %v598 = vld [vmem:[%s540 + $0x1c0] sm:$0xff]
                  %599 = vst [vmem:[%s541 + $0xe0] sm:$0xff] %v598
                  %v600 = vld [vmem:[%s540 + $0x1d0] sm:$0xff]
                  %601 = vst [vmem:[%s541 + $0xe8] sm:$0xff] %v600
                  %v602 = vld [vmem:[%s540 + $0x1e0] sm:$0xff]
                  %603 = vst [vmem:[%s541 + $0xf0] sm:$0xff] %v602
                  %v604 = vld [vmem:[%s540 + $0x1f0] sm:$0xff]
                  %605 = vst [vmem:[%s541 + $0xf8] sm:$0xff] %v604
                  %v606 = vld [vmem:[%s540 + $0x200] sm:$0xff]
                  %607 = vst [vmem:[%s541 + $0x100] sm:$0xff] %v606
                  %v608 = vld [vmem:[%s540 + $0x210] sm:$0xff]
                  %609 = vst [vmem:[%s541 + $0x108] sm:$0xff] %v608
                  %v610 = vld [vmem:[%s540 + $0x220] sm:$0xff]
                  %611 = vst [vmem:[%s541 + $0x110] sm:$0xff] %v610
                  %v612 = vld [vmem:[%s540 + $0x230] sm:$0xff]
                  %613 = vst [vmem:[%s541 + $0x118] sm:$0xff] %v612
                  %v614 = vld [vmem:[%s540 + $0x240] sm:$0xff]
                  %615 = vst [vmem:[%s541 + $0x120] sm:$0xff] %v614
                  %v616 = vld [vmem:[%s540 + $0x250] sm:$0xff]
                  %617 = vst [vmem:[%s541 + $0x128] sm:$0xff] %v616
                  %v618 = vld [vmem:[%s540 + $0x260] sm:$0xff]
                  %619 = vst [vmem:[%s541 + $0x130] sm:$0xff] %v618
                  %v620 = vld [vmem:[%s540 + $0x270] sm:$0xff]
                  %621 = vst [vmem:[%s541 + $0x138] sm:$0xff] %v620
                  %v622 = vld [vmem:[%s540 + $0x280] sm:$0xff]
                  %623 = vst [vmem:[%s541 + $0x140] sm:$0xff] %v622
                  %v624 = vld [vmem:[%s540 + $0x290] sm:$0xff]
                  %625 = vst [vmem:[%s541 + $0x148] sm:$0xff] %v624
                  %v626 = vld [vmem:[%s540 + $0x2a0] sm:$0xff]
                  %627 = vst [vmem:[%s541 + $0x150] sm:$0xff] %v626
                  %v628 = vld [vmem:[%s540 + $0x2b0] sm:$0xff]
                  %629 = vst [vmem:[%s541 + $0x158] sm:$0xff] %v628
                  %v630 = vld [vmem:[%s540 + $0x2c0] sm:$0xff]
                  %631 = vst [vmem:[%s541 + $0x160] sm:$0xff] %v630
                  %v632 = vld [vmem:[%s540 + $0x2d0] sm:$0xff]
                  %633 = vst [vmem:[%s541 + $0x168] sm:$0xff] %v632
                  %v634 = vld [vmem:[%s540 + $0x2e0] sm:$0xff]
                  %635 = vst [vmem:[%s541 + $0x170] sm:$0xff] %v634
                  %v636 = vld [vmem:[%s540 + $0x2f0] sm:$0xff]
                  %637 = vst [vmem:[%s541 + $0x178] sm:$0xff] %v636
                  %v638 = vld [vmem:[%s540 + $0x300] sm:$0xff]
                  %639 = vst [vmem:[%s541 + $0x180] sm:$0xff] %v638
                  %v640 = vld [vmem:[%s540 + $0x310] sm:$0xff]
                  %641 = vst [vmem:[%s541 + $0x188] sm:$0xff] %v640
                  %v642 = vld [vmem:[%s540 + $0x320] sm:$0xff]
                  %643 = vst [vmem:[%s541 + $0x190] sm:$0xff] %v642
                  %v644 = vld [vmem:[%s540 + $0x330] sm:$0xff]
                  %645 = vst [vmem:[%s541 + $0x198] sm:$0xff] %v644
                  %v646 = vld [vmem:[%s540 + $0x340] sm:$0xff]
                  %647 = vst [vmem:[%s541 + $0x1a0] sm:$0xff] %v646
                  %v648 = vld [vmem:[%s540 + $0x350] sm:$0xff]
                  %649 = vst [vmem:[%s541 + $0x1a8] sm:$0xff] %v648
                  %v650 = vld [vmem:[%s540 + $0x360] sm:$0xff]
                  %651 = vst [vmem:[%s541 + $0x1b0] sm:$0xff] %v650
                  %v652 = vld [vmem:[%s540 + $0x370] sm:$0xff]
                  %653 = vst [vmem:[%s541 + $0x1b8] sm:$0xff] %v652
                  %v654 = vld [vmem:[%s540 + $0x380] sm:$0xff]
                  %655 = vst [vmem:[%s541 + $0x1c0] sm:$0xff] %v654
                  %v656 = vld [vmem:[%s540 + $0x390] sm:$0xff]
                  %657 = vst [vmem:[%s541 + $0x1c8] sm:$0xff] %v656
                  %v658 = vld [vmem:[%s540 + $0x3a0] sm:$0xff]
                  %659 = vst [vmem:[%s541 + $0x1d0] sm:$0xff] %v658
                  %v660 = vld [vmem:[%s540 + $0x3b0] sm:$0xff]
                  %661 = vst [vmem:[%s541 + $0x1d8] sm:$0xff] %v660
                  %v662 = vld [vmem:[%s540 + $0x3c0] sm:$0xff]
                  %663 = vst [vmem:[%s541 + $0x1e0] sm:$0xff] %v662
                  %v664 = vld [vmem:[%s540 + $0x3d0] sm:$0xff]
                  %665 = vst [vmem:[%s541 + $0x1e8] sm:$0xff] %v664
                  %v666 = vld [vmem:[%s540 + $0x3e0] sm:$0xff]
                  %667 = vst [vmem:[%s541 + $0x1f0] sm:$0xff] %v666
                  %v668 = vld [vmem:[%s540 + $0x3f0] sm:$0xff]
                  %669 = vst [vmem:[%s541 + $0x1f8] sm:$0xff] %v668
                  %v670 = vld [vmem:[%s540 + $0x400] sm:$0xff]
                  %671 = vst [vmem:[%s541 + $0x200] sm:$0xff] %v670
                  %v672 = vld [vmem:[%s540 + $0x410] sm:$0xff]
                  %673 = vst [vmem:[%s541 + $0x208] sm:$0xff] %v672
                  %v674 = vld [vmem:[%s540 + $0x420] sm:$0xff]
                  %675 = vst [vmem:[%s541 + $0x210] sm:$0xff] %v674
                  %v676 = vld [vmem:[%s540 + $0x430] sm:$0xff]
                  %677 = vst [vmem:[%s541 + $0x218] sm:$0xff] %v676
                  %v678 = vld [vmem:[%s540 + $0x440] sm:$0xff]
                  %679 = vst [vmem:[%s541 + $0x220] sm:$0xff] %v678
                  %v680 = vld [vmem:[%s540 + $0x450] sm:$0xff]
                  %681 = vst [vmem:[%s541 + $0x228] sm:$0xff] %v680
                  %v682 = vld [vmem:[%s540 + $0x460] sm:$0xff]
                  %683 = vst [vmem:[%s541 + $0x230] sm:$0xff] %v682
                  %v684 = vld [vmem:[%s540 + $0x470] sm:$0xff]
                  %685 = vst [vmem:[%s541 + $0x238] sm:$0xff] %v684
                  %v686 = vld [vmem:[%s540 + $0x480] sm:$0xff]
                  %687 = vst [vmem:[%s541 + $0x240] sm:$0xff] %v686
                  %v688 = vld [vmem:[%s540 + $0x490] sm:$0xff]
                  %689 = vst [vmem:[%s541 + $0x248] sm:$0xff] %v688
                  %v690 = vld [vmem:[%s540 + $0x4a0] sm:$0xff]
                  %691 = vst [vmem:[%s541 + $0x250] sm:$0xff] %v690
                  %v692 = vld [vmem:[%s540 + $0x4b0] sm:$0xff]
                  %693 = vst [vmem:[%s541 + $0x258] sm:$0xff] %v692
                  %v694 = vld [vmem:[%s540 + $0x4c0] sm:$0xff]
                  %695 = vst [vmem:[%s541 + $0x260] sm:$0xff] %v694
                  %v696 = vld [vmem:[%s540 + $0x4d0] sm:$0xff]
                  %697 = vst [vmem:[%s541 + $0x268] sm:$0xff] %v696
                  %v698 = vld [vmem:[%s540 + $0x4e0] sm:$0xff]
                  %699 = vst [vmem:[%s541 + $0x270] sm:$0xff] %v698
                  %v700 = vld [vmem:[%s540 + $0x4f0] sm:$0xff]
                  %701 = vst [vmem:[%s541 + $0x278] sm:$0xff] %v700
                  %v702 = vld [vmem:[%s540 + $0x500] sm:$0xff]
                  %703 = vst [vmem:[%s541 + $0x280] sm:$0xff] %v702
                  %v704 = vld [vmem:[%s540 + $0x510] sm:$0xff]
                  %705 = vst [vmem:[%s541 + $0x288] sm:$0xff] %v704
                  %v706 = vld [vmem:[%s540 + $0x520] sm:$0xff]
                  %707 = vst [vmem:[%s541 + $0x290] sm:$0xff] %v706
                  %v708 = vld [vmem:[%s540 + $0x530] sm:$0xff]
                  %709 = vst [vmem:[%s541 + $0x298] sm:$0xff] %v708
                  %v710 = vld [vmem:[%s540 + $0x540] sm:$0xff]
                  %711 = vst [vmem:[%s541 + $0x2a0] sm:$0xff] %v710
                  %v712 = vld [vmem:[%s540 + $0x550] sm:$0xff]
                  %713 = vst [vmem:[%s541 + $0x2a8] sm:$0xff] %v712
                  %v714 = vld [vmem:[%s540 + $0x560] sm:$0xff]
                  %715 = vst [vmem:[%s541 + $0x2b0] sm:$0xff] %v714
                  %v716 = vld [vmem:[%s540 + $0x570] sm:$0xff]
                  %717 = vst [vmem:[%s541 + $0x2b8] sm:$0xff] %v716
                  %v718 = vld [vmem:[%s540 + $0x580] sm:$0xff]
                  %719 = vst [vmem:[%s541 + $0x2c0] sm:$0xff] %v718
                  %v720 = vld [vmem:[%s540 + $0x590] sm:$0xff]
                  %721 = vst [vmem:[%s541 + $0x2c8] sm:$0xff] %v720
                  %v722 = vld [vmem:[%s540 + $0x5a0] sm:$0xff]
                  %723 = vst [vmem:[%s541 + $0x2d0] sm:$0xff] %v722
                  %v724 = vld [vmem:[%s540 + $0x5b0] sm:$0xff]
                  %725 = vst [vmem:[%s541 + $0x2d8] sm:$0xff] %v724
                  %v726 = vld [vmem:[%s540 + $0x5c0] sm:$0xff]
                  %727 = vst [vmem:[%s541 + $0x2e0] sm:$0xff] %v726
                  %v728 = vld [vmem:[%s540 + $0x5d0] sm:$0xff]
                  %729 = vst [vmem:[%s541 + $0x2e8] sm:$0xff] %v728
                  %v730 = vld [vmem:[%s540 + $0x5e0] sm:$0xff]
                  %731 = vst [vmem:[%s541 + $0x2f0] sm:$0xff] %v730
                  %v732 = vld [vmem:[%s540 + $0x5f0] sm:$0xff]
                  %733 = vst [vmem:[%s541 + $0x2f8] sm:$0xff] %v732
                  %v734 = vld [vmem:[%s540 + $0x600] sm:$0xff]
                  %735 = vst [vmem:[%s541 + $0x300] sm:$0xff] %v734
                  %v736 = vld [vmem:[%s540 + $0x610] sm:$0xff]
                  %737 = vst [vmem:[%s541 + $0x308] sm:$0xff] %v736
                  %v738 = vld [vmem:[%s540 + $0x620] sm:$0xff]
                  %739 = vst [vmem:[%s541 + $0x310] sm:$0xff] %v738
                  %v740 = vld [vmem:[%s540 + $0x630] sm:$0xff]
                  %741 = vst [vmem:[%s541 + $0x318] sm:$0xff] %v740
                  %v742 = vld [vmem:[%s540 + $0x640] sm:$0xff]
                  %743 = vst [vmem:[%s541 + $0x320] sm:$0xff] %v742
                  %v744 = vld [vmem:[%s540 + $0x650] sm:$0xff]
                  %745 = vst [vmem:[%s541 + $0x328] sm:$0xff] %v744
                  %v746 = vld [vmem:[%s540 + $0x660] sm:$0xff]
                  %747 = vst [vmem:[%s541 + $0x330] sm:$0xff] %v746
                  %v748 = vld [vmem:[%s540 + $0x670] sm:$0xff]
                  %749 = vst [vmem:[%s541 + $0x338] sm:$0xff] %v748
                  %v750 = vld [vmem:[%s540 + $0x680] sm:$0xff]
                  %751 = vst [vmem:[%s541 + $0x340] sm:$0xff] %v750
                  %v752 = vld [vmem:[%s540 + $0x690] sm:$0xff]
                  %753 = vst [vmem:[%s541 + $0x348] sm:$0xff] %v752
                  %v754 = vld [vmem:[%s540 + $0x6a0] sm:$0xff]
                  %755 = vst [vmem:[%s541 + $0x350] sm:$0xff] %v754
                  %v756 = vld [vmem:[%s540 + $0x6b0] sm:$0xff]
                  %757 = vst [vmem:[%s541 + $0x358] sm:$0xff] %v756
                  %v758 = vld [vmem:[%s540 + $0x6c0] sm:$0xff]
                  %759 = vst [vmem:[%s541 + $0x360] sm:$0xff] %v758
                  %v760 = vld [vmem:[%s540 + $0x6d0] sm:$0xff]
                  %761 = vst [vmem:[%s541 + $0x368] sm:$0xff] %v760
                  %v762 = vld [vmem:[%s540 + $0x6e0] sm:$0xff]
                  %763 = vst [vmem:[%s541 + $0x370] sm:$0xff] %v762
                  %v764 = vld [vmem:[%s540 + $0x6f0] sm:$0xff]
                  %765 = vst [vmem:[%s541 + $0x378] sm:$0xff] %v764
                  %v766 = vld [vmem:[%s540 + $0x700] sm:$0xff]
                  %767 = vst [vmem:[%s541 + $0x380] sm:$0xff] %v766
                  %v768 = vld [vmem:[%s540 + $0x710] sm:$0xff]
                  %769 = vst [vmem:[%s541 + $0x388] sm:$0xff] %v768
                  %v770 = vld [vmem:[%s540 + $0x720] sm:$0xff]
                  %771 = vst [vmem:[%s541 + $0x390] sm:$0xff] %v770
                  %v772 = vld [vmem:[%s540 + $0x730] sm:$0xff]
                  %773 = vst [vmem:[%s541 + $0x398] sm:$0xff] %v772
                  %v774 = vld [vmem:[%s540 + $0x740] sm:$0xff]
                  %775 = vst [vmem:[%s541 + $0x3a0] sm:$0xff] %v774
                  %v776 = vld [vmem:[%s540 + $0x750] sm:$0xff]
                  %777 = vst [vmem:[%s541 + $0x3a8] sm:$0xff] %v776
                  %v778 = vld [vmem:[%s540 + $0x760] sm:$0xff]
                  %779 = vst [vmem:[%s541 + $0x3b0] sm:$0xff] %v778
                  %v780 = vld [vmem:[%s540 + $0x770] sm:$0xff]
                  %781 = vst [vmem:[%s541 + $0x3b8] sm:$0xff] %v780
                  %v782 = vld [vmem:[%s540 + $0x780] sm:$0xff]
                  %783 = vst [vmem:[%s541 + $0x3c0] sm:$0xff] %v782
                  %v784 = vld [vmem:[%s540 + $0x790] sm:$0xff]
                  %785 = vst [vmem:[%s541 + $0x3c8] sm:$0xff] %v784
                  %v786 = vld [vmem:[%s540 + $0x7a0] sm:$0xff]
                  %787 = vst [vmem:[%s541 + $0x3d0] sm:$0xff] %v786
                  %v788 = vld [vmem:[%s540 + $0x7b0] sm:$0xff]
                  %789 = vst [vmem:[%s541 + $0x3d8] sm:$0xff] %v788
                  %v790 = vld [vmem:[%s540 + $0x7c0] sm:$0xff]
                  %791 = vst [vmem:[%s541 + $0x3e0] sm:$0xff] %v790
                  %v792 = vld [vmem:[%s540 + $0x7d0] sm:$0xff]
                  %793 = vst [vmem:[%s541 + $0x3e8] sm:$0xff] %v792
                  %v794 = vld [vmem:[%s540 + $0x7e0] sm:$0xff]
                  %795 = vst [vmem:[%s541 + $0x3f0] sm:$0xff] %v794
                  %v796 = vld [vmem:[%s540 + $0x7f0] sm:$0xff]
                  %797 = vst [vmem:[%s541 + $0x3f8] sm:$0xff] %v796
                  %v798 = vld [vmem:[%s540 + $0x800] sm:$0xff]
                  %799 = vst [vmem:[%s541 + $0x400] sm:$0xff] %v798
                  %v800 = vld [vmem:[%s540 + $0x810] sm:$0xff]
                  %801 = vst [vmem:[%s541 + $0x408] sm:$0xff] %v800
                  %v802 = vld [vmem:[%s540 + $0x820] sm:$0xff]
                  %803 = vst [vmem:[%s541 + $0x410] sm:$0xff] %v802
                  %v804 = vld [vmem:[%s540 + $0x830] sm:$0xff]
                  %805 = vst [vmem:[%s541 + $0x418] sm:$0xff] %v804
                  %v806 = vld [vmem:[%s540 + $0x840] sm:$0xff]
                  %807 = vst [vmem:[%s541 + $0x420] sm:$0xff] %v806
                  %v808 = vld [vmem:[%s540 + $0x850] sm:$0xff]
                  %809 = vst [vmem:[%s541 + $0x428] sm:$0xff] %v808
                  %v810 = vld [vmem:[%s540 + $0x860] sm:$0xff]
                  %811 = vst [vmem:[%s541 + $0x430] sm:$0xff] %v810
                  %v812 = vld [vmem:[%s540 + $0x870] sm:$0xff]
                  %813 = vst [vmem:[%s541 + $0x438] sm:$0xff] %v812
                  %v814 = vld [vmem:[%s540 + $0x880] sm:$0xff]
                  %815 = vst [vmem:[%s541 + $0x440] sm:$0xff] %v814
                  %v816 = vld [vmem:[%s540 + $0x890] sm:$0xff]
                  %817 = vst [vmem:[%s541 + $0x448] sm:$0xff] %v816
                  %v818 = vld [vmem:[%s540 + $0x8a0] sm:$0xff]
                  %819 = vst [vmem:[%s541 + $0x450] sm:$0xff] %v818
                  %v820 = vld [vmem:[%s540 + $0x8b0] sm:$0xff]
                  %821 = vst [vmem:[%s541 + $0x458] sm:$0xff] %v820
                  %v822 = vld [vmem:[%s540 + $0x8c0] sm:$0xff]
                  %823 = vst [vmem:[%s541 + $0x460] sm:$0xff] %v822
                  %v824 = vld [vmem:[%s540 + $0x8d0] sm:$0xff]
                  %825 = vst [vmem:[%s541 + $0x468] sm:$0xff] %v824
                  %v826 = vld [vmem:[%s540 + $0x8e0] sm:$0xff]
                  %827 = vst [vmem:[%s541 + $0x470] sm:$0xff] %v826
                  %v828 = vld [vmem:[%s540 + $0x8f0] sm:$0xff]
                  %829 = vst [vmem:[%s541 + $0x478] sm:$0xff] %v828
                $region74: #{flownet_er_forward.14} parent=68 // loop_footer
                  %s539 = sadd.s32 1, %s535
                $region75: #{flownet_er_forward.14} parent=68 // loop_footer_branch
                  %534 = sbr.rel target = $region71
                $region76: #{flownet_er_forward.14} parent=68 // loop_exit
                  _
              $region69: #{flownet_er_forward.14} parent=53 // pred_fallthru
                _
              // Predicated region
              $region77: #{flownet_er_forward.14} parent=53 // pred_check
                _
              $region78: #{flownet_er_forward.14} parent=53 // pred_check_branch
                %831 = sbr.rel target = $region80
              $region79: #{flownet_er_forward.14} parent=53 // pred_region
                _
              $region80: #{flownet_er_forward.14} parent=53 // pred_fallthru
                _
            $region54: #{flownet_er_forward.14} parent=49 // pred_fallthru
              _
            // Predicated region
            $region55: #{flownet_er_forward.14} parent=49 // pred_check
              _
            $region56: #{flownet_er_forward.14} parent=49 // pred_check_branch
              %233 = sbr.rel target = $region58
            $region57: #{flownet_er_forward.14} parent=49 // pred_region
              %s235 = ssub.s32 256, 1
              loop: start=0, step=1, limit=1
              $region59: #{flownet_er_forward.14} parent=57 // loop_pre_header
                _
              $region60: #{flownet_er_forward.14} parent=57 // loop_header
                %s237 = sphi 0, %s241
                %p238 = scmp.ge.s32.totalorder %s237, 1
                %s242 = sphi %s227, %s227
                %s243 = sphi %s221, %s221
              $region61: #{flownet_er_forward.14} parent=57 // loop_header_branch
                %240 = sbr.rel (%p238) target = $region65
              $region62: #{flownet_er_forward.14} parent=57 // loop_body
                %v244 = vld [vmem:[%s242] sm:%s235]
                %245 = vst [vmem:[%s243] sm:%s235] %v244
                %v246 = vld [vmem:[%s242 + $0x10] sm:%s235]
                %247 = vst [vmem:[%s243 + $0x8] sm:%s235] %v246
                %v248 = vld [vmem:[%s242 + $0x20] sm:%s235]
                %249 = vst [vmem:[%s243 + $0x10] sm:%s235] %v248
                %v250 = vld [vmem:[%s242 + $0x30] sm:%s235]
                %251 = vst [vmem:[%s243 + $0x18] sm:%s235] %v250
                %v252 = vld [vmem:[%s242 + $0x40] sm:%s235]
                %253 = vst [vmem:[%s243 + $0x20] sm:%s235] %v252
                %v254 = vld [vmem:[%s242 + $0x50] sm:%s235]
                %255 = vst [vmem:[%s243 + $0x28] sm:%s235] %v254
                %v256 = vld [vmem:[%s242 + $0x60] sm:%s235]
                %257 = vst [vmem:[%s243 + $0x30] sm:%s235] %v256
                %v258 = vld [vmem:[%s242 + $0x70] sm:%s235]
                %259 = vst [vmem:[%s243 + $0x38] sm:%s235] %v258
                %v260 = vld [vmem:[%s242 + $0x80] sm:%s235]
                %261 = vst [vmem:[%s243 + $0x40] sm:%s235] %v260
                %v262 = vld [vmem:[%s242 + $0x90] sm:%s235]
                %263 = vst [vmem:[%s243 + $0x48] sm:%s235] %v262
                %v264 = vld [vmem:[%s242 + $0xa0] sm:%s235]
                %265 = vst [vmem:[%s243 + $0x50] sm:%s235] %v264
                %v266 = vld [vmem:[%s242 + $0xb0] sm:%s235]
                %267 = vst [vmem:[%s243 + $0x58] sm:%s235] %v266
                %v268 = vld [vmem:[%s242 + $0xc0] sm:%s235]
                %269 = vst [vmem:[%s243 + $0x60] sm:%s235] %v268
                %v270 = vld [vmem:[%s242 + $0xd0] sm:%s235]
                %271 = vst [vmem:[%s243 + $0x68] sm:%s235] %v270
                %v272 = vld [vmem:[%s242 + $0xe0] sm:%s235]
                %273 = vst [vmem:[%s243 + $0x70] sm:%s235] %v272
                %v274 = vld [vmem:[%s242 + $0xf0] sm:%s235]
                %275 = vst [vmem:[%s243 + $0x78] sm:%s235] %v274
                %v276 = vld [vmem:[%s242 + $0x100] sm:%s235]
                %277 = vst [vmem:[%s243 + $0x80] sm:%s235] %v276
                %v278 = vld [vmem:[%s242 + $0x110] sm:%s235]
                %279 = vst [vmem:[%s243 + $0x88] sm:%s235] %v278
                %v280 = vld [vmem:[%s242 + $0x120] sm:%s235]
                %281 = vst [vmem:[%s243 + $0x90] sm:%s235] %v280
                %v282 = vld [vmem:[%s242 + $0x130] sm:%s235]
                %283 = vst [vmem:[%s243 + $0x98] sm:%s235] %v282
                %v284 = vld [vmem:[%s242 + $0x140] sm:%s235]
                %285 = vst [vmem:[%s243 + $0xa0] sm:%s235] %v284
                %v286 = vld [vmem:[%s242 + $0x150] sm:%s235]
                %287 = vst [vmem:[%s243 + $0xa8] sm:%s235] %v286
                %v288 = vld [vmem:[%s242 + $0x160] sm:%s235]
                %289 = vst [vmem:[%s243 + $0xb0] sm:%s235] %v288
                %v290 = vld [vmem:[%s242 + $0x170] sm:%s235]
                %291 = vst [vmem:[%s243 + $0xb8] sm:%s235] %v290
                %v292 = vld [vmem:[%s242 + $0x180] sm:%s235]
                %293 = vst [vmem:[%s243 + $0xc0] sm:%s235] %v292
                %v294 = vld [vmem:[%s242 + $0x190] sm:%s235]
                %295 = vst [vmem:[%s243 + $0xc8] sm:%s235] %v294
                %v296 = vld [vmem:[%s242 + $0x1a0] sm:%s235]
                %297 = vst [vmem:[%s243 + $0xd0] sm:%s235] %v296
                %v298 = vld [vmem:[%s242 + $0x1b0] sm:%s235]
                %299 = vst [vmem:[%s243 + $0xd8] sm:%s235] %v298
                %v300 = vld [vmem:[%s242 + $0x1c0] sm:%s235]
                %301 = vst [vmem:[%s243 + $0xe0] sm:%s235] %v300
                %v302 = vld [vmem:[%s242 + $0x1d0] sm:%s235]
                %303 = vst [vmem:[%s243 + $0xe8] sm:%s235] %v302
                %v304 = vld [vmem:[%s242 + $0x1e0] sm:%s235]
                %305 = vst [vmem:[%s243 + $0xf0] sm:%s235] %v304
                %v306 = vld [vmem:[%s242 + $0x1f0] sm:%s235]
                %307 = vst [vmem:[%s243 + $0xf8] sm:%s235] %v306
                %v308 = vld [vmem:[%s242 + $0x200] sm:%s235]
                %309 = vst [vmem:[%s243 + $0x100] sm:%s235] %v308
                %v310 = vld [vmem:[%s242 + $0x210] sm:%s235]
                %311 = vst [vmem:[%s243 + $0x108] sm:%s235] %v310
                %v312 = vld [vmem:[%s242 + $0x220] sm:%s235]
                %313 = vst [vmem:[%s243 + $0x110] sm:%s235] %v312
                %v314 = vld [vmem:[%s242 + $0x230] sm:%s235]
                %315 = vst [vmem:[%s243 + $0x118] sm:%s235] %v314
                %v316 = vld [vmem:[%s242 + $0x240] sm:%s235]
                %317 = vst [vmem:[%s243 + $0x120] sm:%s235] %v316
                %v318 = vld [vmem:[%s242 + $0x250] sm:%s235]
                %319 = vst [vmem:[%s243 + $0x128] sm:%s235] %v318
                %v320 = vld [vmem:[%s242 + $0x260] sm:%s235]
                %321 = vst [vmem:[%s243 + $0x130] sm:%s235] %v320
                %v322 = vld [vmem:[%s242 + $0x270] sm:%s235]
                %323 = vst [vmem:[%s243 + $0x138] sm:%s235] %v322
                %v324 = vld [vmem:[%s242 + $0x280] sm:%s235]
                %325 = vst [vmem:[%s243 + $0x140] sm:%s235] %v324
                %v326 = vld [vmem:[%s242 + $0x290] sm:%s235]
                %327 = vst [vmem:[%s243 + $0x148] sm:%s235] %v326
                %v328 = vld [vmem:[%s242 + $0x2a0] sm:%s235]
                %329 = vst [vmem:[%s243 + $0x150] sm:%s235] %v328
                %v330 = vld [vmem:[%s242 + $0x2b0] sm:%s235]
                %331 = vst [vmem:[%s243 + $0x158] sm:%s235] %v330
                %v332 = vld [vmem:[%s242 + $0x2c0] sm:%s235]
                %333 = vst [vmem:[%s243 + $0x160] sm:%s235] %v332
                %v334 = vld [vmem:[%s242 + $0x2d0] sm:%s235]
                %335 = vst [vmem:[%s243 + $0x168] sm:%s235] %v334
                %v336 = vld [vmem:[%s242 + $0x2e0] sm:%s235]
                %337 = vst [vmem:[%s243 + $0x170] sm:%s235] %v336
                %v338 = vld [vmem:[%s242 + $0x2f0] sm:%s235]
                %339 = vst [vmem:[%s243 + $0x178] sm:%s235] %v338
                %v340 = vld [vmem:[%s242 + $0x300] sm:%s235]
                %341 = vst [vmem:[%s243 + $0x180] sm:%s235] %v340
                %v342 = vld [vmem:[%s242 + $0x310] sm:%s235]
                %343 = vst [vmem:[%s243 + $0x188] sm:%s235] %v342
                %v344 = vld [vmem:[%s242 + $0x320] sm:%s235]
                %345 = vst [vmem:[%s243 + $0x190] sm:%s235] %v344
                %v346 = vld [vmem:[%s242 + $0x330] sm:%s235]
                %347 = vst [vmem:[%s243 + $0x198] sm:%s235] %v346
                %v348 = vld [vmem:[%s242 + $0x340] sm:%s235]
                %349 = vst [vmem:[%s243 + $0x1a0] sm:%s235] %v348
                %v350 = vld [vmem:[%s242 + $0x350] sm:%s235]
                %351 = vst [vmem:[%s243 + $0x1a8] sm:%s235] %v350
                %v352 = vld [vmem:[%s242 + $0x360] sm:%s235]
                %353 = vst [vmem:[%s243 + $0x1b0] sm:%s235] %v352
                %v354 = vld [vmem:[%s242 + $0x370] sm:%s235]
                %355 = vst [vmem:[%s243 + $0x1b8] sm:%s235] %v354
                %v356 = vld [vmem:[%s242 + $0x380] sm:%s235]
                %357 = vst [vmem:[%s243 + $0x1c0] sm:%s235] %v356
                %v358 = vld [vmem:[%s242 + $0x390] sm:%s235]
                %359 = vst [vmem:[%s243 + $0x1c8] sm:%s235] %v358
                %v360 = vld [vmem:[%s242 + $0x3a0] sm:%s235]
                %361 = vst [vmem:[%s243 + $0x1d0] sm:%s235] %v360
                %v362 = vld [vmem:[%s242 + $0x3b0] sm:%s235]
                %363 = vst [vmem:[%s243 + $0x1d8] sm:%s235] %v362
                %v364 = vld [vmem:[%s242 + $0x3c0] sm:%s235]
                %365 = vst [vmem:[%s243 + $0x1e0] sm:%s235] %v364
                %v366 = vld [vmem:[%s242 + $0x3d0] sm:%s235]
                %367 = vst [vmem:[%s243 + $0x1e8] sm:%s235] %v366
                %v368 = vld [vmem:[%s242 + $0x3e0] sm:%s235]
                %369 = vst [vmem:[%s243 + $0x1f0] sm:%s235] %v368
                %v370 = vld [vmem:[%s242 + $0x3f0] sm:%s235]
                %371 = vst [vmem:[%s243 + $0x1f8] sm:%s235] %v370
                %v372 = vld [vmem:[%s242 + $0x400] sm:%s235]
                %373 = vst [vmem:[%s243 + $0x200] sm:%s235] %v372
                %v374 = vld [vmem:[%s242 + $0x410] sm:%s235]
                %375 = vst [vmem:[%s243 + $0x208] sm:%s235] %v374
                %v376 = vld [vmem:[%s242 + $0x420] sm:%s235]
                %377 = vst [vmem:[%s243 + $0x210] sm:%s235] %v376
                %v378 = vld [vmem:[%s242 + $0x430] sm:%s235]
                %379 = vst [vmem:[%s243 + $0x218] sm:%s235] %v378
                %v380 = vld [vmem:[%s242 + $0x440] sm:%s235]
                %381 = vst [vmem:[%s243 + $0x220] sm:%s235] %v380
                %v382 = vld [vmem:[%s242 + $0x450] sm:%s235]
                %383 = vst [vmem:[%s243 + $0x228] sm:%s235] %v382
                %v384 = vld [vmem:[%s242 + $0x460] sm:%s235]
                %385 = vst [vmem:[%s243 + $0x230] sm:%s235] %v384
                %v386 = vld [vmem:[%s242 + $0x470] sm:%s235]
                %387 = vst [vmem:[%s243 + $0x238] sm:%s235] %v386
                %v388 = vld [vmem:[%s242 + $0x480] sm:%s235]
                %389 = vst [vmem:[%s243 + $0x240] sm:%s235] %v388
                %v390 = vld [vmem:[%s242 + $0x490] sm:%s235]
                %391 = vst [vmem:[%s243 + $0x248] sm:%s235] %v390
                %v392 = vld [vmem:[%s242 + $0x4a0] sm:%s235]
                %393 = vst [vmem:[%s243 + $0x250] sm:%s235] %v392
                %v394 = vld [vmem:[%s242 + $0x4b0] sm:%s235]
                %395 = vst [vmem:[%s243 + $0x258] sm:%s235] %v394
                %v396 = vld [vmem:[%s242 + $0x4c0] sm:%s235]
                %397 = vst [vmem:[%s243 + $0x260] sm:%s235] %v396
                %v398 = vld [vmem:[%s242 + $0x4d0] sm:%s235]
                %399 = vst [vmem:[%s243 + $0x268] sm:%s235] %v398
                %v400 = vld [vmem:[%s242 + $0x4e0] sm:%s235]
                %401 = vst [vmem:[%s243 + $0x270] sm:%s235] %v400
                %v402 = vld [vmem:[%s242 + $0x4f0] sm:%s235]
                %403 = vst [vmem:[%s243 + $0x278] sm:%s235] %v402
                %v404 = vld [vmem:[%s242 + $0x500] sm:%s235]
                %405 = vst [vmem:[%s243 + $0x280] sm:%s235] %v404
                %v406 = vld [vmem:[%s242 + $0x510] sm:%s235]
                %407 = vst [vmem:[%s243 + $0x288] sm:%s235] %v406
                %v408 = vld [vmem:[%s242 + $0x520] sm:%s235]
                %409 = vst [vmem:[%s243 + $0x290] sm:%s235] %v408
                %v410 = vld [vmem:[%s242 + $0x530] sm:%s235]
                %411 = vst [vmem:[%s243 + $0x298] sm:%s235] %v410
                %v412 = vld [vmem:[%s242 + $0x540] sm:%s235]
                %413 = vst [vmem:[%s243 + $0x2a0] sm:%s235] %v412
                %v414 = vld [vmem:[%s242 + $0x550] sm:%s235]
                %415 = vst [vmem:[%s243 + $0x2a8] sm:%s235] %v414
                %v416 = vld [vmem:[%s242 + $0x560] sm:%s235]
                %417 = vst [vmem:[%s243 + $0x2b0] sm:%s235] %v416
                %v418 = vld [vmem:[%s242 + $0x570] sm:%s235]
                %419 = vst [vmem:[%s243 + $0x2b8] sm:%s235] %v418
                %v420 = vld [vmem:[%s242 + $0x580] sm:%s235]
                %421 = vst [vmem:[%s243 + $0x2c0] sm:%s235] %v420
                %v422 = vld [vmem:[%s242 + $0x590] sm:%s235]
                %423 = vst [vmem:[%s243 + $0x2c8] sm:%s235] %v422
                %v424 = vld [vmem:[%s242 + $0x5a0] sm:%s235]
                %425 = vst [vmem:[%s243 + $0x2d0] sm:%s235] %v424
                %v426 = vld [vmem:[%s242 + $0x5b0] sm:%s235]
                %427 = vst [vmem:[%s243 + $0x2d8] sm:%s235] %v426
                %v428 = vld [vmem:[%s242 + $0x5c0] sm:%s235]
                %429 = vst [vmem:[%s243 + $0x2e0] sm:%s235] %v428
                %v430 = vld [vmem:[%s242 + $0x5d0] sm:%s235]
                %431 = vst [vmem:[%s243 + $0x2e8] sm:%s235] %v430
                %v432 = vld [vmem:[%s242 + $0x5e0] sm:%s235]
                %433 = vst [vmem:[%s243 + $0x2f0] sm:%s235] %v432
                %v434 = vld [vmem:[%s242 + $0x5f0] sm:%s235]
                %435 = vst [vmem:[%s243 + $0x2f8] sm:%s235] %v434
                %v436 = vld [vmem:[%s242 + $0x600] sm:%s235]
                %437 = vst [vmem:[%s243 + $0x300] sm:%s235] %v436
                %v438 = vld [vmem:[%s242 + $0x610] sm:%s235]
                %439 = vst [vmem:[%s243 + $0x308] sm:%s235] %v438
                %v440 = vld [vmem:[%s242 + $0x620] sm:%s235]
                %441 = vst [vmem:[%s243 + $0x310] sm:%s235] %v440
                %v442 = vld [vmem:[%s242 + $0x630] sm:%s235]
                %443 = vst [vmem:[%s243 + $0x318] sm:%s235] %v442
                %v444 = vld [vmem:[%s242 + $0x640] sm:%s235]
                %445 = vst [vmem:[%s243 + $0x320] sm:%s235] %v444
                %v446 = vld [vmem:[%s242 + $0x650] sm:%s235]
                %447 = vst [vmem:[%s243 + $0x328] sm:%s235] %v446
                %v448 = vld [vmem:[%s242 + $0x660] sm:%s235]
                %449 = vst [vmem:[%s243 + $0x330] sm:%s235] %v448
                %v450 = vld [vmem:[%s242 + $0x670] sm:%s235]
                %451 = vst [vmem:[%s243 + $0x338] sm:%s235] %v450
                %v452 = vld [vmem:[%s242 + $0x680] sm:%s235]
                %453 = vst [vmem:[%s243 + $0x340] sm:%s235] %v452
                %v454 = vld [vmem:[%s242 + $0x690] sm:%s235]
                %455 = vst [vmem:[%s243 + $0x348] sm:%s235] %v454
                %v456 = vld [vmem:[%s242 + $0x6a0] sm:%s235]
                %457 = vst [vmem:[%s243 + $0x350] sm:%s235] %v456
                %v458 = vld [vmem:[%s242 + $0x6b0] sm:%s235]
                %459 = vst [vmem:[%s243 + $0x358] sm:%s235] %v458
                %v460 = vld [vmem:[%s242 + $0x6c0] sm:%s235]
                %461 = vst [vmem:[%s243 + $0x360] sm:%s235] %v460
                %v462 = vld [vmem:[%s242 + $0x6d0] sm:%s235]
                %463 = vst [vmem:[%s243 + $0x368] sm:%s235] %v462
                %v464 = vld [vmem:[%s242 + $0x6e0] sm:%s235]
                %465 = vst [vmem:[%s243 + $0x370] sm:%s235] %v464
                %v466 = vld [vmem:[%s242 + $0x6f0] sm:%s235]
                %467 = vst [vmem:[%s243 + $0x378] sm:%s235] %v466
                %v468 = vld [vmem:[%s242 + $0x700] sm:%s235]
                %469 = vst [vmem:[%s243 + $0x380] sm:%s235] %v468
                %v470 = vld [vmem:[%s242 + $0x710] sm:%s235]
                %471 = vst [vmem:[%s243 + $0x388] sm:%s235] %v470
                %v472 = vld [vmem:[%s242 + $0x720] sm:%s235]
                %473 = vst [vmem:[%s243 + $0x390] sm:%s235] %v472
                %v474 = vld [vmem:[%s242 + $0x730] sm:%s235]
                %475 = vst [vmem:[%s243 + $0x398] sm:%s235] %v474
                %v476 = vld [vmem:[%s242 + $0x740] sm:%s235]
                %477 = vst [vmem:[%s243 + $0x3a0] sm:%s235] %v476
                %v478 = vld [vmem:[%s242 + $0x750] sm:%s235]
                %479 = vst [vmem:[%s243 + $0x3a8] sm:%s235] %v478
                %v480 = vld [vmem:[%s242 + $0x760] sm:%s235]
                %481 = vst [vmem:[%s243 + $0x3b0] sm:%s235] %v480
                %v482 = vld [vmem:[%s242 + $0x770] sm:%s235]
                %483 = vst [vmem:[%s243 + $0x3b8] sm:%s235] %v482
                %v484 = vld [vmem:[%s242 + $0x780] sm:%s235]
                %485 = vst [vmem:[%s243 + $0x3c0] sm:%s235] %v484
                %v486 = vld [vmem:[%s242 + $0x790] sm:%s235]
                %487 = vst [vmem:[%s243 + $0x3c8] sm:%s235] %v486
                %v488 = vld [vmem:[%s242 + $0x7a0] sm:%s235]
                %489 = vst [vmem:[%s243 + $0x3d0] sm:%s235] %v488
                %v490 = vld [vmem:[%s242 + $0x7b0] sm:%s235]
                %491 = vst [vmem:[%s243 + $0x3d8] sm:%s235] %v490
                %v492 = vld [vmem:[%s242 + $0x7c0] sm:%s235]
                %493 = vst [vmem:[%s243 + $0x3e0] sm:%s235] %v492
                %v494 = vld [vmem:[%s242 + $0x7d0] sm:%s235]
                %495 = vst [vmem:[%s243 + $0x3e8] sm:%s235] %v494
                %v496 = vld [vmem:[%s242 + $0x7e0] sm:%s235]
                %497 = vst [vmem:[%s243 + $0x3f0] sm:%s235] %v496
                %v498 = vld [vmem:[%s242 + $0x7f0] sm:%s235]
                %499 = vst [vmem:[%s243 + $0x3f8] sm:%s235] %v498
                %v500 = vld [vmem:[%s242 + $0x800] sm:%s235]
                %501 = vst [vmem:[%s243 + $0x400] sm:%s235] %v500
                %v502 = vld [vmem:[%s242 + $0x810] sm:%s235]
                %503 = vst [vmem:[%s243 + $0x408] sm:%s235] %v502
                %v504 = vld [vmem:[%s242 + $0x820] sm:%s235]
                %505 = vst [vmem:[%s243 + $0x410] sm:%s235] %v504
                %v506 = vld [vmem:[%s242 + $0x830] sm:%s235]
                %507 = vst [vmem:[%s243 + $0x418] sm:%s235] %v506
                %v508 = vld [vmem:[%s242 + $0x840] sm:%s235]
                %509 = vst [vmem:[%s243 + $0x420] sm:%s235] %v508
                %v510 = vld [vmem:[%s242 + $0x850] sm:%s235]
                %511 = vst [vmem:[%s243 + $0x428] sm:%s235] %v510
                %v512 = vld [vmem:[%s242 + $0x860] sm:%s235]
                %513 = vst [vmem:[%s243 + $0x430] sm:%s235] %v512
                %v514 = vld [vmem:[%s242 + $0x870] sm:%s235]
                %515 = vst [vmem:[%s243 + $0x438] sm:%s235] %v514
                %v516 = vld [vmem:[%s242 + $0x880] sm:%s235]
                %517 = vst [vmem:[%s243 + $0x440] sm:%s235] %v516
                %v518 = vld [vmem:[%s242 + $0x890] sm:%s235]
                %519 = vst [vmem:[%s243 + $0x448] sm:%s235] %v518
                %v520 = vld [vmem:[%s242 + $0x8a0] sm:%s235]
                %521 = vst [vmem:[%s243 + $0x450] sm:%s235] %v520
                %v522 = vld [vmem:[%s242 + $0x8b0] sm:%s235]
                %523 = vst [vmem:[%s243 + $0x458] sm:%s235] %v522
                %v524 = vld [vmem:[%s242 + $0x8c0] sm:%s235]
                %525 = vst [vmem:[%s243 + $0x460] sm:%s235] %v524
                %v526 = vld [vmem:[%s242 + $0x8d0] sm:%s235]
                %527 = vst [vmem:[%s243 + $0x468] sm:%s235] %v526
                %v528 = vld [vmem:[%s242 + $0x8e0] sm:%s235]
                %529 = vst [vmem:[%s243 + $0x470] sm:%s235] %v528
                %v530 = vld [vmem:[%s242 + $0x8f0] sm:%s235]
                %531 = vst [vmem:[%s243 + $0x478] sm:%s235] %v530
              $region63: #{flownet_er_forward.14} parent=57 // loop_footer
                %s241 = sadd.s32 1, %s237
              $region64: #{flownet_er_forward.14} parent=57 // loop_footer_branch
                %236 = sbr.rel target = $region60
              $region65: #{flownet_er_forward.14} parent=57 // loop_exit
                _
            $region58: #{flownet_er_forward.14} parent=49 // pred_fallthru
              _
          $region50: #{flownet_er_forward.14} parent=45 // pred_fallthru
            _
          %832 = vnop
        $region46: #{flownet_er_forward.14} parent=15 // pred_fallthru
          _
        // Predicated region
        $region81: #{flownet_er_forward.14} parent=15 // pred_check
          %p833 = pneg %p104
        $region82: #{flownet_er_forward.14} parent=15 // pred_check_branch
          %835 = sbr.rel (%p833) target = $region84
        $region83: #{flownet_er_forward.14} parent=15 // pred_region
          %s836 = smul.u32 2, %s17
          %p837 = scmp.lt.s32.totalorder %s836, 3
          %s838 = scalar_select %p837, %s836, 3
          %s839 = scalar_lea.vmem %s2, %s838
          %s840 = smul.u32 2, %s17
        $region84: #{flownet_er_forward.14} parent=15 // pred_fallthru
          _
      $region16: #{flownet_er_forward.14} parent=5 // pred_fallthru
        _
      %p841 = scmp.le.s32.totalorder 1, %s9
      %p842 = scmp.lt.s32.totalorder %s9, 5
      %p843 = pnand %p841, %p842
      %p844 = pneg %p843
      // Predicated region
      $region85: #{flownet_er_forward.14} parent=5 // pred_check
        _
      $region86: #{flownet_er_forward.14} parent=5 // pred_check_branch
        %846 = sbr.rel (%p843) target = $region88
      $region87: #{flownet_er_forward.14} parent=5 // pred_region
        %s847 = ssub.s32 %s9, 1
        %s848 = sand.u32 %s43, 1
        %s849 = sand.u32 %s43, 1
        %s850 = smul.addr %s849, 72
        %s851 = scalar_lea.vmem [#allocation3], %s850
        // Predicated region
        $region89: #{flownet_er_forward.14} parent=87 // pred_check
          %p852 = pneg %p56
        $region90: #{flownet_er_forward.14} parent=87 // pred_check_branch
          %854 = sbr.rel (%p852) target = $region92
        $region91: #{flownet_er_forward.14} parent=87 // pred_region
          _
        $region92: #{flownet_er_forward.14} parent=87 // pred_fallthru
          _
        %s855 = sand.u32 %s71, 1
        %s856 = sand.u32 %s71, 1
        %s857 = smul.addr %s856, 1152
        %s858 = scalar_lea.vmem [#allocation4], %s857
        // Predicated region
        $region93: #{flownet_er_forward.14} parent=87 // pred_check
          %p859 = pneg %p84
        $region94: #{flownet_er_forward.14} parent=87 // pred_check_branch
          %861 = sbr.rel (%p859) target = $region96
        $region95: #{flownet_er_forward.14} parent=87 // pred_region
          _
        $region96: #{flownet_er_forward.14} parent=87 // pred_fallthru
          _
        %s862 = sand.u32 %s43, 1
        %s863 = sand.u32 %s43, 1
        %s864 = smul.addr %s863, 72
        %s865 = scalar_lea.vmem [#allocation3], %s864
        %p866 = pneg %p56
        %p867 = pneg %p53
        %s868 = sand.u32 %s71, 1
        %s869 = sand.u32 %s71, 1
        %s870 = smul.addr %s869, 1152
        %s871 = scalar_lea.vmem [#allocation4], %s870
        %p872 = pneg %p84
        %p873 = pneg %p81
        %s874 = smul.u32 2, %s20
        %p875 = scmp.lt.s32.totalorder %s874, 3
        %s876 = scalar_select %p875, %s874, 3
        %s877 = scalar_lea.vmem %s2, %s876
        %p878 = pneg %p110
        %p879 = pneg %p107
        %p880 = pneg %p138
        %p881 = pneg %p135
        %s882 = sand.u32 %s125, 1
        %s883 = sand.u32 %s125, 1
        %s884 = smul.addr %s883, 16
        %s885 = scalar_lea.vmem [#allocation5], %s884
        %s886 = smul.u32 2, %s19
        %s887 = smul.u32 9, %s21
        %s888 = smul.u32 144, %s21
        %s889 = smul.u32 2, %s20
        %s890 = smul.u32 2, %s20
        %p891 = scmp.lt.s32.totalorder %s890, 3
        %s892 = scalar_select %p891, %s890, 3
        %s893 = scalar_lea.vmem %s2, %s892
        %s894 = smul.u32 2, %s20
        %s895 = smul.u32 2, %s19
        %s896 = smul.u32 2, %s20
        %p897 = scmp.eq.s32.totalorder %s21, 0
        // Predicated region
        $region97: #{flownet_er_forward.14} parent=87 // pred_check
          %p898 = pneg %p897
        $region98: #{flownet_er_forward.14} parent=87 // pred_check_branch
          %900 = sbr.rel (%p898) target = $region100
        $region99: #{flownet_er_forward.14} parent=87 // pred_region
          %901 = vst [vmem:[#allocation2] sm:$0xff] 0.0
          %902 = vst [vmem:[#allocation2 + $0x8] sm:$0xff] 0.0
          %903 = vst [vmem:[#allocation2 + $0x10] sm:$0xff] 0.0
          %904 = vst [vmem:[#allocation2 + $0x18] sm:$0xff] 0.0
        $region100: #{flownet_er_forward.14} parent=87 // pred_fallthru
          _
        %v905 = vld [vmem:[#allocation2] sm:$0xff]
        %v906 = vld [vmem:[#allocation2 + $0x8] sm:$0xff]
        %v907 = vld [vmem:[#allocation2 + $0x10] sm:$0xff]
        %v908 = vld [vmem:[#allocation2 + $0x18] sm:$0xff]
        %v909 = vld [vmem:[%s851] sm:$0xff]
        %v910 = vld [vmem:[%s851 + $0x8] sm:$0xff]
        %v911 = vld [vmem:[%s851 + $0x10] sm:$0xff]
        %v912 = vld [vmem:[%s851 + $0x18] sm:$0xff]
        %v913 = vld [vmem:[%s851 + $0x20] sm:$0xf]
        %v914 = vld [vmem:[%s851 + $0x24] sm:$0xff]
        %v915 = vld [vmem:[%s851 + $0x2c] sm:$0xff]
        %v916 = vld [vmem:[%s851 + $0x34] sm:$0xff]
        %v917 = vld [vmem:[%s851 + $0x3c] sm:$0xff]
        %v918 = vld [vmem:[%s851 + $0x44] sm:$0xf]
        %v919 = vld [vmem:[%s858] sm:$0xff]
        %v920 = vld [vmem:[%s858 + $0x8] sm:$0xff]
        %v921 = vld [vmem:[%s858 + $0x10] sm:$0xff]
        %v922 = vld [vmem:[%s858 + $0x18] sm:$0xff]
        %v923 = vld [vmem:[%s858 + $0x20] sm:$0xff]
        %v924 = vld [vmem:[%s858 + $0x28] sm:$0xff]
        %v925 = vld [vmem:[%s858 + $0x30] sm:$0xff]
        %v926 = vld [vmem:[%s858 + $0x38] sm:$0xff]
        %v927 = vld [vmem:[%s858 + $0x40] sm:$0xff]
        %v928 = vld [vmem:[%s858 + $0x48] sm:$0xff]
        %v929 = vld [vmem:[%s858 + $0x50] sm:$0xff]
        %v930 = vld [vmem:[%s858 + $0x58] sm:$0xff]
        %v931 = vld [vmem:[%s858 + $0x60] sm:$0xff]
        %v932 = vld [vmem:[%s858 + $0x68] sm:$0xff]
        %v933 = vld [vmem:[%s858 + $0x70] sm:$0xff]
        %v934 = vld [vmem:[%s858 + $0x78] sm:$0xff]
        %v935 = vld [vmem:[%s858 + $0x80] sm:$0xff]
        %v936 = vld [vmem:[%s858 + $0x88] sm:$0xff]
        %v937 = vld [vmem:[%s858 + $0x90] sm:$0xff]
        %v938 = vld [vmem:[%s858 + $0x98] sm:$0xff]
        %v939 = vld [vmem:[%s858 + $0xa0] sm:$0xff]
        %v940 = vld [vmem:[%s858 + $0xa8] sm:$0xff]
        %v941 = vld [vmem:[%s858 + $0xb0] sm:$0xff]
        %v942 = vld [vmem:[%s858 + $0xb8] sm:$0xff]
        %v943 = vld [vmem:[%s858 + $0xc0] sm:$0xff]
        %v944 = vld [vmem:[%s858 + $0xc8] sm:$0xff]
        %v945 = vld [vmem:[%s858 + $0xd0] sm:$0xff]
        %v946 = vld [vmem:[%s858 + $0xd8] sm:$0xff]
        %v947 = vld [vmem:[%s858 + $0xe0] sm:$0xff]
        %v948 = vld [vmem:[%s858 + $0xe8] sm:$0xff]
        %v949 = vld [vmem:[%s858 + $0xf0] sm:$0xff]
        %v950 = vld [vmem:[%s858 + $0xf8] sm:$0xff]
        %v951 = vld [vmem:[%s858 + $0x100] sm:$0xff]
        %v952 = vld [vmem:[%s858 + $0x108] sm:$0xff]
        %v953 = vld [vmem:[%s858 + $0x110] sm:$0xff]
        %v954 = vld [vmem:[%s858 + $0x118] sm:$0xff]
        %v955 = vld [vmem:[%s858 + $0x120] sm:$0xff]
        %v956 = vld [vmem:[%s858 + $0x128] sm:$0xff]
        %v957 = vld [vmem:[%s858 + $0x130] sm:$0xff]
        %v958 = vld [vmem:[%s858 + $0x138] sm:$0xff]
        %v959 = vld [vmem:[%s858 + $0x140] sm:$0xff]
        %v960 = vld [vmem:[%s858 + $0x148] sm:$0xff]
        %v961 = vld [vmem:[%s858 + $0x150] sm:$0xff]
        %v962 = vld [vmem:[%s858 + $0x158] sm:$0xff]
        %v963 = vld [vmem:[%s858 + $0x160] sm:$0xff]
        %v964 = vld [vmem:[%s858 + $0x168] sm:$0xff]
        %v965 = vld [vmem:[%s858 + $0x170] sm:$0xff]
        %v966 = vld [vmem:[%s858 + $0x178] sm:$0xff]
        %v967 = vld [vmem:[%s858 + $0x180] sm:$0xff]
        %v968 = vld [vmem:[%s858 + $0x188] sm:$0xff]
        %v969 = vld [vmem:[%s858 + $0x190] sm:$0xff]
        %v970 = vld [vmem:[%s858 + $0x198] sm:$0xff]
        %v971 = vld [vmem:[%s858 + $0x1a0] sm:$0xff]
        %v972 = vld [vmem:[%s858 + $0x1a8] sm:$0xff]
        %v973 = vld [vmem:[%s858 + $0x1b0] sm:$0xff]
        %v974 = vld [vmem:[%s858 + $0x1b8] sm:$0xff]
        %v975 = vld [vmem:[%s858 + $0x1c0] sm:$0xff]
        %v976 = vld [vmem:[%s858 + $0x1c8] sm:$0xff]
        %v977 = vld [vmem:[%s858 + $0x1d0] sm:$0xff]
        %v978 = vld [vmem:[%s858 + $0x1d8] sm:$0xff]
        %v979 = vld [vmem:[%s858 + $0x1e0] sm:$0xff]
        %v980 = vld [vmem:[%s858 + $0x1e8] sm:$0xff]
        %v981 = vld [vmem:[%s858 + $0x1f0] sm:$0xff]
        %v982 = vld [vmem:[%s858 + $0x1f8] sm:$0xff]
        %v983 = vld [vmem:[%s858 + $0x200] sm:$0xff]
        %v984 = vld [vmem:[%s858 + $0x208] sm:$0xff]
        %v985 = vld [vmem:[%s858 + $0x210] sm:$0xff]
        %v986 = vld [vmem:[%s858 + $0x218] sm:$0xff]
        %v987 = vld [vmem:[%s858 + $0x220] sm:$0xff]
        %v988 = vld [vmem:[%s858 + $0x228] sm:$0xff]
        %v989 = vld [vmem:[%s858 + $0x230] sm:$0xff]
        %v990 = vld [vmem:[%s858 + $0x238] sm:$0xff]
        %v991 = vld [vmem:[%s858 + $0x240] sm:$0xff]
        %v992 = vld [vmem:[%s858 + $0x248] sm:$0xff]
        %v993 = vld [vmem:[%s858 + $0x250] sm:$0xff]
        %v994 = vld [vmem:[%s858 + $0x258] sm:$0xff]
        %v995 = vld [vmem:[%s858 + $0x260] sm:$0xff]
        %v996 = vld [vmem:[%s858 + $0x268] sm:$0xff]
        %v997 = vld [vmem:[%s858 + $0x270] sm:$0xff]
        %v998 = vld [vmem:[%s858 + $0x278] sm:$0xff]
        %v999 = vld [vmem:[%s858 + $0x280] sm:$0xff]
        %v1000 = vld [vmem:[%s858 + $0x288] sm:$0xff]
        %v1001 = vld [vmem:[%s858 + $0x290] sm:$0xff]
        %v1002 = vld [vmem:[%s858 + $0x298] sm:$0xff]
        %v1003 = vld [vmem:[%s858 + $0x2a0] sm:$0xff]
        %v1004 = vld [vmem:[%s858 + $0x2a8] sm:$0xff]
        %v1005 = vld [vmem:[%s858 + $0x2b0] sm:$0xff]
        %v1006 = vld [vmem:[%s858 + $0x2b8] sm:$0xff]
        %v1007 = vld [vmem:[%s858 + $0x2c0] sm:$0xff]
        %v1008 = vld [vmem:[%s858 + $0x2c8] sm:$0xff]
        %v1009 = vld [vmem:[%s858 + $0x2d0] sm:$0xff]
        %v1010 = vld [vmem:[%s858 + $0x2d8] sm:$0xff]
        %v1011 = vld [vmem:[%s858 + $0x2e0] sm:$0xff]
        %v1012 = vld [vmem:[%s858 + $0x2e8] sm:$0xff]
        %v1013 = vld [vmem:[%s858 + $0x2f0] sm:$0xff]
        %v1014 = vld [vmem:[%s858 + $0x2f8] sm:$0xff]
        %v1015 = vld [vmem:[%s858 + $0x300] sm:$0xff]
        %v1016 = vld [vmem:[%s858 + $0x308] sm:$0xff]
        %v1017 = vld [vmem:[%s858 + $0x310] sm:$0xff]
        %v1018 = vld [vmem:[%s858 + $0x318] sm:$0xff]
        %v1019 = vld [vmem:[%s858 + $0x320] sm:$0xff]
        %v1020 = vld [vmem:[%s858 + $0x328] sm:$0xff]
        %v1021 = vld [vmem:[%s858 + $0x330] sm:$0xff]
        %v1022 = vld [vmem:[%s858 + $0x338] sm:$0xff]
        %v1023 = vld [vmem:[%s858 + $0x340] sm:$0xff]
        %v1024 = vld [vmem:[%s858 + $0x348] sm:$0xff]
        %v1025 = vld [vmem:[%s858 + $0x350] sm:$0xff]
        %v1026 = vld [vmem:[%s858 + $0x358] sm:$0xff]
        %v1027 = vld [vmem:[%s858 + $0x360] sm:$0xff]
        %v1028 = vld [vmem:[%s858 + $0x368] sm:$0xff]
        %v1029 = vld [vmem:[%s858 + $0x370] sm:$0xff]
        %v1030 = vld [vmem:[%s858 + $0x378] sm:$0xff]
        %v1031 = vld [vmem:[%s858 + $0x380] sm:$0xff]
        %v1032 = vld [vmem:[%s858 + $0x388] sm:$0xff]
        %v1033 = vld [vmem:[%s858 + $0x390] sm:$0xff]
        %v1034 = vld [vmem:[%s858 + $0x398] sm:$0xff]
        %v1035 = vld [vmem:[%s858 + $0x3a0] sm:$0xff]
        %v1036 = vld [vmem:[%s858 + $0x3a8] sm:$0xff]
        %v1037 = vld [vmem:[%s858 + $0x3b0] sm:$0xff]
        %v1038 = vld [vmem:[%s858 + $0x3b8] sm:$0xff]
        %v1039 = vld [vmem:[%s858 + $0x3c0] sm:$0xff]
        %v1040 = vld [vmem:[%s858 + $0x3c8] sm:$0xff]
        %v1041 = vld [vmem:[%s858 + $0x3d0] sm:$0xff]
        %v1042 = vld [vmem:[%s858 + $0x3d8] sm:$0xff]
        %v1043 = vld [vmem:[%s858 + $0x3e0] sm:$0xff]
        %v1044 = vld [vmem:[%s858 + $0x3e8] sm:$0xff]
        %v1045 = vld [vmem:[%s858 + $0x3f0] sm:$0xff]
        %v1046 = vld [vmem:[%s858 + $0x3f8] sm:$0xff]
        %v1047 = vld [vmem:[%s858 + $0x400] sm:$0xff]
        %v1048 = vld [vmem:[%s858 + $0x408] sm:$0xff]
        %v1049 = vld [vmem:[%s858 + $0x410] sm:$0xff]
        %v1050 = vld [vmem:[%s858 + $0x418] sm:$0xff]
        %v1051 = vld [vmem:[%s858 + $0x420] sm:$0xff]
        %v1052 = vld [vmem:[%s858 + $0x428] sm:$0xff]
        %v1053 = vld [vmem:[%s858 + $0x430] sm:$0xff]
        %v1054 = vld [vmem:[%s858 + $0x438] sm:$0xff]
        %v1055 = vld [vmem:[%s858 + $0x440] sm:$0xff]
        %v1056 = vld [vmem:[%s858 + $0x448] sm:$0xff]
        %v1057 = vld [vmem:[%s858 + $0x450] sm:$0xff]
        %v1058 = vld [vmem:[%s858 + $0x458] sm:$0xff]
        %v1059 = vld [vmem:[%s858 + $0x460] sm:$0xff]
        %v1060 = vld [vmem:[%s858 + $0x468] sm:$0xff]
        %v1061 = vld [vmem:[%s858 + $0x470] sm:$0xff]
        %v1062 = vld [vmem:[%s858 + $0x478] sm:$0xff]
        %v1073 = vunpack.c.l.b16 %v909
        %v1074 = vunpack.c.h.b16 %v909
        %v1075 = vunpack.c.l.b16 %v910
        %v1076 = vunpack.c.h.b16 %v910
        %v1077 = vunpack.c.l.b16 %v911
        %v1078 = vunpack.c.h.b16 %v911
        %v1079 = vunpack.c.l.b16 %v912
        %v1080 = vunpack.c.h.b16 %v912
        %v1081 = vunpack.c.l.b16 %v913
        %v1082 = vunpack.c.l.b16 %v914
        %v1083 = vunpack.c.h.b16 %v914
        %v1084 = vunpack.c.l.b16 %v915
        %v1085 = vunpack.c.h.b16 %v915
        %v1086 = vunpack.c.l.b16 %v916
        %v1087 = vunpack.c.h.b16 %v916
        %v1088 = vunpack.c.l.b16 %v917
        %v1089 = vunpack.c.h.b16 %v917
        %v1090 = vunpack.c.l.b16 %v918
        %v1091 = vpack.c.b16 %v1082, %v1073
        %v1092 = vpack.c.b16 %v1083, %v1074
        %v1093 = vpack.c.b16 %v1084, %v1075
        %v1094 = vpack.c.b16 %v1085, %v1076
        %v1095 = vpack.c.b16 %v1086, %v1077
        %v1096 = vpack.c.b16 %v1087, %v1078
        %v1097 = vpack.c.b16 %v1088, %v1079
        %v1098 = vpack.c.b16 %v1089, %v1080
        %v1099 = vpack.c.b16 %v1090, %v1081
        %v1253 = vunpack.c.l.b16 %v919
        %v1254 = vunpack.c.h.b16 %v919
        %v1255 = vunpack.c.l.b16 %v920
        %v1256 = vunpack.c.h.b16 %v920
        %v1257 = vunpack.c.l.b16 %v921
        %v1258 = vunpack.c.h.b16 %v921
        %v1259 = vunpack.c.l.b16 %v922
        %v1260 = vunpack.c.h.b16 %v922
        %v1261 = vunpack.c.l.b16 %v923
        %v1262 = vunpack.c.h.b16 %v923
        %v1263 = vunpack.c.l.b16 %v924
        %v1264 = vunpack.c.h.b16 %v924
        %v1265 = vunpack.c.l.b16 %v925
        %v1266 = vunpack.c.h.b16 %v925
        %v1267 = vunpack.c.l.b16 %v926
        %v1268 = vunpack.c.h.b16 %v926
        %v1269 = vunpack.c.l.b16 %v927
        %v1270 = vunpack.c.h.b16 %v927
        %v1271 = vunpack.c.l.b16 %v928
        %v1272 = vunpack.c.h.b16 %v928
        %v1273 = vunpack.c.l.b16 %v929
        %v1274 = vunpack.c.h.b16 %v929
        %v1275 = vunpack.c.l.b16 %v930
        %v1276 = vunpack.c.h.b16 %v930
        %v1277 = vunpack.c.l.b16 %v931
        %v1278 = vunpack.c.h.b16 %v931
        %v1279 = vunpack.c.l.b16 %v932
        %v1280 = vunpack.c.h.b16 %v932
        %v1281 = vunpack.c.l.b16 %v933
        %v1282 = vunpack.c.h.b16 %v933
        %v1283 = vunpack.c.l.b16 %v934
        %v1284 = vunpack.c.h.b16 %v934
        %v1285 = vunpack.c.l.b16 %v935
        %v1286 = vunpack.c.h.b16 %v935
        %v1287 = vunpack.c.l.b16 %v936
        %v1288 = vunpack.c.h.b16 %v936
        %v1289 = vunpack.c.l.b16 %v937
        %v1290 = vunpack.c.h.b16 %v937
        %v1291 = vunpack.c.l.b16 %v938
        %v1292 = vunpack.c.h.b16 %v938
        %v1293 = vunpack.c.l.b16 %v939
        %v1294 = vunpack.c.h.b16 %v939
        %v1295 = vunpack.c.l.b16 %v940
        %v1296 = vunpack.c.h.b16 %v940
        %v1297 = vunpack.c.l.b16 %v941
        %v1298 = vunpack.c.h.b16 %v941
        %v1299 = vunpack.c.l.b16 %v942
        %v1300 = vunpack.c.h.b16 %v942
        %v1301 = vunpack.c.l.b16 %v943
        %v1302 = vunpack.c.h.b16 %v943
        %v1303 = vunpack.c.l.b16 %v944
        %v1304 = vunpack.c.h.b16 %v944
        %v1305 = vunpack.c.l.b16 %v945
        %v1306 = vunpack.c.h.b16 %v945
        %v1307 = vunpack.c.l.b16 %v946
        %v1308 = vunpack.c.h.b16 %v946
        %v1309 = vunpack.c.l.b16 %v947
        %v1310 = vunpack.c.h.b16 %v947
        %v1311 = vunpack.c.l.b16 %v948
        %v1312 = vunpack.c.h.b16 %v948
        %v1313 = vunpack.c.l.b16 %v949
        %v1314 = vunpack.c.h.b16 %v949
        %v1315 = vunpack.c.l.b16 %v950
        %v1316 = vunpack.c.h.b16 %v950
        %v1317 = vunpack.c.l.b16 %v951
        %v1318 = vunpack.c.h.b16 %v951
        %v1319 = vunpack.c.l.b16 %v952
        %v1320 = vunpack.c.h.b16 %v952
        %v1321 = vunpack.c.l.b16 %v953
        %v1322 = vunpack.c.h.b16 %v953
        %v1323 = vunpack.c.l.b16 %v954
        %v1324 = vunpack.c.h.b16 %v954
        %v1325 = vunpack.c.l.b16 %v955
        %v1326 = vunpack.c.h.b16 %v955
        %v1327 = vunpack.c.l.b16 %v956
        %v1328 = vunpack.c.h.b16 %v956
        %v1329 = vunpack.c.l.b16 %v957
        %v1330 = vunpack.c.h.b16 %v957
        %v1331 = vunpack.c.l.b16 %v958
        %v1332 = vunpack.c.h.b16 %v958
        %v1333 = vunpack.c.l.b16 %v959
        %v1334 = vunpack.c.h.b16 %v959
        %v1335 = vunpack.c.l.b16 %v960
        %v1336 = vunpack.c.h.b16 %v960
        %v1337 = vunpack.c.l.b16 %v961
        %v1338 = vunpack.c.h.b16 %v961
        %v1339 = vunpack.c.l.b16 %v962
        %v1340 = vunpack.c.h.b16 %v962
        %v1341 = vunpack.c.l.b16 %v963
        %v1342 = vunpack.c.h.b16 %v963
        %v1343 = vunpack.c.l.b16 %v964
        %v1344 = vunpack.c.h.b16 %v964
        %v1345 = vunpack.c.l.b16 %v965
        %v1346 = vunpack.c.h.b16 %v965
        %v1347 = vunpack.c.l.b16 %v966
        %v1348 = vunpack.c.h.b16 %v966
        %v1349 = vunpack.c.l.b16 %v967
        %v1350 = vunpack.c.h.b16 %v967
        %v1351 = vunpack.c.l.b16 %v968
        %v1352 = vunpack.c.h.b16 %v968
        %v1353 = vunpack.c.l.b16 %v969
        %v1354 = vunpack.c.h.b16 %v969
        %v1355 = vunpack.c.l.b16 %v970
        %v1356 = vunpack.c.h.b16 %v970
        %v1357 = vunpack.c.l.b16 %v971
        %v1358 = vunpack.c.h.b16 %v971
        %v1359 = vunpack.c.l.b16 %v972
        %v1360 = vunpack.c.h.b16 %v972
        %v1361 = vunpack.c.l.b16 %v973
        %v1362 = vunpack.c.h.b16 %v973
        %v1363 = vunpack.c.l.b16 %v974
        %v1364 = vunpack.c.h.b16 %v974
        %v1365 = vunpack.c.l.b16 %v975
        %v1366 = vunpack.c.h.b16 %v975
        %v1367 = vunpack.c.l.b16 %v976
        %v1368 = vunpack.c.h.b16 %v976
        %v1369 = vunpack.c.l.b16 %v977
        %v1370 = vunpack.c.h.b16 %v977
        %v1371 = vunpack.c.l.b16 %v978
        %v1372 = vunpack.c.h.b16 %v978
        %v1373 = vunpack.c.l.b16 %v979
        %v1374 = vunpack.c.h.b16 %v979
        %v1375 = vunpack.c.l.b16 %v980
        %v1376 = vunpack.c.h.b16 %v980
        %v1377 = vunpack.c.l.b16 %v981
        %v1378 = vunpack.c.h.b16 %v981
        %v1379 = vunpack.c.l.b16 %v982
        %v1380 = vunpack.c.h.b16 %v982
        %v1381 = vunpack.c.l.b16 %v983
        %v1382 = vunpack.c.h.b16 %v983
        %v1383 = vunpack.c.l.b16 %v984
        %v1384 = vunpack.c.h.b16 %v984
        %v1385 = vunpack.c.l.b16 %v985
        %v1386 = vunpack.c.h.b16 %v985
        %v1387 = vunpack.c.l.b16 %v986
        %v1388 = vunpack.c.h.b16 %v986
        %v1389 = vunpack.c.l.b16 %v987
        %v1390 = vunpack.c.h.b16 %v987
        %v1391 = vunpack.c.l.b16 %v988
        %v1392 = vunpack.c.h.b16 %v988
        %v1393 = vunpack.c.l.b16 %v989
        %v1394 = vunpack.c.h.b16 %v989
        %v1395 = vunpack.c.l.b16 %v990
        %v1396 = vunpack.c.h.b16 %v990
        %v1397 = vunpack.c.l.b16 %v991
        %v1398 = vunpack.c.h.b16 %v991
        %v1399 = vunpack.c.l.b16 %v992
        %v1400 = vunpack.c.h.b16 %v992
        %v1401 = vunpack.c.l.b16 %v993
        %v1402 = vunpack.c.h.b16 %v993
        %v1403 = vunpack.c.l.b16 %v994
        %v1404 = vunpack.c.h.b16 %v994
        %v1405 = vunpack.c.l.b16 %v995
        %v1406 = vunpack.c.h.b16 %v995
        %v1407 = vunpack.c.l.b16 %v996
        %v1408 = vunpack.c.h.b16 %v996
        %v1409 = vunpack.c.l.b16 %v997
        %v1410 = vunpack.c.h.b16 %v997
        %v1411 = vunpack.c.l.b16 %v998
        %v1412 = vunpack.c.h.b16 %v998
        %v1413 = vunpack.c.l.b16 %v999
        %v1414 = vunpack.c.h.b16 %v999
        %v1415 = vunpack.c.l.b16 %v1000
        %v1416 = vunpack.c.h.b16 %v1000
        %v1417 = vunpack.c.l.b16 %v1001
        %v1418 = vunpack.c.h.b16 %v1001
        %v1419 = vunpack.c.l.b16 %v1002
        %v1420 = vunpack.c.h.b16 %v1002
        %v1421 = vunpack.c.l.b16 %v1003
        %v1422 = vunpack.c.h.b16 %v1003
        %v1423 = vunpack.c.l.b16 %v1004
        %v1424 = vunpack.c.h.b16 %v1004
        %v1425 = vunpack.c.l.b16 %v1005
        %v1426 = vunpack.c.h.b16 %v1005
        %v1427 = vunpack.c.l.b16 %v1006
        %v1428 = vunpack.c.h.b16 %v1006
        %v1429 = vunpack.c.l.b16 %v1007
        %v1430 = vunpack.c.h.b16 %v1007
        %v1431 = vunpack.c.l.b16 %v1008
        %v1432 = vunpack.c.h.b16 %v1008
        %v1433 = vunpack.c.l.b16 %v1009
        %v1434 = vunpack.c.h.b16 %v1009
        %v1435 = vunpack.c.l.b16 %v1010
        %v1436 = vunpack.c.h.b16 %v1010
        %v1437 = vunpack.c.l.b16 %v1011
        %v1438 = vunpack.c.h.b16 %v1011
        %v1439 = vunpack.c.l.b16 %v1012
        %v1440 = vunpack.c.h.b16 %v1012
        %v1441 = vunpack.c.l.b16 %v1013
        %v1442 = vunpack.c.h.b16 %v1013
        %v1443 = vunpack.c.l.b16 %v1014
        %v1444 = vunpack.c.h.b16 %v1014
        %v1445 = vunpack.c.l.b16 %v1015
        %v1446 = vunpack.c.h.b16 %v1015
        %v1447 = vunpack.c.l.b16 %v1016
        %v1448 = vunpack.c.h.b16 %v1016
        %v1449 = vunpack.c.l.b16 %v1017
        %v1450 = vunpack.c.h.b16 %v1017
        %v1451 = vunpack.c.l.b16 %v1018
        %v1452 = vunpack.c.h.b16 %v1018
        %v1453 = vunpack.c.l.b16 %v1019
        %v1454 = vunpack.c.h.b16 %v1019
        %v1455 = vunpack.c.l.b16 %v1020
        %v1456 = vunpack.c.h.b16 %v1020
        %v1457 = vunpack.c.l.b16 %v1021
        %v1458 = vunpack.c.h.b16 %v1021
        %v1459 = vunpack.c.l.b16 %v1022
        %v1460 = vunpack.c.h.b16 %v1022
        %v1461 = vunpack.c.l.b16 %v1023
        %v1462 = vunpack.c.h.b16 %v1023
        %v1463 = vunpack.c.l.b16 %v1024
        %v1464 = vunpack.c.h.b16 %v1024
        %v1465 = vunpack.c.l.b16 %v1025
        %v1466 = vunpack.c.h.b16 %v1025
        %v1467 = vunpack.c.l.b16 %v1026
        %v1468 = vunpack.c.h.b16 %v1026
        %v1469 = vunpack.c.l.b16 %v1027
        %v1470 = vunpack.c.h.b16 %v1027
        %v1471 = vunpack.c.l.b16 %v1028
        %v1472 = vunpack.c.h.b16 %v1028
        %v1473 = vunpack.c.l.b16 %v1029
        %v1474 = vunpack.c.h.b16 %v1029
        %v1475 = vunpack.c.l.b16 %v1030
        %v1476 = vunpack.c.h.b16 %v1030
        %v1477 = vunpack.c.l.b16 %v1031
        %v1478 = vunpack.c.h.b16 %v1031
        %v1479 = vunpack.c.l.b16 %v1032
        %v1480 = vunpack.c.h.b16 %v1032
        %v1481 = vunpack.c.l.b16 %v1033
        %v1482 = vunpack.c.h.b16 %v1033
        %v1483 = vunpack.c.l.b16 %v1034
        %v1484 = vunpack.c.h.b16 %v1034
        %v1485 = vunpack.c.l.b16 %v1035
        %v1486 = vunpack.c.h.b16 %v1035
        %v1487 = vunpack.c.l.b16 %v1036
        %v1488 = vunpack.c.h.b16 %v1036
        %v1489 = vunpack.c.l.b16 %v1037
        %v1490 = vunpack.c.h.b16 %v1037
        %v1491 = vunpack.c.l.b16 %v1038
        %v1492 = vunpack.c.h.b16 %v1038
        %v1493 = vunpack.c.l.b16 %v1039
        %v1494 = vunpack.c.h.b16 %v1039
        %v1495 = vunpack.c.l.b16 %v1040
        %v1496 = vunpack.c.h.b16 %v1040
        %v1497 = vunpack.c.l.b16 %v1041
        %v1498 = vunpack.c.h.b16 %v1041
        %v1499 = vunpack.c.l.b16 %v1042
        %v1500 = vunpack.c.h.b16 %v1042
        %v1501 = vunpack.c.l.b16 %v1043
        %v1502 = vunpack.c.h.b16 %v1043
        %v1503 = vunpack.c.l.b16 %v1044
        %v1504 = vunpack.c.h.b16 %v1044
        %v1505 = vunpack.c.l.b16 %v1045
        %v1506 = vunpack.c.h.b16 %v1045
        %v1507 = vunpack.c.l.b16 %v1046
        %v1508 = vunpack.c.h.b16 %v1046
        %v1509 = vunpack.c.l.b16 %v1047
        %v1510 = vunpack.c.h.b16 %v1047
        %v1511 = vunpack.c.l.b16 %v1048
        %v1512 = vunpack.c.h.b16 %v1048
        %v1513 = vunpack.c.l.b16 %v1049
        %v1514 = vunpack.c.h.b16 %v1049
        %v1515 = vunpack.c.l.b16 %v1050
        %v1516 = vunpack.c.h.b16 %v1050
        %v1517 = vunpack.c.l.b16 %v1051
        %v1518 = vunpack.c.h.b16 %v1051
        %v1519 = vunpack.c.l.b16 %v1052
        %v1520 = vunpack.c.h.b16 %v1052
        %v1521 = vunpack.c.l.b16 %v1053
        %v1522 = vunpack.c.h.b16 %v1053
        %v1523 = vunpack.c.l.b16 %v1054
        %v1524 = vunpack.c.h.b16 %v1054
        %v1525 = vunpack.c.l.b16 %v1055
        %v1526 = vunpack.c.h.b16 %v1055
        %v1527 = vunpack.c.l.b16 %v1056
        %v1528 = vunpack.c.h.b16 %v1056
        %v1529 = vunpack.c.l.b16 %v1057
        %v1530 = vunpack.c.h.b16 %v1057
        %v1531 = vunpack.c.l.b16 %v1058
        %v1532 = vunpack.c.h.b16 %v1058
        %v1533 = vunpack.c.l.b16 %v1059
        %v1534 = vunpack.c.h.b16 %v1059
        %v1535 = vunpack.c.l.b16 %v1060
        %v1536 = vunpack.c.h.b16 %v1060
        %v1537 = vunpack.c.l.b16 %v1061
        %v1538 = vunpack.c.h.b16 %v1061
        %v1539 = vunpack.c.l.b16 %v1062
        %v1540 = vunpack.c.h.b16 %v1062
        %v1541 = vpack.c.b16 %v1255, %v1253
        %v1542 = vpack.c.b16 %v1256, %v1254
        %v1543 = vpack.c.b16 %v1259, %v1257
        %v1544 = vpack.c.b16 %v1260, %v1258
        %v1545 = vpack.c.b16 %v1263, %v1261
        %v1546 = vpack.c.b16 %v1264, %v1262
        %v1547 = vpack.c.b16 %v1267, %v1265
        %v1548 = vpack.c.b16 %v1268, %v1266
        %v1549 = vpack.c.b16 %v1271, %v1269
        %v1550 = vpack.c.b16 %v1272, %v1270
        %v1551 = vpack.c.b16 %v1275, %v1273
        %v1552 = vpack.c.b16 %v1276, %v1274
        %v1553 = vpack.c.b16 %v1279, %v1277
        %v1554 = vpack.c.b16 %v1280, %v1278
        %v1555 = vpack.c.b16 %v1283, %v1281
        %v1556 = vpack.c.b16 %v1284, %v1282
        %v1557 = vpack.c.b16 %v1287, %v1285
        %v1558 = vpack.c.b16 %v1288, %v1286
        %v1559 = vpack.c.b16 %v1291, %v1289
        %v1560 = vpack.c.b16 %v1292, %v1290
        %v1561 = vpack.c.b16 %v1295, %v1293
        %v1562 = vpack.c.b16 %v1296, %v1294
        %v1563 = vpack.c.b16 %v1299, %v1297
        %v1564 = vpack.c.b16 %v1300, %v1298
        %v1565 = vpack.c.b16 %v1303, %v1301
        %v1566 = vpack.c.b16 %v1304, %v1302
        %v1567 = vpack.c.b16 %v1307, %v1305
        %v1568 = vpack.c.b16 %v1308, %v1306
        %v1569 = vpack.c.b16 %v1311, %v1309
        %v1570 = vpack.c.b16 %v1312, %v1310
        %v1571 = vpack.c.b16 %v1315, %v1313
        %v1572 = vpack.c.b16 %v1316, %v1314
        %v1573 = vpack.c.b16 %v1319, %v1317
        %v1574 = vpack.c.b16 %v1320, %v1318
        %v1575 = vpack.c.b16 %v1323, %v1321
        %v1576 = vpack.c.b16 %v1324, %v1322
        %v1577 = vpack.c.b16 %v1327, %v1325
        %v1578 = vpack.c.b16 %v1328, %v1326
        %v1579 = vpack.c.b16 %v1331, %v1329
        %v1580 = vpack.c.b16 %v1332, %v1330
        %v1581 = vpack.c.b16 %v1335, %v1333
        %v1582 = vpack.c.b16 %v1336, %v1334
        %v1583 = vpack.c.b16 %v1339, %v1337
        %v1584 = vpack.c.b16 %v1340, %v1338
        %v1585 = vpack.c.b16 %v1343, %v1341
        %v1586 = vpack.c.b16 %v1344, %v1342
        %v1587 = vpack.c.b16 %v1347, %v1345
        %v1588 = vpack.c.b16 %v1348, %v1346
        %v1589 = vpack.c.b16 %v1351, %v1349
        %v1590 = vpack.c.b16 %v1352, %v1350
        %v1591 = vpack.c.b16 %v1355, %v1353
        %v1592 = vpack.c.b16 %v1356, %v1354
        %v1593 = vpack.c.b16 %v1359, %v1357
        %v1594 = vpack.c.b16 %v1360, %v1358
        %v1595 = vpack.c.b16 %v1363, %v1361
        %v1596 = vpack.c.b16 %v1364, %v1362
        %v1597 = vpack.c.b16 %v1367, %v1365
        %v1598 = vpack.c.b16 %v1368, %v1366
        %v1599 = vpack.c.b16 %v1371, %v1369
        %v1600 = vpack.c.b16 %v1372, %v1370
        %v1601 = vpack.c.b16 %v1375, %v1373
        %v1602 = vpack.c.b16 %v1376, %v1374
        %v1603 = vpack.c.b16 %v1379, %v1377
        %v1604 = vpack.c.b16 %v1380, %v1378
        %v1605 = vpack.c.b16 %v1383, %v1381
        %v1606 = vpack.c.b16 %v1384, %v1382
        %v1607 = vpack.c.b16 %v1387, %v1385
        %v1608 = vpack.c.b16 %v1388, %v1386
        %v1609 = vpack.c.b16 %v1391, %v1389
        %v1610 = vpack.c.b16 %v1392, %v1390
        %v1611 = vpack.c.b16 %v1395, %v1393
        %v1612 = vpack.c.b16 %v1396, %v1394
        %v1613 = vpack.c.b16 %v1399, %v1397
        %v1614 = vpack.c.b16 %v1400, %v1398
        %v1615 = vpack.c.b16 %v1403, %v1401
        %v1616 = vpack.c.b16 %v1404, %v1402
        %v1617 = vpack.c.b16 %v1407, %v1405
        %v1618 = vpack.c.b16 %v1408, %v1406
        %v1619 = vpack.c.b16 %v1411, %v1409
        %v1620 = vpack.c.b16 %v1412, %v1410
        %v1621 = vpack.c.b16 %v1415, %v1413
        %v1622 = vpack.c.b16 %v1416, %v1414
        %v1623 = vpack.c.b16 %v1419, %v1417
        %v1624 = vpack.c.b16 %v1420, %v1418
        %v1625 = vpack.c.b16 %v1423, %v1421
        %v1626 = vpack.c.b16 %v1424, %v1422
        %v1627 = vpack.c.b16 %v1427, %v1425
        %v1628 = vpack.c.b16 %v1428, %v1426
        %v1629 = vpack.c.b16 %v1431, %v1429
        %v1630 = vpack.c.b16 %v1432, %v1430
        %v1631 = vpack.c.b16 %v1435, %v1433
        %v1632 = vpack.c.b16 %v1436, %v1434
        %v1633 = vpack.c.b16 %v1439, %v1437
        %v1634 = vpack.c.b16 %v1440, %v1438
        %v1635 = vpack.c.b16 %v1443, %v1441
        %v1636 = vpack.c.b16 %v1444, %v1442
        %v1637 = vpack.c.b16 %v1447, %v1445
        %v1638 = vpack.c.b16 %v1448, %v1446
        %v1639 = vpack.c.b16 %v1451, %v1449
        %v1640 = vpack.c.b16 %v1452, %v1450
        %v1641 = vpack.c.b16 %v1455, %v1453
        %v1642 = vpack.c.b16 %v1456, %v1454
        %v1643 = vpack.c.b16 %v1459, %v1457
        %v1644 = vpack.c.b16 %v1460, %v1458
        %v1645 = vpack.c.b16 %v1463, %v1461
        %v1646 = vpack.c.b16 %v1464, %v1462
        %v1647 = vpack.c.b16 %v1467, %v1465
        %v1648 = vpack.c.b16 %v1468, %v1466
        %v1649 = vpack.c.b16 %v1471, %v1469
        %v1650 = vpack.c.b16 %v1472, %v1470
        %v1651 = vpack.c.b16 %v1475, %v1473
        %v1652 = vpack.c.b16 %v1476, %v1474
        %v1653 = vpack.c.b16 %v1479, %v1477
        %v1654 = vpack.c.b16 %v1480, %v1478
        %v1655 = vpack.c.b16 %v1483, %v1481
        %v1656 = vpack.c.b16 %v1484, %v1482
        %v1657 = vpack.c.b16 %v1487, %v1485
        %v1658 = vpack.c.b16 %v1488, %v1486
        %v1659 = vpack.c.b16 %v1491, %v1489
        %v1660 = vpack.c.b16 %v1492, %v1490
        %v1661 = vpack.c.b16 %v1495, %v1493
        %v1662 = vpack.c.b16 %v1496, %v1494
        %v1663 = vpack.c.b16 %v1499, %v1497
        %v1664 = vpack.c.b16 %v1500, %v1498
        %v1665 = vpack.c.b16 %v1503, %v1501
        %v1666 = vpack.c.b16 %v1504, %v1502
        %v1667 = vpack.c.b16 %v1507, %v1505
        %v1668 = vpack.c.b16 %v1508, %v1506
        %v1669 = vpack.c.b16 %v1511, %v1509
        %v1670 = vpack.c.b16 %v1512, %v1510
        %v1671 = vpack.c.b16 %v1515, %v1513
        %v1672 = vpack.c.b16 %v1516, %v1514
        %v1673 = vpack.c.b16 %v1519, %v1517
        %v1674 = vpack.c.b16 %v1520, %v1518
        %v1675 = vpack.c.b16 %v1523, %v1521
        %v1676 = vpack.c.b16 %v1524, %v1522
        %v1677 = vpack.c.b16 %v1527, %v1525
        %v1678 = vpack.c.b16 %v1528, %v1526
        %v1679 = vpack.c.b16 %v1531, %v1529
        %v1680 = vpack.c.b16 %v1532, %v1530
        %v1681 = vpack.c.b16 %v1535, %v1533
        %v1682 = vpack.c.b16 %v1536, %v1534
        %v1683 = vpack.c.b16 %v1539, %v1537
        %v1684 = vpack.c.b16 %v1540, %v1538
        %1829 = vmatpush.bf16.msra.mxu0 %v1555
        %1830 = vmatpush.bf16.msra.mxu0 %v1553
        %1831 = vmatpush.bf16.msra.mxu0 %v1551
        %1832 = vmatpush.bf16.msra.mxu0 %v1549
        %1833 = vmatpush.bf16.msra.mxu0 %v1547
        %1834 = vmatpush.bf16.msra.mxu0 %v1545
        %1835 = vmatpush.bf16.msra.mxu0 %v1543
        %1836 = vmatpush.bf16.msra.mxu0 %v1541
        %1837 = vmatmul.bf16.gmra.mxu0 %v1091
        %v1838 = vpop.f32.mrf.mxu0
        %v1839 = vadd.f32 0.0, %v1838
        %v1840 = vpop.f32.mrf.mxu0
        %v1841 = vadd.f32 0.0, %v1840
        %1842 = vdwg.mxu0
        %1843 = vmatpush.bf16.msra.mxu0 %v1571
        %1844 = vmatpush.bf16.msra.mxu0 %v1569
        %1845 = vmatpush.bf16.msra.mxu0 %v1567
        %1846 = vmatpush.bf16.msra.mxu0 %v1565
        %1847 = vmatpush.bf16.msra.mxu0 %v1563
        %1848 = vmatpush.bf16.msra.mxu0 %v1561
        %1849 = vmatpush.bf16.msra.mxu0 %v1559
        %1850 = vmatpush.bf16.msra.mxu0 %v1557
        %1851 = vmatmul.bf16.gmra.mxu0 %v1092
        %v1852 = vpop.f32.mrf.mxu0
        %v1853 = vadd.f32 %v1839, %v1852
        %v1854 = vpop.f32.mrf.mxu0
        %v1855 = vadd.f32 %v1841, %v1854
        %1856 = vdwg.mxu0
        %1857 = vmatpush.bf16.msra.mxu0 %v1587
        %1858 = vmatpush.bf16.msra.mxu0 %v1585
        %1859 = vmatpush.bf16.msra.mxu0 %v1583
        %1860 = vmatpush.bf16.msra.mxu0 %v1581
        %1861 = vmatpush.bf16.msra.mxu0 %v1579
        %1862 = vmatpush.bf16.msra.mxu0 %v1577
        %1863 = vmatpush.bf16.msra.mxu0 %v1575
        %1864 = vmatpush.bf16.msra.mxu0 %v1573
        %1865 = vmatmul.bf16.gmra.mxu0 %v1093
        %v1866 = vpop.f32.mrf.mxu0
        %v1867 = vadd.f32 %v1853, %v1866
        %v1868 = vpop.f32.mrf.mxu0
        %v1869 = vadd.f32 %v1855, %v1868
        %1870 = vdwg.mxu0
        %1871 = vmatpush.bf16.msra.mxu0 %v1603
        %1872 = vmatpush.bf16.msra.mxu0 %v1601
        %1873 = vmatpush.bf16.msra.mxu0 %v1599
        %1874 = vmatpush.bf16.msra.mxu0 %v1597
        %1875 = vmatpush.bf16.msra.mxu0 %v1595
        %1876 = vmatpush.bf16.msra.mxu0 %v1593
        %1877 = vmatpush.bf16.msra.mxu0 %v1591
        %1878 = vmatpush.bf16.msra.mxu0 %v1589
        %1879 = vmatmul.bf16.gmra.mxu0 %v1094
        %v1880 = vpop.f32.mrf.mxu0
        %v1881 = vadd.f32 %v1867, %v1880
        %v1882 = vpop.f32.mrf.mxu0
        %v1883 = vadd.f32 %v1869, %v1882
        %1884 = vdwg.mxu0
        %1885 = vmatpush.bf16.msra.mxu0 %v1619
        %1886 = vmatpush.bf16.msra.mxu0 %v1617
        %1887 = vmatpush.bf16.msra.mxu0 %v1615
        %1888 = vmatpush.bf16.msra.mxu0 %v1613
        %1889 = vmatpush.bf16.msra.mxu0 %v1611
        %1890 = vmatpush.bf16.msra.mxu0 %v1609
        %1891 = vmatpush.bf16.msra.mxu0 %v1607
        %1892 = vmatpush.bf16.msra.mxu0 %v1605
        %1893 = vmatmul.bf16.gmra.mxu0 %v1095
        %v1894 = vpop.f32.mrf.mxu0
        %v1895 = vadd.f32 %v1881, %v1894
        %v1896 = vpop.f32.mrf.mxu0
        %v1897 = vadd.f32 %v1883, %v1896
        %1898 = vdwg.mxu0
        %1899 = vmatpush.bf16.msra.mxu0 %v1635
        %1900 = vmatpush.bf16.msra.mxu0 %v1633
        %1901 = vmatpush.bf16.msra.mxu0 %v1631
        %1902 = vmatpush.bf16.msra.mxu0 %v1629
        %1903 = vmatpush.bf16.msra.mxu0 %v1627
        %1904 = vmatpush.bf16.msra.mxu0 %v1625
        %1905 = vmatpush.bf16.msra.mxu0 %v1623
        %1906 = vmatpush.bf16.msra.mxu0 %v1621
        %1907 = vmatmul.bf16.gmra.mxu0 %v1096
        %v1908 = vpop.f32.mrf.mxu0
        %v1909 = vadd.f32 %v1895, %v1908
        %v1910 = vpop.f32.mrf.mxu0
        %v1911 = vadd.f32 %v1897, %v1910
        %1912 = vdwg.mxu0
        %1913 = vmatpush.bf16.msra.mxu0 %v1651
        %1914 = vmatpush.bf16.msra.mxu0 %v1649
        %1915 = vmatpush.bf16.msra.mxu0 %v1647
        %1916 = vmatpush.bf16.msra.mxu0 %v1645
        %1917 = vmatpush.bf16.msra.mxu0 %v1643
        %1918 = vmatpush.bf16.msra.mxu0 %v1641
        %1919 = vmatpush.bf16.msra.mxu0 %v1639
        %1920 = vmatpush.bf16.msra.mxu0 %v1637
        %1921 = vmatmul.bf16.gmra.mxu0 %v1097
        %v1922 = vpop.f32.mrf.mxu0
        %v1923 = vadd.f32 %v1909, %v1922
        %v1924 = vpop.f32.mrf.mxu0
        %v1925 = vadd.f32 %v1911, %v1924
        %1926 = vdwg.mxu0
        %1927 = vmatpush.bf16.msra.mxu0 %v1667
        %1928 = vmatpush.bf16.msra.mxu0 %v1665
        %1929 = vmatpush.bf16.msra.mxu0 %v1663
        %1930 = vmatpush.bf16.msra.mxu0 %v1661
        %1931 = vmatpush.bf16.msra.mxu0 %v1659
        %1932 = vmatpush.bf16.msra.mxu0 %v1657
        %1933 = vmatpush.bf16.msra.mxu0 %v1655
        %1934 = vmatpush.bf16.msra.mxu0 %v1653
        %1935 = vmatmul.bf16.gmra.mxu0 %v1098
        %v1936 = vpop.f32.mrf.mxu0
        %v1937 = vadd.f32 %v1923, %v1936
        %v1938 = vpop.f32.mrf.mxu0
        %v1939 = vadd.f32 %v1925, %v1938
        %1940 = vdwg.mxu0
        %1941 = vmatpush.bf16.msra.mxu0 %v1683
        %1942 = vmatpush.bf16.msra.mxu0 %v1681
        %1943 = vmatpush.bf16.msra.mxu0 %v1679
        %1944 = vmatpush.bf16.msra.mxu0 %v1677
        %1945 = vmatpush.bf16.msra.mxu0 %v1675
        %1946 = vmatpush.bf16.msra.mxu0 %v1673
        %1947 = vmatpush.bf16.msra.mxu0 %v1671
        %1948 = vmatpush.bf16.msra.mxu0 %v1669
        %1949 = vmatmul.bf16.gmra.mxu0 %v1099
        %v1950 = vpop.f32.mrf.mxu0
        %v1951 = vadd.f32 %v1937, %v1950
        %v1952 = vpop.f32.mrf.mxu0
        %v1953 = vadd.f32 %v1939, %v1952
        %1954 = vdwg.mxu0
        %1955 = vmatpush.bf16.msra.mxu0 %v1556
        %1956 = vmatpush.bf16.msra.mxu0 %v1554
        %1957 = vmatpush.bf16.msra.mxu0 %v1552
        %1958 = vmatpush.bf16.msra.mxu0 %v1550
        %1959 = vmatpush.bf16.msra.mxu0 %v1548
        %1960 = vmatpush.bf16.msra.mxu0 %v1546
        %1961 = vmatpush.bf16.msra.mxu0 %v1544
        %1962 = vmatpush.bf16.msra.mxu0 %v1542
        %1963 = vmatmul.bf16.gmra.mxu0 %v1091
        %v1964 = vpop.f32.mrf.mxu0
        %v1965 = vadd.f32 0.0, %v1964
        %v1966 = vpop.f32.mrf.mxu0
        %v1967 = vadd.f32 0.0, %v1966
        %1968 = vdwg.mxu0
        %1969 = vmatpush.bf16.msra.mxu0 %v1572
        %1970 = vmatpush.bf16.msra.mxu0 %v1570
        %1971 = vmatpush.bf16.msra.mxu0 %v1568
        %1972 = vmatpush.bf16.msra.mxu0 %v1566
        %1973 = vmatpush.bf16.msra.mxu0 %v1564
        %1974 = vmatpush.bf16.msra.mxu0 %v1562
        %1975 = vmatpush.bf16.msra.mxu0 %v1560
        %1976 = vmatpush.bf16.msra.mxu0 %v1558
        %1977 = vmatmul.bf16.gmra.mxu0 %v1092
        %v1978 = vpop.f32.mrf.mxu0
        %v1979 = vadd.f32 %v1965, %v1978
        %v1980 = vpop.f32.mrf.mxu0
        %v1981 = vadd.f32 %v1967, %v1980
        %1982 = vdwg.mxu0
        %1983 = vmatpush.bf16.msra.mxu0 %v1588
        %1984 = vmatpush.bf16.msra.mxu0 %v1586
        %1985 = vmatpush.bf16.msra.mxu0 %v1584
        %1986 = vmatpush.bf16.msra.mxu0 %v1582
        %1987 = vmatpush.bf16.msra.mxu0 %v1580
        %1988 = vmatpush.bf16.msra.mxu0 %v1578
        %1989 = vmatpush.bf16.msra.mxu0 %v1576
        %1990 = vmatpush.bf16.msra.mxu0 %v1574
        %1991 = vmatmul.bf16.gmra.mxu0 %v1093
        %v1992 = vpop.f32.mrf.mxu0
        %v1993 = vadd.f32 %v1979, %v1992
        %v1994 = vpop.f32.mrf.mxu0
        %v1995 = vadd.f32 %v1981, %v1994
        %1996 = vdwg.mxu0
        %1997 = vmatpush.bf16.msra.mxu0 %v1604
        %1998 = vmatpush.bf16.msra.mxu0 %v1602
        %1999 = vmatpush.bf16.msra.mxu0 %v1600
        %2000 = vmatpush.bf16.msra.mxu0 %v1598
        %2001 = vmatpush.bf16.msra.mxu0 %v1596
        %2002 = vmatpush.bf16.msra.mxu0 %v1594
        %2003 = vmatpush.bf16.msra.mxu0 %v1592
        %2004 = vmatpush.bf16.msra.mxu0 %v1590
        %2005 = vmatmul.bf16.gmra.mxu0 %v1094
        %v2006 = vpop.f32.mrf.mxu0
        %v2007 = vadd.f32 %v1993, %v2006
        %v2008 = vpop.f32.mrf.mxu0
        %v2009 = vadd.f32 %v1995, %v2008
        %2010 = vdwg.mxu0
        %2011 = vmatpush.bf16.msra.mxu0 %v1620
        %2012 = vmatpush.bf16.msra.mxu0 %v1618
        %2013 = vmatpush.bf16.msra.mxu0 %v1616
        %2014 = vmatpush.bf16.msra.mxu0 %v1614
        %2015 = vmatpush.bf16.msra.mxu0 %v1612
        %2016 = vmatpush.bf16.msra.mxu0 %v1610
        %2017 = vmatpush.bf16.msra.mxu0 %v1608
        %2018 = vmatpush.bf16.msra.mxu0 %v1606
        %2019 = vmatmul.bf16.gmra.mxu0 %v1095
        %v2020 = vpop.f32.mrf.mxu0
        %v2021 = vadd.f32 %v2007, %v2020
        %v2022 = vpop.f32.mrf.mxu0
        %v2023 = vadd.f32 %v2009, %v2022
        %2024 = vdwg.mxu0
        %2025 = vmatpush.bf16.msra.mxu0 %v1636
        %2026 = vmatpush.bf16.msra.mxu0 %v1634
        %2027 = vmatpush.bf16.msra.mxu0 %v1632
        %2028 = vmatpush.bf16.msra.mxu0 %v1630
        %2029 = vmatpush.bf16.msra.mxu0 %v1628
        %2030 = vmatpush.bf16.msra.mxu0 %v1626
        %2031 = vmatpush.bf16.msra.mxu0 %v1624
        %2032 = vmatpush.bf16.msra.mxu0 %v1622
        %2033 = vmatmul.bf16.gmra.mxu0 %v1096
        %v2034 = vpop.f32.mrf.mxu0
        %v2035 = vadd.f32 %v2021, %v2034
        %v2036 = vpop.f32.mrf.mxu0
        %v2037 = vadd.f32 %v2023, %v2036
        %2038 = vdwg.mxu0
        %2039 = vmatpush.bf16.msra.mxu0 %v1652
        %2040 = vmatpush.bf16.msra.mxu0 %v1650
        %2041 = vmatpush.bf16.msra.mxu0 %v1648
        %2042 = vmatpush.bf16.msra.mxu0 %v1646
        %2043 = vmatpush.bf16.msra.mxu0 %v1644
        %2044 = vmatpush.bf16.msra.mxu0 %v1642
        %2045 = vmatpush.bf16.msra.mxu0 %v1640
        %2046 = vmatpush.bf16.msra.mxu0 %v1638
        %2047 = vmatmul.bf16.gmra.mxu0 %v1097
        %v2048 = vpop.f32.mrf.mxu0
        %v2049 = vadd.f32 %v2035, %v2048
        %v2050 = vpop.f32.mrf.mxu0
        %v2051 = vadd.f32 %v2037, %v2050
        %2052 = vdwg.mxu0
        %2053 = vmatpush.bf16.msra.mxu0 %v1668
        %2054 = vmatpush.bf16.msra.mxu0 %v1666
        %2055 = vmatpush.bf16.msra.mxu0 %v1664
        %2056 = vmatpush.bf16.msra.mxu0 %v1662
        %2057 = vmatpush.bf16.msra.mxu0 %v1660
        %2058 = vmatpush.bf16.msra.mxu0 %v1658
        %2059 = vmatpush.bf16.msra.mxu0 %v1656
        %2060 = vmatpush.bf16.msra.mxu0 %v1654
        %2061 = vmatmul.bf16.gmra.mxu0 %v1098
        %v2062 = vpop.f32.mrf.mxu0
        %v2063 = vadd.f32 %v2049, %v2062
        %v2064 = vpop.f32.mrf.mxu0
        %v2065 = vadd.f32 %v2051, %v2064
        %2066 = vdwg.mxu0
        %2067 = vmatpush.bf16.msra.mxu0 %v1684
        %2068 = vmatpush.bf16.msra.mxu0 %v1682
        %2069 = vmatpush.bf16.msra.mxu0 %v1680
        %2070 = vmatpush.bf16.msra.mxu0 %v1678
        %2071 = vmatpush.bf16.msra.mxu0 %v1676
        %2072 = vmatpush.bf16.msra.mxu0 %v1674
        %2073 = vmatpush.bf16.msra.mxu0 %v1672
        %2074 = vmatpush.bf16.msra.mxu0 %v1670
        %2075 = vmatmul.bf16.gmra.mxu0 %v1099
        %v2076 = vpop.f32.mrf.mxu0
        %v2077 = vadd.f32 %v2063, %v2076
        %v2078 = vpop.f32.mrf.mxu0
        %v2079 = vadd.f32 %v2065, %v2078
        %2080 = vdwg.mxu0
        %v2081 = vadd.f32 %v905, %v1951
        %v2082 = vadd.f32 %v906, %v2077
        %v2083 = vadd.f32 %v907, %v1953
        %v2084 = vadd.f32 %v908, %v2079
        %2085 = vst [vmem:[#allocation2] sm:$0xff] %v2081
        %2086 = vst [vmem:[#allocation2 + $0x8] sm:$0xff] %v2082
        %2087 = vst [vmem:[#allocation2 + $0x10] sm:$0xff] %v2083
        %2088 = vst [vmem:[#allocation2 + $0x18] sm:$0xff] %v2084
        %p2089 = scmp.eq.s32.totalorder %s21, 1
        // Predicated region
        $region101: #{flownet_er_forward.14} parent=87 // pred_check
          %p2090 = pneg %p2089
        $region102: #{flownet_er_forward.14} parent=87 // pred_check_branch
          %2092 = sbr.rel (%p2090) target = $region104
        $region103: #{flownet_er_forward.14} parent=87 // pred_region
          %v2093 = vld [vmem:[#allocation2] sm:$0xff]
          %v2094 = vld [vmem:[#allocation2 + $0x8] sm:$0xff]
          %v2095 = vld [vmem:[#allocation2 + $0x10] sm:$0xff]
          %v2096 = vld [vmem:[#allocation2 + $0x18] sm:$0xff]
          %v2097 = vld [vmem:[%s893] sm:$0x3]
          %v2099 = vperm.slane %v2097, 0
          %v2100 = vperm.slane %v2097, 1
          %v2103 = vadd.f32 %v2093, %v2099
          %v2104 = vadd.f32 %v2094, %v2100
          %v2105 = vadd.f32 %v2095, %v2099
          %v2106 = vadd.f32 %v2096, %v2100
          %vm2107 = vcmp.ge.f32.partialorder %v2103, 0.0
          %vm2108 = vcmp.ge.f32.partialorder %v2104, 0.0
          %vm2109 = vcmp.ge.f32.partialorder %v2105, 0.0
          %vm2110 = vcmp.ge.f32.partialorder %v2106, 0.0
          %v2111 = vmul.f32 %v2103, 0.01
          %v2112 = vmul.f32 %v2104, 0.01
          %v2113 = vmul.f32 %v2105, 0.01
          %v2114 = vmul.f32 %v2106, 0.01
          %v2115 = vsel %vm2107, %v2103, %v2111
          %v2116 = vsel %vm2108, %v2104, %v2112
          %v2117 = vsel %vm2109, %v2105, %v2113
          %v2118 = vsel %vm2110, %v2106, %v2114
          %v2119 = vpack.c.bf16 %v2116, %v2115
          %v2120 = vpack.c.bf16 %v2118, %v2117
          %2121 = vst [vmem:[%s885] sm:$0xff] %v2119
          %2122 = vst [vmem:[%s885 + $0x8] sm:$0xff] %v2120
        $region104: #{flownet_er_forward.14} parent=87 // pred_fallthru
          _
        %s2123 = sand.u32 %s125, 1
        %s2124 = sand.u32 %s125, 1
        %s2125 = smul.addr %s2124, 16
        %s2126 = scalar_lea.vmem [#allocation5], %s2125
        // Predicated region
        $region105: #{flownet_er_forward.14} parent=87 // pred_check
          %p2127 = pneg %p135
        $region106: #{flownet_er_forward.14} parent=87 // pred_check_branch
          %2129 = sbr.rel (%p2127) target = $region108
        $region107: #{flownet_er_forward.14} parent=87 // pred_region
          %s2130 = smul.u32 2, %s19
          %s2131 = smul.u32 2, %s20
          %s2132 = smul.addr %s2130, 4
          %s2133 = sadd.s32 %s2131, %s2132
          %s2134 = smul.addr %s2133, 4
          %s2135 = scalar_lea.vmem %s3, %s2134
          // Predicated region
          $region109: #{flownet_er_forward.14} parent=107 // pred_check
            _
          $region110: #{flownet_er_forward.14} parent=107 // pred_check_branch
            %2137 = sbr.rel (0) target = $region112
          $region111: #{flownet_er_forward.14} parent=107 // pred_region
            // Predicated region
            $region113: #{flownet_er_forward.14} parent=111 // pred_check
              _
            $region114: #{flownet_er_forward.14} parent=111 // pred_check_branch
              %2139 = sbr.rel (0) target = $region116
            $region115: #{flownet_er_forward.14} parent=111 // pred_region
              // Predicated region
              $region128: #{flownet_er_forward.14} parent=115 // pred_check
                _
              $region129: #{flownet_er_forward.14} parent=115 // pred_check_branch
                %2157 = sbr.rel (0) target = $region131
              $region130: #{flownet_er_forward.14} parent=115 // pred_region
                loop: start=0, step=1, limit=1
                $region132: #{flownet_er_forward.14} parent=130 // loop_pre_header
                  _
                $region133: #{flownet_er_forward.14} parent=130 // loop_header
                  %s2159 = sphi 0, %s2163
                  %p2160 = scmp.ge.s32.totalorder %s2159, 1
                  %s2164 = sphi %s2126, %s2126
                  %s2165 = sphi %s2135, %s2135
                $region134: #{flownet_er_forward.14} parent=130 // loop_header_branch
                  %2162 = sbr.rel (%p2160) target = $region138
                $region135: #{flownet_er_forward.14} parent=130 // loop_body
                  %v2166 = vld [vmem:[%s2164] sm:$0xff]
                  %2167 = vst [vmem:[%s2165] sm:$0xff] %v2166
                  %v2168 = vld [vmem:[%s2164 + $0x8] sm:$0xff]
                  %2169 = vst [vmem:[%s2165 + $0x10] sm:$0xff] %v2168
                $region136: #{flownet_er_forward.14} parent=130 // loop_footer
                  %s2163 = sadd.s32 1, %s2159
                $region137: #{flownet_er_forward.14} parent=130 // loop_footer_branch
                  %2158 = sbr.rel target = $region133
                $region138: #{flownet_er_forward.14} parent=130 // loop_exit
                  _
              $region131: #{flownet_er_forward.14} parent=115 // pred_fallthru
                _
              // Predicated region
              $region139: #{flownet_er_forward.14} parent=115 // pred_check
                _
              $region140: #{flownet_er_forward.14} parent=115 // pred_check_branch
                %2171 = sbr.rel target = $region142
              $region141: #{flownet_er_forward.14} parent=115 // pred_region
                _
              $region142: #{flownet_er_forward.14} parent=115 // pred_fallthru
                _
            $region116: #{flownet_er_forward.14} parent=111 // pred_fallthru
              _
            // Predicated region
            $region117: #{flownet_er_forward.14} parent=111 // pred_check
              _
            $region118: #{flownet_er_forward.14} parent=111 // pred_check_branch
              %2141 = sbr.rel target = $region120
            $region119: #{flownet_er_forward.14} parent=111 // pred_region
              %s2143 = ssub.s32 256, 1
              loop: start=0, step=1, limit=1
              $region121: #{flownet_er_forward.14} parent=119 // loop_pre_header
                _
              $region122: #{flownet_er_forward.14} parent=119 // loop_header
                %s2145 = sphi 0, %s2149
                %p2146 = scmp.ge.s32.totalorder %s2145, 1
                %s2150 = sphi %s2126, %s2126
                %s2151 = sphi %s2135, %s2135
              $region123: #{flownet_er_forward.14} parent=119 // loop_header_branch
                %2148 = sbr.rel (%p2146) target = $region127
              $region124: #{flownet_er_forward.14} parent=119 // loop_body
                %v2152 = vld [vmem:[%s2150] sm:%s2143]
                %2153 = vst [vmem:[%s2151] sm:%s2143] %v2152
                %v2154 = vld [vmem:[%s2150 + $0x8] sm:%s2143]
                %2155 = vst [vmem:[%s2151 + $0x10] sm:%s2143] %v2154
              $region125: #{flownet_er_forward.14} parent=119 // loop_footer
                %s2149 = sadd.s32 1, %s2145
              $region126: #{flownet_er_forward.14} parent=119 // loop_footer_branch
                %2144 = sbr.rel target = $region122
              $region127: #{flownet_er_forward.14} parent=119 // loop_exit
                _
            $region120: #{flownet_er_forward.14} parent=111 // pred_fallthru
              _
          $region112: #{flownet_er_forward.14} parent=107 // pred_fallthru
            _
          %2172 = vnop
        $region108: #{flownet_er_forward.14} parent=87 // pred_fallthru
          _
      $region88: #{flownet_er_forward.14} parent=5 // pred_fallthru
        _
      %p2173 = scmp.le.s32.totalorder 2, %s9
      // Predicated region
      $region143: #{flownet_er_forward.14} parent=5 // pred_check
        %p2174 = pneg %p2173
      $region144: #{flownet_er_forward.14} parent=5 // pred_check_branch
        %2176 = sbr.rel (%p2174) target = $region146
      $region145: #{flownet_er_forward.14} parent=5 // pred_region
        %s2177 = ssub.s32 %s9, 2
        // Predicated region
        $region147: #{flownet_er_forward.14} parent=145 // pred_check
          %p2178 = pneg %p141
        $region148: #{flownet_er_forward.14} parent=145 // pred_check_branch
          %2180 = sbr.rel (%p2178) target = $region150
        $region149: #{flownet_er_forward.14} parent=145 // pred_region
          %s2181 = sand.u32 %s126, 1
          %s2182 = sand.u32 %s126, 1
          %s2183 = smul.addr %s2182, 16
          %s2184 = scalar_lea.vmem [#allocation5], %s2183
        $region150: #{flownet_er_forward.14} parent=145 // pred_fallthru
          _
      $region146: #{flownet_er_forward.14} parent=5 // pred_fallthru
        _
    $region6: #{flownet_er_forward.14} parent=1 // loop_footer
      %s13 = sadd.s32 1, %s9
    $region7: #{flownet_er_forward.14} parent=1 // loop_footer_branch
      %8 = sbr.rel target = $region3
    $region8: #{flownet_er_forward.14} parent=1 // loop_exit
      _

// kernel: flownet_er_forward.15
$region0: #{flownet_er_forward.15}
  #allocation0 [shape = 'u32[]', space=smem, size = 0x4, offset = 0x4, fixed_abs, tag = 'smem constant byte address 0x4 - core index']
  #allocation1 [shape = 'u32[72,128]{1,0:T(1,128)}', space=vmem, size = 0x9000, scoped, tag = 'internal scratch']
  #allocation2 [shape = 'f32[16,256]{1,0:T(8,128)}', space=vmem, size = 0x4000, scoped, tag = 'scratch operand']
  %s0 = inlined_call_operand.vmem [shape: bf16[16,4608], index: 0, kind: input, shape index: {}]
  %s1 = inlined_call_operand.vmem [shape: bf16[4608,1024], index: 1, kind: input, shape index: {}]
  %s2 = inlined_call_operand.vmem [shape: f32[1,1024], index: 2, kind: input, shape index: {}]
  %s3 = inlined_call_operand.vmem [shape: bf16[16,1024], index: 3, kind: output, shape index: {}]
  %s4 = sld [smem:[#allocation0]]
  $region148: #{flownet_er_forward.15} parent=0
    _
  %s6 = ssub.s32 1, %s4
  %s7 = scalar_select 0, %s6, %s4
  $region1: #{flownet_er_forward.15} parent=0
    #allocation3 [shape = 'u8[98304]{0}', space=vmem, size = 0x18000, scoped, tag = 'input window, operand 0']
    #allocation4 [shape = 'u8[1572864]{0}', space=vmem, size = 0x180000, scoped, tag = 'input window, operand 1']
    #allocation5 [shape = 'u8[16384]{0}', space=vmem, size = 0x4000, scoped, tag = 'output window, operand 0']
    loop: start=0, step=1, limit=14
    $region2: #{flownet_er_forward.15} parent=1 // loop_pre_header
      _
    $region3: #{flownet_er_forward.15} parent=1 // loop_header
      %s9 = sphi 0, %s13
      %p10 = scmp.ge.s32.totalorder %s9, 14
      %s16 = sphi 0, %s35
      %s17 = sphi 0, %s31
      %s18 = sphi 0, %s27
      %s19 = sphi 0, %s16
      %s20 = sphi 0, %s17
      %s21 = sphi 0, %s18
      %s22 = sphi 0, %s19
      %s23 = sphi 0, %s20
      %s24 = sphi 0, %s21
      %s40 = sphi 0, %s42
      %s43 = sphi 0, %s40
      %s44 = sphi 0, %s43
      %s60 = sphi 0, %s44
      %s68 = sphi 0, %s70
      %s71 = sphi 0, %s68
      %s72 = sphi 0, %s71
      %s88 = sphi 0, %s72
      %s94 = sphi 0, %s96
      %s97 = sphi 0, %s94
      %s98 = sphi 0, %s97
      %s114 = sphi 0, %s98
      %s122 = sphi 0, %s124
      %s125 = sphi 0, %s122
      %s126 = sphi 0, %s125
      %s142 = sphi 0, %s126
    $region4: #{flownet_er_forward.15} parent=1 // loop_header_branch
      %12 = sbr.rel (%p10) target = $region8
    $region5: #{flownet_er_forward.15} parent=1 // loop_body
      %s14 = ssub.s32 %s9, 1
      %s15 = ssub.s32 %s9, 2
      %s25 = sadd.s32 1, %s18
      %p26 = scmp.ge.s32.totalorder %s25, 3
      %s27 = scalar_select %p26, 0, %s25
      %s28 = sadd.s32 1, %s17
      %s29 = scalar_select %p26, %s28, %s17
      %p30 = scmp.ge.s32.totalorder %s29, 4
      %s31 = scalar_select %p30, 0, %s29
      %s32 = sadd.s32 1, %s16
      %s33 = scalar_select %p30, %s32, %s16
      %p34 = scmp.ge.s32.totalorder %s33, 1
      %s35 = scalar_select %p34, 0, %s33
      %s36 = ssub.s32 %s16, %s35
      %s37 = ssub.s32 %s18, %s27
      %s38 = sor.u32 %s36, %s37
      %p39 = scmp.eq.s32.totalorder %s38, 0
      %s41 = sadd.s32 %s40, 1
      %s42 = scalar_select %p39, %s40, %s41
      %p45 = pneg %p39
      %p46 = scmp.eq.s32.totalorder %s9, 11
      %p47 = por %p45, %p46
      %p48 = scmp.ne.s32.totalorder %s40, %s43
      %p49 = scmp.eq.s32.totalorder %s9, 0
      %p50 = por %p48, %p49
      %p51 = scmp.ne.s32.totalorder %s40, %s43
      %p52 = scmp.eq.s32.totalorder %s14, 11
      %p53 = por %p51, %p52
      %p54 = scmp.ne.s32.totalorder %s43, %s44
      %p55 = scmp.eq.s32.totalorder %s14, 0
      %p56 = por %p54, %p55
      %p57 = scmp.ne.s32.totalorder %s43, %s44
      %p58 = scmp.eq.s32.totalorder %s15, 11
      %p59 = por %p57, %p58
      %p61 = scmp.ne.s32.totalorder %s44, %s60
      %p62 = scmp.eq.s32.totalorder %s15, 0
      %p63 = por %p61, %p62
      %s64 = ssub.s32 %s18, %s27
      %s65 = ssub.s32 %s17, %s31
      %s66 = sor.u32 %s64, %s65
      %p67 = scmp.eq.s32.totalorder %s66, 0
      %s69 = sadd.s32 %s68, 1
      %s70 = scalar_select %p67, %s68, %s69
      %p73 = pneg %p67
      %p74 = scmp.eq.s32.totalorder %s9, 11
      %p75 = por %p73, %p74
      %p76 = scmp.ne.s32.totalorder %s68, %s71
      %p77 = scmp.eq.s32.totalorder %s9, 0
      %p78 = por %p76, %p77
      %p79 = scmp.ne.s32.totalorder %s68, %s71
      %p80 = scmp.eq.s32.totalorder %s14, 11
      %p81 = por %p79, %p80
      %p82 = scmp.ne.s32.totalorder %s71, %s72
      %p83 = scmp.eq.s32.totalorder %s14, 0
      %p84 = por %p82, %p83
      %p85 = scmp.ne.s32.totalorder %s71, %s72
      %p86 = scmp.eq.s32.totalorder %s15, 11
      %p87 = por %p85, %p86
      %p89 = scmp.ne.s32.totalorder %s72, %s88
      %p90 = scmp.eq.s32.totalorder %s15, 0
      %p91 = por %p89, %p90
      %s92 = ssub.s32 %s17, %s31
      %p93 = scmp.eq.s32.totalorder %s92, 0
      %s95 = sadd.s32 %s94, 1
      %s96 = scalar_select %p93, %s94, %s95
      %p99 = pneg %p93
      %p100 = scmp.eq.s32.totalorder %s9, 11
      %p101 = por %p99, %p100
      %p102 = scmp.ne.s32.totalorder %s94, %s97
      %p103 = scmp.eq.s32.totalorder %s9, 0
      %p104 = por %p102, %p103
      %p105 = scmp.ne.s32.totalorder %s94, %s97
      %p106 = scmp.eq.s32.totalorder %s14, 11
      %p107 = por %p105, %p106
      %p108 = scmp.ne.s32.totalorder %s97, %s98
      %p109 = scmp.eq.s32.totalorder %s14, 0
      %p110 = por %p108, %p109
      %p111 = scmp.ne.s32.totalorder %s97, %s98
      %p112 = scmp.eq.s32.totalorder %s15, 11
      %p113 = por %p111, %p112
      %p115 = scmp.ne.s32.totalorder %s98, %s114
      %p116 = scmp.eq.s32.totalorder %s15, 0
      %p117 = por %p115, %p116
      %s118 = ssub.s32 %s16, %s35
      %s119 = ssub.s32 %s17, %s31
      %s120 = sor.u32 %s118, %s119
      %p121 = scmp.eq.s32.totalorder %s120, 0
      %s123 = sadd.s32 %s122, 1
      %s124 = scalar_select %p121, %s122, %s123
      %p127 = pneg %p121
      %p128 = scmp.eq.s32.totalorder %s9, 11
      %p129 = por %p127, %p128
      %p130 = scmp.ne.s32.totalorder %s122, %s125
      %p131 = scmp.eq.s32.totalorder %s9, 0
      %p132 = por %p130, %p131
      %p133 = scmp.ne.s32.totalorder %s122, %s125
      %p134 = scmp.eq.s32.totalorder %s14, 11
      %p135 = por %p133, %p134
      %p136 = scmp.ne.s32.totalorder %s125, %s126
      %p137 = scmp.eq.s32.totalorder %s14, 0
      %p138 = por %p136, %p137
      %p139 = scmp.ne.s32.totalorder %s125, %s126
      %p140 = scmp.eq.s32.totalorder %s15, 11
      %p141 = por %p139, %p140
      %p143 = scmp.ne.s32.totalorder %s126, %s142
      %p144 = scmp.eq.s32.totalorder %s15, 0
      %p145 = por %p143, %p144
      %p146 = scmp.le.s32.totalorder 1, %s9
      %p147 = scmp.lt.s32.totalorder %s9, 13
      %p148 = pnand %p146, %p147
      %p149 = pneg %p148
      // Predicated region
      $region9: #{flownet_er_forward.15} parent=5 // pred_check
        _
      $region10: #{flownet_er_forward.15} parent=5 // pred_check_branch
        %151 = sbr.rel (%p148) target = $region12
      $region11: #{flownet_er_forward.15} parent=5 // pred_region
        %s152 = ssub.s32 %s9, 1
      $region12: #{flownet_er_forward.15} parent=5 // pred_fallthru
        _
      %p153 = scmp.lt.s32.totalorder %s9, 12
      // Predicated region
      $region13: #{flownet_er_forward.15} parent=5 // pred_check
        %p154 = pneg %p153
      $region14: #{flownet_er_forward.15} parent=5 // pred_check_branch
        %156 = sbr.rel (%p154) target = $region16
      $region15: #{flownet_er_forward.15} parent=5 // pred_region
        // Predicated region
        $region17: #{flownet_er_forward.15} parent=15 // pred_check
          %p157 = pneg %p50
        $region18: #{flownet_er_forward.15} parent=15 // pred_check_branch
          %159 = sbr.rel (%p157) target = $region20
        $region19: #{flownet_er_forward.15} parent=15 // pred_region
          %s160 = sand.u32 %s40, 1
          %s161 = sand.u32 %s40, 1
          %s162 = smul.addr %s161, 96
          %s163 = scalar_lea.vmem [#allocation3], %s162
          %s164 = smul.u32 2, %s16
          %s165 = smul.u32 12, %s18
          %s166 = smul.addr %s164, 36
          %s167 = sadd.s32 %s165, %s166
          %s168 = smul.addr %s167, 4
          %s169 = scalar_lea.vmem %s0, %s168
          // Predicated region
          $region21: #{flownet_er_forward.15} parent=19 // pred_check
            _
          $region22: #{flownet_er_forward.15} parent=19 // pred_check_branch
            %171 = sbr.rel (0) target = $region24
          $region23: #{flownet_er_forward.15} parent=19 // pred_region
            // Predicated region
            $region25: #{flownet_er_forward.15} parent=23 // pred_check
              _
            $region26: #{flownet_er_forward.15} parent=23 // pred_check_branch
              %173 = sbr.rel (0) target = $region28
            $region27: #{flownet_er_forward.15} parent=23 // pred_region
              loop: start=0, step=1, limit=1
              $region29: #{flownet_er_forward.15} parent=27 // loop_pre_header
                _
              $region30: #{flownet_er_forward.15} parent=27 // loop_header
                %s175 = sphi 0, %s179
                %p176 = scmp.ge.s32.totalorder %s175, 1
                %s180 = sphi %s169, %s169
                %s181 = sphi %s163, %s163
              $region31: #{flownet_er_forward.15} parent=27 // loop_header_branch
                %178 = sbr.rel (%p176) target = $region35
              $region32: #{flownet_er_forward.15} parent=27 // loop_body
                %v182 = vld [vmem:[%s180] sm:$0xff]
                %183 = vst [vmem:[%s181] sm:$0xff] %v182
                %v184 = vld [vmem:[%s180 + $0x8] sm:$0xff]
                %185 = vst [vmem:[%s181 + $0x8] sm:$0xff] %v184
                %v186 = vld [vmem:[%s180 + $0x10] sm:$0xff]
                %187 = vst [vmem:[%s181 + $0x10] sm:$0xff] %v186
                %v188 = vld [vmem:[%s180 + $0x18] sm:$0xff]
                %189 = vst [vmem:[%s181 + $0x18] sm:$0xff] %v188
                %v190 = vld [vmem:[%s180 + $0x20] sm:$0xff]
                %191 = vst [vmem:[%s181 + $0x20] sm:$0xff] %v190
                %v192 = vld [vmem:[%s180 + $0x28] sm:$0xff]
                %193 = vst [vmem:[%s181 + $0x28] sm:$0xff] %v192
                %v194 = vld [vmem:[%s180 + $0x90] sm:$0xff]
                %195 = vst [vmem:[%s181 + $0x30] sm:$0xff] %v194
                %v196 = vld [vmem:[%s180 + $0x98] sm:$0xff]
                %197 = vst [vmem:[%s181 + $0x38] sm:$0xff] %v196
                %v198 = vld [vmem:[%s180 + $0xa0] sm:$0xff]
                %199 = vst [vmem:[%s181 + $0x40] sm:$0xff] %v198
                %v200 = vld [vmem:[%s180 + $0xa8] sm:$0xff]
                %201 = vst [vmem:[%s181 + $0x48] sm:$0xff] %v200
                %v202 = vld [vmem:[%s180 + $0xb0] sm:$0xff]
                %203 = vst [vmem:[%s181 + $0x50] sm:$0xff] %v202
                %v204 = vld [vmem:[%s180 + $0xb8] sm:$0xff]
                %205 = vst [vmem:[%s181 + $0x58] sm:$0xff] %v204
              $region33: #{flownet_er_forward.15} parent=27 // loop_footer
                %s179 = sadd.s32 1, %s175
              $region34: #{flownet_er_forward.15} parent=27 // loop_footer_branch
                %174 = sbr.rel target = $region30
              $region35: #{flownet_er_forward.15} parent=27 // loop_exit
                _
            $region28: #{flownet_er_forward.15} parent=23 // pred_fallthru
              _
            // Predicated region
            $region36: #{flownet_er_forward.15} parent=23 // pred_check
              _
            $region37: #{flownet_er_forward.15} parent=23 // pred_check_branch
              %207 = sbr.rel target = $region39
            $region38: #{flownet_er_forward.15} parent=23 // pred_region
              _
            $region39: #{flownet_er_forward.15} parent=23 // pred_fallthru
              _
          $region24: #{flownet_er_forward.15} parent=19 // pred_fallthru
            _
          %208 = vnop
        $region20: #{flownet_er_forward.15} parent=15 // pred_fallthru
          _
        // Predicated region
        $region40: #{flownet_er_forward.15} parent=15 // pred_check
          %p209 = pneg %p78
        $region41: #{flownet_er_forward.15} parent=15 // pred_check_branch
          %211 = sbr.rel (%p209) target = $region43
        $region42: #{flownet_er_forward.15} parent=15 // pred_region
          %s212 = sand.u32 %s68, 1
          %s213 = sand.u32 %s68, 1
          %s214 = smul.addr %s213, 1536
          %s215 = scalar_lea.vmem [#allocation4], %s214
          %s216 = smul.u32 192, %s18
          %s217 = smul.u32 2, %s17
          %s218 = smul.addr %s216, 8
          %s219 = sadd.s32 %s217, %s218
          %s220 = smul.addr %s219, 4
          %s221 = scalar_lea.vmem %s1, %s220
          // Predicated region
          $region44: #{flownet_er_forward.15} parent=42 // pred_check
            _
          $region45: #{flownet_er_forward.15} parent=42 // pred_check_branch
            %223 = sbr.rel (0) target = $region47
          $region46: #{flownet_er_forward.15} parent=42 // pred_region
            // Predicated region
            $region48: #{flownet_er_forward.15} parent=46 // pred_check
              _
            $region49: #{flownet_er_forward.15} parent=46 // pred_check_branch
              %225 = sbr.rel (0) target = $region51
            $region50: #{flownet_er_forward.15} parent=46 // pred_region
              // Predicated region
              $region63: #{flownet_er_forward.15} parent=50 // pred_check
                _
              $region64: #{flownet_er_forward.15} parent=50 // pred_check_branch
                %623 = sbr.rel (0) target = $region66
              $region65: #{flownet_er_forward.15} parent=50 // pred_region
                loop: start=0, step=1, limit=1
                $region67: #{flownet_er_forward.15} parent=65 // loop_pre_header
                  _
                $region68: #{flownet_er_forward.15} parent=65 // loop_header
                  %s625 = sphi 0, %s629
                  %p626 = scmp.ge.s32.totalorder %s625, 1
                  %s630 = sphi %s221, %s221
                  %s631 = sphi %s215, %s215
                $region69: #{flownet_er_forward.15} parent=65 // loop_header_branch
                  %628 = sbr.rel (%p626) target = $region73
                $region70: #{flownet_er_forward.15} parent=65 // loop_body
                  %v632 = vld [vmem:[%s630] sm:$0xff]
                  %633 = vst [vmem:[%s631] sm:$0xff] %v632
                  %v634 = vld [vmem:[%s630 + $0x20] sm:$0xff]
                  %635 = vst [vmem:[%s631 + $0x8] sm:$0xff] %v634
                  %v636 = vld [vmem:[%s630 + $0x40] sm:$0xff]
                  %637 = vst [vmem:[%s631 + $0x10] sm:$0xff] %v636
                  %v638 = vld [vmem:[%s630 + $0x60] sm:$0xff]
                  %639 = vst [vmem:[%s631 + $0x18] sm:$0xff] %v638
                  %v640 = vld [vmem:[%s630 + $0x80] sm:$0xff]
                  %641 = vst [vmem:[%s631 + $0x20] sm:$0xff] %v640
                  %v642 = vld [vmem:[%s630 + $0xa0] sm:$0xff]
                  %643 = vst [vmem:[%s631 + $0x28] sm:$0xff] %v642
                  %v644 = vld [vmem:[%s630 + $0xc0] sm:$0xff]
                  %645 = vst [vmem:[%s631 + $0x30] sm:$0xff] %v644
                  %v646 = vld [vmem:[%s630 + $0xe0] sm:$0xff]
                  %647 = vst [vmem:[%s631 + $0x38] sm:$0xff] %v646
                  %v648 = vld [vmem:[%s630 + $0x100] sm:$0xff]
                  %649 = vst [vmem:[%s631 + $0x40] sm:$0xff] %v648
                  %v650 = vld [vmem:[%s630 + $0x120] sm:$0xff]
                  %651 = vst [vmem:[%s631 + $0x48] sm:$0xff] %v650
                  %v652 = vld [vmem:[%s630 + $0x140] sm:$0xff]
                  %653 = vst [vmem:[%s631 + $0x50] sm:$0xff] %v652
                  %v654 = vld [vmem:[%s630 + $0x160] sm:$0xff]
                  %655 = vst [vmem:[%s631 + $0x58] sm:$0xff] %v654
                  %v656 = vld [vmem:[%s630 + $0x180] sm:$0xff]
                  %657 = vst [vmem:[%s631 + $0x60] sm:$0xff] %v656
                  %v658 = vld [vmem:[%s630 + $0x1a0] sm:$0xff]
                  %659 = vst [vmem:[%s631 + $0x68] sm:$0xff] %v658
                  %v660 = vld [vmem:[%s630 + $0x1c0] sm:$0xff]
                  %661 = vst [vmem:[%s631 + $0x70] sm:$0xff] %v660
                  %v662 = vld [vmem:[%s630 + $0x1e0] sm:$0xff]
                  %663 = vst [vmem:[%s631 + $0x78] sm:$0xff] %v662
                  %v664 = vld [vmem:[%s630 + $0x200] sm:$0xff]
                  %665 = vst [vmem:[%s631 + $0x80] sm:$0xff] %v664
                  %v666 = vld [vmem:[%s630 + $0x220] sm:$0xff]
                  %667 = vst [vmem:[%s631 + $0x88] sm:$0xff] %v666
                  %v668 = vld [vmem:[%s630 + $0x240] sm:$0xff]
                  %669 = vst [vmem:[%s631 + $0x90] sm:$0xff] %v668
                  %v670 = vld [vmem:[%s630 + $0x260] sm:$0xff]
                  %671 = vst [vmem:[%s631 + $0x98] sm:$0xff] %v670
                  %v672 = vld [vmem:[%s630 + $0x280] sm:$0xff]
                  %673 = vst [vmem:[%s631 + $0xa0] sm:$0xff] %v672
                  %v674 = vld [vmem:[%s630 + $0x2a0] sm:$0xff]
                  %675 = vst [vmem:[%s631 + $0xa8] sm:$0xff] %v674
                  %v676 = vld [vmem:[%s630 + $0x2c0] sm:$0xff]
                  %677 = vst [vmem:[%s631 + $0xb0] sm:$0xff] %v676
                  %v678 = vld [vmem:[%s630 + $0x2e0] sm:$0xff]
                  %679 = vst [vmem:[%s631 + $0xb8] sm:$0xff] %v678
                  %v680 = vld [vmem:[%s630 + $0x300] sm:$0xff]
                  %681 = vst [vmem:[%s631 + $0xc0] sm:$0xff] %v680
                  %v682 = vld [vmem:[%s630 + $0x320] sm:$0xff]
                  %683 = vst [vmem:[%s631 + $0xc8] sm:$0xff] %v682
                  %v684 = vld [vmem:[%s630 + $0x340] sm:$0xff]
                  %685 = vst [vmem:[%s631 + $0xd0] sm:$0xff] %v684
                  %v686 = vld [vmem:[%s630 + $0x360] sm:$0xff]
                  %687 = vst [vmem:[%s631 + $0xd8] sm:$0xff] %v686
                  %v688 = vld [vmem:[%s630 + $0x380] sm:$0xff]
                  %689 = vst [vmem:[%s631 + $0xe0] sm:$0xff] %v688
                  %v690 = vld [vmem:[%s630 + $0x3a0] sm:$0xff]
                  %691 = vst [vmem:[%s631 + $0xe8] sm:$0xff] %v690
                  %v692 = vld [vmem:[%s630 + $0x3c0] sm:$0xff]
                  %693 = vst [vmem:[%s631 + $0xf0] sm:$0xff] %v692
                  %v694 = vld [vmem:[%s630 + $0x3e0] sm:$0xff]
                  %695 = vst [vmem:[%s631 + $0xf8] sm:$0xff] %v694
                  %v696 = vld [vmem:[%s630 + $0x400] sm:$0xff]
                  %697 = vst [vmem:[%s631 + $0x100] sm:$0xff] %v696
                  %v698 = vld [vmem:[%s630 + $0x420] sm:$0xff]
                  %699 = vst [vmem:[%s631 + $0x108] sm:$0xff] %v698
                  %v700 = vld [vmem:[%s630 + $0x440] sm:$0xff]
                  %701 = vst [vmem:[%s631 + $0x110] sm:$0xff] %v700
                  %v702 = vld [vmem:[%s630 + $0x460] sm:$0xff]
                  %703 = vst [vmem:[%s631 + $0x118] sm:$0xff] %v702
                  %v704 = vld [vmem:[%s630 + $0x480] sm:$0xff]
                  %705 = vst [vmem:[%s631 + $0x120] sm:$0xff] %v704
                  %v706 = vld [vmem:[%s630 + $0x4a0] sm:$0xff]
                  %707 = vst [vmem:[%s631 + $0x128] sm:$0xff] %v706
                  %v708 = vld [vmem:[%s630 + $0x4c0] sm:$0xff]
                  %709 = vst [vmem:[%s631 + $0x130] sm:$0xff] %v708
                  %v710 = vld [vmem:[%s630 + $0x4e0] sm:$0xff]
                  %711 = vst [vmem:[%s631 + $0x138] sm:$0xff] %v710
                  %v712 = vld [vmem:[%s630 + $0x500] sm:$0xff]
                  %713 = vst [vmem:[%s631 + $0x140] sm:$0xff] %v712
                  %v714 = vld [vmem:[%s630 + $0x520] sm:$0xff]
                  %715 = vst [vmem:[%s631 + $0x148] sm:$0xff] %v714
                  %v716 = vld [vmem:[%s630 + $0x540] sm:$0xff]
                  %717 = vst [vmem:[%s631 + $0x150] sm:$0xff] %v716
                  %v718 = vld [vmem:[%s630 + $0x560] sm:$0xff]
                  %719 = vst [vmem:[%s631 + $0x158] sm:$0xff] %v718
                  %v720 = vld [vmem:[%s630 + $0x580] sm:$0xff]
                  %721 = vst [vmem:[%s631 + $0x160] sm:$0xff] %v720
                  %v722 = vld [vmem:[%s630 + $0x5a0] sm:$0xff]
                  %723 = vst [vmem:[%s631 + $0x168] sm:$0xff] %v722
                  %v724 = vld [vmem:[%s630 + $0x5c0] sm:$0xff]
                  %725 = vst [vmem:[%s631 + $0x170] sm:$0xff] %v724
                  %v726 = vld [vmem:[%s630 + $0x5e0] sm:$0xff]
                  %727 = vst [vmem:[%s631 + $0x178] sm:$0xff] %v726
                  %v728 = vld [vmem:[%s630 + $0x600] sm:$0xff]
                  %729 = vst [vmem:[%s631 + $0x180] sm:$0xff] %v728
                  %v730 = vld [vmem:[%s630 + $0x620] sm:$0xff]
                  %731 = vst [vmem:[%s631 + $0x188] sm:$0xff] %v730
                  %v732 = vld [vmem:[%s630 + $0x640] sm:$0xff]
                  %733 = vst [vmem:[%s631 + $0x190] sm:$0xff] %v732
                  %v734 = vld [vmem:[%s630 + $0x660] sm:$0xff]
                  %735 = vst [vmem:[%s631 + $0x198] sm:$0xff] %v734
                  %v736 = vld [vmem:[%s630 + $0x680] sm:$0xff]
                  %737 = vst [vmem:[%s631 + $0x1a0] sm:$0xff] %v736
                  %v738 = vld [vmem:[%s630 + $0x6a0] sm:$0xff]
                  %739 = vst [vmem:[%s631 + $0x1a8] sm:$0xff] %v738
                  %v740 = vld [vmem:[%s630 + $0x6c0] sm:$0xff]
                  %741 = vst [vmem:[%s631 + $0x1b0] sm:$0xff] %v740
                  %v742 = vld [vmem:[%s630 + $0x6e0] sm:$0xff]
                  %743 = vst [vmem:[%s631 + $0x1b8] sm:$0xff] %v742
                  %v744 = vld [vmem:[%s630 + $0x700] sm:$0xff]
                  %745 = vst [vmem:[%s631 + $0x1c0] sm:$0xff] %v744
                  %v746 = vld [vmem:[%s630 + $0x720] sm:$0xff]
                  %747 = vst [vmem:[%s631 + $0x1c8] sm:$0xff] %v746
                  %v748 = vld [vmem:[%s630 + $0x740] sm:$0xff]
                  %749 = vst [vmem:[%s631 + $0x1d0] sm:$0xff] %v748
                  %v750 = vld [vmem:[%s630 + $0x760] sm:$0xff]
                  %751 = vst [vmem:[%s631 + $0x1d8] sm:$0xff] %v750
                  %v752 = vld [vmem:[%s630 + $0x780] sm:$0xff]
                  %753 = vst [vmem:[%s631 + $0x1e0] sm:$0xff] %v752
                  %v754 = vld [vmem:[%s630 + $0x7a0] sm:$0xff]
                  %755 = vst [vmem:[%s631 + $0x1e8] sm:$0xff] %v754
                  %v756 = vld [vmem:[%s630 + $0x7c0] sm:$0xff]
                  %757 = vst [vmem:[%s631 + $0x1f0] sm:$0xff] %v756
                  %v758 = vld [vmem:[%s630 + $0x7e0] sm:$0xff]
                  %759 = vst [vmem:[%s631 + $0x1f8] sm:$0xff] %v758
                  %v760 = vld [vmem:[%s630 + $0x800] sm:$0xff]
                  %761 = vst [vmem:[%s631 + $0x200] sm:$0xff] %v760
                  %v762 = vld [vmem:[%s630 + $0x820] sm:$0xff]
                  %763 = vst [vmem:[%s631 + $0x208] sm:$0xff] %v762
                  %v764 = vld [vmem:[%s630 + $0x840] sm:$0xff]
                  %765 = vst [vmem:[%s631 + $0x210] sm:$0xff] %v764
                  %v766 = vld [vmem:[%s630 + $0x860] sm:$0xff]
                  %767 = vst [vmem:[%s631 + $0x218] sm:$0xff] %v766
                  %v768 = vld [vmem:[%s630 + $0x880] sm:$0xff]
                  %769 = vst [vmem:[%s631 + $0x220] sm:$0xff] %v768
                  %v770 = vld [vmem:[%s630 + $0x8a0] sm:$0xff]
                  %771 = vst [vmem:[%s631 + $0x228] sm:$0xff] %v770
                  %v772 = vld [vmem:[%s630 + $0x8c0] sm:$0xff]
                  %773 = vst [vmem:[%s631 + $0x230] sm:$0xff] %v772
                  %v774 = vld [vmem:[%s630 + $0x8e0] sm:$0xff]
                  %775 = vst [vmem:[%s631 + $0x238] sm:$0xff] %v774
                  %v776 = vld [vmem:[%s630 + $0x900] sm:$0xff]
                  %777 = vst [vmem:[%s631 + $0x240] sm:$0xff] %v776
                  %v778 = vld [vmem:[%s630 + $0x920] sm:$0xff]
                  %779 = vst [vmem:[%s631 + $0x248] sm:$0xff] %v778
                  %v780 = vld [vmem:[%s630 + $0x940] sm:$0xff]
                  %781 = vst [vmem:[%s631 + $0x250] sm:$0xff] %v780
                  %v782 = vld [vmem:[%s630 + $0x960] sm:$0xff]
                  %783 = vst [vmem:[%s631 + $0x258] sm:$0xff] %v782
                  %v784 = vld [vmem:[%s630 + $0x980] sm:$0xff]
                  %785 = vst [vmem:[%s631 + $0x260] sm:$0xff] %v784
                  %v786 = vld [vmem:[%s630 + $0x9a0] sm:$0xff]
                  %787 = vst [vmem:[%s631 + $0x268] sm:$0xff] %v786
                  %v788 = vld [vmem:[%s630 + $0x9c0] sm:$0xff]
                  %789 = vst [vmem:[%s631 + $0x270] sm:$0xff] %v788
                  %v790 = vld [vmem:[%s630 + $0x9e0] sm:$0xff]
                  %791 = vst [vmem:[%s631 + $0x278] sm:$0xff] %v790
                  %v792 = vld [vmem:[%s630 + $0xa00] sm:$0xff]
                  %793 = vst [vmem:[%s631 + $0x280] sm:$0xff] %v792
                  %v794 = vld [vmem:[%s630 + $0xa20] sm:$0xff]
                  %795 = vst [vmem:[%s631 + $0x288] sm:$0xff] %v794
                  %v796 = vld [vmem:[%s630 + $0xa40] sm:$0xff]
                  %797 = vst [vmem:[%s631 + $0x290] sm:$0xff] %v796
                  %v798 = vld [vmem:[%s630 + $0xa60] sm:$0xff]
                  %799 = vst [vmem:[%s631 + $0x298] sm:$0xff] %v798
                  %v800 = vld [vmem:[%s630 + $0xa80] sm:$0xff]
                  %801 = vst [vmem:[%s631 + $0x2a0] sm:$0xff] %v800
                  %v802 = vld [vmem:[%s630 + $0xaa0] sm:$0xff]
                  %803 = vst [vmem:[%s631 + $0x2a8] sm:$0xff] %v802
                  %v804 = vld [vmem:[%s630 + $0xac0] sm:$0xff]
                  %805 = vst [vmem:[%s631 + $0x2b0] sm:$0xff] %v804
                  %v806 = vld [vmem:[%s630 + $0xae0] sm:$0xff]
                  %807 = vst [vmem:[%s631 + $0x2b8] sm:$0xff] %v806
                  %v808 = vld [vmem:[%s630 + $0xb00] sm:$0xff]
                  %809 = vst [vmem:[%s631 + $0x2c0] sm:$0xff] %v808
                  %v810 = vld [vmem:[%s630 + $0xb20] sm:$0xff]
                  %811 = vst [vmem:[%s631 + $0x2c8] sm:$0xff] %v810
                  %v812 = vld [vmem:[%s630 + $0xb40] sm:$0xff]
                  %813 = vst [vmem:[%s631 + $0x2d0] sm:$0xff] %v812
                  %v814 = vld [vmem:[%s630 + $0xb60] sm:$0xff]
                  %815 = vst [vmem:[%s631 + $0x2d8] sm:$0xff] %v814
                  %v816 = vld [vmem:[%s630 + $0xb80] sm:$0xff]
                  %817 = vst [vmem:[%s631 + $0x2e0] sm:$0xff] %v816
                  %v818 = vld [vmem:[%s630 + $0xba0] sm:$0xff]
                  %819 = vst [vmem:[%s631 + $0x2e8] sm:$0xff] %v818
                  %v820 = vld [vmem:[%s630 + $0xbc0] sm:$0xff]
                  %821 = vst [vmem:[%s631 + $0x2f0] sm:$0xff] %v820
                  %v822 = vld [vmem:[%s630 + $0xbe0] sm:$0xff]
                  %823 = vst [vmem:[%s631 + $0x2f8] sm:$0xff] %v822
                  %v824 = vld [vmem:[%s630 + $0xc00] sm:$0xff]
                  %825 = vst [vmem:[%s631 + $0x300] sm:$0xff] %v824
                  %v826 = vld [vmem:[%s630 + $0xc20] sm:$0xff]
                  %827 = vst [vmem:[%s631 + $0x308] sm:$0xff] %v826
                  %v828 = vld [vmem:[%s630 + $0xc40] sm:$0xff]
                  %829 = vst [vmem:[%s631 + $0x310] sm:$0xff] %v828
                  %v830 = vld [vmem:[%s630 + $0xc60] sm:$0xff]
                  %831 = vst [vmem:[%s631 + $0x318] sm:$0xff] %v830
                  %v832 = vld [vmem:[%s630 + $0xc80] sm:$0xff]
                  %833 = vst [vmem:[%s631 + $0x320] sm:$0xff] %v832
                  %v834 = vld [vmem:[%s630 + $0xca0] sm:$0xff]
                  %835 = vst [vmem:[%s631 + $0x328] sm:$0xff] %v834
                  %v836 = vld [vmem:[%s630 + $0xcc0] sm:$0xff]
                  %837 = vst [vmem:[%s631 + $0x330] sm:$0xff] %v836
                  %v838 = vld [vmem:[%s630 + $0xce0] sm:$0xff]
                  %839 = vst [vmem:[%s631 + $0x338] sm:$0xff] %v838
                  %v840 = vld [vmem:[%s630 + $0xd00] sm:$0xff]
                  %841 = vst [vmem:[%s631 + $0x340] sm:$0xff] %v840
                  %v842 = vld [vmem:[%s630 + $0xd20] sm:$0xff]
                  %843 = vst [vmem:[%s631 + $0x348] sm:$0xff] %v842
                  %v844 = vld [vmem:[%s630 + $0xd40] sm:$0xff]
                  %845 = vst [vmem:[%s631 + $0x350] sm:$0xff] %v844
                  %v846 = vld [vmem:[%s630 + $0xd60] sm:$0xff]
                  %847 = vst [vmem:[%s631 + $0x358] sm:$0xff] %v846
                  %v848 = vld [vmem:[%s630 + $0xd80] sm:$0xff]
                  %849 = vst [vmem:[%s631 + $0x360] sm:$0xff] %v848
                  %v850 = vld [vmem:[%s630 + $0xda0] sm:$0xff]
                  %851 = vst [vmem:[%s631 + $0x368] sm:$0xff] %v850
                  %v852 = vld [vmem:[%s630 + $0xdc0] sm:$0xff]
                  %853 = vst [vmem:[%s631 + $0x370] sm:$0xff] %v852
                  %v854 = vld [vmem:[%s630 + $0xde0] sm:$0xff]
                  %855 = vst [vmem:[%s631 + $0x378] sm:$0xff] %v854
                  %v856 = vld [vmem:[%s630 + $0xe00] sm:$0xff]
                  %857 = vst [vmem:[%s631 + $0x380] sm:$0xff] %v856
                  %v858 = vld [vmem:[%s630 + $0xe20] sm:$0xff]
                  %859 = vst [vmem:[%s631 + $0x388] sm:$0xff] %v858
                  %v860 = vld [vmem:[%s630 + $0xe40] sm:$0xff]
                  %861 = vst [vmem:[%s631 + $0x390] sm:$0xff] %v860
                  %v862 = vld [vmem:[%s630 + $0xe60] sm:$0xff]
                  %863 = vst [vmem:[%s631 + $0x398] sm:$0xff] %v862
                  %v864 = vld [vmem:[%s630 + $0xe80] sm:$0xff]
                  %865 = vst [vmem:[%s631 + $0x3a0] sm:$0xff] %v864
                  %v866 = vld [vmem:[%s630 + $0xea0] sm:$0xff]
                  %867 = vst [vmem:[%s631 + $0x3a8] sm:$0xff] %v866
                  %v868 = vld [vmem:[%s630 + $0xec0] sm:$0xff]
                  %869 = vst [vmem:[%s631 + $0x3b0] sm:$0xff] %v868
                  %v870 = vld [vmem:[%s630 + $0xee0] sm:$0xff]
                  %871 = vst [vmem:[%s631 + $0x3b8] sm:$0xff] %v870
                  %v872 = vld [vmem:[%s630 + $0xf00] sm:$0xff]
                  %873 = vst [vmem:[%s631 + $0x3c0] sm:$0xff] %v872
                  %v874 = vld [vmem:[%s630 + $0xf20] sm:$0xff]
                  %875 = vst [vmem:[%s631 + $0x3c8] sm:$0xff] %v874
                  %v876 = vld [vmem:[%s630 + $0xf40] sm:$0xff]
                  %877 = vst [vmem:[%s631 + $0x3d0] sm:$0xff] %v876
                  %v878 = vld [vmem:[%s630 + $0xf60] sm:$0xff]
                  %879 = vst [vmem:[%s631 + $0x3d8] sm:$0xff] %v878
                  %v880 = vld [vmem:[%s630 + $0xf80] sm:$0xff]
                  %881 = vst [vmem:[%s631 + $0x3e0] sm:$0xff] %v880
                  %v882 = vld [vmem:[%s630 + $0xfa0] sm:$0xff]
                  %883 = vst [vmem:[%s631 + $0x3e8] sm:$0xff] %v882
                  %v884 = vld [vmem:[%s630 + $0xfc0] sm:$0xff]
                  %885 = vst [vmem:[%s631 + $0x3f0] sm:$0xff] %v884
                  %v886 = vld [vmem:[%s630 + $0xfe0] sm:$0xff]
                  %887 = vst [vmem:[%s631 + $0x3f8] sm:$0xff] %v886
                  %v888 = vld [vmem:[%s630 + $0x1000] sm:$0xff]
                  %889 = vst [vmem:[%s631 + $0x400] sm:$0xff] %v888
                  %v890 = vld [vmem:[%s630 + $0x1020] sm:$0xff]
                  %891 = vst [vmem:[%s631 + $0x408] sm:$0xff] %v890
                  %v892 = vld [vmem:[%s630 + $0x1040] sm:$0xff]
                  %893 = vst [vmem:[%s631 + $0x410] sm:$0xff] %v892
                  %v894 = vld [vmem:[%s630 + $0x1060] sm:$0xff]
                  %895 = vst [vmem:[%s631 + $0x418] sm:$0xff] %v894
                  %v896 = vld [vmem:[%s630 + $0x1080] sm:$0xff]
                  %897 = vst [vmem:[%s631 + $0x420] sm:$0xff] %v896
                  %v898 = vld [vmem:[%s630 + $0x10a0] sm:$0xff]
                  %899 = vst [vmem:[%s631 + $0x428] sm:$0xff] %v898
                  %v900 = vld [vmem:[%s630 + $0x10c0] sm:$0xff]
                  %901 = vst [vmem:[%s631 + $0x430] sm:$0xff] %v900
                  %v902 = vld [vmem:[%s630 + $0x10e0] sm:$0xff]
                  %903 = vst [vmem:[%s631 + $0x438] sm:$0xff] %v902
                  %v904 = vld [vmem:[%s630 + $0x1100] sm:$0xff]
                  %905 = vst [vmem:[%s631 + $0x440] sm:$0xff] %v904
                  %v906 = vld [vmem:[%s630 + $0x1120] sm:$0xff]
                  %907 = vst [vmem:[%s631 + $0x448] sm:$0xff] %v906
                  %v908 = vld [vmem:[%s630 + $0x1140] sm:$0xff]
                  %909 = vst [vmem:[%s631 + $0x450] sm:$0xff] %v908
                  %v910 = vld [vmem:[%s630 + $0x1160] sm:$0xff]
                  %911 = vst [vmem:[%s631 + $0x458] sm:$0xff] %v910
                  %v912 = vld [vmem:[%s630 + $0x1180] sm:$0xff]
                  %913 = vst [vmem:[%s631 + $0x460] sm:$0xff] %v912
                  %v914 = vld [vmem:[%s630 + $0x11a0] sm:$0xff]
                  %915 = vst [vmem:[%s631 + $0x468] sm:$0xff] %v914
                  %v916 = vld [vmem:[%s630 + $0x11c0] sm:$0xff]
                  %917 = vst [vmem:[%s631 + $0x470] sm:$0xff] %v916
                  %v918 = vld [vmem:[%s630 + $0x11e0] sm:$0xff]
                  %919 = vst [vmem:[%s631 + $0x478] sm:$0xff] %v918
                  %v920 = vld [vmem:[%s630 + $0x1200] sm:$0xff]
                  %921 = vst [vmem:[%s631 + $0x480] sm:$0xff] %v920
                  %v922 = vld [vmem:[%s630 + $0x1220] sm:$0xff]
                  %923 = vst [vmem:[%s631 + $0x488] sm:$0xff] %v922
                  %v924 = vld [vmem:[%s630 + $0x1240] sm:$0xff]
                  %925 = vst [vmem:[%s631 + $0x490] sm:$0xff] %v924
                  %v926 = vld [vmem:[%s630 + $0x1260] sm:$0xff]
                  %927 = vst [vmem:[%s631 + $0x498] sm:$0xff] %v926
                  %v928 = vld [vmem:[%s630 + $0x1280] sm:$0xff]
                  %929 = vst [vmem:[%s631 + $0x4a0] sm:$0xff] %v928
                  %v930 = vld [vmem:[%s630 + $0x12a0] sm:$0xff]
                  %931 = vst [vmem:[%s631 + $0x4a8] sm:$0xff] %v930
                  %v932 = vld [vmem:[%s630 + $0x12c0] sm:$0xff]
                  %933 = vst [vmem:[%s631 + $0x4b0] sm:$0xff] %v932
                  %v934 = vld [vmem:[%s630 + $0x12e0] sm:$0xff]
                  %935 = vst [vmem:[%s631 + $0x4b8] sm:$0xff] %v934
                  %v936 = vld [vmem:[%s630 + $0x1300] sm:$0xff]
                  %937 = vst [vmem:[%s631 + $0x4c0] sm:$0xff] %v936
                  %v938 = vld [vmem:[%s630 + $0x1320] sm:$0xff]
                  %939 = vst [vmem:[%s631 + $0x4c8] sm:$0xff] %v938
                  %v940 = vld [vmem:[%s630 + $0x1340] sm:$0xff]
                  %941 = vst [vmem:[%s631 + $0x4d0] sm:$0xff] %v940
                  %v942 = vld [vmem:[%s630 + $0x1360] sm:$0xff]
                  %943 = vst [vmem:[%s631 + $0x4d8] sm:$0xff] %v942
                  %v944 = vld [vmem:[%s630 + $0x1380] sm:$0xff]
                  %945 = vst [vmem:[%s631 + $0x4e0] sm:$0xff] %v944
                  %v946 = vld [vmem:[%s630 + $0x13a0] sm:$0xff]
                  %947 = vst [vmem:[%s631 + $0x4e8] sm:$0xff] %v946
                  %v948 = vld [vmem:[%s630 + $0x13c0] sm:$0xff]
                  %949 = vst [vmem:[%s631 + $0x4f0] sm:$0xff] %v948
                  %v950 = vld [vmem:[%s630 + $0x13e0] sm:$0xff]
                  %951 = vst [vmem:[%s631 + $0x4f8] sm:$0xff] %v950
                  %v952 = vld [vmem:[%s630 + $0x1400] sm:$0xff]
                  %953 = vst [vmem:[%s631 + $0x500] sm:$0xff] %v952
                  %v954 = vld [vmem:[%s630 + $0x1420] sm:$0xff]
                  %955 = vst [vmem:[%s631 + $0x508] sm:$0xff] %v954
                  %v956 = vld [vmem:[%s630 + $0x1440] sm:$0xff]
                  %957 = vst [vmem:[%s631 + $0x510] sm:$0xff] %v956
                  %v958 = vld [vmem:[%s630 + $0x1460] sm:$0xff]
                  %959 = vst [vmem:[%s631 + $0x518] sm:$0xff] %v958
                  %v960 = vld [vmem:[%s630 + $0x1480] sm:$0xff]
                  %961 = vst [vmem:[%s631 + $0x520] sm:$0xff] %v960
                  %v962 = vld [vmem:[%s630 + $0x14a0] sm:$0xff]
                  %963 = vst [vmem:[%s631 + $0x528] sm:$0xff] %v962
                  %v964 = vld [vmem:[%s630 + $0x14c0] sm:$0xff]
                  %965 = vst [vmem:[%s631 + $0x530] sm:$0xff] %v964
                  %v966 = vld [vmem:[%s630 + $0x14e0] sm:$0xff]
                  %967 = vst [vmem:[%s631 + $0x538] sm:$0xff] %v966
                  %v968 = vld [vmem:[%s630 + $0x1500] sm:$0xff]
                  %969 = vst [vmem:[%s631 + $0x540] sm:$0xff] %v968
                  %v970 = vld [vmem:[%s630 + $0x1520] sm:$0xff]
                  %971 = vst [vmem:[%s631 + $0x548] sm:$0xff] %v970
                  %v972 = vld [vmem:[%s630 + $0x1540] sm:$0xff]
                  %973 = vst [vmem:[%s631 + $0x550] sm:$0xff] %v972
                  %v974 = vld [vmem:[%s630 + $0x1560] sm:$0xff]
                  %975 = vst [vmem:[%s631 + $0x558] sm:$0xff] %v974
                  %v976 = vld [vmem:[%s630 + $0x1580] sm:$0xff]
                  %977 = vst [vmem:[%s631 + $0x560] sm:$0xff] %v976
                  %v978 = vld [vmem:[%s630 + $0x15a0] sm:$0xff]
                  %979 = vst [vmem:[%s631 + $0x568] sm:$0xff] %v978
                  %v980 = vld [vmem:[%s630 + $0x15c0] sm:$0xff]
                  %981 = vst [vmem:[%s631 + $0x570] sm:$0xff] %v980
                  %v982 = vld [vmem:[%s630 + $0x15e0] sm:$0xff]
                  %983 = vst [vmem:[%s631 + $0x578] sm:$0xff] %v982
                  %v984 = vld [vmem:[%s630 + $0x1600] sm:$0xff]
                  %985 = vst [vmem:[%s631 + $0x580] sm:$0xff] %v984
                  %v986 = vld [vmem:[%s630 + $0x1620] sm:$0xff]
                  %987 = vst [vmem:[%s631 + $0x588] sm:$0xff] %v986
                  %v988 = vld [vmem:[%s630 + $0x1640] sm:$0xff]
                  %989 = vst [vmem:[%s631 + $0x590] sm:$0xff] %v988
                  %v990 = vld [vmem:[%s630 + $0x1660] sm:$0xff]
                  %991 = vst [vmem:[%s631 + $0x598] sm:$0xff] %v990
                  %v992 = vld [vmem:[%s630 + $0x1680] sm:$0xff]
                  %993 = vst [vmem:[%s631 + $0x5a0] sm:$0xff] %v992
                  %v994 = vld [vmem:[%s630 + $0x16a0] sm:$0xff]
                  %995 = vst [vmem:[%s631 + $0x5a8] sm:$0xff] %v994
                  %v996 = vld [vmem:[%s630 + $0x16c0] sm:$0xff]
                  %997 = vst [vmem:[%s631 + $0x5b0] sm:$0xff] %v996
                  %v998 = vld [vmem:[%s630 + $0x16e0] sm:$0xff]
                  %999 = vst [vmem:[%s631 + $0x5b8] sm:$0xff] %v998
                  %v1000 = vld [vmem:[%s630 + $0x1700] sm:$0xff]
                  %1001 = vst [vmem:[%s631 + $0x5c0] sm:$0xff] %v1000
                  %v1002 = vld [vmem:[%s630 + $0x1720] sm:$0xff]
                  %1003 = vst [vmem:[%s631 + $0x5c8] sm:$0xff] %v1002
                  %v1004 = vld [vmem:[%s630 + $0x1740] sm:$0xff]
                  %1005 = vst [vmem:[%s631 + $0x5d0] sm:$0xff] %v1004
                  %v1006 = vld [vmem:[%s630 + $0x1760] sm:$0xff]
                  %1007 = vst [vmem:[%s631 + $0x5d8] sm:$0xff] %v1006
                  %v1008 = vld [vmem:[%s630 + $0x1780] sm:$0xff]
                  %1009 = vst [vmem:[%s631 + $0x5e0] sm:$0xff] %v1008
                  %v1010 = vld [vmem:[%s630 + $0x17a0] sm:$0xff]
                  %1011 = vst [vmem:[%s631 + $0x5e8] sm:$0xff] %v1010
                  %v1012 = vld [vmem:[%s630 + $0x17c0] sm:$0xff]
                  %1013 = vst [vmem:[%s631 + $0x5f0] sm:$0xff] %v1012
                  %v1014 = vld [vmem:[%s630 + $0x17e0] sm:$0xff]
                  %1015 = vst [vmem:[%s631 + $0x5f8] sm:$0xff] %v1014
                $region71: #{flownet_er_forward.15} parent=65 // loop_footer
                  %s629 = sadd.s32 1, %s625
                $region72: #{flownet_er_forward.15} parent=65 // loop_footer_branch
                  %624 = sbr.rel target = $region68
                $region73: #{flownet_er_forward.15} parent=65 // loop_exit
                  _
              $region66: #{flownet_er_forward.15} parent=50 // pred_fallthru
                _
              // Predicated region
              $region74: #{flownet_er_forward.15} parent=50 // pred_check
                _
              $region75: #{flownet_er_forward.15} parent=50 // pred_check_branch
                %1017 = sbr.rel target = $region77
              $region76: #{flownet_er_forward.15} parent=50 // pred_region
                _
              $region77: #{flownet_er_forward.15} parent=50 // pred_fallthru
                _
            $region51: #{flownet_er_forward.15} parent=46 // pred_fallthru
              _
            // Predicated region
            $region52: #{flownet_er_forward.15} parent=46 // pred_check
              _
            $region53: #{flownet_er_forward.15} parent=46 // pred_check_branch
              %227 = sbr.rel target = $region55
            $region54: #{flownet_er_forward.15} parent=46 // pred_region
              %s229 = ssub.s32 256, 1
              loop: start=0, step=1, limit=1
              $region56: #{flownet_er_forward.15} parent=54 // loop_pre_header
                _
              $region57: #{flownet_er_forward.15} parent=54 // loop_header
                %s231 = sphi 0, %s235
                %p232 = scmp.ge.s32.totalorder %s231, 1
                %s236 = sphi %s221, %s221
                %s237 = sphi %s215, %s215
              $region58: #{flownet_er_forward.15} parent=54 // loop_header_branch
                %234 = sbr.rel (%p232) target = $region62
              $region59: #{flownet_er_forward.15} parent=54 // loop_body
                %v238 = vld [vmem:[%s236] sm:%s229]
                %239 = vst [vmem:[%s237] sm:%s229] %v238
                %v240 = vld [vmem:[%s236 + $0x20] sm:%s229]
                %241 = vst [vmem:[%s237 + $0x8] sm:%s229] %v240
                %v242 = vld [vmem:[%s236 + $0x40] sm:%s229]
                %243 = vst [vmem:[%s237 + $0x10] sm:%s229] %v242
                %v244 = vld [vmem:[%s236 + $0x60] sm:%s229]
                %245 = vst [vmem:[%s237 + $0x18] sm:%s229] %v244
                %v246 = vld [vmem:[%s236 + $0x80] sm:%s229]
                %247 = vst [vmem:[%s237 + $0x20] sm:%s229] %v246
                %v248 = vld [vmem:[%s236 + $0xa0] sm:%s229]
                %249 = vst [vmem:[%s237 + $0x28] sm:%s229] %v248
                %v250 = vld [vmem:[%s236 + $0xc0] sm:%s229]
                %251 = vst [vmem:[%s237 + $0x30] sm:%s229] %v250
                %v252 = vld [vmem:[%s236 + $0xe0] sm:%s229]
                %253 = vst [vmem:[%s237 + $0x38] sm:%s229] %v252
                %v254 = vld [vmem:[%s236 + $0x100] sm:%s229]
                %255 = vst [vmem:[%s237 + $0x40] sm:%s229] %v254
                %v256 = vld [vmem:[%s236 + $0x120] sm:%s229]
                %257 = vst [vmem:[%s237 + $0x48] sm:%s229] %v256
                %v258 = vld [vmem:[%s236 + $0x140] sm:%s229]
                %259 = vst [vmem:[%s237 + $0x50] sm:%s229] %v258
                %v260 = vld [vmem:[%s236 + $0x160] sm:%s229]
                %261 = vst [vmem:[%s237 + $0x58] sm:%s229] %v260
                %v262 = vld [vmem:[%s236 + $0x180] sm:%s229]
                %263 = vst [vmem:[%s237 + $0x60] sm:%s229] %v262
                %v264 = vld [vmem:[%s236 + $0x1a0] sm:%s229]
                %265 = vst [vmem:[%s237 + $0x68] sm:%s229] %v264
                %v266 = vld [vmem:[%s236 + $0x1c0] sm:%s229]
                %267 = vst [vmem:[%s237 + $0x70] sm:%s229] %v266
                %v268 = vld [vmem:[%s236 + $0x1e0] sm:%s229]
                %269 = vst [vmem:[%s237 + $0x78] sm:%s229] %v268
                %v270 = vld [vmem:[%s236 + $0x200] sm:%s229]
                %271 = vst [vmem:[%s237 + $0x80] sm:%s229] %v270
                %v272 = vld [vmem:[%s236 + $0x220] sm:%s229]
                %273 = vst [vmem:[%s237 + $0x88] sm:%s229] %v272
                %v274 = vld [vmem:[%s236 + $0x240] sm:%s229]
                %275 = vst [vmem:[%s237 + $0x90] sm:%s229] %v274
                %v276 = vld [vmem:[%s236 + $0x260] sm:%s229]
                %277 = vst [vmem:[%s237 + $0x98] sm:%s229] %v276
                %v278 = vld [vmem:[%s236 + $0x280] sm:%s229]
                %279 = vst [vmem:[%s237 + $0xa0] sm:%s229] %v278
                %v280 = vld [vmem:[%s236 + $0x2a0] sm:%s229]
                %281 = vst [vmem:[%s237 + $0xa8] sm:%s229] %v280
                %v282 = vld [vmem:[%s236 + $0x2c0] sm:%s229]
                %283 = vst [vmem:[%s237 + $0xb0] sm:%s229] %v282
                %v284 = vld [vmem:[%s236 + $0x2e0] sm:%s229]
                %285 = vst [vmem:[%s237 + $0xb8] sm:%s229] %v284
                %v286 = vld [vmem:[%s236 + $0x300] sm:%s229]
                %287 = vst [vmem:[%s237 + $0xc0] sm:%s229] %v286
                %v288 = vld [vmem:[%s236 + $0x320] sm:%s229]
                %289 = vst [vmem:[%s237 + $0xc8] sm:%s229] %v288
                %v290 = vld [vmem:[%s236 + $0x340] sm:%s229]
                %291 = vst [vmem:[%s237 + $0xd0] sm:%s229] %v290
                %v292 = vld [vmem:[%s236 + $0x360] sm:%s229]
                %293 = vst [vmem:[%s237 + $0xd8] sm:%s229] %v292
                %v294 = vld [vmem:[%s236 + $0x380] sm:%s229]
                %295 = vst [vmem:[%s237 + $0xe0] sm:%s229] %v294
                %v296 = vld [vmem:[%s236 + $0x3a0] sm:%s229]
                %297 = vst [vmem:[%s237 + $0xe8] sm:%s229] %v296
                %v298 = vld [vmem:[%s236 + $0x3c0] sm:%s229]
                %299 = vst [vmem:[%s237 + $0xf0] sm:%s229] %v298
                %v300 = vld [vmem:[%s236 + $0x3e0] sm:%s229]
                %301 = vst [vmem:[%s237 + $0xf8] sm:%s229] %v300
                %v302 = vld [vmem:[%s236 + $0x400] sm:%s229]
                %303 = vst [vmem:[%s237 + $0x100] sm:%s229] %v302
                %v304 = vld [vmem:[%s236 + $0x420] sm:%s229]
                %305 = vst [vmem:[%s237 + $0x108] sm:%s229] %v304
                %v306 = vld [vmem:[%s236 + $0x440] sm:%s229]
                %307 = vst [vmem:[%s237 + $0x110] sm:%s229] %v306
                %v308 = vld [vmem:[%s236 + $0x460] sm:%s229]
                %309 = vst [vmem:[%s237 + $0x118] sm:%s229] %v308
                %v310 = vld [vmem:[%s236 + $0x480] sm:%s229]
                %311 = vst [vmem:[%s237 + $0x120] sm:%s229] %v310
                %v312 = vld [vmem:[%s236 + $0x4a0] sm:%s229]
                %313 = vst [vmem:[%s237 + $0x128] sm:%s229] %v312
                %v314 = vld [vmem:[%s236 + $0x4c0] sm:%s229]
                %315 = vst [vmem:[%s237 + $0x130] sm:%s229] %v314
                %v316 = vld [vmem:[%s236 + $0x4e0] sm:%s229]
                %317 = vst [vmem:[%s237 + $0x138] sm:%s229] %v316
                %v318 = vld [vmem:[%s236 + $0x500] sm:%s229]
                %319 = vst [vmem:[%s237 + $0x140] sm:%s229] %v318
                %v320 = vld [vmem:[%s236 + $0x520] sm:%s229]
                %321 = vst [vmem:[%s237 + $0x148] sm:%s229] %v320
                %v322 = vld [vmem:[%s236 + $0x540] sm:%s229]
                %323 = vst [vmem:[%s237 + $0x150] sm:%s229] %v322
                %v324 = vld [vmem:[%s236 + $0x560] sm:%s229]
                %325 = vst [vmem:[%s237 + $0x158] sm:%s229] %v324
                %v326 = vld [vmem:[%s236 + $0x580] sm:%s229]
                %327 = vst [vmem:[%s237 + $0x160] sm:%s229] %v326
                %v328 = vld [vmem:[%s236 + $0x5a0] sm:%s229]
                %329 = vst [vmem:[%s237 + $0x168] sm:%s229] %v328
                %v330 = vld [vmem:[%s236 + $0x5c0] sm:%s229]
                %331 = vst [vmem:[%s237 + $0x170] sm:%s229] %v330
                %v332 = vld [vmem:[%s236 + $0x5e0] sm:%s229]
                %333 = vst [vmem:[%s237 + $0x178] sm:%s229] %v332
                %v334 = vld [vmem:[%s236 + $0x600] sm:%s229]
                %335 = vst [vmem:[%s237 + $0x180] sm:%s229] %v334
                %v336 = vld [vmem:[%s236 + $0x620] sm:%s229]
                %337 = vst [vmem:[%s237 + $0x188] sm:%s229] %v336
                %v338 = vld [vmem:[%s236 + $0x640] sm:%s229]
                %339 = vst [vmem:[%s237 + $0x190] sm:%s229] %v338
                %v340 = vld [vmem:[%s236 + $0x660] sm:%s229]
                %341 = vst [vmem:[%s237 + $0x198] sm:%s229] %v340
                %v342 = vld [vmem:[%s236 + $0x680] sm:%s229]
                %343 = vst [vmem:[%s237 + $0x1a0] sm:%s229] %v342
                %v344 = vld [vmem:[%s236 + $0x6a0] sm:%s229]
                %345 = vst [vmem:[%s237 + $0x1a8] sm:%s229] %v344
                %v346 = vld [vmem:[%s236 + $0x6c0] sm:%s229]
                %347 = vst [vmem:[%s237 + $0x1b0] sm:%s229] %v346
                %v348 = vld [vmem:[%s236 + $0x6e0] sm:%s229]
                %349 = vst [vmem:[%s237 + $0x1b8] sm:%s229] %v348
                %v350 = vld [vmem:[%s236 + $0x700] sm:%s229]
                %351 = vst [vmem:[%s237 + $0x1c0] sm:%s229] %v350
                %v352 = vld [vmem:[%s236 + $0x720] sm:%s229]
                %353 = vst [vmem:[%s237 + $0x1c8] sm:%s229] %v352
                %v354 = vld [vmem:[%s236 + $0x740] sm:%s229]
                %355 = vst [vmem:[%s237 + $0x1d0] sm:%s229] %v354
                %v356 = vld [vmem:[%s236 + $0x760] sm:%s229]
                %357 = vst [vmem:[%s237 + $0x1d8] sm:%s229] %v356
                %v358 = vld [vmem:[%s236 + $0x780] sm:%s229]
                %359 = vst [vmem:[%s237 + $0x1e0] sm:%s229] %v358
                %v360 = vld [vmem:[%s236 + $0x7a0] sm:%s229]
                %361 = vst [vmem:[%s237 + $0x1e8] sm:%s229] %v360
                %v362 = vld [vmem:[%s236 + $0x7c0] sm:%s229]
                %363 = vst [vmem:[%s237 + $0x1f0] sm:%s229] %v362
                %v364 = vld [vmem:[%s236 + $0x7e0] sm:%s229]
                %365 = vst [vmem:[%s237 + $0x1f8] sm:%s229] %v364
                %v366 = vld [vmem:[%s236 + $0x800] sm:%s229]
                %367 = vst [vmem:[%s237 + $0x200] sm:%s229] %v366
                %v368 = vld [vmem:[%s236 + $0x820] sm:%s229]
                %369 = vst [vmem:[%s237 + $0x208] sm:%s229] %v368
                %v370 = vld [vmem:[%s236 + $0x840] sm:%s229]
                %371 = vst [vmem:[%s237 + $0x210] sm:%s229] %v370
                %v372 = vld [vmem:[%s236 + $0x860] sm:%s229]
                %373 = vst [vmem:[%s237 + $0x218] sm:%s229] %v372
                %v374 = vld [vmem:[%s236 + $0x880] sm:%s229]
                %375 = vst [vmem:[%s237 + $0x220] sm:%s229] %v374
                %v376 = vld [vmem:[%s236 + $0x8a0] sm:%s229]
                %377 = vst [vmem:[%s237 + $0x228] sm:%s229] %v376
                %v378 = vld [vmem:[%s236 + $0x8c0] sm:%s229]
                %379 = vst [vmem:[%s237 + $0x230] sm:%s229] %v378
                %v380 = vld [vmem:[%s236 + $0x8e0] sm:%s229]
                %381 = vst [vmem:[%s237 + $0x238] sm:%s229] %v380
                %v382 = vld [vmem:[%s236 + $0x900] sm:%s229]
                %383 = vst [vmem:[%s237 + $0x240] sm:%s229] %v382
                %v384 = vld [vmem:[%s236 + $0x920] sm:%s229]
                %385 = vst [vmem:[%s237 + $0x248] sm:%s229] %v384
                %v386 = vld [vmem:[%s236 + $0x940] sm:%s229]
                %387 = vst [vmem:[%s237 + $0x250] sm:%s229] %v386
                %v388 = vld [vmem:[%s236 + $0x960] sm:%s229]
                %389 = vst [vmem:[%s237 + $0x258] sm:%s229] %v388
                %v390 = vld [vmem:[%s236 + $0x980] sm:%s229]
                %391 = vst [vmem:[%s237 + $0x260] sm:%s229] %v390
                %v392 = vld [vmem:[%s236 + $0x9a0] sm:%s229]
                %393 = vst [vmem:[%s237 + $0x268] sm:%s229] %v392
                %v394 = vld [vmem:[%s236 + $0x9c0] sm:%s229]
                %395 = vst [vmem:[%s237 + $0x270] sm:%s229] %v394
                %v396 = vld [vmem:[%s236 + $0x9e0] sm:%s229]
                %397 = vst [vmem:[%s237 + $0x278] sm:%s229] %v396
                %v398 = vld [vmem:[%s236 + $0xa00] sm:%s229]
                %399 = vst [vmem:[%s237 + $0x280] sm:%s229] %v398
                %v400 = vld [vmem:[%s236 + $0xa20] sm:%s229]
                %401 = vst [vmem:[%s237 + $0x288] sm:%s229] %v400
                %v402 = vld [vmem:[%s236 + $0xa40] sm:%s229]
                %403 = vst [vmem:[%s237 + $0x290] sm:%s229] %v402
                %v404 = vld [vmem:[%s236 + $0xa60] sm:%s229]
                %405 = vst [vmem:[%s237 + $0x298] sm:%s229] %v404
                %v406 = vld [vmem:[%s236 + $0xa80] sm:%s229]
                %407 = vst [vmem:[%s237 + $0x2a0] sm:%s229] %v406
                %v408 = vld [vmem:[%s236 + $0xaa0] sm:%s229]
                %409 = vst [vmem:[%s237 + $0x2a8] sm:%s229] %v408
                %v410 = vld [vmem:[%s236 + $0xac0] sm:%s229]
                %411 = vst [vmem:[%s237 + $0x2b0] sm:%s229] %v410
                %v412 = vld [vmem:[%s236 + $0xae0] sm:%s229]
                %413 = vst [vmem:[%s237 + $0x2b8] sm:%s229] %v412
                %v414 = vld [vmem:[%s236 + $0xb00] sm:%s229]
                %415 = vst [vmem:[%s237 + $0x2c0] sm:%s229] %v414
                %v416 = vld [vmem:[%s236 + $0xb20] sm:%s229]
                %417 = vst [vmem:[%s237 + $0x2c8] sm:%s229] %v416
                %v418 = vld [vmem:[%s236 + $0xb40] sm:%s229]
                %419 = vst [vmem:[%s237 + $0x2d0] sm:%s229] %v418
                %v420 = vld [vmem:[%s236 + $0xb60] sm:%s229]
                %421 = vst [vmem:[%s237 + $0x2d8] sm:%s229] %v420
                %v422 = vld [vmem:[%s236 + $0xb80] sm:%s229]
                %423 = vst [vmem:[%s237 + $0x2e0] sm:%s229] %v422
                %v424 = vld [vmem:[%s236 + $0xba0] sm:%s229]
                %425 = vst [vmem:[%s237 + $0x2e8] sm:%s229] %v424
                %v426 = vld [vmem:[%s236 + $0xbc0] sm:%s229]
                %427 = vst [vmem:[%s237 + $0x2f0] sm:%s229] %v426
                %v428 = vld [vmem:[%s236 + $0xbe0] sm:%s229]
                %429 = vst [vmem:[%s237 + $0x2f8] sm:%s229] %v428
                %v430 = vld [vmem:[%s236 + $0xc00] sm:%s229]
                %431 = vst [vmem:[%s237 + $0x300] sm:%s229] %v430
                %v432 = vld [vmem:[%s236 + $0xc20] sm:%s229]
                %433 = vst [vmem:[%s237 + $0x308] sm:%s229] %v432
                %v434 = vld [vmem:[%s236 + $0xc40] sm:%s229]
                %435 = vst [vmem:[%s237 + $0x310] sm:%s229] %v434
                %v436 = vld [vmem:[%s236 + $0xc60] sm:%s229]
                %437 = vst [vmem:[%s237 + $0x318] sm:%s229] %v436
                %v438 = vld [vmem:[%s236 + $0xc80] sm:%s229]
                %439 = vst [vmem:[%s237 + $0x320] sm:%s229] %v438
                %v440 = vld [vmem:[%s236 + $0xca0] sm:%s229]
                %441 = vst [vmem:[%s237 + $0x328] sm:%s229] %v440
                %v442 = vld [vmem:[%s236 + $0xcc0] sm:%s229]
                %443 = vst [vmem:[%s237 + $0x330] sm:%s229] %v442
                %v444 = vld [vmem:[%s236 + $0xce0] sm:%s229]
                %445 = vst [vmem:[%s237 + $0x338] sm:%s229] %v444
                %v446 = vld [vmem:[%s236 + $0xd00] sm:%s229]
                %447 = vst [vmem:[%s237 + $0x340] sm:%s229] %v446
                %v448 = vld [vmem:[%s236 + $0xd20] sm:%s229]
                %449 = vst [vmem:[%s237 + $0x348] sm:%s229] %v448
                %v450 = vld [vmem:[%s236 + $0xd40] sm:%s229]
                %451 = vst [vmem:[%s237 + $0x350] sm:%s229] %v450
                %v452 = vld [vmem:[%s236 + $0xd60] sm:%s229]
                %453 = vst [vmem:[%s237 + $0x358] sm:%s229] %v452
                %v454 = vld [vmem:[%s236 + $0xd80] sm:%s229]
                %455 = vst [vmem:[%s237 + $0x360] sm:%s229] %v454
                %v456 = vld [vmem:[%s236 + $0xda0] sm:%s229]
                %457 = vst [vmem:[%s237 + $0x368] sm:%s229] %v456
                %v458 = vld [vmem:[%s236 + $0xdc0] sm:%s229]
                %459 = vst [vmem:[%s237 + $0x370] sm:%s229] %v458
                %v460 = vld [vmem:[%s236 + $0xde0] sm:%s229]
                %461 = vst [vmem:[%s237 + $0x378] sm:%s229] %v460
                %v462 = vld [vmem:[%s236 + $0xe00] sm:%s229]
                %463 = vst [vmem:[%s237 + $0x380] sm:%s229] %v462
                %v464 = vld [vmem:[%s236 + $0xe20] sm:%s229]
                %465 = vst [vmem:[%s237 + $0x388] sm:%s229] %v464
                %v466 = vld [vmem:[%s236 + $0xe40] sm:%s229]
                %467 = vst [vmem:[%s237 + $0x390] sm:%s229] %v466
                %v468 = vld [vmem:[%s236 + $0xe60] sm:%s229]
                %469 = vst [vmem:[%s237 + $0x398] sm:%s229] %v468
                %v470 = vld [vmem:[%s236 + $0xe80] sm:%s229]
                %471 = vst [vmem:[%s237 + $0x3a0] sm:%s229] %v470
                %v472 = vld [vmem:[%s236 + $0xea0] sm:%s229]
                %473 = vst [vmem:[%s237 + $0x3a8] sm:%s229] %v472
                %v474 = vld [vmem:[%s236 + $0xec0] sm:%s229]
                %475 = vst [vmem:[%s237 + $0x3b0] sm:%s229] %v474
                %v476 = vld [vmem:[%s236 + $0xee0] sm:%s229]
                %477 = vst [vmem:[%s237 + $0x3b8] sm:%s229] %v476
                %v478 = vld [vmem:[%s236 + $0xf00] sm:%s229]
                %479 = vst [vmem:[%s237 + $0x3c0] sm:%s229] %v478
                %v480 = vld [vmem:[%s236 + $0xf20] sm:%s229]
                %481 = vst [vmem:[%s237 + $0x3c8] sm:%s229] %v480
                %v482 = vld [vmem:[%s236 + $0xf40] sm:%s229]
                %483 = vst [vmem:[%s237 + $0x3d0] sm:%s229] %v482
                %v484 = vld [vmem:[%s236 + $0xf60] sm:%s229]
                %485 = vst [vmem:[%s237 + $0x3d8] sm:%s229] %v484
                %v486 = vld [vmem:[%s236 + $0xf80] sm:%s229]
                %487 = vst [vmem:[%s237 + $0x3e0] sm:%s229] %v486
                %v488 = vld [vmem:[%s236 + $0xfa0] sm:%s229]
                %489 = vst [vmem:[%s237 + $0x3e8] sm:%s229] %v488
                %v490 = vld [vmem:[%s236 + $0xfc0] sm:%s229]
                %491 = vst [vmem:[%s237 + $0x3f0] sm:%s229] %v490
                %v492 = vld [vmem:[%s236 + $0xfe0] sm:%s229]
                %493 = vst [vmem:[%s237 + $0x3f8] sm:%s229] %v492
                %v494 = vld [vmem:[%s236 + $0x1000] sm:%s229]
                %495 = vst [vmem:[%s237 + $0x400] sm:%s229] %v494
                %v496 = vld [vmem:[%s236 + $0x1020] sm:%s229]
                %497 = vst [vmem:[%s237 + $0x408] sm:%s229] %v496
                %v498 = vld [vmem:[%s236 + $0x1040] sm:%s229]
                %499 = vst [vmem:[%s237 + $0x410] sm:%s229] %v498
                %v500 = vld [vmem:[%s236 + $0x1060] sm:%s229]
                %501 = vst [vmem:[%s237 + $0x418] sm:%s229] %v500
                %v502 = vld [vmem:[%s236 + $0x1080] sm:%s229]
                %503 = vst [vmem:[%s237 + $0x420] sm:%s229] %v502
                %v504 = vld [vmem:[%s236 + $0x10a0] sm:%s229]
                %505 = vst [vmem:[%s237 + $0x428] sm:%s229] %v504
                %v506 = vld [vmem:[%s236 + $0x10c0] sm:%s229]
                %507 = vst [vmem:[%s237 + $0x430] sm:%s229] %v506
                %v508 = vld [vmem:[%s236 + $0x10e0] sm:%s229]
                %509 = vst [vmem:[%s237 + $0x438] sm:%s229] %v508
                %v510 = vld [vmem:[%s236 + $0x1100] sm:%s229]
                %511 = vst [vmem:[%s237 + $0x440] sm:%s229] %v510
                %v512 = vld [vmem:[%s236 + $0x1120] sm:%s229]
                %513 = vst [vmem:[%s237 + $0x448] sm:%s229] %v512
                %v514 = vld [vmem:[%s236 + $0x1140] sm:%s229]
                %515 = vst [vmem:[%s237 + $0x450] sm:%s229] %v514
                %v516 = vld [vmem:[%s236 + $0x1160] sm:%s229]
                %517 = vst [vmem:[%s237 + $0x458] sm:%s229] %v516
                %v518 = vld [vmem:[%s236 + $0x1180] sm:%s229]
                %519 = vst [vmem:[%s237 + $0x460] sm:%s229] %v518
                %v520 = vld [vmem:[%s236 + $0x11a0] sm:%s229]
                %521 = vst [vmem:[%s237 + $0x468] sm:%s229] %v520
                %v522 = vld [vmem:[%s236 + $0x11c0] sm:%s229]
                %523 = vst [vmem:[%s237 + $0x470] sm:%s229] %v522
                %v524 = vld [vmem:[%s236 + $0x11e0] sm:%s229]
                %525 = vst [vmem:[%s237 + $0x478] sm:%s229] %v524
                %v526 = vld [vmem:[%s236 + $0x1200] sm:%s229]
                %527 = vst [vmem:[%s237 + $0x480] sm:%s229] %v526
                %v528 = vld [vmem:[%s236 + $0x1220] sm:%s229]
                %529 = vst [vmem:[%s237 + $0x488] sm:%s229] %v528
                %v530 = vld [vmem:[%s236 + $0x1240] sm:%s229]
                %531 = vst [vmem:[%s237 + $0x490] sm:%s229] %v530
                %v532 = vld [vmem:[%s236 + $0x1260] sm:%s229]
                %533 = vst [vmem:[%s237 + $0x498] sm:%s229] %v532
                %v534 = vld [vmem:[%s236 + $0x1280] sm:%s229]
                %535 = vst [vmem:[%s237 + $0x4a0] sm:%s229] %v534
                %v536 = vld [vmem:[%s236 + $0x12a0] sm:%s229]
                %537 = vst [vmem:[%s237 + $0x4a8] sm:%s229] %v536
                %v538 = vld [vmem:[%s236 + $0x12c0] sm:%s229]
                %539 = vst [vmem:[%s237 + $0x4b0] sm:%s229] %v538
                %v540 = vld [vmem:[%s236 + $0x12e0] sm:%s229]
                %541 = vst [vmem:[%s237 + $0x4b8] sm:%s229] %v540
                %v542 = vld [vmem:[%s236 + $0x1300] sm:%s229]
                %543 = vst [vmem:[%s237 + $0x4c0] sm:%s229] %v542
                %v544 = vld [vmem:[%s236 + $0x1320] sm:%s229]
                %545 = vst [vmem:[%s237 + $0x4c8] sm:%s229] %v544
                %v546 = vld [vmem:[%s236 + $0x1340] sm:%s229]
                %547 = vst [vmem:[%s237 + $0x4d0] sm:%s229] %v546
                %v548 = vld [vmem:[%s236 + $0x1360] sm:%s229]
                %549 = vst [vmem:[%s237 + $0x4d8] sm:%s229] %v548
                %v550 = vld [vmem:[%s236 + $0x1380] sm:%s229]
                %551 = vst [vmem:[%s237 + $0x4e0] sm:%s229] %v550
                %v552 = vld [vmem:[%s236 + $0x13a0] sm:%s229]
                %553 = vst [vmem:[%s237 + $0x4e8] sm:%s229] %v552
                %v554 = vld [vmem:[%s236 + $0x13c0] sm:%s229]
                %555 = vst [vmem:[%s237 + $0x4f0] sm:%s229] %v554
                %v556 = vld [vmem:[%s236 + $0x13e0] sm:%s229]
                %557 = vst [vmem:[%s237 + $0x4f8] sm:%s229] %v556
                %v558 = vld [vmem:[%s236 + $0x1400] sm:%s229]
                %559 = vst [vmem:[%s237 + $0x500] sm:%s229] %v558
                %v560 = vld [vmem:[%s236 + $0x1420] sm:%s229]
                %561 = vst [vmem:[%s237 + $0x508] sm:%s229] %v560
                %v562 = vld [vmem:[%s236 + $0x1440] sm:%s229]
                %563 = vst [vmem:[%s237 + $0x510] sm:%s229] %v562
                %v564 = vld [vmem:[%s236 + $0x1460] sm:%s229]
                %565 = vst [vmem:[%s237 + $0x518] sm:%s229] %v564
                %v566 = vld [vmem:[%s236 + $0x1480] sm:%s229]
                %567 = vst [vmem:[%s237 + $0x520] sm:%s229] %v566
                %v568 = vld [vmem:[%s236 + $0x14a0] sm:%s229]
                %569 = vst [vmem:[%s237 + $0x528] sm:%s229] %v568
                %v570 = vld [vmem:[%s236 + $0x14c0] sm:%s229]
                %571 = vst [vmem:[%s237 + $0x530] sm:%s229] %v570
                %v572 = vld [vmem:[%s236 + $0x14e0] sm:%s229]
                %573 = vst [vmem:[%s237 + $0x538] sm:%s229] %v572
                %v574 = vld [vmem:[%s236 + $0x1500] sm:%s229]
                %575 = vst [vmem:[%s237 + $0x540] sm:%s229] %v574
                %v576 = vld [vmem:[%s236 + $0x1520] sm:%s229]
                %577 = vst [vmem:[%s237 + $0x548] sm:%s229] %v576
                %v578 = vld [vmem:[%s236 + $0x1540] sm:%s229]
                %579 = vst [vmem:[%s237 + $0x550] sm:%s229] %v578
                %v580 = vld [vmem:[%s236 + $0x1560] sm:%s229]
                %581 = vst [vmem:[%s237 + $0x558] sm:%s229] %v580
                %v582 = vld [vmem:[%s236 + $0x1580] sm:%s229]
                %583 = vst [vmem:[%s237 + $0x560] sm:%s229] %v582
                %v584 = vld [vmem:[%s236 + $0x15a0] sm:%s229]
                %585 = vst [vmem:[%s237 + $0x568] sm:%s229] %v584
                %v586 = vld [vmem:[%s236 + $0x15c0] sm:%s229]
                %587 = vst [vmem:[%s237 + $0x570] sm:%s229] %v586
                %v588 = vld [vmem:[%s236 + $0x15e0] sm:%s229]
                %589 = vst [vmem:[%s237 + $0x578] sm:%s229] %v588
                %v590 = vld [vmem:[%s236 + $0x1600] sm:%s229]
                %591 = vst [vmem:[%s237 + $0x580] sm:%s229] %v590
                %v592 = vld [vmem:[%s236 + $0x1620] sm:%s229]
                %593 = vst [vmem:[%s237 + $0x588] sm:%s229] %v592
                %v594 = vld [vmem:[%s236 + $0x1640] sm:%s229]
                %595 = vst [vmem:[%s237 + $0x590] sm:%s229] %v594
                %v596 = vld [vmem:[%s236 + $0x1660] sm:%s229]
                %597 = vst [vmem:[%s237 + $0x598] sm:%s229] %v596
                %v598 = vld [vmem:[%s236 + $0x1680] sm:%s229]
                %599 = vst [vmem:[%s237 + $0x5a0] sm:%s229] %v598
                %v600 = vld [vmem:[%s236 + $0x16a0] sm:%s229]
                %601 = vst [vmem:[%s237 + $0x5a8] sm:%s229] %v600
                %v602 = vld [vmem:[%s236 + $0x16c0] sm:%s229]
                %603 = vst [vmem:[%s237 + $0x5b0] sm:%s229] %v602
                %v604 = vld [vmem:[%s236 + $0x16e0] sm:%s229]
                %605 = vst [vmem:[%s237 + $0x5b8] sm:%s229] %v604
                %v606 = vld [vmem:[%s236 + $0x1700] sm:%s229]
                %607 = vst [vmem:[%s237 + $0x5c0] sm:%s229] %v606
                %v608 = vld [vmem:[%s236 + $0x1720] sm:%s229]
                %609 = vst [vmem:[%s237 + $0x5c8] sm:%s229] %v608
                %v610 = vld [vmem:[%s236 + $0x1740] sm:%s229]
                %611 = vst [vmem:[%s237 + $0x5d0] sm:%s229] %v610
                %v612 = vld [vmem:[%s236 + $0x1760] sm:%s229]
                %613 = vst [vmem:[%s237 + $0x5d8] sm:%s229] %v612
                %v614 = vld [vmem:[%s236 + $0x1780] sm:%s229]
                %615 = vst [vmem:[%s237 + $0x5e0] sm:%s229] %v614
                %v616 = vld [vmem:[%s236 + $0x17a0] sm:%s229]
                %617 = vst [vmem:[%s237 + $0x5e8] sm:%s229] %v616
                %v618 = vld [vmem:[%s236 + $0x17c0] sm:%s229]
                %619 = vst [vmem:[%s237 + $0x5f0] sm:%s229] %v618
                %v620 = vld [vmem:[%s236 + $0x17e0] sm:%s229]
                %621 = vst [vmem:[%s237 + $0x5f8] sm:%s229] %v620
              $region60: #{flownet_er_forward.15} parent=54 // loop_footer
                %s235 = sadd.s32 1, %s231
              $region61: #{flownet_er_forward.15} parent=54 // loop_footer_branch
                %230 = sbr.rel target = $region57
              $region62: #{flownet_er_forward.15} parent=54 // loop_exit
                _
            $region55: #{flownet_er_forward.15} parent=46 // pred_fallthru
              _
          $region47: #{flownet_er_forward.15} parent=42 // pred_fallthru
            _
          %1018 = vnop
        $region43: #{flownet_er_forward.15} parent=15 // pred_fallthru
          _
        // Predicated region
        $region78: #{flownet_er_forward.15} parent=15 // pred_check
          %p1019 = pneg %p104
        $region79: #{flownet_er_forward.15} parent=15 // pred_check_branch
          %1021 = sbr.rel (%p1019) target = $region81
        $region80: #{flownet_er_forward.15} parent=15 // pred_region
          %s1022 = smul.u32 2, %s17
          %p1023 = scmp.lt.s32.totalorder %s1022, 7
          %s1024 = scalar_select %p1023, %s1022, 7
          %s1025 = scalar_lea.vmem %s2, %s1024
          %s1026 = smul.u32 2, %s17
        $region81: #{flownet_er_forward.15} parent=15 // pred_fallthru
          _
      $region16: #{flownet_er_forward.15} parent=5 // pred_fallthru
        _
      %p1027 = scmp.le.s32.totalorder 1, %s9
      %p1028 = scmp.lt.s32.totalorder %s9, 13
      %p1029 = pnand %p1027, %p1028
      %p1030 = pneg %p1029
      // Predicated region
      $region82: #{flownet_er_forward.15} parent=5 // pred_check
        _
      $region83: #{flownet_er_forward.15} parent=5 // pred_check_branch
        %1032 = sbr.rel (%p1029) target = $region85
      $region84: #{flownet_er_forward.15} parent=5 // pred_region
        %s1033 = ssub.s32 %s9, 1
        %s1034 = sand.u32 %s43, 1
        %s1035 = sand.u32 %s43, 1
        %s1036 = smul.addr %s1035, 96
        %s1037 = scalar_lea.vmem [#allocation3], %s1036
        // Predicated region
        $region86: #{flownet_er_forward.15} parent=84 // pred_check
          %p1038 = pneg %p56
        $region87: #{flownet_er_forward.15} parent=84 // pred_check_branch
          %1040 = sbr.rel (%p1038) target = $region89
        $region88: #{flownet_er_forward.15} parent=84 // pred_region
          _
        $region89: #{flownet_er_forward.15} parent=84 // pred_fallthru
          _
        %s1041 = sand.u32 %s71, 1
        %s1042 = sand.u32 %s71, 1
        %s1043 = smul.addr %s1042, 1536
        %s1044 = scalar_lea.vmem [#allocation4], %s1043
        // Predicated region
        $region90: #{flownet_er_forward.15} parent=84 // pred_check
          %p1045 = pneg %p84
        $region91: #{flownet_er_forward.15} parent=84 // pred_check_branch
          %1047 = sbr.rel (%p1045) target = $region93
        $region92: #{flownet_er_forward.15} parent=84 // pred_region
          _
        $region93: #{flownet_er_forward.15} parent=84 // pred_fallthru
          _
        %s1048 = sand.u32 %s43, 1
        %s1049 = sand.u32 %s43, 1
        %s1050 = smul.addr %s1049, 96
        %s1051 = scalar_lea.vmem [#allocation3], %s1050
        %p1052 = pneg %p56
        %p1053 = pneg %p53
        %s1054 = sand.u32 %s71, 1
        %s1055 = sand.u32 %s71, 1
        %s1056 = smul.addr %s1055, 1536
        %s1057 = scalar_lea.vmem [#allocation4], %s1056
        %p1058 = pneg %p84
        %p1059 = pneg %p81
        %s1060 = smul.u32 2, %s20
        %p1061 = scmp.lt.s32.totalorder %s1060, 7
        %s1062 = scalar_select %p1061, %s1060, 7
        %s1063 = scalar_lea.vmem %s2, %s1062
        %p1064 = pneg %p110
        %p1065 = pneg %p107
        %p1066 = pneg %p138
        %p1067 = pneg %p135
        %s1068 = sand.u32 %s125, 1
        %s1069 = sand.u32 %s125, 1
        %s1070 = smul.addr %s1069, 16
        %s1071 = scalar_lea.vmem [#allocation5], %s1070
        %s1072 = smul.u32 2, %s19
        %s1073 = smul.u32 12, %s21
        %s1074 = smul.u32 192, %s21
        %s1075 = smul.u32 2, %s20
        %s1076 = smul.u32 2, %s20
        %p1077 = scmp.lt.s32.totalorder %s1076, 7
        %s1078 = scalar_select %p1077, %s1076, 7
        %s1079 = scalar_lea.vmem %s2, %s1078
        %s1080 = smul.u32 2, %s20
        %s1081 = smul.u32 2, %s19
        %s1082 = smul.u32 2, %s20
        %p1083 = scmp.eq.s32.totalorder %s21, 0
        // Predicated region
        $region94: #{flownet_er_forward.15} parent=84 // pred_check
          %p1084 = pneg %p1083
        $region95: #{flownet_er_forward.15} parent=84 // pred_check_branch
          %1086 = sbr.rel (%p1084) target = $region97
        $region96: #{flownet_er_forward.15} parent=84 // pred_region
          %1087 = vst [vmem:[#allocation2] sm:$0xff] 0.0
          %1088 = vst [vmem:[#allocation2 + $0x8] sm:$0xff] 0.0
          %1089 = vst [vmem:[#allocation2 + $0x10] sm:$0xff] 0.0
          %1090 = vst [vmem:[#allocation2 + $0x18] sm:$0xff] 0.0
        $region97: #{flownet_er_forward.15} parent=84 // pred_fallthru
          _
        %v1091 = vld [vmem:[#allocation2] sm:$0xff]
        %v1092 = vld [vmem:[#allocation2 + $0x8] sm:$0xff]
        %v1093 = vld [vmem:[#allocation2 + $0x10] sm:$0xff]
        %v1094 = vld [vmem:[#allocation2 + $0x18] sm:$0xff]
        %v1095 = vld [vmem:[%s1037] sm:$0xff]
        %v1096 = vld [vmem:[%s1037 + $0x8] sm:$0xff]
        %v1097 = vld [vmem:[%s1037 + $0x10] sm:$0xff]
        %v1098 = vld [vmem:[%s1037 + $0x18] sm:$0xff]
        %v1099 = vld [vmem:[%s1037 + $0x20] sm:$0xff]
        %v1100 = vld [vmem:[%s1037 + $0x28] sm:$0xff]
        %v1101 = vld [vmem:[%s1037 + $0x30] sm:$0xff]
        %v1102 = vld [vmem:[%s1037 + $0x38] sm:$0xff]
        %v1103 = vld [vmem:[%s1037 + $0x40] sm:$0xff]
        %v1104 = vld [vmem:[%s1037 + $0x48] sm:$0xff]
        %v1105 = vld [vmem:[%s1037 + $0x50] sm:$0xff]
        %v1106 = vld [vmem:[%s1037 + $0x58] sm:$0xff]
        %v1107 = vld [vmem:[%s1044] sm:$0xff]
        %v1108 = vld [vmem:[%s1044 + $0x8] sm:$0xff]
        %v1109 = vld [vmem:[%s1044 + $0x10] sm:$0xff]
        %v1110 = vld [vmem:[%s1044 + $0x18] sm:$0xff]
        %v1111 = vld [vmem:[%s1044 + $0x20] sm:$0xff]
        %v1112 = vld [vmem:[%s1044 + $0x28] sm:$0xff]
        %v1113 = vld [vmem:[%s1044 + $0x30] sm:$0xff]
        %v1114 = vld [vmem:[%s1044 + $0x38] sm:$0xff]
        %v1115 = vld [vmem:[%s1044 + $0x40] sm:$0xff]
        %v1116 = vld [vmem:[%s1044 + $0x48] sm:$0xff]
        %v1117 = vld [vmem:[%s1044 + $0x50] sm:$0xff]
        %v1118 = vld [vmem:[%s1044 + $0x58] sm:$0xff]
        %v1119 = vld [vmem:[%s1044 + $0x60] sm:$0xff]
        %v1120 = vld [vmem:[%s1044 + $0x68] sm:$0xff]
        %v1121 = vld [vmem:[%s1044 + $0x70] sm:$0xff]
        %v1122 = vld [vmem:[%s1044 + $0x78] sm:$0xff]
        %v1123 = vld [vmem:[%s1044 + $0x80] sm:$0xff]
        %v1124 = vld [vmem:[%s1044 + $0x88] sm:$0xff]
        %v1125 = vld [vmem:[%s1044 + $0x90] sm:$0xff]
        %v1126 = vld [vmem:[%s1044 + $0x98] sm:$0xff]
        %v1127 = vld [vmem:[%s1044 + $0xa0] sm:$0xff]
        %v1128 = vld [vmem:[%s1044 + $0xa8] sm:$0xff]
        %v1129 = vld [vmem:[%s1044 + $0xb0] sm:$0xff]
        %v1130 = vld [vmem:[%s1044 + $0xb8] sm:$0xff]
        %v1131 = vld [vmem:[%s1044 + $0xc0] sm:$0xff]
        %v1132 = vld [vmem:[%s1044 + $0xc8] sm:$0xff]
        %v1133 = vld [vmem:[%s1044 + $0xd0] sm:$0xff]
        %v1134 = vld [vmem:[%s1044 + $0xd8] sm:$0xff]
        %v1135 = vld [vmem:[%s1044 + $0xe0] sm:$0xff]
        %v1136 = vld [vmem:[%s1044 + $0xe8] sm:$0xff]
        %v1137 = vld [vmem:[%s1044 + $0xf0] sm:$0xff]
        %v1138 = vld [vmem:[%s1044 + $0xf8] sm:$0xff]
        %v1139 = vld [vmem:[%s1044 + $0x100] sm:$0xff]
        %v1140 = vld [vmem:[%s1044 + $0x108] sm:$0xff]
        %v1141 = vld [vmem:[%s1044 + $0x110] sm:$0xff]
        %v1142 = vld [vmem:[%s1044 + $0x118] sm:$0xff]
        %v1143 = vld [vmem:[%s1044 + $0x120] sm:$0xff]
        %v1144 = vld [vmem:[%s1044 + $0x128] sm:$0xff]
        %v1145 = vld [vmem:[%s1044 + $0x130] sm:$0xff]
        %v1146 = vld [vmem:[%s1044 + $0x138] sm:$0xff]
        %v1147 = vld [vmem:[%s1044 + $0x140] sm:$0xff]
        %v1148 = vld [vmem:[%s1044 + $0x148] sm:$0xff]
        %v1149 = vld [vmem:[%s1044 + $0x150] sm:$0xff]
        %v1150 = vld [vmem:[%s1044 + $0x158] sm:$0xff]
        %v1151 = vld [vmem:[%s1044 + $0x160] sm:$0xff]
        %v1152 = vld [vmem:[%s1044 + $0x168] sm:$0xff]
        %v1153 = vld [vmem:[%s1044 + $0x170] sm:$0xff]
        %v1154 = vld [vmem:[%s1044 + $0x178] sm:$0xff]
        %v1155 = vld [vmem:[%s1044 + $0x180] sm:$0xff]
        %v1156 = vld [vmem:[%s1044 + $0x188] sm:$0xff]
        %v1157 = vld [vmem:[%s1044 + $0x190] sm:$0xff]
        %v1158 = vld [vmem:[%s1044 + $0x198] sm:$0xff]
        %v1159 = vld [vmem:[%s1044 + $0x1a0] sm:$0xff]
        %v1160 = vld [vmem:[%s1044 + $0x1a8] sm:$0xff]
        %v1161 = vld [vmem:[%s1044 + $0x1b0] sm:$0xff]
        %v1162 = vld [vmem:[%s1044 + $0x1b8] sm:$0xff]
        %v1163 = vld [vmem:[%s1044 + $0x1c0] sm:$0xff]
        %v1164 = vld [vmem:[%s1044 + $0x1c8] sm:$0xff]
        %v1165 = vld [vmem:[%s1044 + $0x1d0] sm:$0xff]
        %v1166 = vld [vmem:[%s1044 + $0x1d8] sm:$0xff]
        %v1167 = vld [vmem:[%s1044 + $0x1e0] sm:$0xff]
        %v1168 = vld [vmem:[%s1044 + $0x1e8] sm:$0xff]
        %v1169 = vld [vmem:[%s1044 + $0x1f0] sm:$0xff]
        %v1170 = vld [vmem:[%s1044 + $0x1f8] sm:$0xff]
        %v1171 = vld [vmem:[%s1044 + $0x200] sm:$0xff]
        %v1172 = vld [vmem:[%s1044 + $0x208] sm:$0xff]
        %v1173 = vld [vmem:[%s1044 + $0x210] sm:$0xff]
        %v1174 = vld [vmem:[%s1044 + $0x218] sm:$0xff]
        %v1175 = vld [vmem:[%s1044 + $0x220] sm:$0xff]
        %v1176 = vld [vmem:[%s1044 + $0x228] sm:$0xff]
        %v1177 = vld [vmem:[%s1044 + $0x230] sm:$0xff]
        %v1178 = vld [vmem:[%s1044 + $0x238] sm:$0xff]
        %v1179 = vld [vmem:[%s1044 + $0x240] sm:$0xff]
        %v1180 = vld [vmem:[%s1044 + $0x248] sm:$0xff]
        %v1181 = vld [vmem:[%s1044 + $0x250] sm:$0xff]
        %v1182 = vld [vmem:[%s1044 + $0x258] sm:$0xff]
        %v1183 = vld [vmem:[%s1044 + $0x260] sm:$0xff]
        %v1184 = vld [vmem:[%s1044 + $0x268] sm:$0xff]
        %v1185 = vld [vmem:[%s1044 + $0x270] sm:$0xff]
        %v1186 = vld [vmem:[%s1044 + $0x278] sm:$0xff]
        %v1187 = vld [vmem:[%s1044 + $0x280] sm:$0xff]
        %v1188 = vld [vmem:[%s1044 + $0x288] sm:$0xff]
        %v1189 = vld [vmem:[%s1044 + $0x290] sm:$0xff]
        %v1190 = vld [vmem:[%s1044 + $0x298] sm:$0xff]
        %v1191 = vld [vmem:[%s1044 + $0x2a0] sm:$0xff]
        %v1192 = vld [vmem:[%s1044 + $0x2a8] sm:$0xff]
        %v1193 = vld [vmem:[%s1044 + $0x2b0] sm:$0xff]
        %v1194 = vld [vmem:[%s1044 + $0x2b8] sm:$0xff]
        %v1195 = vld [vmem:[%s1044 + $0x2c0] sm:$0xff]
        %v1196 = vld [vmem:[%s1044 + $0x2c8] sm:$0xff]
        %v1197 = vld [vmem:[%s1044 + $0x2d0] sm:$0xff]
        %v1198 = vld [vmem:[%s1044 + $0x2d8] sm:$0xff]
        %v1199 = vld [vmem:[%s1044 + $0x2e0] sm:$0xff]
        %v1200 = vld [vmem:[%s1044 + $0x2e8] sm:$0xff]
        %v1201 = vld [vmem:[%s1044 + $0x2f0] sm:$0xff]
        %v1202 = vld [vmem:[%s1044 + $0x2f8] sm:$0xff]
        %v1203 = vld [vmem:[%s1044 + $0x300] sm:$0xff]
        %v1204 = vld [vmem:[%s1044 + $0x308] sm:$0xff]
        %v1205 = vld [vmem:[%s1044 + $0x310] sm:$0xff]
        %v1206 = vld [vmem:[%s1044 + $0x318] sm:$0xff]
        %v1207 = vld [vmem:[%s1044 + $0x320] sm:$0xff]
        %v1208 = vld [vmem:[%s1044 + $0x328] sm:$0xff]
        %v1209 = vld [vmem:[%s1044 + $0x330] sm:$0xff]
        %v1210 = vld [vmem:[%s1044 + $0x338] sm:$0xff]
        %v1211 = vld [vmem:[%s1044 + $0x340] sm:$0xff]
        %v1212 = vld [vmem:[%s1044 + $0x348] sm:$0xff]
        %v1213 = vld [vmem:[%s1044 + $0x350] sm:$0xff]
        %v1214 = vld [vmem:[%s1044 + $0x358] sm:$0xff]
        %v1215 = vld [vmem:[%s1044 + $0x360] sm:$0xff]
        %v1216 = vld [vmem:[%s1044 + $0x368] sm:$0xff]
        %v1217 = vld [vmem:[%s1044 + $0x370] sm:$0xff]
        %v1218 = vld [vmem:[%s1044 + $0x378] sm:$0xff]
        %v1219 = vld [vmem:[%s1044 + $0x380] sm:$0xff]
        %v1220 = vld [vmem:[%s1044 + $0x388] sm:$0xff]
        %v1221 = vld [vmem:[%s1044 + $0x390] sm:$0xff]
        %v1222 = vld [vmem:[%s1044 + $0x398] sm:$0xff]
        %v1223 = vld [vmem:[%s1044 + $0x3a0] sm:$0xff]
        %v1224 = vld [vmem:[%s1044 + $0x3a8] sm:$0xff]
        %v1225 = vld [vmem:[%s1044 + $0x3b0] sm:$0xff]
        %v1226 = vld [vmem:[%s1044 + $0x3b8] sm:$0xff]
        %v1227 = vld [vmem:[%s1044 + $0x3c0] sm:$0xff]
        %v1228 = vld [vmem:[%s1044 + $0x3c8] sm:$0xff]
        %v1229 = vld [vmem:[%s1044 + $0x3d0] sm:$0xff]
        %v1230 = vld [vmem:[%s1044 + $0x3d8] sm:$0xff]
        %v1231 = vld [vmem:[%s1044 + $0x3e0] sm:$0xff]
        %v1232 = vld [vmem:[%s1044 + $0x3e8] sm:$0xff]
        %v1233 = vld [vmem:[%s1044 + $0x3f0] sm:$0xff]
        %v1234 = vld [vmem:[%s1044 + $0x3f8] sm:$0xff]
        %v1235 = vld [vmem:[%s1044 + $0x400] sm:$0xff]
        %v1236 = vld [vmem:[%s1044 + $0x408] sm:$0xff]
        %v1237 = vld [vmem:[%s1044 + $0x410] sm:$0xff]
        %v1238 = vld [vmem:[%s1044 + $0x418] sm:$0xff]
        %v1239 = vld [vmem:[%s1044 + $0x420] sm:$0xff]
        %v1240 = vld [vmem:[%s1044 + $0x428] sm:$0xff]
        %v1241 = vld [vmem:[%s1044 + $0x430] sm:$0xff]
        %v1242 = vld [vmem:[%s1044 + $0x438] sm:$0xff]
        %v1243 = vld [vmem:[%s1044 + $0x440] sm:$0xff]
        %v1244 = vld [vmem:[%s1044 + $0x448] sm:$0xff]
        %v1245 = vld [vmem:[%s1044 + $0x450] sm:$0xff]
        %v1246 = vld [vmem:[%s1044 + $0x458] sm:$0xff]
        %v1247 = vld [vmem:[%s1044 + $0x460] sm:$0xff]
        %v1248 = vld [vmem:[%s1044 + $0x468] sm:$0xff]
        %v1249 = vld [vmem:[%s1044 + $0x470] sm:$0xff]
        %v1250 = vld [vmem:[%s1044 + $0x478] sm:$0xff]
        %v1251 = vld [vmem:[%s1044 + $0x480] sm:$0xff]
        %v1252 = vld [vmem:[%s1044 + $0x488] sm:$0xff]
        %v1253 = vld [vmem:[%s1044 + $0x490] sm:$0xff]
        %v1254 = vld [vmem:[%s1044 + $0x498] sm:$0xff]
        %v1255 = vld [vmem:[%s1044 + $0x4a0] sm:$0xff]
        %v1256 = vld [vmem:[%s1044 + $0x4a8] sm:$0xff]
        %v1257 = vld [vmem:[%s1044 + $0x4b0] sm:$0xff]
        %v1258 = vld [vmem:[%s1044 + $0x4b8] sm:$0xff]
        %v1259 = vld [vmem:[%s1044 + $0x4c0] sm:$0xff]
        %v1260 = vld [vmem:[%s1044 + $0x4c8] sm:$0xff]
        %v1261 = vld [vmem:[%s1044 + $0x4d0] sm:$0xff]
        %v1262 = vld [vmem:[%s1044 + $0x4d8] sm:$0xff]
        %v1263 = vld [vmem:[%s1044 + $0x4e0] sm:$0xff]
        %v1264 = vld [vmem:[%s1044 + $0x4e8] sm:$0xff]
        %v1265 = vld [vmem:[%s1044 + $0x4f0] sm:$0xff]
        %v1266 = vld [vmem:[%s1044 + $0x4f8] sm:$0xff]
        %v1267 = vld [vmem:[%s1044 + $0x500] sm:$0xff]
        %v1268 = vld [vmem:[%s1044 + $0x508] sm:$0xff]
        %v1269 = vld [vmem:[%s1044 + $0x510] sm:$0xff]
        %v1270 = vld [vmem:[%s1044 + $0x518] sm:$0xff]
        %v1271 = vld [vmem:[%s1044 + $0x520] sm:$0xff]
        %v1272 = vld [vmem:[%s1044 + $0x528] sm:$0xff]
        %v1273 = vld [vmem:[%s1044 + $0x530] sm:$0xff]
        %v1274 = vld [vmem:[%s1044 + $0x538] sm:$0xff]
        %v1275 = vld [vmem:[%s1044 + $0x540] sm:$0xff]
        %v1276 = vld [vmem:[%s1044 + $0x548] sm:$0xff]
        %v1277 = vld [vmem:[%s1044 + $0x550] sm:$0xff]
        %v1278 = vld [vmem:[%s1044 + $0x558] sm:$0xff]
        %v1279 = vld [vmem:[%s1044 + $0x560] sm:$0xff]
        %v1280 = vld [vmem:[%s1044 + $0x568] sm:$0xff]
        %v1281 = vld [vmem:[%s1044 + $0x570] sm:$0xff]
        %v1282 = vld [vmem:[%s1044 + $0x578] sm:$0xff]
        %v1283 = vld [vmem:[%s1044 + $0x580] sm:$0xff]
        %v1284 = vld [vmem:[%s1044 + $0x588] sm:$0xff]
        %v1285 = vld [vmem:[%s1044 + $0x590] sm:$0xff]
        %v1286 = vld [vmem:[%s1044 + $0x598] sm:$0xff]
        %v1287 = vld [vmem:[%s1044 + $0x5a0] sm:$0xff]
        %v1288 = vld [vmem:[%s1044 + $0x5a8] sm:$0xff]
        %v1289 = vld [vmem:[%s1044 + $0x5b0] sm:$0xff]
        %v1290 = vld [vmem:[%s1044 + $0x5b8] sm:$0xff]
        %v1291 = vld [vmem:[%s1044 + $0x5c0] sm:$0xff]
        %v1292 = vld [vmem:[%s1044 + $0x5c8] sm:$0xff]
        %v1293 = vld [vmem:[%s1044 + $0x5d0] sm:$0xff]
        %v1294 = vld [vmem:[%s1044 + $0x5d8] sm:$0xff]
        %v1295 = vld [vmem:[%s1044 + $0x5e0] sm:$0xff]
        %v1296 = vld [vmem:[%s1044 + $0x5e8] sm:$0xff]
        %v1297 = vld [vmem:[%s1044 + $0x5f0] sm:$0xff]
        %v1298 = vld [vmem:[%s1044 + $0x5f8] sm:$0xff]
        %v1311 = vunpack.c.l.b16 %v1095
        %v1312 = vunpack.c.h.b16 %v1095
        %v1313 = vunpack.c.l.b16 %v1096
        %v1314 = vunpack.c.h.b16 %v1096
        %v1315 = vunpack.c.l.b16 %v1097
        %v1316 = vunpack.c.h.b16 %v1097
        %v1317 = vunpack.c.l.b16 %v1098
        %v1318 = vunpack.c.h.b16 %v1098
        %v1319 = vunpack.c.l.b16 %v1099
        %v1320 = vunpack.c.h.b16 %v1099
        %v1321 = vunpack.c.l.b16 %v1100
        %v1322 = vunpack.c.h.b16 %v1100
        %v1323 = vunpack.c.l.b16 %v1101
        %v1324 = vunpack.c.h.b16 %v1101
        %v1325 = vunpack.c.l.b16 %v1102
        %v1326 = vunpack.c.h.b16 %v1102
        %v1327 = vunpack.c.l.b16 %v1103
        %v1328 = vunpack.c.h.b16 %v1103
        %v1329 = vunpack.c.l.b16 %v1104
        %v1330 = vunpack.c.h.b16 %v1104
        %v1331 = vunpack.c.l.b16 %v1105
        %v1332 = vunpack.c.h.b16 %v1105
        %v1333 = vunpack.c.l.b16 %v1106
        %v1334 = vunpack.c.h.b16 %v1106
        %v1335 = vpack.c.b16 %v1323, %v1311
        %v1336 = vpack.c.b16 %v1324, %v1312
        %v1337 = vpack.c.b16 %v1325, %v1313
        %v1338 = vpack.c.b16 %v1326, %v1314
        %v1339 = vpack.c.b16 %v1327, %v1315
        %v1340 = vpack.c.b16 %v1328, %v1316
        %v1341 = vpack.c.b16 %v1329, %v1317
        %v1342 = vpack.c.b16 %v1330, %v1318
        %v1343 = vpack.c.b16 %v1331, %v1319
        %v1344 = vpack.c.b16 %v1332, %v1320
        %v1345 = vpack.c.b16 %v1333, %v1321
        %v1346 = vpack.c.b16 %v1334, %v1322
        %v1551 = vunpack.c.l.b16 %v1107
        %v1552 = vunpack.c.h.b16 %v1107
        %v1553 = vunpack.c.l.b16 %v1108
        %v1554 = vunpack.c.h.b16 %v1108
        %v1555 = vunpack.c.l.b16 %v1109
        %v1556 = vunpack.c.h.b16 %v1109
        %v1557 = vunpack.c.l.b16 %v1110
        %v1558 = vunpack.c.h.b16 %v1110
        %v1559 = vunpack.c.l.b16 %v1111
        %v1560 = vunpack.c.h.b16 %v1111
        %v1561 = vunpack.c.l.b16 %v1112
        %v1562 = vunpack.c.h.b16 %v1112
        %v1563 = vunpack.c.l.b16 %v1113
        %v1564 = vunpack.c.h.b16 %v1113
        %v1565 = vunpack.c.l.b16 %v1114
        %v1566 = vunpack.c.h.b16 %v1114
        %v1567 = vunpack.c.l.b16 %v1115
        %v1568 = vunpack.c.h.b16 %v1115
        %v1569 = vunpack.c.l.b16 %v1116
        %v1570 = vunpack.c.h.b16 %v1116
        %v1571 = vunpack.c.l.b16 %v1117
        %v1572 = vunpack.c.h.b16 %v1117
        %v1573 = vunpack.c.l.b16 %v1118
        %v1574 = vunpack.c.h.b16 %v1118
        %v1575 = vunpack.c.l.b16 %v1119
        %v1576 = vunpack.c.h.b16 %v1119
        %v1577 = vunpack.c.l.b16 %v1120
        %v1578 = vunpack.c.h.b16 %v1120
        %v1579 = vunpack.c.l.b16 %v1121
        %v1580 = vunpack.c.h.b16 %v1121
        %v1581 = vunpack.c.l.b16 %v1122
        %v1582 = vunpack.c.h.b16 %v1122
        %v1583 = vunpack.c.l.b16 %v1123
        %v1584 = vunpack.c.h.b16 %v1123
        %v1585 = vunpack.c.l.b16 %v1124
        %v1586 = vunpack.c.h.b16 %v1124
        %v1587 = vunpack.c.l.b16 %v1125
        %v1588 = vunpack.c.h.b16 %v1125
        %v1589 = vunpack.c.l.b16 %v1126
        %v1590 = vunpack.c.h.b16 %v1126
        %v1591 = vunpack.c.l.b16 %v1127
        %v1592 = vunpack.c.h.b16 %v1127
        %v1593 = vunpack.c.l.b16 %v1128
        %v1594 = vunpack.c.h.b16 %v1128
        %v1595 = vunpack.c.l.b16 %v1129
        %v1596 = vunpack.c.h.b16 %v1129
        %v1597 = vunpack.c.l.b16 %v1130
        %v1598 = vunpack.c.h.b16 %v1130
        %v1599 = vunpack.c.l.b16 %v1131
        %v1600 = vunpack.c.h.b16 %v1131
        %v1601 = vunpack.c.l.b16 %v1132
        %v1602 = vunpack.c.h.b16 %v1132
        %v1603 = vunpack.c.l.b16 %v1133
        %v1604 = vunpack.c.h.b16 %v1133
        %v1605 = vunpack.c.l.b16 %v1134
        %v1606 = vunpack.c.h.b16 %v1134
        %v1607 = vunpack.c.l.b16 %v1135
        %v1608 = vunpack.c.h.b16 %v1135
        %v1609 = vunpack.c.l.b16 %v1136
        %v1610 = vunpack.c.h.b16 %v1136
        %v1611 = vunpack.c.l.b16 %v1137
        %v1612 = vunpack.c.h.b16 %v1137
        %v1613 = vunpack.c.l.b16 %v1138
        %v1614 = vunpack.c.h.b16 %v1138
        %v1615 = vunpack.c.l.b16 %v1139
        %v1616 = vunpack.c.h.b16 %v1139
        %v1617 = vunpack.c.l.b16 %v1140
        %v1618 = vunpack.c.h.b16 %v1140
        %v1619 = vunpack.c.l.b16 %v1141
        %v1620 = vunpack.c.h.b16 %v1141
        %v1621 = vunpack.c.l.b16 %v1142
        %v1622 = vunpack.c.h.b16 %v1142
        %v1623 = vunpack.c.l.b16 %v1143
        %v1624 = vunpack.c.h.b16 %v1143
        %v1625 = vunpack.c.l.b16 %v1144
        %v1626 = vunpack.c.h.b16 %v1144
        %v1627 = vunpack.c.l.b16 %v1145
        %v1628 = vunpack.c.h.b16 %v1145
        %v1629 = vunpack.c.l.b16 %v1146
        %v1630 = vunpack.c.h.b16 %v1146
        %v1631 = vunpack.c.l.b16 %v1147
        %v1632 = vunpack.c.h.b16 %v1147
        %v1633 = vunpack.c.l.b16 %v1148
        %v1634 = vunpack.c.h.b16 %v1148
        %v1635 = vunpack.c.l.b16 %v1149
        %v1636 = vunpack.c.h.b16 %v1149
        %v1637 = vunpack.c.l.b16 %v1150
        %v1638 = vunpack.c.h.b16 %v1150
        %v1639 = vunpack.c.l.b16 %v1151
        %v1640 = vunpack.c.h.b16 %v1151
        %v1641 = vunpack.c.l.b16 %v1152
        %v1642 = vunpack.c.h.b16 %v1152
        %v1643 = vunpack.c.l.b16 %v1153
        %v1644 = vunpack.c.h.b16 %v1153
        %v1645 = vunpack.c.l.b16 %v1154
        %v1646 = vunpack.c.h.b16 %v1154
        %v1647 = vunpack.c.l.b16 %v1155
        %v1648 = vunpack.c.h.b16 %v1155
        %v1649 = vunpack.c.l.b16 %v1156
        %v1650 = vunpack.c.h.b16 %v1156
        %v1651 = vunpack.c.l.b16 %v1157
        %v1652 = vunpack.c.h.b16 %v1157
        %v1653 = vunpack.c.l.b16 %v1158
        %v1654 = vunpack.c.h.b16 %v1158
        %v1655 = vunpack.c.l.b16 %v1159
        %v1656 = vunpack.c.h.b16 %v1159
        %v1657 = vunpack.c.l.b16 %v1160
        %v1658 = vunpack.c.h.b16 %v1160
        %v1659 = vunpack.c.l.b16 %v1161
        %v1660 = vunpack.c.h.b16 %v1161
        %v1661 = vunpack.c.l.b16 %v1162
        %v1662 = vunpack.c.h.b16 %v1162
        %v1663 = vunpack.c.l.b16 %v1163
        %v1664 = vunpack.c.h.b16 %v1163
        %v1665 = vunpack.c.l.b16 %v1164
        %v1666 = vunpack.c.h.b16 %v1164
        %v1667 = vunpack.c.l.b16 %v1165
        %v1668 = vunpack.c.h.b16 %v1165
        %v1669 = vunpack.c.l.b16 %v1166
        %v1670 = vunpack.c.h.b16 %v1166
        %v1671 = vunpack.c.l.b16 %v1167
        %v1672 = vunpack.c.h.b16 %v1167
        %v1673 = vunpack.c.l.b16 %v1168
        %v1674 = vunpack.c.h.b16 %v1168
        %v1675 = vunpack.c.l.b16 %v1169
        %v1676 = vunpack.c.h.b16 %v1169
        %v1677 = vunpack.c.l.b16 %v1170
        %v1678 = vunpack.c.h.b16 %v1170
        %v1679 = vunpack.c.l.b16 %v1171
        %v1680 = vunpack.c.h.b16 %v1171
        %v1681 = vunpack.c.l.b16 %v1172
        %v1682 = vunpack.c.h.b16 %v1172
        %v1683 = vunpack.c.l.b16 %v1173
        %v1684 = vunpack.c.h.b16 %v1173
        %v1685 = vunpack.c.l.b16 %v1174
        %v1686 = vunpack.c.h.b16 %v1174
        %v1687 = vunpack.c.l.b16 %v1175
        %v1688 = vunpack.c.h.b16 %v1175
        %v1689 = vunpack.c.l.b16 %v1176
        %v1690 = vunpack.c.h.b16 %v1176
        %v1691 = vunpack.c.l.b16 %v1177
        %v1692 = vunpack.c.h.b16 %v1177
        %v1693 = vunpack.c.l.b16 %v1178
        %v1694 = vunpack.c.h.b16 %v1178
        %v1695 = vunpack.c.l.b16 %v1179
        %v1696 = vunpack.c.h.b16 %v1179
        %v1697 = vunpack.c.l.b16 %v1180
        %v1698 = vunpack.c.h.b16 %v1180
        %v1699 = vunpack.c.l.b16 %v1181
        %v1700 = vunpack.c.h.b16 %v1181
        %v1701 = vunpack.c.l.b16 %v1182
        %v1702 = vunpack.c.h.b16 %v1182
        %v1703 = vunpack.c.l.b16 %v1183
        %v1704 = vunpack.c.h.b16 %v1183
        %v1705 = vunpack.c.l.b16 %v1184
        %v1706 = vunpack.c.h.b16 %v1184
        %v1707 = vunpack.c.l.b16 %v1185
        %v1708 = vunpack.c.h.b16 %v1185
        %v1709 = vunpack.c.l.b16 %v1186
        %v1710 = vunpack.c.h.b16 %v1186
        %v1711 = vunpack.c.l.b16 %v1187
        %v1712 = vunpack.c.h.b16 %v1187
        %v1713 = vunpack.c.l.b16 %v1188
        %v1714 = vunpack.c.h.b16 %v1188
        %v1715 = vunpack.c.l.b16 %v1189
        %v1716 = vunpack.c.h.b16 %v1189
        %v1717 = vunpack.c.l.b16 %v1190
        %v1718 = vunpack.c.h.b16 %v1190
        %v1719 = vunpack.c.l.b16 %v1191
        %v1720 = vunpack.c.h.b16 %v1191
        %v1721 = vunpack.c.l.b16 %v1192
        %v1722 = vunpack.c.h.b16 %v1192
        %v1723 = vunpack.c.l.b16 %v1193
        %v1724 = vunpack.c.h.b16 %v1193
        %v1725 = vunpack.c.l.b16 %v1194
        %v1726 = vunpack.c.h.b16 %v1194
        %v1727 = vunpack.c.l.b16 %v1195
        %v1728 = vunpack.c.h.b16 %v1195
        %v1729 = vunpack.c.l.b16 %v1196
        %v1730 = vunpack.c.h.b16 %v1196
        %v1731 = vunpack.c.l.b16 %v1197
        %v1732 = vunpack.c.h.b16 %v1197
        %v1733 = vunpack.c.l.b16 %v1198
        %v1734 = vunpack.c.h.b16 %v1198
        %v1735 = vunpack.c.l.b16 %v1199
        %v1736 = vunpack.c.h.b16 %v1199
        %v1737 = vunpack.c.l.b16 %v1200
        %v1738 = vunpack.c.h.b16 %v1200
        %v1739 = vunpack.c.l.b16 %v1201
        %v1740 = vunpack.c.h.b16 %v1201
        %v1741 = vunpack.c.l.b16 %v1202
        %v1742 = vunpack.c.h.b16 %v1202
        %v1743 = vunpack.c.l.b16 %v1203
        %v1744 = vunpack.c.h.b16 %v1203
        %v1745 = vunpack.c.l.b16 %v1204
        %v1746 = vunpack.c.h.b16 %v1204
        %v1747 = vunpack.c.l.b16 %v1205
        %v1748 = vunpack.c.h.b16 %v1205
        %v1749 = vunpack.c.l.b16 %v1206
        %v1750 = vunpack.c.h.b16 %v1206
        %v1751 = vunpack.c.l.b16 %v1207
        %v1752 = vunpack.c.h.b16 %v1207
        %v1753 = vunpack.c.l.b16 %v1208
        %v1754 = vunpack.c.h.b16 %v1208
        %v1755 = vunpack.c.l.b16 %v1209
        %v1756 = vunpack.c.h.b16 %v1209
        %v1757 = vunpack.c.l.b16 %v1210
        %v1758 = vunpack.c.h.b16 %v1210
        %v1759 = vunpack.c.l.b16 %v1211
        %v1760 = vunpack.c.h.b16 %v1211
        %v1761 = vunpack.c.l.b16 %v1212
        %v1762 = vunpack.c.h.b16 %v1212
        %v1763 = vunpack.c.l.b16 %v1213
        %v1764 = vunpack.c.h.b16 %v1213
        %v1765 = vunpack.c.l.b16 %v1214
        %v1766 = vunpack.c.h.b16 %v1214
        %v1767 = vunpack.c.l.b16 %v1215
        %v1768 = vunpack.c.h.b16 %v1215
        %v1769 = vunpack.c.l.b16 %v1216
        %v1770 = vunpack.c.h.b16 %v1216
        %v1771 = vunpack.c.l.b16 %v1217
        %v1772 = vunpack.c.h.b16 %v1217
        %v1773 = vunpack.c.l.b16 %v1218
        %v1774 = vunpack.c.h.b16 %v1218
        %v1775 = vunpack.c.l.b16 %v1219
        %v1776 = vunpack.c.h.b16 %v1219
        %v1777 = vunpack.c.l.b16 %v1220
        %v1778 = vunpack.c.h.b16 %v1220
        %v1779 = vunpack.c.l.b16 %v1221
        %v1780 = vunpack.c.h.b16 %v1221
        %v1781 = vunpack.c.l.b16 %v1222
        %v1782 = vunpack.c.h.b16 %v1222
        %v1783 = vunpack.c.l.b16 %v1223
        %v1784 = vunpack.c.h.b16 %v1223
        %v1785 = vunpack.c.l.b16 %v1224
        %v1786 = vunpack.c.h.b16 %v1224
        %v1787 = vunpack.c.l.b16 %v1225
        %v1788 = vunpack.c.h.b16 %v1225
        %v1789 = vunpack.c.l.b16 %v1226
        %v1790 = vunpack.c.h.b16 %v1226
        %v1791 = vunpack.c.l.b16 %v1227
        %v1792 = vunpack.c.h.b16 %v1227
        %v1793 = vunpack.c.l.b16 %v1228
        %v1794 = vunpack.c.h.b16 %v1228
        %v1795 = vunpack.c.l.b16 %v1229
        %v1796 = vunpack.c.h.b16 %v1229
        %v1797 = vunpack.c.l.b16 %v1230
        %v1798 = vunpack.c.h.b16 %v1230
        %v1799 = vunpack.c.l.b16 %v1231
        %v1800 = vunpack.c.h.b16 %v1231
        %v1801 = vunpack.c.l.b16 %v1232
        %v1802 = vunpack.c.h.b16 %v1232
        %v1803 = vunpack.c.l.b16 %v1233
        %v1804 = vunpack.c.h.b16 %v1233
        %v1805 = vunpack.c.l.b16 %v1234
        %v1806 = vunpack.c.h.b16 %v1234
        %v1807 = vunpack.c.l.b16 %v1235
        %v1808 = vunpack.c.h.b16 %v1235
        %v1809 = vunpack.c.l.b16 %v1236
        %v1810 = vunpack.c.h.b16 %v1236
        %v1811 = vunpack.c.l.b16 %v1237
        %v1812 = vunpack.c.h.b16 %v1237
        %v1813 = vunpack.c.l.b16 %v1238
        %v1814 = vunpack.c.h.b16 %v1238
        %v1815 = vunpack.c.l.b16 %v1239
        %v1816 = vunpack.c.h.b16 %v1239
        %v1817 = vunpack.c.l.b16 %v1240
        %v1818 = vunpack.c.h.b16 %v1240
        %v1819 = vunpack.c.l.b16 %v1241
        %v1820 = vunpack.c.h.b16 %v1241
        %v1821 = vunpack.c.l.b16 %v1242
        %v1822 = vunpack.c.h.b16 %v1242
        %v1823 = vunpack.c.l.b16 %v1243
        %v1824 = vunpack.c.h.b16 %v1243
        %v1825 = vunpack.c.l.b16 %v1244
        %v1826 = vunpack.c.h.b16 %v1244
        %v1827 = vunpack.c.l.b16 %v1245
        %v1828 = vunpack.c.h.b16 %v1245
        %v1829 = vunpack.c.l.b16 %v1246
        %v1830 = vunpack.c.h.b16 %v1246
        %v1831 = vunpack.c.l.b16 %v1247
        %v1832 = vunpack.c.h.b16 %v1247
        %v1833 = vunpack.c.l.b16 %v1248
        %v1834 = vunpack.c.h.b16 %v1248
        %v1835 = vunpack.c.l.b16 %v1249
        %v1836 = vunpack.c.h.b16 %v1249
        %v1837 = vunpack.c.l.b16 %v1250
        %v1838 = vunpack.c.h.b16 %v1250
        %v1839 = vunpack.c.l.b16 %v1251
        %v1840 = vunpack.c.h.b16 %v1251
        %v1841 = vunpack.c.l.b16 %v1252
        %v1842 = vunpack.c.h.b16 %v1252
        %v1843 = vunpack.c.l.b16 %v1253
        %v1844 = vunpack.c.h.b16 %v1253
        %v1845 = vunpack.c.l.b16 %v1254
        %v1846 = vunpack.c.h.b16 %v1254
        %v1847 = vunpack.c.l.b16 %v1255
        %v1848 = vunpack.c.h.b16 %v1255
        %v1849 = vunpack.c.l.b16 %v1256
        %v1850 = vunpack.c.h.b16 %v1256
        %v1851 = vunpack.c.l.b16 %v1257
        %v1852 = vunpack.c.h.b16 %v1257
        %v1853 = vunpack.c.l.b16 %v1258
        %v1854 = vunpack.c.h.b16 %v1258
        %v1855 = vunpack.c.l.b16 %v1259
        %v1856 = vunpack.c.h.b16 %v1259
        %v1857 = vunpack.c.l.b16 %v1260
        %v1858 = vunpack.c.h.b16 %v1260
        %v1859 = vunpack.c.l.b16 %v1261
        %v1860 = vunpack.c.h.b16 %v1261
        %v1861 = vunpack.c.l.b16 %v1262
        %v1862 = vunpack.c.h.b16 %v1262
        %v1863 = vunpack.c.l.b16 %v1263
        %v1864 = vunpack.c.h.b16 %v1263
        %v1865 = vunpack.c.l.b16 %v1264
        %v1866 = vunpack.c.h.b16 %v1264
        %v1867 = vunpack.c.l.b16 %v1265
        %v1868 = vunpack.c.h.b16 %v1265
        %v1869 = vunpack.c.l.b16 %v1266
        %v1870 = vunpack.c.h.b16 %v1266
        %v1871 = vunpack.c.l.b16 %v1267
        %v1872 = vunpack.c.h.b16 %v1267
        %v1873 = vunpack.c.l.b16 %v1268
        %v1874 = vunpack.c.h.b16 %v1268
        %v1875 = vunpack.c.l.b16 %v1269
        %v1876 = vunpack.c.h.b16 %v1269
        %v1877 = vunpack.c.l.b16 %v1270
        %v1878 = vunpack.c.h.b16 %v1270
        %v1879 = vunpack.c.l.b16 %v1271
        %v1880 = vunpack.c.h.b16 %v1271
        %v1881 = vunpack.c.l.b16 %v1272
        %v1882 = vunpack.c.h.b16 %v1272
        %v1883 = vunpack.c.l.b16 %v1273
        %v1884 = vunpack.c.h.b16 %v1273
        %v1885 = vunpack.c.l.b16 %v1274
        %v1886 = vunpack.c.h.b16 %v1274
        %v1887 = vunpack.c.l.b16 %v1275
        %v1888 = vunpack.c.h.b16 %v1275
        %v1889 = vunpack.c.l.b16 %v1276
        %v1890 = vunpack.c.h.b16 %v1276
        %v1891 = vunpack.c.l.b16 %v1277
        %v1892 = vunpack.c.h.b16 %v1277
        %v1893 = vunpack.c.l.b16 %v1278
        %v1894 = vunpack.c.h.b16 %v1278
        %v1895 = vunpack.c.l.b16 %v1279
        %v1896 = vunpack.c.h.b16 %v1279
        %v1897 = vunpack.c.l.b16 %v1280
        %v1898 = vunpack.c.h.b16 %v1280
        %v1899 = vunpack.c.l.b16 %v1281
        %v1900 = vunpack.c.h.b16 %v1281
        %v1901 = vunpack.c.l.b16 %v1282
        %v1902 = vunpack.c.h.b16 %v1282
        %v1903 = vunpack.c.l.b16 %v1283
        %v1904 = vunpack.c.h.b16 %v1283
        %v1905 = vunpack.c.l.b16 %v1284
        %v1906 = vunpack.c.h.b16 %v1284
        %v1907 = vunpack.c.l.b16 %v1285
        %v1908 = vunpack.c.h.b16 %v1285
        %v1909 = vunpack.c.l.b16 %v1286
        %v1910 = vunpack.c.h.b16 %v1286
        %v1911 = vunpack.c.l.b16 %v1287
        %v1912 = vunpack.c.h.b16 %v1287
        %v1913 = vunpack.c.l.b16 %v1288
        %v1914 = vunpack.c.h.b16 %v1288
        %v1915 = vunpack.c.l.b16 %v1289
        %v1916 = vunpack.c.h.b16 %v1289
        %v1917 = vunpack.c.l.b16 %v1290
        %v1918 = vunpack.c.h.b16 %v1290
        %v1919 = vunpack.c.l.b16 %v1291
        %v1920 = vunpack.c.h.b16 %v1291
        %v1921 = vunpack.c.l.b16 %v1292
        %v1922 = vunpack.c.h.b16 %v1292
        %v1923 = vunpack.c.l.b16 %v1293
        %v1924 = vunpack.c.h.b16 %v1293
        %v1925 = vunpack.c.l.b16 %v1294
        %v1926 = vunpack.c.h.b16 %v1294
        %v1927 = vunpack.c.l.b16 %v1295
        %v1928 = vunpack.c.h.b16 %v1295
        %v1929 = vunpack.c.l.b16 %v1296
        %v1930 = vunpack.c.h.b16 %v1296
        %v1931 = vunpack.c.l.b16 %v1297
        %v1932 = vunpack.c.h.b16 %v1297
        %v1933 = vunpack.c.l.b16 %v1298
        %v1934 = vunpack.c.h.b16 %v1298
        %v1935 = vpack.c.b16 %v1553, %v1551
        %v1936 = vpack.c.b16 %v1554, %v1552
        %v1937 = vpack.c.b16 %v1557, %v1555
        %v1938 = vpack.c.b16 %v1558, %v1556
        %v1939 = vpack.c.b16 %v1561, %v1559
        %v1940 = vpack.c.b16 %v1562, %v1560
        %v1941 = vpack.c.b16 %v1565, %v1563
        %v1942 = vpack.c.b16 %v1566, %v1564
        %v1943 = vpack.c.b16 %v1569, %v1567
        %v1944 = vpack.c.b16 %v1570, %v1568
        %v1945 = vpack.c.b16 %v1573, %v1571
        %v1946 = vpack.c.b16 %v1574, %v1572
        %v1947 = vpack.c.b16 %v1577, %v1575
        %v1948 = vpack.c.b16 %v1578, %v1576
        %v1949 = vpack.c.b16 %v1581, %v1579
        %v1950 = vpack.c.b16 %v1582, %v1580
        %v1951 = vpack.c.b16 %v1585, %v1583
        %v1952 = vpack.c.b16 %v1586, %v1584
        %v1953 = vpack.c.b16 %v1589, %v1587
        %v1954 = vpack.c.b16 %v1590, %v1588
        %v1955 = vpack.c.b16 %v1593, %v1591
        %v1956 = vpack.c.b16 %v1594, %v1592
        %v1957 = vpack.c.b16 %v1597, %v1595
        %v1958 = vpack.c.b16 %v1598, %v1596
        %v1959 = vpack.c.b16 %v1601, %v1599
        %v1960 = vpack.c.b16 %v1602, %v1600
        %v1961 = vpack.c.b16 %v1605, %v1603
        %v1962 = vpack.c.b16 %v1606, %v1604
        %v1963 = vpack.c.b16 %v1609, %v1607
        %v1964 = vpack.c.b16 %v1610, %v1608
        %v1965 = vpack.c.b16 %v1613, %v1611
        %v1966 = vpack.c.b16 %v1614, %v1612
        %v1967 = vpack.c.b16 %v1617, %v1615
        %v1968 = vpack.c.b16 %v1618, %v1616
        %v1969 = vpack.c.b16 %v1621, %v1619
        %v1970 = vpack.c.b16 %v1622, %v1620
        %v1971 = vpack.c.b16 %v1625, %v1623
        %v1972 = vpack.c.b16 %v1626, %v1624
        %v1973 = vpack.c.b16 %v1629, %v1627
        %v1974 = vpack.c.b16 %v1630, %v1628
        %v1975 = vpack.c.b16 %v1633, %v1631
        %v1976 = vpack.c.b16 %v1634, %v1632
        %v1977 = vpack.c.b16 %v1637, %v1635
        %v1978 = vpack.c.b16 %v1638, %v1636
        %v1979 = vpack.c.b16 %v1641, %v1639
        %v1980 = vpack.c.b16 %v1642, %v1640
        %v1981 = vpack.c.b16 %v1645, %v1643
        %v1982 = vpack.c.b16 %v1646, %v1644
        %v1983 = vpack.c.b16 %v1649, %v1647
        %v1984 = vpack.c.b16 %v1650, %v1648
        %v1985 = vpack.c.b16 %v1653, %v1651
        %v1986 = vpack.c.b16 %v1654, %v1652
        %v1987 = vpack.c.b16 %v1657, %v1655
        %v1988 = vpack.c.b16 %v1658, %v1656
        %v1989 = vpack.c.b16 %v1661, %v1659
        %v1990 = vpack.c.b16 %v1662, %v1660
        %v1991 = vpack.c.b16 %v1665, %v1663
        %v1992 = vpack.c.b16 %v1666, %v1664
        %v1993 = vpack.c.b16 %v1669, %v1667
        %v1994 = vpack.c.b16 %v1670, %v1668
        %v1995 = vpack.c.b16 %v1673, %v1671
        %v1996 = vpack.c.b16 %v1674, %v1672
        %v1997 = vpack.c.b16 %v1677, %v1675
        %v1998 = vpack.c.b16 %v1678, %v1676
        %v1999 = vpack.c.b16 %v1681, %v1679
        %v2000 = vpack.c.b16 %v1682, %v1680
        %v2001 = vpack.c.b16 %v1685, %v1683
        %v2002 = vpack.c.b16 %v1686, %v1684
        %v2003 = vpack.c.b16 %v1689, %v1687
        %v2004 = vpack.c.b16 %v1690, %v1688
        %v2005 = vpack.c.b16 %v1693, %v1691
        %v2006 = vpack.c.b16 %v1694, %v1692
        %v2007 = vpack.c.b16 %v1697, %v1695
        %v2008 = vpack.c.b16 %v1698, %v1696
        %v2009 = vpack.c.b16 %v1701, %v1699
        %v2010 = vpack.c.b16 %v1702, %v1700
        %v2011 = vpack.c.b16 %v1705, %v1703
        %v2012 = vpack.c.b16 %v1706, %v1704
        %v2013 = vpack.c.b16 %v1709, %v1707
        %v2014 = vpack.c.b16 %v1710, %v1708
        %v2015 = vpack.c.b16 %v1713, %v1711
        %v2016 = vpack.c.b16 %v1714, %v1712
        %v2017 = vpack.c.b16 %v1717, %v1715
        %v2018 = vpack.c.b16 %v1718, %v1716
        %v2019 = vpack.c.b16 %v1721, %v1719
        %v2020 = vpack.c.b16 %v1722, %v1720
        %v2021 = vpack.c.b16 %v1725, %v1723
        %v2022 = vpack.c.b16 %v1726, %v1724
        %v2023 = vpack.c.b16 %v1729, %v1727
        %v2024 = vpack.c.b16 %v1730, %v1728
        %v2025 = vpack.c.b16 %v1733, %v1731
        %v2026 = vpack.c.b16 %v1734, %v1732
        %v2027 = vpack.c.b16 %v1737, %v1735
        %v2028 = vpack.c.b16 %v1738, %v1736
        %v2029 = vpack.c.b16 %v1741, %v1739
        %v2030 = vpack.c.b16 %v1742, %v1740
        %v2031 = vpack.c.b16 %v1745, %v1743
        %v2032 = vpack.c.b16 %v1746, %v1744
        %v2033 = vpack.c.b16 %v1749, %v1747
        %v2034 = vpack.c.b16 %v1750, %v1748
        %v2035 = vpack.c.b16 %v1753, %v1751
        %v2036 = vpack.c.b16 %v1754, %v1752
        %v2037 = vpack.c.b16 %v1757, %v1755
        %v2038 = vpack.c.b16 %v1758, %v1756
        %v2039 = vpack.c.b16 %v1761, %v1759
        %v2040 = vpack.c.b16 %v1762, %v1760
        %v2041 = vpack.c.b16 %v1765, %v1763
        %v2042 = vpack.c.b16 %v1766, %v1764
        %v2043 = vpack.c.b16 %v1769, %v1767
        %v2044 = vpack.c.b16 %v1770, %v1768
        %v2045 = vpack.c.b16 %v1773, %v1771
        %v2046 = vpack.c.b16 %v1774, %v1772
        %v2047 = vpack.c.b16 %v1777, %v1775
        %v2048 = vpack.c.b16 %v1778, %v1776
        %v2049 = vpack.c.b16 %v1781, %v1779
        %v2050 = vpack.c.b16 %v1782, %v1780
        %v2051 = vpack.c.b16 %v1785, %v1783
        %v2052 = vpack.c.b16 %v1786, %v1784
        %v2053 = vpack.c.b16 %v1789, %v1787
        %v2054 = vpack.c.b16 %v1790, %v1788
        %v2055 = vpack.c.b16 %v1793, %v1791
        %v2056 = vpack.c.b16 %v1794, %v1792
        %v2057 = vpack.c.b16 %v1797, %v1795
        %v2058 = vpack.c.b16 %v1798, %v1796
        %v2059 = vpack.c.b16 %v1801, %v1799
        %v2060 = vpack.c.b16 %v1802, %v1800
        %v2061 = vpack.c.b16 %v1805, %v1803
        %v2062 = vpack.c.b16 %v1806, %v1804
        %v2063 = vpack.c.b16 %v1809, %v1807
        %v2064 = vpack.c.b16 %v1810, %v1808
        %v2065 = vpack.c.b16 %v1813, %v1811
        %v2066 = vpack.c.b16 %v1814, %v1812
        %v2067 = vpack.c.b16 %v1817, %v1815
        %v2068 = vpack.c.b16 %v1818, %v1816
        %v2069 = vpack.c.b16 %v1821, %v1819
        %v2070 = vpack.c.b16 %v1822, %v1820
        %v2071 = vpack.c.b16 %v1825, %v1823
        %v2072 = vpack.c.b16 %v1826, %v1824
        %v2073 = vpack.c.b16 %v1829, %v1827
        %v2074 = vpack.c.b16 %v1830, %v1828
        %v2075 = vpack.c.b16 %v1833, %v1831
        %v2076 = vpack.c.b16 %v1834, %v1832
        %v2077 = vpack.c.b16 %v1837, %v1835
        %v2078 = vpack.c.b16 %v1838, %v1836
        %v2079 = vpack.c.b16 %v1841, %v1839
        %v2080 = vpack.c.b16 %v1842, %v1840
        %v2081 = vpack.c.b16 %v1845, %v1843
        %v2082 = vpack.c.b16 %v1846, %v1844
        %v2083 = vpack.c.b16 %v1849, %v1847
        %v2084 = vpack.c.b16 %v1850, %v1848
        %v2085 = vpack.c.b16 %v1853, %v1851
        %v2086 = vpack.c.b16 %v1854, %v1852
        %v2087 = vpack.c.b16 %v1857, %v1855
        %v2088 = vpack.c.b16 %v1858, %v1856
        %v2089 = vpack.c.b16 %v1861, %v1859
        %v2090 = vpack.c.b16 %v1862, %v1860
        %v2091 = vpack.c.b16 %v1865, %v1863
        %v2092 = vpack.c.b16 %v1866, %v1864
        %v2093 = vpack.c.b16 %v1869, %v1867
        %v2094 = vpack.c.b16 %v1870, %v1868
        %v2095 = vpack.c.b16 %v1873, %v1871
        %v2096 = vpack.c.b16 %v1874, %v1872
        %v2097 = vpack.c.b16 %v1877, %v1875
        %v2098 = vpack.c.b16 %v1878, %v1876
        %v2099 = vpack.c.b16 %v1881, %v1879
        %v2100 = vpack.c.b16 %v1882, %v1880
        %v2101 = vpack.c.b16 %v1885, %v1883
        %v2102 = vpack.c.b16 %v1886, %v1884
        %v2103 = vpack.c.b16 %v1889, %v1887
        %v2104 = vpack.c.b16 %v1890, %v1888
        %v2105 = vpack.c.b16 %v1893, %v1891
        %v2106 = vpack.c.b16 %v1894, %v1892
        %v2107 = vpack.c.b16 %v1897, %v1895
        %v2108 = vpack.c.b16 %v1898, %v1896
        %v2109 = vpack.c.b16 %v1901, %v1899
        %v2110 = vpack.c.b16 %v1902, %v1900
        %v2111 = vpack.c.b16 %v1905, %v1903
        %v2112 = vpack.c.b16 %v1906, %v1904
        %v2113 = vpack.c.b16 %v1909, %v1907
        %v2114 = vpack.c.b16 %v1910, %v1908
        %v2115 = vpack.c.b16 %v1913, %v1911
        %v2116 = vpack.c.b16 %v1914, %v1912
        %v2117 = vpack.c.b16 %v1917, %v1915
        %v2118 = vpack.c.b16 %v1918, %v1916
        %v2119 = vpack.c.b16 %v1921, %v1919
        %v2120 = vpack.c.b16 %v1922, %v1920
        %v2121 = vpack.c.b16 %v1925, %v1923
        %v2122 = vpack.c.b16 %v1926, %v1924
        %v2123 = vpack.c.b16 %v1929, %v1927
        %v2124 = vpack.c.b16 %v1930, %v1928
        %v2125 = vpack.c.b16 %v1933, %v1931
        %v2126 = vpack.c.b16 %v1934, %v1932
        %2319 = vmatpush.bf16.msra.mxu0 %v1949
        %2320 = vmatpush.bf16.msra.mxu0 %v1947
        %2321 = vmatpush.bf16.msra.mxu0 %v1945
        %2322 = vmatpush.bf16.msra.mxu0 %v1943
        %2323 = vmatpush.bf16.msra.mxu0 %v1941
        %2324 = vmatpush.bf16.msra.mxu0 %v1939
        %2325 = vmatpush.bf16.msra.mxu0 %v1937
        %2326 = vmatpush.bf16.msra.mxu0 %v1935
        %2327 = vmatmul.bf16.gmra.mxu0 %v1335
        %v2328 = vpop.f32.mrf.mxu0
        %v2329 = vadd.f32 0.0, %v2328
        %v2330 = vpop.f32.mrf.mxu0
        %v2331 = vadd.f32 0.0, %v2330
        %2332 = vdwg.mxu0
        %2333 = vmatpush.bf16.msra.mxu0 %v1965
        %2334 = vmatpush.bf16.msra.mxu0 %v1963
        %2335 = vmatpush.bf16.msra.mxu0 %v1961
        %2336 = vmatpush.bf16.msra.mxu0 %v1959
        %2337 = vmatpush.bf16.msra.mxu0 %v1957
        %2338 = vmatpush.bf16.msra.mxu0 %v1955
        %2339 = vmatpush.bf16.msra.mxu0 %v1953
        %2340 = vmatpush.bf16.msra.mxu0 %v1951
        %2341 = vmatmul.bf16.gmra.mxu0 %v1336
        %v2342 = vpop.f32.mrf.mxu0
        %v2343 = vadd.f32 %v2329, %v2342
        %v2344 = vpop.f32.mrf.mxu0
        %v2345 = vadd.f32 %v2331, %v2344
        %2346 = vdwg.mxu0
        %2347 = vmatpush.bf16.msra.mxu0 %v1981
        %2348 = vmatpush.bf16.msra.mxu0 %v1979
        %2349 = vmatpush.bf16.msra.mxu0 %v1977
        %2350 = vmatpush.bf16.msra.mxu0 %v1975
        %2351 = vmatpush.bf16.msra.mxu0 %v1973
        %2352 = vmatpush.bf16.msra.mxu0 %v1971
        %2353 = vmatpush.bf16.msra.mxu0 %v1969
        %2354 = vmatpush.bf16.msra.mxu0 %v1967
        %2355 = vmatmul.bf16.gmra.mxu0 %v1337
        %v2356 = vpop.f32.mrf.mxu0
        %v2357 = vadd.f32 %v2343, %v2356
        %v2358 = vpop.f32.mrf.mxu0
        %v2359 = vadd.f32 %v2345, %v2358
        %2360 = vdwg.mxu0
        %2361 = vmatpush.bf16.msra.mxu0 %v1997
        %2362 = vmatpush.bf16.msra.mxu0 %v1995
        %2363 = vmatpush.bf16.msra.mxu0 %v1993
        %2364 = vmatpush.bf16.msra.mxu0 %v1991
        %2365 = vmatpush.bf16.msra.mxu0 %v1989
        %2366 = vmatpush.bf16.msra.mxu0 %v1987
        %2367 = vmatpush.bf16.msra.mxu0 %v1985
        %2368 = vmatpush.bf16.msra.mxu0 %v1983
        %2369 = vmatmul.bf16.gmra.mxu0 %v1338
        %v2370 = vpop.f32.mrf.mxu0
        %v2371 = vadd.f32 %v2357, %v2370
        %v2372 = vpop.f32.mrf.mxu0
        %v2373 = vadd.f32 %v2359, %v2372
        %2374 = vdwg.mxu0
        %2375 = vmatpush.bf16.msra.mxu0 %v2013
        %2376 = vmatpush.bf16.msra.mxu0 %v2011
        %2377 = vmatpush.bf16.msra.mxu0 %v2009
        %2378 = vmatpush.bf16.msra.mxu0 %v2007
        %2379 = vmatpush.bf16.msra.mxu0 %v2005
        %2380 = vmatpush.bf16.msra.mxu0 %v2003
        %2381 = vmatpush.bf16.msra.mxu0 %v2001
        %2382 = vmatpush.bf16.msra.mxu0 %v1999
        %2383 = vmatmul.bf16.gmra.mxu0 %v1339
        %v2384 = vpop.f32.mrf.mxu0
        %v2385 = vadd.f32 %v2371, %v2384
        %v2386 = vpop.f32.mrf.mxu0
        %v2387 = vadd.f32 %v2373, %v2386
        %2388 = vdwg.mxu0
        %2389 = vmatpush.bf16.msra.mxu0 %v2029
        %2390 = vmatpush.bf16.msra.mxu0 %v2027
        %2391 = vmatpush.bf16.msra.mxu0 %v2025
        %2392 = vmatpush.bf16.msra.mxu0 %v2023
        %2393 = vmatpush.bf16.msra.mxu0 %v2021
        %2394 = vmatpush.bf16.msra.mxu0 %v2019
        %2395 = vmatpush.bf16.msra.mxu0 %v2017
        %2396 = vmatpush.bf16.msra.mxu0 %v2015
        %2397 = vmatmul.bf16.gmra.mxu0 %v1340
        %v2398 = vpop.f32.mrf.mxu0
        %v2399 = vadd.f32 %v2385, %v2398
        %v2400 = vpop.f32.mrf.mxu0
        %v2401 = vadd.f32 %v2387, %v2400
        %2402 = vdwg.mxu0
        %2403 = vmatpush.bf16.msra.mxu0 %v2045
        %2404 = vmatpush.bf16.msra.mxu0 %v2043
        %2405 = vmatpush.bf16.msra.mxu0 %v2041
        %2406 = vmatpush.bf16.msra.mxu0 %v2039
        %2407 = vmatpush.bf16.msra.mxu0 %v2037
        %2408 = vmatpush.bf16.msra.mxu0 %v2035
        %2409 = vmatpush.bf16.msra.mxu0 %v2033
        %2410 = vmatpush.bf16.msra.mxu0 %v2031
        %2411 = vmatmul.bf16.gmra.mxu0 %v1341
        %v2412 = vpop.f32.mrf.mxu0
        %v2413 = vadd.f32 %v2399, %v2412
        %v2414 = vpop.f32.mrf.mxu0
        %v2415 = vadd.f32 %v2401, %v2414
        %2416 = vdwg.mxu0
        %2417 = vmatpush.bf16.msra.mxu0 %v2061
        %2418 = vmatpush.bf16.msra.mxu0 %v2059
        %2419 = vmatpush.bf16.msra.mxu0 %v2057
        %2420 = vmatpush.bf16.msra.mxu0 %v2055
        %2421 = vmatpush.bf16.msra.mxu0 %v2053
        %2422 = vmatpush.bf16.msra.mxu0 %v2051
        %2423 = vmatpush.bf16.msra.mxu0 %v2049
        %2424 = vmatpush.bf16.msra.mxu0 %v2047
        %2425 = vmatmul.bf16.gmra.mxu0 %v1342
        %v2426 = vpop.f32.mrf.mxu0
        %v2427 = vadd.f32 %v2413, %v2426
        %v2428 = vpop.f32.mrf.mxu0
        %v2429 = vadd.f32 %v2415, %v2428
        %2430 = vdwg.mxu0
        %2431 = vmatpush.bf16.msra.mxu0 %v2077
        %2432 = vmatpush.bf16.msra.mxu0 %v2075
        %2433 = vmatpush.bf16.msra.mxu0 %v2073
        %2434 = vmatpush.bf16.msra.mxu0 %v2071
        %2435 = vmatpush.bf16.msra.mxu0 %v2069
        %2436 = vmatpush.bf16.msra.mxu0 %v2067
        %2437 = vmatpush.bf16.msra.mxu0 %v2065
        %2438 = vmatpush.bf16.msra.mxu0 %v2063
        %2439 = vmatmul.bf16.gmra.mxu0 %v1343
        %v2440 = vpop.f32.mrf.mxu0
        %v2441 = vadd.f32 %v2427, %v2440
        %v2442 = vpop.f32.mrf.mxu0
        %v2443 = vadd.f32 %v2429, %v2442
        %2444 = vdwg.mxu0
        %2445 = vmatpush.bf16.msra.mxu0 %v2093
        %2446 = vmatpush.bf16.msra.mxu0 %v2091
        %2447 = vmatpush.bf16.msra.mxu0 %v2089
        %2448 = vmatpush.bf16.msra.mxu0 %v2087
        %2449 = vmatpush.bf16.msra.mxu0 %v2085
        %2450 = vmatpush.bf16.msra.mxu0 %v2083
        %2451 = vmatpush.bf16.msra.mxu0 %v2081
        %2452 = vmatpush.bf16.msra.mxu0 %v2079
        %2453 = vmatmul.bf16.gmra.mxu0 %v1344
        %v2454 = vpop.f32.mrf.mxu0
        %v2455 = vadd.f32 %v2441, %v2454
        %v2456 = vpop.f32.mrf.mxu0
        %v2457 = vadd.f32 %v2443, %v2456
        %2458 = vdwg.mxu0
        %2459 = vmatpush.bf16.msra.mxu0 %v2109
        %2460 = vmatpush.bf16.msra.mxu0 %v2107
        %2461 = vmatpush.bf16.msra.mxu0 %v2105
        %2462 = vmatpush.bf16.msra.mxu0 %v2103
        %2463 = vmatpush.bf16.msra.mxu0 %v2101
        %2464 = vmatpush.bf16.msra.mxu0 %v2099
        %2465 = vmatpush.bf16.msra.mxu0 %v2097
        %2466 = vmatpush.bf16.msra.mxu0 %v2095
        %2467 = vmatmul.bf16.gmra.mxu0 %v1345
        %v2468 = vpop.f32.mrf.mxu0
        %v2469 = vadd.f32 %v2455, %v2468
        %v2470 = vpop.f32.mrf.mxu0
        %v2471 = vadd.f32 %v2457, %v2470
        %2472 = vdwg.mxu0
        %2473 = vmatpush.bf16.msra.mxu0 %v2125
        %2474 = vmatpush.bf16.msra.mxu0 %v2123
        %2475 = vmatpush.bf16.msra.mxu0 %v2121
        %2476 = vmatpush.bf16.msra.mxu0 %v2119
        %2477 = vmatpush.bf16.msra.mxu0 %v2117
        %2478 = vmatpush.bf16.msra.mxu0 %v2115
        %2479 = vmatpush.bf16.msra.mxu0 %v2113
        %2480 = vmatpush.bf16.msra.mxu0 %v2111
        %2481 = vmatmul.bf16.gmra.mxu0 %v1346
        %v2482 = vpop.f32.mrf.mxu0
        %v2483 = vadd.f32 %v2469, %v2482
        %v2484 = vpop.f32.mrf.mxu0
        %v2485 = vadd.f32 %v2471, %v2484
        %2486 = vdwg.mxu0
        %2487 = vmatpush.bf16.msra.mxu0 %v1950
        %2488 = vmatpush.bf16.msra.mxu0 %v1948
        %2489 = vmatpush.bf16.msra.mxu0 %v1946
        %2490 = vmatpush.bf16.msra.mxu0 %v1944
        %2491 = vmatpush.bf16.msra.mxu0 %v1942
        %2492 = vmatpush.bf16.msra.mxu0 %v1940
        %2493 = vmatpush.bf16.msra.mxu0 %v1938
        %2494 = vmatpush.bf16.msra.mxu0 %v1936
        %2495 = vmatmul.bf16.gmra.mxu0 %v1335
        %v2496 = vpop.f32.mrf.mxu0
        %v2497 = vadd.f32 0.0, %v2496
        %v2498 = vpop.f32.mrf.mxu0
        %v2499 = vadd.f32 0.0, %v2498
        %2500 = vdwg.mxu0
        %2501 = vmatpush.bf16.msra.mxu0 %v1966
        %2502 = vmatpush.bf16.msra.mxu0 %v1964
        %2503 = vmatpush.bf16.msra.mxu0 %v1962
        %2504 = vmatpush.bf16.msra.mxu0 %v1960
        %2505 = vmatpush.bf16.msra.mxu0 %v1958
        %2506 = vmatpush.bf16.msra.mxu0 %v1956
        %2507 = vmatpush.bf16.msra.mxu0 %v1954
        %2508 = vmatpush.bf16.msra.mxu0 %v1952
        %2509 = vmatmul.bf16.gmra.mxu0 %v1336
        %v2510 = vpop.f32.mrf.mxu0
        %v2511 = vadd.f32 %v2497, %v2510
        %v2512 = vpop.f32.mrf.mxu0
        %v2513 = vadd.f32 %v2499, %v2512
        %2514 = vdwg.mxu0
        %2515 = vmatpush.bf16.msra.mxu0 %v1982
        %2516 = vmatpush.bf16.msra.mxu0 %v1980
        %2517 = vmatpush.bf16.msra.mxu0 %v1978
        %2518 = vmatpush.bf16.msra.mxu0 %v1976
        %2519 = vmatpush.bf16.msra.mxu0 %v1974
        %2520 = vmatpush.bf16.msra.mxu0 %v1972
        %2521 = vmatpush.bf16.msra.mxu0 %v1970
        %2522 = vmatpush.bf16.msra.mxu0 %v1968
        %2523 = vmatmul.bf16.gmra.mxu0 %v1337
        %v2524 = vpop.f32.mrf.mxu0
        %v2525 = vadd.f32 %v2511, %v2524
        %v2526 = vpop.f32.mrf.mxu0
        %v2527 = vadd.f32 %v2513, %v2526
        %2528 = vdwg.mxu0
        %2529 = vmatpush.bf16.msra.mxu0 %v1998
        %2530 = vmatpush.bf16.msra.mxu0 %v1996
        %2531 = vmatpush.bf16.msra.mxu0 %v1994
        %2532 = vmatpush.bf16.msra.mxu0 %v1992
        %2533 = vmatpush.bf16.msra.mxu0 %v1990
        %2534 = vmatpush.bf16.msra.mxu0 %v1988
        %2535 = vmatpush.bf16.msra.mxu0 %v1986
        %2536 = vmatpush.bf16.msra.mxu0 %v1984
        %2537 = vmatmul.bf16.gmra.mxu0 %v1338
        %v2538 = vpop.f32.mrf.mxu0
        %v2539 = vadd.f32 %v2525, %v2538
        %v2540 = vpop.f32.mrf.mxu0
        %v2541 = vadd.f32 %v2527, %v2540
        %2542 = vdwg.mxu0
        %2543 = vmatpush.bf16.msra.mxu0 %v2014
        %2544 = vmatpush.bf16.msra.mxu0 %v2012
        %2545 = vmatpush.bf16.msra.mxu0 %v2010
        %2546 = vmatpush.bf16.msra.mxu0 %v2008
        %2547 = vmatpush.bf16.msra.mxu0 %v2006
        %2548 = vmatpush.bf16.msra.mxu0 %v2004
        %2549 = vmatpush.bf16.msra.mxu0 %v2002
        %2550 = vmatpush.bf16.msra.mxu0 %v2000
        %2551 = vmatmul.bf16.gmra.mxu0 %v1339
        %v2552 = vpop.f32.mrf.mxu0
        %v2553 = vadd.f32 %v2539, %v2552
        %v2554 = vpop.f32.mrf.mxu0
        %v2555 = vadd.f32 %v2541, %v2554
        %2556 = vdwg.mxu0
        %2557 = vmatpush.bf16.msra.mxu0 %v2030
        %2558 = vmatpush.bf16.msra.mxu0 %v2028
        %2559 = vmatpush.bf16.msra.mxu0 %v2026
        %2560 = vmatpush.bf16.msra.mxu0 %v2024
        %2561 = vmatpush.bf16.msra.mxu0 %v2022
        %2562 = vmatpush.bf16.msra.mxu0 %v2020
        %2563 = vmatpush.bf16.msra.mxu0 %v2018
        %2564 = vmatpush.bf16.msra.mxu0 %v2016
        %2565 = vmatmul.bf16.gmra.mxu0 %v1340
        %v2566 = vpop.f32.mrf.mxu0
        %v2567 = vadd.f32 %v2553, %v2566
        %v2568 = vpop.f32.mrf.mxu0
        %v2569 = vadd.f32 %v2555, %v2568
        %2570 = vdwg.mxu0
        %2571 = vmatpush.bf16.msra.mxu0 %v2046
        %2572 = vmatpush.bf16.msra.mxu0 %v2044
        %2573 = vmatpush.bf16.msra.mxu0 %v2042
        %2574 = vmatpush.bf16.msra.mxu0 %v2040
        %2575 = vmatpush.bf16.msra.mxu0 %v2038
        %2576 = vmatpush.bf16.msra.mxu0 %v2036
        %2577 = vmatpush.bf16.msra.mxu0 %v2034
        %2578 = vmatpush.bf16.msra.mxu0 %v2032
        %2579 = vmatmul.bf16.gmra.mxu0 %v1341
        %v2580 = vpop.f32.mrf.mxu0
        %v2581 = vadd.f32 %v2567, %v2580
        %v2582 = vpop.f32.mrf.mxu0
        %v2583 = vadd.f32 %v2569, %v2582
        %2584 = vdwg.mxu0
        %2585 = vmatpush.bf16.msra.mxu0 %v2062
        %2586 = vmatpush.bf16.msra.mxu0 %v2060
        %2587 = vmatpush.bf16.msra.mxu0 %v2058
        %2588 = vmatpush.bf16.msra.mxu0 %v2056
        %2589 = vmatpush.bf16.msra.mxu0 %v2054
        %2590 = vmatpush.bf16.msra.mxu0 %v2052
        %2591 = vmatpush.bf16.msra.mxu0 %v2050
        %2592 = vmatpush.bf16.msra.mxu0 %v2048
        %2593 = vmatmul.bf16.gmra.mxu0 %v1342
        %v2594 = vpop.f32.mrf.mxu0
        %v2595 = vadd.f32 %v2581, %v2594
        %v2596 = vpop.f32.mrf.mxu0
        %v2597 = vadd.f32 %v2583, %v2596
        %2598 = vdwg.mxu0
        %2599 = vmatpush.bf16.msra.mxu0 %v2078
        %2600 = vmatpush.bf16.msra.mxu0 %v2076
        %2601 = vmatpush.bf16.msra.mxu0 %v2074
        %2602 = vmatpush.bf16.msra.mxu0 %v2072
        %2603 = vmatpush.bf16.msra.mxu0 %v2070
        %2604 = vmatpush.bf16.msra.mxu0 %v2068
        %2605 = vmatpush.bf16.msra.mxu0 %v2066
        %2606 = vmatpush.bf16.msra.mxu0 %v2064
        %2607 = vmatmul.bf16.gmra.mxu0 %v1343
        %v2608 = vpop.f32.mrf.mxu0
        %v2609 = vadd.f32 %v2595, %v2608
        %v2610 = vpop.f32.mrf.mxu0
        %v2611 = vadd.f32 %v2597, %v2610
        %2612 = vdwg.mxu0
        %2613 = vmatpush.bf16.msra.mxu0 %v2094
        %2614 = vmatpush.bf16.msra.mxu0 %v2092
        %2615 = vmatpush.bf16.msra.mxu0 %v2090
        %2616 = vmatpush.bf16.msra.mxu0 %v2088
        %2617 = vmatpush.bf16.msra.mxu0 %v2086
        %2618 = vmatpush.bf16.msra.mxu0 %v2084
        %2619 = vmatpush.bf16.msra.mxu0 %v2082
        %2620 = vmatpush.bf16.msra.mxu0 %v2080
        %2621 = vmatmul.bf16.gmra.mxu0 %v1344
        %v2622 = vpop.f32.mrf.mxu0
        %v2623 = vadd.f32 %v2609, %v2622
        %v2624 = vpop.f32.mrf.mxu0
        %v2625 = vadd.f32 %v2611, %v2624
        %2626 = vdwg.mxu0
        %2627 = vmatpush.bf16.msra.mxu0 %v2110
        %2628 = vmatpush.bf16.msra.mxu0 %v2108
        %2629 = vmatpush.bf16.msra.mxu0 %v2106
        %2630 = vmatpush.bf16.msra.mxu0 %v2104
        %2631 = vmatpush.bf16.msra.mxu0 %v2102
        %2632 = vmatpush.bf16.msra.mxu0 %v2100
        %2633 = vmatpush.bf16.msra.mxu0 %v2098
        %2634 = vmatpush.bf16.msra.mxu0 %v2096
        %2635 = vmatmul.bf16.gmra.mxu0 %v1345
        %v2636 = vpop.f32.mrf.mxu0
        %v2637 = vadd.f32 %v2623, %v2636
        %v2638 = vpop.f32.mrf.mxu0
        %v2639 = vadd.f32 %v2625, %v2638
        %2640 = vdwg.mxu0
        %2641 = vmatpush.bf16.msra.mxu0 %v2126
        %2642 = vmatpush.bf16.msra.mxu0 %v2124
        %2643 = vmatpush.bf16.msra.mxu0 %v2122
        %2644 = vmatpush.bf16.msra.mxu0 %v2120
        %2645 = vmatpush.bf16.msra.mxu0 %v2118
        %2646 = vmatpush.bf16.msra.mxu0 %v2116
        %2647 = vmatpush.bf16.msra.mxu0 %v2114
        %2648 = vmatpush.bf16.msra.mxu0 %v2112
        %2649 = vmatmul.bf16.gmra.mxu0 %v1346
        %v2650 = vpop.f32.mrf.mxu0
        %v2651 = vadd.f32 %v2637, %v2650
        %v2652 = vpop.f32.mrf.mxu0
        %v2653 = vadd.f32 %v2639, %v2652
        %2654 = vdwg.mxu0
        %v2655 = vadd.f32 %v1091, %v2483
        %v2656 = vadd.f32 %v1092, %v2651
        %v2657 = vadd.f32 %v1093, %v2485
        %v2658 = vadd.f32 %v1094, %v2653
        %2659 = vst [vmem:[#allocation2] sm:$0xff] %v2655
        %2660 = vst [vmem:[#allocation2 + $0x8] sm:$0xff] %v2656
        %2661 = vst [vmem:[#allocation2 + $0x10] sm:$0xff] %v2657
        %2662 = vst [vmem:[#allocation2 + $0x18] sm:$0xff] %v2658
        %p2663 = scmp.eq.s32.totalorder %s21, 2
        // Predicated region
        $region98: #{flownet_er_forward.15} parent=84 // pred_check
          %p2664 = pneg %p2663
        $region99: #{flownet_er_forward.15} parent=84 // pred_check_branch
          %2666 = sbr.rel (%p2664) target = $region101
        $region100: #{flownet_er_forward.15} parent=84 // pred_region
          %v2667 = vld [vmem:[#allocation2] sm:$0xff]
          %v2668 = vld [vmem:[#allocation2 + $0x8] sm:$0xff]
          %v2669 = vld [vmem:[#allocation2 + $0x10] sm:$0xff]
          %v2670 = vld [vmem:[#allocation2 + $0x18] sm:$0xff]
          %v2671 = vld [vmem:[%s1079] sm:$0x3]
          %v2673 = vperm.slane %v2671, 0
          %v2674 = vperm.slane %v2671, 1
          %v2677 = vadd.f32 %v2667, %v2673
          %v2678 = vadd.f32 %v2668, %v2674
          %v2679 = vadd.f32 %v2669, %v2673
          %v2680 = vadd.f32 %v2670, %v2674
          %vm2681 = vcmp.ge.f32.partialorder %v2677, 0.0
          %vm2682 = vcmp.ge.f32.partialorder %v2678, 0.0
          %vm2683 = vcmp.ge.f32.partialorder %v2679, 0.0
          %vm2684 = vcmp.ge.f32.partialorder %v2680, 0.0
          %v2685 = vmul.f32 %v2677, 0.01
          %v2686 = vmul.f32 %v2678, 0.01
          %v2687 = vmul.f32 %v2679, 0.01
          %v2688 = vmul.f32 %v2680, 0.01
          %v2689 = vsel %vm2681, %v2677, %v2685
          %v2690 = vsel %vm2682, %v2678, %v2686
          %v2691 = vsel %vm2683, %v2679, %v2687
          %v2692 = vsel %vm2684, %v2680, %v2688
          %v2693 = vpack.c.bf16 %v2690, %v2689
          %v2694 = vpack.c.bf16 %v2692, %v2691
          %2695 = vst [vmem:[%s1071] sm:$0xff] %v2693
          %2696 = vst [vmem:[%s1071 + $0x8] sm:$0xff] %v2694
        $region101: #{flownet_er_forward.15} parent=84 // pred_fallthru
          _
        %s2697 = sand.u32 %s125, 1
        %s2698 = sand.u32 %s125, 1
        %s2699 = smul.addr %s2698, 16
        %s2700 = scalar_lea.vmem [#allocation5], %s2699
        // Predicated region
        $region102: #{flownet_er_forward.15} parent=84 // pred_check
          %p2701 = pneg %p135
        $region103: #{flownet_er_forward.15} parent=84 // pred_check_branch
          %2703 = sbr.rel (%p2701) target = $region105
        $region104: #{flownet_er_forward.15} parent=84 // pred_region
          %s2704 = smul.u32 2, %s19
          %s2705 = smul.u32 2, %s20
          %s2706 = smul.addr %s2704, 8
          %s2707 = sadd.s32 %s2705, %s2706
          %s2708 = smul.addr %s2707, 4
          %s2709 = scalar_lea.vmem %s3, %s2708
          // Predicated region
          $region106: #{flownet_er_forward.15} parent=104 // pred_check
            _
          $region107: #{flownet_er_forward.15} parent=104 // pred_check_branch
            %2711 = sbr.rel (0) target = $region109
          $region108: #{flownet_er_forward.15} parent=104 // pred_region
            // Predicated region
            $region110: #{flownet_er_forward.15} parent=108 // pred_check
              _
            $region111: #{flownet_er_forward.15} parent=108 // pred_check_branch
              %2713 = sbr.rel (0) target = $region113
            $region112: #{flownet_er_forward.15} parent=108 // pred_region
              // Predicated region
              $region125: #{flownet_er_forward.15} parent=112 // pred_check
                _
              $region126: #{flownet_er_forward.15} parent=112 // pred_check_branch
                %2731 = sbr.rel (0) target = $region128
              $region127: #{flownet_er_forward.15} parent=112 // pred_region
                loop: start=0, step=1, limit=1
                $region129: #{flownet_er_forward.15} parent=127 // loop_pre_header
                  _
                $region130: #{flownet_er_forward.15} parent=127 // loop_header
                  %s2733 = sphi 0, %s2737
                  %p2734 = scmp.ge.s32.totalorder %s2733, 1
                  %s2738 = sphi %s2700, %s2700
                  %s2739 = sphi %s2709, %s2709
                $region131: #{flownet_er_forward.15} parent=127 // loop_header_branch
                  %2736 = sbr.rel (%p2734) target = $region135
                $region132: #{flownet_er_forward.15} parent=127 // loop_body
                  %v2740 = vld [vmem:[%s2738] sm:$0xff]
                  %2741 = vst [vmem:[%s2739] sm:$0xff] %v2740
                  %v2742 = vld [vmem:[%s2738 + $0x8] sm:$0xff]
                  %2743 = vst [vmem:[%s2739 + $0x20] sm:$0xff] %v2742
                $region133: #{flownet_er_forward.15} parent=127 // loop_footer
                  %s2737 = sadd.s32 1, %s2733
                $region134: #{flownet_er_forward.15} parent=127 // loop_footer_branch
                  %2732 = sbr.rel target = $region130
                $region135: #{flownet_er_forward.15} parent=127 // loop_exit
                  _
              $region128: #{flownet_er_forward.15} parent=112 // pred_fallthru
                _
              // Predicated region
              $region136: #{flownet_er_forward.15} parent=112 // pred_check
                _
              $region137: #{flownet_er_forward.15} parent=112 // pred_check_branch
                %2745 = sbr.rel target = $region139
              $region138: #{flownet_er_forward.15} parent=112 // pred_region
                _
              $region139: #{flownet_er_forward.15} parent=112 // pred_fallthru
                _
            $region113: #{flownet_er_forward.15} parent=108 // pred_fallthru
              _
            // Predicated region
            $region114: #{flownet_er_forward.15} parent=108 // pred_check
              _
            $region115: #{flownet_er_forward.15} parent=108 // pred_check_branch
              %2715 = sbr.rel target = $region117
            $region116: #{flownet_er_forward.15} parent=108 // pred_region
              %s2717 = ssub.s32 256, 1
              loop: start=0, step=1, limit=1
              $region118: #{flownet_er_forward.15} parent=116 // loop_pre_header
                _
              $region119: #{flownet_er_forward.15} parent=116 // loop_header
                %s2719 = sphi 0, %s2723
                %p2720 = scmp.ge.s32.totalorder %s2719, 1
                %s2724 = sphi %s2700, %s2700
                %s2725 = sphi %s2709, %s2709
              $region120: #{flownet_er_forward.15} parent=116 // loop_header_branch
                %2722 = sbr.rel (%p2720) target = $region124
              $region121: #{flownet_er_forward.15} parent=116 // loop_body
                %v2726 = vld [vmem:[%s2724] sm:%s2717]
                %2727 = vst [vmem:[%s2725] sm:%s2717] %v2726
                %v2728 = vld [vmem:[%s2724 + $0x8] sm:%s2717]
                %2729 = vst [vmem:[%s2725 + $0x20] sm:%s2717] %v2728
              $region122: #{flownet_er_forward.15} parent=116 // loop_footer
                %s2723 = sadd.s32 1, %s2719
              $region123: #{flownet_er_forward.15} parent=116 // loop_footer_branch
                %2718 = sbr.rel target = $region119
              $region124: #{flownet_er_forward.15} parent=116 // loop_exit
                _
            $region117: #{flownet_er_forward.15} parent=108 // pred_fallthru
              _
          $region109: #{flownet_er_forward.15} parent=104 // pred_fallthru
            _
          %2746 = vnop
        $region105: #{flownet_er_forward.15} parent=84 // pred_fallthru
          _
      $region85: #{flownet_er_forward.15} parent=5 // pred_fallthru
        _
      %p2747 = scmp.le.s32.totalorder 2, %s9
      // Predicated region
      $region140: #{flownet_er_forward.15} parent=5 // pred_check
        %p2748 = pneg %p2747
      $region141: #{flownet_er_forward.15} parent=5 // pred_check_branch
        %2750 = sbr.rel (%p2748) target = $region143
      $region142: #{flownet_er_forward.15} parent=5 // pred_region
        %s2751 = ssub.s32 %s9, 2
        // Predicated region
        $region144: #{flownet_er_forward.15} parent=142 // pred_check
          %p2752 = pneg %p141
        $region145: #{flownet_er_forward.15} parent=142 // pred_check_branch
          %2754 = sbr.rel (%p2752) target = $region147
        $region146: #{flownet_er_forward.15} parent=142 // pred_region
          %s2755 = sand.u32 %s126, 1
          %s2756 = sand.u32 %s126, 1
          %s2757 = smul.addr %s2756, 16
          %s2758 = scalar_lea.vmem [#allocation5], %s2757
        $region147: #{flownet_er_forward.15} parent=142 // pred_fallthru
          _
      $region143: #{flownet_er_forward.15} parent=5 // pred_fallthru
        _
    $region6: #{flownet_er_forward.15} parent=1 // loop_footer
      %s13 = sadd.s32 1, %s9
    $region7: #{flownet_er_forward.15} parent=1 // loop_footer_branch
      %8 = sbr.rel target = $region3
    $region8: #{flownet_er_forward.15} parent=1 // loop_exit
      _

// kernel: flownet_er_forward.17
$region0: #{flownet_er_forward.17}
  #allocation0 [shape = 'u32[]', space=smem, size = 0x4, offset = 0x4, fixed_abs, tag = 'smem constant byte address 0x4 - core index']
  #allocation1 [shape = 'u32[72,128]{1,0:T(1,128)}', space=vmem, size = 0x9000, scoped, tag = 'internal scratch']
  #allocation2 [shape = 'f32[32,128]{1,0:T(8,128)}', space=vmem, size = 0x4000, scoped, tag = 'scratch operand']
  %s0 = inlined_call_operand.vmem [shape: bf16[32,3456], index: 0, kind: input, shape index: {}]
  %s1 = inlined_call_operand.vmem [shape: bf16[3456,128], index: 1, kind: input, shape index: {}]
  %s2 = inlined_call_operand.vmem [shape: f32[1,128], index: 2, kind: input, shape index: {}]
  %s3 = inlined_call_operand.vmem [shape: f32[32,128], index: 3, kind: output, shape index: {}]
  %s4 = sld [smem:[#allocation0]]
  $region79: #{flownet_er_forward.17} parent=0
    _
  %s6 = ssub.s32 1, %s4
  %s7 = scalar_select 0, %s6, %s4
  $region1: #{flownet_er_forward.17} parent=0
    #allocation3 [shape = 'u8[147456]{0}', space=vmem, size = 0x24000, scoped, tag = 'input window, operand 0']
    loop: start=0, step=1, limit=5
    $region2: #{flownet_er_forward.17} parent=1 // loop_pre_header
      _
    $region3: #{flownet_er_forward.17} parent=1 // loop_header
      %s9 = sphi 0, %s13
      %p10 = scmp.ge.s32.totalorder %s9, 5
      %s16 = sphi 0, %s35
      %s17 = sphi 0, %s31
      %s18 = sphi 0, %s27
      %s19 = sphi 0, %s16
      %s20 = sphi 0, %s17
      %s21 = sphi 0, %s18
      %s22 = sphi 0, %s19
      %s23 = sphi 0, %s20
      %s24 = sphi 0, %s21
      %s40 = sphi 0, %s42
      %s43 = sphi 0, %s40
      %s44 = sphi 0, %s43
      %s60 = sphi 0, %s44
      %s68 = sphi 0, %s70
      %s71 = sphi 0, %s68
      %s72 = sphi 0, %s71
      %s88 = sphi 0, %s72
      %s94 = sphi 0, %s96
      %s97 = sphi 0, %s94
      %s98 = sphi 0, %s97
      %s114 = sphi 0, %s98
      %s122 = sphi 0, %s124
      %s125 = sphi 0, %s122
      %s126 = sphi 0, %s125
      %s142 = sphi 0, %s126
    $region4: #{flownet_er_forward.17} parent=1 // loop_header_branch
      %12 = sbr.rel (%p10) target = $region8
    $region5: #{flownet_er_forward.17} parent=1 // loop_body
      %s14 = ssub.s32 %s9, 1
      %s15 = ssub.s32 %s9, 2
      %s25 = sadd.s32 1, %s18
      %p26 = scmp.ge.s32.totalorder %s25, 3
      %s27 = scalar_select %p26, 0, %s25
      %s28 = sadd.s32 1, %s17
      %s29 = scalar_select %p26, %s28, %s17
      %p30 = scmp.ge.s32.totalorder %s29, 1
      %s31 = scalar_select %p30, 0, %s29
      %s32 = sadd.s32 1, %s16
      %s33 = scalar_select %p30, %s32, %s16
      %p34 = scmp.ge.s32.totalorder %s33, 1
      %s35 = scalar_select %p34, 0, %s33
      %s36 = ssub.s32 %s16, %s35
      %s37 = ssub.s32 %s18, %s27
      %s38 = sor.u32 %s36, %s37
      %p39 = scmp.eq.s32.totalorder %s38, 0
      %s41 = sadd.s32 %s40, 1
      %s42 = scalar_select %p39, %s40, %s41
      %p45 = pneg %p39
      %p46 = scmp.eq.s32.totalorder %s9, 2
      %p47 = por %p45, %p46
      %p48 = scmp.ne.s32.totalorder %s40, %s43
      %p49 = scmp.eq.s32.totalorder %s9, 0
      %p50 = por %p48, %p49
      %p51 = scmp.ne.s32.totalorder %s40, %s43
      %p52 = scmp.eq.s32.totalorder %s14, 2
      %p53 = por %p51, %p52
      %p54 = scmp.ne.s32.totalorder %s43, %s44
      %p55 = scmp.eq.s32.totalorder %s14, 0
      %p56 = por %p54, %p55
      %p57 = scmp.ne.s32.totalorder %s43, %s44
      %p58 = scmp.eq.s32.totalorder %s15, 2
      %p59 = por %p57, %p58
      %p61 = scmp.ne.s32.totalorder %s44, %s60
      %p62 = scmp.eq.s32.totalorder %s15, 0
      %p63 = por %p61, %p62
      %s64 = ssub.s32 %s18, %s27
      %s65 = ssub.s32 %s17, %s31
      %s66 = sor.u32 %s64, %s65
      %p67 = scmp.eq.s32.totalorder %s66, 0
      %s69 = sadd.s32 %s68, 1
      %s70 = scalar_select %p67, %s68, %s69
      %p73 = pneg %p67
      %p74 = scmp.eq.s32.totalorder %s9, 2
      %p75 = por %p73, %p74
      %p76 = scmp.ne.s32.totalorder %s68, %s71
      %p77 = scmp.eq.s32.totalorder %s9, 0
      %p78 = por %p76, %p77
      %p79 = scmp.ne.s32.totalorder %s68, %s71
      %p80 = scmp.eq.s32.totalorder %s14, 2
      %p81 = por %p79, %p80
      %p82 = scmp.ne.s32.totalorder %s71, %s72
      %p83 = scmp.eq.s32.totalorder %s14, 0
      %p84 = por %p82, %p83
      %p85 = scmp.ne.s32.totalorder %s71, %s72
      %p86 = scmp.eq.s32.totalorder %s15, 2
      %p87 = por %p85, %p86
      %p89 = scmp.ne.s32.totalorder %s72, %s88
      %p90 = scmp.eq.s32.totalorder %s15, 0
      %p91 = por %p89, %p90
      %s92 = ssub.s32 %s17, %s31
      %p93 = scmp.eq.s32.totalorder %s92, 0
      %s95 = sadd.s32 %s94, 1
      %s96 = scalar_select %p93, %s94, %s95
      %p99 = pneg %p93
      %p100 = scmp.eq.s32.totalorder %s9, 2
      %p101 = por %p99, %p100
      %p102 = scmp.ne.s32.totalorder %s94, %s97
      %p103 = scmp.eq.s32.totalorder %s9, 0
      %p104 = por %p102, %p103
      %p105 = scmp.ne.s32.totalorder %s94, %s97
      %p106 = scmp.eq.s32.totalorder %s14, 2
      %p107 = por %p105, %p106
      %p108 = scmp.ne.s32.totalorder %s97, %s98
      %p109 = scmp.eq.s32.totalorder %s14, 0
      %p110 = por %p108, %p109
      %p111 = scmp.ne.s32.totalorder %s97, %s98
      %p112 = scmp.eq.s32.totalorder %s15, 2
      %p113 = por %p111, %p112
      %p115 = scmp.ne.s32.totalorder %s98, %s114
      %p116 = scmp.eq.s32.totalorder %s15, 0
      %p117 = por %p115, %p116
      %s118 = ssub.s32 %s16, %s35
      %s119 = ssub.s32 %s17, %s31
      %s120 = sor.u32 %s118, %s119
      %p121 = scmp.eq.s32.totalorder %s120, 0
      %s123 = sadd.s32 %s122, 1
      %s124 = scalar_select %p121, %s122, %s123
      %p127 = pneg %p121
      %p128 = scmp.eq.s32.totalorder %s9, 2
      %p129 = por %p127, %p128
      %p130 = scmp.ne.s32.totalorder %s122, %s125
      %p131 = scmp.eq.s32.totalorder %s9, 0
      %p132 = por %p130, %p131
      %p133 = scmp.ne.s32.totalorder %s122, %s125
      %p134 = scmp.eq.s32.totalorder %s14, 2
      %p135 = por %p133, %p134
      %p136 = scmp.ne.s32.totalorder %s125, %s126
      %p137 = scmp.eq.s32.totalorder %s14, 0
      %p138 = por %p136, %p137
      %p139 = scmp.ne.s32.totalorder %s125, %s126
      %p140 = scmp.eq.s32.totalorder %s15, 2
      %p141 = por %p139, %p140
      %p143 = scmp.ne.s32.totalorder %s126, %s142
      %p144 = scmp.eq.s32.totalorder %s15, 0
      %p145 = por %p143, %p144
      %p146 = scmp.le.s32.totalorder 1, %s9
      %p147 = scmp.lt.s32.totalorder %s9, 4
      %p148 = pnand %p146, %p147
      %p149 = pneg %p148
      // Predicated region
      $region9: #{flownet_er_forward.17} parent=5 // pred_check
        _
      $region10: #{flownet_er_forward.17} parent=5 // pred_check_branch
        %151 = sbr.rel (%p148) target = $region12
      $region11: #{flownet_er_forward.17} parent=5 // pred_region
        %s152 = ssub.s32 %s9, 1
        // Predicated region
        $region13: #{flownet_er_forward.17} parent=11 // pred_check
          %p153 = pneg %p110
        $region14: #{flownet_er_forward.17} parent=11 // pred_check_branch
          %155 = sbr.rel (%p153) target = $region16
        $region15: #{flownet_er_forward.17} parent=11 // pred_region
          %p156 = scmp.lt.s32.totalorder %s20, 0
          %s157 = scalar_select %p156, %s20, 0
          %s158 = scalar_lea.vmem %s2, %s157
        $region16: #{flownet_er_forward.17} parent=11 // pred_fallthru
          _
      $region12: #{flownet_er_forward.17} parent=5 // pred_fallthru
        _
      %p159 = scmp.lt.s32.totalorder %s9, 3
      // Predicated region
      $region17: #{flownet_er_forward.17} parent=5 // pred_check
        %p160 = pneg %p159
      $region18: #{flownet_er_forward.17} parent=5 // pred_check_branch
        %162 = sbr.rel (%p160) target = $region20
      $region19: #{flownet_er_forward.17} parent=5 // pred_region
        // Predicated region
        $region21: #{flownet_er_forward.17} parent=19 // pred_check
          %p163 = pneg %p50
        $region22: #{flownet_er_forward.17} parent=19 // pred_check_branch
          %165 = sbr.rel (%p163) target = $region24
        $region23: #{flownet_er_forward.17} parent=19 // pred_region
          %s166 = sand.u32 %s40, 1
          %s167 = sand.u32 %s40, 1
          %s168 = smul.addr %s167, 144
          %s169 = scalar_lea.vmem [#allocation3], %s168
          %s170 = smul.u32 4, %s16
          %s171 = smul.u32 9, %s18
          %s172 = smul.addr %s170, 27
          %s173 = sadd.s32 %s171, %s172
          %s174 = smul.addr %s173, 4
          %s175 = scalar_lea.vmem %s0, %s174
          // Predicated region
          $region25: #{flownet_er_forward.17} parent=23 // pred_check
            _
          $region26: #{flownet_er_forward.17} parent=23 // pred_check_branch
            %177 = sbr.rel (0) target = $region28
          $region27: #{flownet_er_forward.17} parent=23 // pred_region
            // Predicated region
            $region29: #{flownet_er_forward.17} parent=27 // pred_check
              _
            $region30: #{flownet_er_forward.17} parent=27 // pred_check_branch
              %179 = sbr.rel (0) target = $region32
            $region31: #{flownet_er_forward.17} parent=27 // pred_region
              %s180 = scalar_lea.vmem %s175, 32
              %s181 = scalar_lea.vmem %s169, 32 [#allocation3]
              loop: start=0, step=1, limit=1
              $region33: #{flownet_er_forward.17} parent=31 // loop_pre_header
                _
              $region34: #{flownet_er_forward.17} parent=31 // loop_header
                %s183 = sphi 0, %s187
                %p184 = scmp.ge.s32.totalorder %s183, 1
                %s188 = sphi %s175, %s175
                %s189 = sphi %s169, %s169
              $region35: #{flownet_er_forward.17} parent=31 // loop_header_branch
                %186 = sbr.rel (%p184) target = $region39
              $region36: #{flownet_er_forward.17} parent=31 // loop_body
                %v190 = vld [vmem:[%s188] sm:$0xff]
                %191 = vst [vmem:[%s189] sm:$0xff] %v190
                %v192 = vld [vmem:[%s188 + $0x8] sm:$0xff]
                %193 = vst [vmem:[%s189 + $0x8] sm:$0xff] %v192
                %v194 = vld [vmem:[%s188 + $0x10] sm:$0xff]
                %195 = vst [vmem:[%s189 + $0x10] sm:$0xff] %v194
                %v196 = vld [vmem:[%s188 + $0x18] sm:$0xff]
                %197 = vst [vmem:[%s189 + $0x18] sm:$0xff] %v196
                %v198 = vld [vmem:[%s188 + $0x6c] sm:$0xff]
                %199 = vst [vmem:[%s189 + $0x24] sm:$0xff] %v198
                %v200 = vld [vmem:[%s188 + $0x74] sm:$0xff]
                %201 = vst [vmem:[%s189 + $0x2c] sm:$0xff] %v200
                %v202 = vld [vmem:[%s188 + $0x7c] sm:$0xff]
                %203 = vst [vmem:[%s189 + $0x34] sm:$0xff] %v202
                %v204 = vld [vmem:[%s188 + $0x84] sm:$0xff]
                %205 = vst [vmem:[%s189 + $0x3c] sm:$0xff] %v204
                %v206 = vld [vmem:[%s188 + $0xd8] sm:$0xff]
                %207 = vst [vmem:[%s189 + $0x48] sm:$0xff] %v206
                %v208 = vld [vmem:[%s188 + $0xe0] sm:$0xff]
                %209 = vst [vmem:[%s189 + $0x50] sm:$0xff] %v208
                %v210 = vld [vmem:[%s188 + $0xe8] sm:$0xff]
                %211 = vst [vmem:[%s189 + $0x58] sm:$0xff] %v210
                %v212 = vld [vmem:[%s188 + $0xf0] sm:$0xff]
                %213 = vst [vmem:[%s189 + $0x60] sm:$0xff] %v212
                %v214 = vld [vmem:[%s188 + $0x144] sm:$0xff]
                %215 = vst [vmem:[%s189 + $0x6c] sm:$0xff] %v214
                %v216 = vld [vmem:[%s188 + $0x14c] sm:$0xff]
                %217 = vst [vmem:[%s189 + $0x74] sm:$0xff] %v216
                %v218 = vld [vmem:[%s188 + $0x154] sm:$0xff]
                %219 = vst [vmem:[%s189 + $0x7c] sm:$0xff] %v218
                %v220 = vld [vmem:[%s188 + $0x15c] sm:$0xff]
                %221 = vst [vmem:[%s189 + $0x84] sm:$0xff] %v220
              $region37: #{flownet_er_forward.17} parent=31 // loop_footer
                %s187 = sadd.s32 1, %s183
              $region38: #{flownet_er_forward.17} parent=31 // loop_footer_branch
                %182 = sbr.rel target = $region34
              $region39: #{flownet_er_forward.17} parent=31 // loop_exit
                _
              %s223 = ssub.s32 16, 1
              loop: start=0, step=1, limit=1
              $region40: #{flownet_er_forward.17} parent=31 // loop_pre_header
                _
              $region41: #{flownet_er_forward.17} parent=31 // loop_header
                %s225 = sphi 0, %s229
                %p226 = scmp.ge.s32.totalorder %s225, 1
                %s230 = sphi %s180, %s180
                %s231 = sphi %s181, %s181
              $region42: #{flownet_er_forward.17} parent=31 // loop_header_branch
                %228 = sbr.rel (%p226) target = $region46
              $region43: #{flownet_er_forward.17} parent=31 // loop_body
                %v232 = vld [vmem:[%s230] sm:%s223]
                %233 = vst [vmem:[%s231] sm:%s223] %v232
                %v234 = vld [vmem:[%s230 + $0x6c] sm:%s223]
                %235 = vst [vmem:[%s231 + $0x24] sm:%s223] %v234
                %v236 = vld [vmem:[%s230 + $0xd8] sm:%s223]
                %237 = vst [vmem:[%s231 + $0x48] sm:%s223] %v236
                %v238 = vld [vmem:[%s230 + $0x144] sm:%s223]
                %239 = vst [vmem:[%s231 + $0x6c] sm:%s223] %v238
              $region44: #{flownet_er_forward.17} parent=31 // loop_footer
                %s229 = sadd.s32 1, %s225
              $region45: #{flownet_er_forward.17} parent=31 // loop_footer_branch
                %224 = sbr.rel target = $region41
              $region46: #{flownet_er_forward.17} parent=31 // loop_exit
                _
            $region32: #{flownet_er_forward.17} parent=27 // pred_fallthru
              _
          $region28: #{flownet_er_forward.17} parent=23 // pred_fallthru
            _
          %240 = vnop
        $region24: #{flownet_er_forward.17} parent=19 // pred_fallthru
          _
        // Predicated region
        $region47: #{flownet_er_forward.17} parent=19 // pred_check
          %p241 = pneg %p78
        $region48: #{flownet_er_forward.17} parent=19 // pred_check_branch
          %243 = sbr.rel (%p241) target = $region50
        $region49: #{flownet_er_forward.17} parent=19 // pred_region
          %s244 = smul.u32 144, %s18
          %p245 = scmp.lt.s32.totalorder %s244, 431
          %s246 = scalar_select %p245, %s244, 431
          %p247 = scmp.lt.s32.totalorder %s17, 0
          %s248 = scalar_select %p247, %s17, 0
          %s249 = sadd.s32 %s248, %s246
          %s250 = smul.addr %s249, 4
          %s251 = scalar_lea.vmem %s1, %s250
          %s252 = smul.u32 144, %s18
        $region50: #{flownet_er_forward.17} parent=19 // pred_fallthru
          _
      $region20: #{flownet_er_forward.17} parent=5 // pred_fallthru
        _
      %p253 = scmp.le.s32.totalorder 1, %s9
      %p254 = scmp.lt.s32.totalorder %s9, 4
      %p255 = pnand %p253, %p254
      %p256 = pneg %p255
      // Predicated region
      $region51: #{flownet_er_forward.17} parent=5 // pred_check
        _
      $region52: #{flownet_er_forward.17} parent=5 // pred_check_branch
        %258 = sbr.rel (%p255) target = $region54
      $region53: #{flownet_er_forward.17} parent=5 // pred_region
        %s259 = ssub.s32 %s9, 1
        %s260 = sand.u32 %s43, 1
        %s261 = sand.u32 %s43, 1
        %s262 = smul.addr %s261, 144
        %s263 = scalar_lea.vmem [#allocation3], %s262
        // Predicated region
        $region55: #{flownet_er_forward.17} parent=53 // pred_check
          %p264 = pneg %p56
        $region56: #{flownet_er_forward.17} parent=53 // pred_check_branch
          %266 = sbr.rel (%p264) target = $region58
        $region57: #{flownet_er_forward.17} parent=53 // pred_region
          _
        $region58: #{flownet_er_forward.17} parent=53 // pred_fallthru
          _
        %s267 = sand.u32 %s43, 1
        %s268 = sand.u32 %s43, 1
        %s269 = smul.addr %s268, 144
        %s270 = scalar_lea.vmem [#allocation3], %s269
        %p271 = pneg %p56
        %p272 = pneg %p53
        %s273 = smul.u32 144, %s21
        %p274 = scmp.lt.s32.totalorder %s273, 431
        %s275 = scalar_select %p274, %s273, 431
        %p276 = scmp.lt.s32.totalorder %s20, 0
        %s277 = scalar_select %p276, %s20, 0
        %s278 = sadd.s32 %s277, %s275
        %s279 = smul.addr %s278, 4
        %s280 = scalar_lea.vmem %s1, %s279
        %p281 = pneg %p84
        %p282 = pneg %p81
        %p283 = scmp.lt.s32.totalorder %s20, 0
        %s284 = scalar_select %p283, %s20, 0
        %s285 = scalar_lea.vmem %s2, %s284
        %p286 = pneg %p110
        %p287 = pneg %p107
        %p288 = pneg %p138
        %p289 = pneg %p135
        %s290 = smul.u32 4, %s19
        %p291 = scmp.lt.s32.totalorder %s290, 3
        %s292 = scalar_select %p291, %s290, 3
        %p293 = scmp.lt.s32.totalorder %s20, 0
        %s294 = scalar_select %p293, %s20, 0
        %s295 = sadd.s32 %s294, %s292
        %s296 = smul.addr %s295, 8
        %s297 = scalar_lea.vmem %s3, %s296
        %s298 = smul.u32 4, %s19
        %s299 = smul.u32 9, %s21
        %s300 = smul.u32 144, %s21
        %p301 = scmp.lt.s32.totalorder %s300, 431
        %s302 = scalar_select %p301, %s300, 431
        %p303 = scmp.lt.s32.totalorder %s20, 0
        %s304 = scalar_select %p303, %s20, 0
        %s305 = sadd.s32 %s304, %s302
        %s306 = smul.addr %s305, 4
        %s307 = scalar_lea.vmem %s1, %s306
        %s308 = smul.u32 144, %s21
        %p309 = scmp.lt.s32.totalorder %s20, 0
        %s310 = scalar_select %p309, %s20, 0
        %s311 = scalar_lea.vmem %s2, %s310
        %s312 = smul.u32 4, %s19
        %p313 = scmp.lt.s32.totalorder %s312, 3
        %s314 = scalar_select %p313, %s312, 3
        %p315 = scmp.lt.s32.totalorder %s20, 0
        %s316 = scalar_select %p315, %s20, 0
        %s317 = sadd.s32 %s316, %s314
        %s318 = smul.addr %s317, 8
        %s319 = scalar_lea.vmem %s3, %s318
        %s320 = smul.u32 4, %s19
        %p321 = scmp.eq.s32.totalorder %s21, 0
        // Predicated region
        $region59: #{flownet_er_forward.17} parent=53 // pred_check
          %p322 = pneg %p321
        $region60: #{flownet_er_forward.17} parent=53 // pred_check_branch
          %324 = sbr.rel (%p322) target = $region62
        $region61: #{flownet_er_forward.17} parent=53 // pred_region
          %325 = vst [vmem:[#allocation2] sm:$0xff] 0.0
          %326 = vst [vmem:[#allocation2 + $0x8] sm:$0xff] 0.0
          %327 = vst [vmem:[#allocation2 + $0x10] sm:$0xff] 0.0
          %328 = vst [vmem:[#allocation2 + $0x18] sm:$0xff] 0.0
        $region62: #{flownet_er_forward.17} parent=53 // pred_fallthru
          _
        %v329 = vld [vmem:[#allocation2] sm:$0xff]
        %v330 = vld [vmem:[#allocation2 + $0x8] sm:$0xff]
        %v331 = vld [vmem:[#allocation2 + $0x10] sm:$0xff]
        %v332 = vld [vmem:[#allocation2 + $0x18] sm:$0xff]
        %v333 = vld [vmem:[%s263] sm:$0xff]
        %v334 = vld [vmem:[%s263 + $0x8] sm:$0xff]
        %v335 = vld [vmem:[%s263 + $0x10] sm:$0xff]
        %v336 = vld [vmem:[%s263 + $0x18] sm:$0xff]
        %v337 = vld [vmem:[%s263 + $0x20] sm:$0xf]
        %v338 = vld [vmem:[%s263 + $0x24] sm:$0xff]
        %v339 = vld [vmem:[%s263 + $0x2c] sm:$0xff]
        %v340 = vld [vmem:[%s263 + $0x34] sm:$0xff]
        %v341 = vld [vmem:[%s263 + $0x3c] sm:$0xff]
        %v342 = vld [vmem:[%s263 + $0x44] sm:$0xf]
        %v343 = vld [vmem:[%s263 + $0x48] sm:$0xff]
        %v344 = vld [vmem:[%s263 + $0x50] sm:$0xff]
        %v345 = vld [vmem:[%s263 + $0x58] sm:$0xff]
        %v346 = vld [vmem:[%s263 + $0x60] sm:$0xff]
        %v347 = vld [vmem:[%s263 + $0x68] sm:$0xf]
        %v348 = vld [vmem:[%s263 + $0x6c] sm:$0xff]
        %v349 = vld [vmem:[%s263 + $0x74] sm:$0xff]
        %v350 = vld [vmem:[%s263 + $0x7c] sm:$0xff]
        %v351 = vld [vmem:[%s263 + $0x84] sm:$0xff]
        %v352 = vld [vmem:[%s263 + $0x8c] sm:$0xf]
        %v353 = vld [vmem:[%s307] sm:$0xf]
        %v354 = vld [vmem:[%s307 + $0x4] sm:$0xf]
        %v355 = vld [vmem:[%s307 + $0x8] sm:$0xf]
        %v356 = vld [vmem:[%s307 + $0xc] sm:$0xf]
        %v357 = vld [vmem:[%s307 + $0x10] sm:$0xf]
        %v358 = vld [vmem:[%s307 + $0x14] sm:$0xf]
        %v359 = vld [vmem:[%s307 + $0x18] sm:$0xf]
        %v360 = vld [vmem:[%s307 + $0x1c] sm:$0xf]
        %v361 = vld [vmem:[%s307 + $0x20] sm:$0xf]
        %v362 = vld [vmem:[%s307 + $0x24] sm:$0xf]
        %v363 = vld [vmem:[%s307 + $0x28] sm:$0xf]
        %v364 = vld [vmem:[%s307 + $0x2c] sm:$0xf]
        %v365 = vld [vmem:[%s307 + $0x30] sm:$0xf]
        %v366 = vld [vmem:[%s307 + $0x34] sm:$0xf]
        %v367 = vld [vmem:[%s307 + $0x38] sm:$0xf]
        %v368 = vld [vmem:[%s307 + $0x3c] sm:$0xf]
        %v369 = vld [vmem:[%s307 + $0x40] sm:$0xf]
        %v370 = vld [vmem:[%s307 + $0x44] sm:$0xf]
        %v371 = vld [vmem:[%s307 + $0x48] sm:$0xf]
        %v372 = vld [vmem:[%s307 + $0x4c] sm:$0xf]
        %v373 = vld [vmem:[%s307 + $0x50] sm:$0xf]
        %v374 = vld [vmem:[%s307 + $0x54] sm:$0xf]
        %v375 = vld [vmem:[%s307 + $0x58] sm:$0xf]
        %v376 = vld [vmem:[%s307 + $0x5c] sm:$0xf]
        %v377 = vld [vmem:[%s307 + $0x60] sm:$0xf]
        %v378 = vld [vmem:[%s307 + $0x64] sm:$0xf]
        %v379 = vld [vmem:[%s307 + $0x68] sm:$0xf]
        %v380 = vld [vmem:[%s307 + $0x6c] sm:$0xf]
        %v381 = vld [vmem:[%s307 + $0x70] sm:$0xf]
        %v382 = vld [vmem:[%s307 + $0x74] sm:$0xf]
        %v383 = vld [vmem:[%s307 + $0x78] sm:$0xf]
        %v384 = vld [vmem:[%s307 + $0x7c] sm:$0xf]
        %v385 = vld [vmem:[%s307 + $0x80] sm:$0xf]
        %v386 = vld [vmem:[%s307 + $0x84] sm:$0xf]
        %v387 = vld [vmem:[%s307 + $0x88] sm:$0xf]
        %v388 = vld [vmem:[%s307 + $0x8c] sm:$0xf]
        %v389 = vld [vmem:[%s307 + $0x90] sm:$0xf]
        %v390 = vld [vmem:[%s307 + $0x94] sm:$0xf]
        %v391 = vld [vmem:[%s307 + $0x98] sm:$0xf]
        %v392 = vld [vmem:[%s307 + $0x9c] sm:$0xf]
        %v393 = vld [vmem:[%s307 + $0xa0] sm:$0xf]
        %v394 = vld [vmem:[%s307 + $0xa4] sm:$0xf]
        %v395 = vld [vmem:[%s307 + $0xa8] sm:$0xf]
        %v396 = vld [vmem:[%s307 + $0xac] sm:$0xf]
        %v397 = vld [vmem:[%s307 + $0xb0] sm:$0xf]
        %v398 = vld [vmem:[%s307 + $0xb4] sm:$0xf]
        %v399 = vld [vmem:[%s307 + $0xb8] sm:$0xf]
        %v400 = vld [vmem:[%s307 + $0xbc] sm:$0xf]
        %v401 = vld [vmem:[%s307 + $0xc0] sm:$0xf]
        %v402 = vld [vmem:[%s307 + $0xc4] sm:$0xf]
        %v403 = vld [vmem:[%s307 + $0xc8] sm:$0xf]
        %v404 = vld [vmem:[%s307 + $0xcc] sm:$0xf]
        %v405 = vld [vmem:[%s307 + $0xd0] sm:$0xf]
        %v406 = vld [vmem:[%s307 + $0xd4] sm:$0xf]
        %v407 = vld [vmem:[%s307 + $0xd8] sm:$0xf]
        %v408 = vld [vmem:[%s307 + $0xdc] sm:$0xf]
        %v409 = vld [vmem:[%s307 + $0xe0] sm:$0xf]
        %v410 = vld [vmem:[%s307 + $0xe4] sm:$0xf]
        %v411 = vld [vmem:[%s307 + $0xe8] sm:$0xf]
        %v412 = vld [vmem:[%s307 + $0xec] sm:$0xf]
        %v413 = vld [vmem:[%s307 + $0xf0] sm:$0xf]
        %v414 = vld [vmem:[%s307 + $0xf4] sm:$0xf]
        %v415 = vld [vmem:[%s307 + $0xf8] sm:$0xf]
        %v416 = vld [vmem:[%s307 + $0xfc] sm:$0xf]
        %v417 = vld [vmem:[%s307 + $0x100] sm:$0xf]
        %v418 = vld [vmem:[%s307 + $0x104] sm:$0xf]
        %v419 = vld [vmem:[%s307 + $0x108] sm:$0xf]
        %v420 = vld [vmem:[%s307 + $0x10c] sm:$0xf]
        %v421 = vld [vmem:[%s307 + $0x110] sm:$0xf]
        %v422 = vld [vmem:[%s307 + $0x114] sm:$0xf]
        %v423 = vld [vmem:[%s307 + $0x118] sm:$0xf]
        %v424 = vld [vmem:[%s307 + $0x11c] sm:$0xf]
        %v425 = vld [vmem:[%s307 + $0x120] sm:$0xf]
        %v426 = vld [vmem:[%s307 + $0x124] sm:$0xf]
        %v427 = vld [vmem:[%s307 + $0x128] sm:$0xf]
        %v428 = vld [vmem:[%s307 + $0x12c] sm:$0xf]
        %v429 = vld [vmem:[%s307 + $0x130] sm:$0xf]
        %v430 = vld [vmem:[%s307 + $0x134] sm:$0xf]
        %v431 = vld [vmem:[%s307 + $0x138] sm:$0xf]
        %v432 = vld [vmem:[%s307 + $0x13c] sm:$0xf]
        %v433 = vld [vmem:[%s307 + $0x140] sm:$0xf]
        %v434 = vld [vmem:[%s307 + $0x144] sm:$0xf]
        %v435 = vld [vmem:[%s307 + $0x148] sm:$0xf]
        %v436 = vld [vmem:[%s307 + $0x14c] sm:$0xf]
        %v437 = vld [vmem:[%s307 + $0x150] sm:$0xf]
        %v438 = vld [vmem:[%s307 + $0x154] sm:$0xf]
        %v439 = vld [vmem:[%s307 + $0x158] sm:$0xf]
        %v440 = vld [vmem:[%s307 + $0x15c] sm:$0xf]
        %v441 = vld [vmem:[%s307 + $0x160] sm:$0xf]
        %v442 = vld [vmem:[%s307 + $0x164] sm:$0xf]
        %v443 = vld [vmem:[%s307 + $0x168] sm:$0xf]
        %v444 = vld [vmem:[%s307 + $0x16c] sm:$0xf]
        %v445 = vld [vmem:[%s307 + $0x170] sm:$0xf]
        %v446 = vld [vmem:[%s307 + $0x174] sm:$0xf]
        %v447 = vld [vmem:[%s307 + $0x178] sm:$0xf]
        %v448 = vld [vmem:[%s307 + $0x17c] sm:$0xf]
        %v449 = vld [vmem:[%s307 + $0x180] sm:$0xf]
        %v450 = vld [vmem:[%s307 + $0x184] sm:$0xf]
        %v451 = vld [vmem:[%s307 + $0x188] sm:$0xf]
        %v452 = vld [vmem:[%s307 + $0x18c] sm:$0xf]
        %v453 = vld [vmem:[%s307 + $0x190] sm:$0xf]
        %v454 = vld [vmem:[%s307 + $0x194] sm:$0xf]
        %v455 = vld [vmem:[%s307 + $0x198] sm:$0xf]
        %v456 = vld [vmem:[%s307 + $0x19c] sm:$0xf]
        %v457 = vld [vmem:[%s307 + $0x1a0] sm:$0xf]
        %v458 = vld [vmem:[%s307 + $0x1a4] sm:$0xf]
        %v459 = vld [vmem:[%s307 + $0x1a8] sm:$0xf]
        %v460 = vld [vmem:[%s307 + $0x1ac] sm:$0xf]
        %v461 = vld [vmem:[%s307 + $0x1b0] sm:$0xf]
        %v462 = vld [vmem:[%s307 + $0x1b4] sm:$0xf]
        %v463 = vld [vmem:[%s307 + $0x1b8] sm:$0xf]
        %v464 = vld [vmem:[%s307 + $0x1bc] sm:$0xf]
        %v465 = vld [vmem:[%s307 + $0x1c0] sm:$0xf]
        %v466 = vld [vmem:[%s307 + $0x1c4] sm:$0xf]
        %v467 = vld [vmem:[%s307 + $0x1c8] sm:$0xf]
        %v468 = vld [vmem:[%s307 + $0x1cc] sm:$0xf]
        %v469 = vld [vmem:[%s307 + $0x1d0] sm:$0xf]
        %v470 = vld [vmem:[%s307 + $0x1d4] sm:$0xf]
        %v471 = vld [vmem:[%s307 + $0x1d8] sm:$0xf]
        %v472 = vld [vmem:[%s307 + $0x1dc] sm:$0xf]
        %v473 = vld [vmem:[%s307 + $0x1e0] sm:$0xf]
        %v474 = vld [vmem:[%s307 + $0x1e4] sm:$0xf]
        %v475 = vld [vmem:[%s307 + $0x1e8] sm:$0xf]
        %v476 = vld [vmem:[%s307 + $0x1ec] sm:$0xf]
        %v477 = vld [vmem:[%s307 + $0x1f0] sm:$0xf]
        %v478 = vld [vmem:[%s307 + $0x1f4] sm:$0xf]
        %v479 = vld [vmem:[%s307 + $0x1f8] sm:$0xf]
        %v480 = vld [vmem:[%s307 + $0x1fc] sm:$0xf]
        %v481 = vld [vmem:[%s307 + $0x200] sm:$0xf]
        %v482 = vld [vmem:[%s307 + $0x204] sm:$0xf]
        %v483 = vld [vmem:[%s307 + $0x208] sm:$0xf]
        %v484 = vld [vmem:[%s307 + $0x20c] sm:$0xf]
        %v485 = vld [vmem:[%s307 + $0x210] sm:$0xf]
        %v486 = vld [vmem:[%s307 + $0x214] sm:$0xf]
        %v487 = vld [vmem:[%s307 + $0x218] sm:$0xf]
        %v488 = vld [vmem:[%s307 + $0x21c] sm:$0xf]
        %v489 = vld [vmem:[%s307 + $0x220] sm:$0xf]
        %v490 = vld [vmem:[%s307 + $0x224] sm:$0xf]
        %v491 = vld [vmem:[%s307 + $0x228] sm:$0xf]
        %v492 = vld [vmem:[%s307 + $0x22c] sm:$0xf]
        %v493 = vld [vmem:[%s307 + $0x230] sm:$0xf]
        %v494 = vld [vmem:[%s307 + $0x234] sm:$0xf]
        %v495 = vld [vmem:[%s307 + $0x238] sm:$0xf]
        %v496 = vld [vmem:[%s307 + $0x23c] sm:$0xf]
        %v517 = vunpack.c.l.b16 %v333
        %v518 = vunpack.c.h.b16 %v333
        %v519 = vunpack.c.l.b16 %v334
        %v520 = vunpack.c.h.b16 %v334
        %v521 = vunpack.c.l.b16 %v335
        %v522 = vunpack.c.h.b16 %v335
        %v523 = vunpack.c.l.b16 %v336
        %v524 = vunpack.c.h.b16 %v336
        %v525 = vunpack.c.l.b16 %v337
        %v526 = vunpack.c.l.b16 %v338
        %v527 = vunpack.c.h.b16 %v338
        %v528 = vunpack.c.l.b16 %v339
        %v529 = vunpack.c.h.b16 %v339
        %v530 = vunpack.c.l.b16 %v340
        %v531 = vunpack.c.h.b16 %v340
        %v532 = vunpack.c.l.b16 %v341
        %v533 = vunpack.c.h.b16 %v341
        %v534 = vunpack.c.l.b16 %v342
        %v535 = vunpack.c.l.b16 %v343
        %v536 = vunpack.c.h.b16 %v343
        %v537 = vunpack.c.l.b16 %v344
        %v538 = vunpack.c.h.b16 %v344
        %v539 = vunpack.c.l.b16 %v345
        %v540 = vunpack.c.h.b16 %v345
        %v541 = vunpack.c.l.b16 %v346
        %v542 = vunpack.c.h.b16 %v346
        %v543 = vunpack.c.l.b16 %v347
        %v544 = vunpack.c.l.b16 %v348
        %v545 = vunpack.c.h.b16 %v348
        %v546 = vunpack.c.l.b16 %v349
        %v547 = vunpack.c.h.b16 %v349
        %v548 = vunpack.c.l.b16 %v350
        %v549 = vunpack.c.h.b16 %v350
        %v550 = vunpack.c.l.b16 %v351
        %v551 = vunpack.c.h.b16 %v351
        %v552 = vunpack.c.l.b16 %v352
        %v553 = vpack.c.b16 %v526, %v517
        %v554 = vpack.c.b16 %v527, %v518
        %v555 = vpack.c.b16 %v528, %v519
        %v556 = vpack.c.b16 %v529, %v520
        %v557 = vpack.c.b16 %v530, %v521
        %v558 = vpack.c.b16 %v531, %v522
        %v559 = vpack.c.b16 %v532, %v523
        %v560 = vpack.c.b16 %v533, %v524
        %v561 = vpack.c.b16 %v534, %v525
        %v562 = vpack.c.b16 %v544, %v535
        %v563 = vpack.c.b16 %v545, %v536
        %v564 = vpack.c.b16 %v546, %v537
        %v565 = vpack.c.b16 %v547, %v538
        %v566 = vpack.c.b16 %v548, %v539
        %v567 = vpack.c.b16 %v549, %v540
        %v568 = vpack.c.b16 %v550, %v541
        %v569 = vpack.c.b16 %v551, %v542
        %v570 = vpack.c.b16 %v552, %v543
        %v733 = vunpack.c.l.b16 %v353
        %v734 = vunpack.c.l.b16 %v354
        %v735 = vunpack.c.l.b16 %v355
        %v736 = vunpack.c.l.b16 %v356
        %v737 = vunpack.c.l.b16 %v357
        %v738 = vunpack.c.l.b16 %v358
        %v739 = vunpack.c.l.b16 %v359
        %v740 = vunpack.c.l.b16 %v360
        %v741 = vunpack.c.l.b16 %v361
        %v742 = vunpack.c.l.b16 %v362
        %v743 = vunpack.c.l.b16 %v363
        %v744 = vunpack.c.l.b16 %v364
        %v745 = vunpack.c.l.b16 %v365
        %v746 = vunpack.c.l.b16 %v366
        %v747 = vunpack.c.l.b16 %v367
        %v748 = vunpack.c.l.b16 %v368
        %v749 = vunpack.c.l.b16 %v369
        %v750 = vunpack.c.l.b16 %v370
        %v751 = vunpack.c.l.b16 %v371
        %v752 = vunpack.c.l.b16 %v372
        %v753 = vunpack.c.l.b16 %v373
        %v754 = vunpack.c.l.b16 %v374
        %v755 = vunpack.c.l.b16 %v375
        %v756 = vunpack.c.l.b16 %v376
        %v757 = vunpack.c.l.b16 %v377
        %v758 = vunpack.c.l.b16 %v378
        %v759 = vunpack.c.l.b16 %v379
        %v760 = vunpack.c.l.b16 %v380
        %v761 = vunpack.c.l.b16 %v381
        %v762 = vunpack.c.l.b16 %v382
        %v763 = vunpack.c.l.b16 %v383
        %v764 = vunpack.c.l.b16 %v384
        %v765 = vunpack.c.l.b16 %v385
        %v766 = vunpack.c.l.b16 %v386
        %v767 = vunpack.c.l.b16 %v387
        %v768 = vunpack.c.l.b16 %v388
        %v769 = vunpack.c.l.b16 %v389
        %v770 = vunpack.c.l.b16 %v390
        %v771 = vunpack.c.l.b16 %v391
        %v772 = vunpack.c.l.b16 %v392
        %v773 = vunpack.c.l.b16 %v393
        %v774 = vunpack.c.l.b16 %v394
        %v775 = vunpack.c.l.b16 %v395
        %v776 = vunpack.c.l.b16 %v396
        %v777 = vunpack.c.l.b16 %v397
        %v778 = vunpack.c.l.b16 %v398
        %v779 = vunpack.c.l.b16 %v399
        %v780 = vunpack.c.l.b16 %v400
        %v781 = vunpack.c.l.b16 %v401
        %v782 = vunpack.c.l.b16 %v402
        %v783 = vunpack.c.l.b16 %v403
        %v784 = vunpack.c.l.b16 %v404
        %v785 = vunpack.c.l.b16 %v405
        %v786 = vunpack.c.l.b16 %v406
        %v787 = vunpack.c.l.b16 %v407
        %v788 = vunpack.c.l.b16 %v408
        %v789 = vunpack.c.l.b16 %v409
        %v790 = vunpack.c.l.b16 %v410
        %v791 = vunpack.c.l.b16 %v411
        %v792 = vunpack.c.l.b16 %v412
        %v793 = vunpack.c.l.b16 %v413
        %v794 = vunpack.c.l.b16 %v414
        %v795 = vunpack.c.l.b16 %v415
        %v796 = vunpack.c.l.b16 %v416
        %v797 = vunpack.c.l.b16 %v417
        %v798 = vunpack.c.l.b16 %v418
        %v799 = vunpack.c.l.b16 %v419
        %v800 = vunpack.c.l.b16 %v420
        %v801 = vunpack.c.l.b16 %v421
        %v802 = vunpack.c.l.b16 %v422
        %v803 = vunpack.c.l.b16 %v423
        %v804 = vunpack.c.l.b16 %v424
        %v805 = vunpack.c.l.b16 %v425
        %v806 = vunpack.c.l.b16 %v426
        %v807 = vunpack.c.l.b16 %v427
        %v808 = vunpack.c.l.b16 %v428
        %v809 = vunpack.c.l.b16 %v429
        %v810 = vunpack.c.l.b16 %v430
        %v811 = vunpack.c.l.b16 %v431
        %v812 = vunpack.c.l.b16 %v432
        %v813 = vunpack.c.l.b16 %v433
        %v814 = vunpack.c.l.b16 %v434
        %v815 = vunpack.c.l.b16 %v435
        %v816 = vunpack.c.l.b16 %v436
        %v817 = vunpack.c.l.b16 %v437
        %v818 = vunpack.c.l.b16 %v438
        %v819 = vunpack.c.l.b16 %v439
        %v820 = vunpack.c.l.b16 %v440
        %v821 = vunpack.c.l.b16 %v441
        %v822 = vunpack.c.l.b16 %v442
        %v823 = vunpack.c.l.b16 %v443
        %v824 = vunpack.c.l.b16 %v444
        %v825 = vunpack.c.l.b16 %v445
        %v826 = vunpack.c.l.b16 %v446
        %v827 = vunpack.c.l.b16 %v447
        %v828 = vunpack.c.l.b16 %v448
        %v829 = vunpack.c.l.b16 %v449
        %v830 = vunpack.c.l.b16 %v450
        %v831 = vunpack.c.l.b16 %v451
        %v832 = vunpack.c.l.b16 %v452
        %v833 = vunpack.c.l.b16 %v453
        %v834 = vunpack.c.l.b16 %v454
        %v835 = vunpack.c.l.b16 %v455
        %v836 = vunpack.c.l.b16 %v456
        %v837 = vunpack.c.l.b16 %v457
        %v838 = vunpack.c.l.b16 %v458
        %v839 = vunpack.c.l.b16 %v459
        %v840 = vunpack.c.l.b16 %v460
        %v841 = vunpack.c.l.b16 %v461
        %v842 = vunpack.c.l.b16 %v462
        %v843 = vunpack.c.l.b16 %v463
        %v844 = vunpack.c.l.b16 %v464
        %v845 = vunpack.c.l.b16 %v465
        %v846 = vunpack.c.l.b16 %v466
        %v847 = vunpack.c.l.b16 %v467
        %v848 = vunpack.c.l.b16 %v468
        %v849 = vunpack.c.l.b16 %v469
        %v850 = vunpack.c.l.b16 %v470
        %v851 = vunpack.c.l.b16 %v471
        %v852 = vunpack.c.l.b16 %v472
        %v853 = vunpack.c.l.b16 %v473
        %v854 = vunpack.c.l.b16 %v474
        %v855 = vunpack.c.l.b16 %v475
        %v856 = vunpack.c.l.b16 %v476
        %v857 = vunpack.c.l.b16 %v477
        %v858 = vunpack.c.l.b16 %v478
        %v859 = vunpack.c.l.b16 %v479
        %v860 = vunpack.c.l.b16 %v480
        %v861 = vunpack.c.l.b16 %v481
        %v862 = vunpack.c.l.b16 %v482
        %v863 = vunpack.c.l.b16 %v483
        %v864 = vunpack.c.l.b16 %v484
        %v865 = vunpack.c.l.b16 %v485
        %v866 = vunpack.c.l.b16 %v486
        %v867 = vunpack.c.l.b16 %v487
        %v868 = vunpack.c.l.b16 %v488
        %v869 = vunpack.c.l.b16 %v489
        %v870 = vunpack.c.l.b16 %v490
        %v871 = vunpack.c.l.b16 %v491
        %v872 = vunpack.c.l.b16 %v492
        %v873 = vunpack.c.l.b16 %v493
        %v874 = vunpack.c.l.b16 %v494
        %v875 = vunpack.c.l.b16 %v495
        %v876 = vunpack.c.l.b16 %v496
        %v877 = vpack.c.b16 %v734, %v733
        %v878 = vpack.c.b16 %v736, %v735
        %v879 = vpack.c.b16 %v738, %v737
        %v880 = vpack.c.b16 %v740, %v739
        %v881 = vpack.c.b16 %v742, %v741
        %v882 = vpack.c.b16 %v744, %v743
        %v883 = vpack.c.b16 %v746, %v745
        %v884 = vpack.c.b16 %v748, %v747
        %v885 = vpack.c.b16 %v750, %v749
        %v886 = vpack.c.b16 %v752, %v751
        %v887 = vpack.c.b16 %v754, %v753
        %v888 = vpack.c.b16 %v756, %v755
        %v889 = vpack.c.b16 %v758, %v757
        %v890 = vpack.c.b16 %v760, %v759
        %v891 = vpack.c.b16 %v762, %v761
        %v892 = vpack.c.b16 %v764, %v763
        %v893 = vpack.c.b16 %v766, %v765
        %v894 = vpack.c.b16 %v768, %v767
        %v895 = vpack.c.b16 %v770, %v769
        %v896 = vpack.c.b16 %v772, %v771
        %v897 = vpack.c.b16 %v774, %v773
        %v898 = vpack.c.b16 %v776, %v775
        %v899 = vpack.c.b16 %v778, %v777
        %v900 = vpack.c.b16 %v780, %v779
        %v901 = vpack.c.b16 %v782, %v781
        %v902 = vpack.c.b16 %v784, %v783
        %v903 = vpack.c.b16 %v786, %v785
        %v904 = vpack.c.b16 %v788, %v787
        %v905 = vpack.c.b16 %v790, %v789
        %v906 = vpack.c.b16 %v792, %v791
        %v907 = vpack.c.b16 %v794, %v793
        %v908 = vpack.c.b16 %v796, %v795
        %v909 = vpack.c.b16 %v798, %v797
        %v910 = vpack.c.b16 %v800, %v799
        %v911 = vpack.c.b16 %v802, %v801
        %v912 = vpack.c.b16 %v804, %v803
        %v913 = vpack.c.b16 %v806, %v805
        %v914 = vpack.c.b16 %v808, %v807
        %v915 = vpack.c.b16 %v810, %v809
        %v916 = vpack.c.b16 %v812, %v811
        %v917 = vpack.c.b16 %v814, %v813
        %v918 = vpack.c.b16 %v816, %v815
        %v919 = vpack.c.b16 %v818, %v817
        %v920 = vpack.c.b16 %v820, %v819
        %v921 = vpack.c.b16 %v822, %v821
        %v922 = vpack.c.b16 %v824, %v823
        %v923 = vpack.c.b16 %v826, %v825
        %v924 = vpack.c.b16 %v828, %v827
        %v925 = vpack.c.b16 %v830, %v829
        %v926 = vpack.c.b16 %v832, %v831
        %v927 = vpack.c.b16 %v834, %v833
        %v928 = vpack.c.b16 %v836, %v835
        %v929 = vpack.c.b16 %v838, %v837
        %v930 = vpack.c.b16 %v840, %v839
        %v931 = vpack.c.b16 %v842, %v841
        %v932 = vpack.c.b16 %v844, %v843
        %v933 = vpack.c.b16 %v846, %v845
        %v934 = vpack.c.b16 %v848, %v847
        %v935 = vpack.c.b16 %v850, %v849
        %v936 = vpack.c.b16 %v852, %v851
        %v937 = vpack.c.b16 %v854, %v853
        %v938 = vpack.c.b16 %v856, %v855
        %v939 = vpack.c.b16 %v858, %v857
        %v940 = vpack.c.b16 %v860, %v859
        %v941 = vpack.c.b16 %v862, %v861
        %v942 = vpack.c.b16 %v864, %v863
        %v943 = vpack.c.b16 %v866, %v865
        %v944 = vpack.c.b16 %v868, %v867
        %v945 = vpack.c.b16 %v870, %v869
        %v946 = vpack.c.b16 %v872, %v871
        %v947 = vpack.c.b16 %v874, %v873
        %v948 = vpack.c.b16 %v876, %v875
        %1021 = vmatpush.bf16.msra.mxu0 %v884
        %1022 = vmatpush.bf16.msra.mxu0 %v883
        %1023 = vmatpush.bf16.msra.mxu0 %v882
        %1024 = vmatpush.bf16.msra.mxu0 %v881
        %1025 = vmatpush.bf16.msra.mxu0 %v880
        %1026 = vmatpush.bf16.msra.mxu0 %v879
        %1027 = vmatpush.bf16.msra.mxu0 %v878
        %1028 = vmatpush.bf16.msra.mxu0 %v877
        %1029 = vmatmul.bf16.gmra.mxu0 %v553
        %v1030 = vpop.f32.mrf.mxu0
        %v1031 = vadd.f32 0.0, %v1030
        %v1032 = vpop.f32.mrf.mxu0
        %v1033 = vadd.f32 0.0, %v1032
        %1034 = vmatmul.bf16.gmra.mxu0 %v562
        %v1035 = vpop.f32.mrf.mxu0
        %v1036 = vadd.f32 0.0, %v1035
        %v1037 = vpop.f32.mrf.mxu0
        %v1038 = vadd.f32 0.0, %v1037
        %1039 = vdwg.mxu0
        %1040 = vmatpush.bf16.msra.mxu0 %v892
        %1041 = vmatpush.bf16.msra.mxu0 %v891
        %1042 = vmatpush.bf16.msra.mxu0 %v890
        %1043 = vmatpush.bf16.msra.mxu0 %v889
        %1044 = vmatpush.bf16.msra.mxu0 %v888
        %1045 = vmatpush.bf16.msra.mxu0 %v887
        %1046 = vmatpush.bf16.msra.mxu0 %v886
        %1047 = vmatpush.bf16.msra.mxu0 %v885
        %1048 = vmatmul.bf16.gmra.mxu0 %v554
        %v1049 = vpop.f32.mrf.mxu0
        %v1050 = vadd.f32 %v1031, %v1049
        %v1051 = vpop.f32.mrf.mxu0
        %v1052 = vadd.f32 %v1033, %v1051
        %1053 = vmatmul.bf16.gmra.mxu0 %v563
        %v1054 = vpop.f32.mrf.mxu0
        %v1055 = vadd.f32 %v1036, %v1054
        %v1056 = vpop.f32.mrf.mxu0
        %v1057 = vadd.f32 %v1038, %v1056
        %1058 = vdwg.mxu0
        %1059 = vmatpush.bf16.msra.mxu0 %v900
        %1060 = vmatpush.bf16.msra.mxu0 %v899
        %1061 = vmatpush.bf16.msra.mxu0 %v898
        %1062 = vmatpush.bf16.msra.mxu0 %v897
        %1063 = vmatpush.bf16.msra.mxu0 %v896
        %1064 = vmatpush.bf16.msra.mxu0 %v895
        %1065 = vmatpush.bf16.msra.mxu0 %v894
        %1066 = vmatpush.bf16.msra.mxu0 %v893
        %1067 = vmatmul.bf16.gmra.mxu0 %v555
        %v1068 = vpop.f32.mrf.mxu0
        %v1069 = vadd.f32 %v1050, %v1068
        %v1070 = vpop.f32.mrf.mxu0
        %v1071 = vadd.f32 %v1052, %v1070
        %1072 = vmatmul.bf16.gmra.mxu0 %v564
        %v1073 = vpop.f32.mrf.mxu0
        %v1074 = vadd.f32 %v1055, %v1073
        %v1075 = vpop.f32.mrf.mxu0
        %v1076 = vadd.f32 %v1057, %v1075
        %1077 = vdwg.mxu0
        %1078 = vmatpush.bf16.msra.mxu0 %v908
        %1079 = vmatpush.bf16.msra.mxu0 %v907
        %1080 = vmatpush.bf16.msra.mxu0 %v906
        %1081 = vmatpush.bf16.msra.mxu0 %v905
        %1082 = vmatpush.bf16.msra.mxu0 %v904
        %1083 = vmatpush.bf16.msra.mxu0 %v903
        %1084 = vmatpush.bf16.msra.mxu0 %v902
        %1085 = vmatpush.bf16.msra.mxu0 %v901
        %1086 = vmatmul.bf16.gmra.mxu0 %v556
        %v1087 = vpop.f32.mrf.mxu0
        %v1088 = vadd.f32 %v1069, %v1087
        %v1089 = vpop.f32.mrf.mxu0
        %v1090 = vadd.f32 %v1071, %v1089
        %1091 = vmatmul.bf16.gmra.mxu0 %v565
        %v1092 = vpop.f32.mrf.mxu0
        %v1093 = vadd.f32 %v1074, %v1092
        %v1094 = vpop.f32.mrf.mxu0
        %v1095 = vadd.f32 %v1076, %v1094
        %1096 = vdwg.mxu0
        %1097 = vmatpush.bf16.msra.mxu0 %v916
        %1098 = vmatpush.bf16.msra.mxu0 %v915
        %1099 = vmatpush.bf16.msra.mxu0 %v914
        %1100 = vmatpush.bf16.msra.mxu0 %v913
        %1101 = vmatpush.bf16.msra.mxu0 %v912
        %1102 = vmatpush.bf16.msra.mxu0 %v911
        %1103 = vmatpush.bf16.msra.mxu0 %v910
        %1104 = vmatpush.bf16.msra.mxu0 %v909
        %1105 = vmatmul.bf16.gmra.mxu0 %v557
        %v1106 = vpop.f32.mrf.mxu0
        %v1107 = vadd.f32 %v1088, %v1106
        %v1108 = vpop.f32.mrf.mxu0
        %v1109 = vadd.f32 %v1090, %v1108
        %1110 = vmatmul.bf16.gmra.mxu0 %v566
        %v1111 = vpop.f32.mrf.mxu0
        %v1112 = vadd.f32 %v1093, %v1111
        %v1113 = vpop.f32.mrf.mxu0
        %v1114 = vadd.f32 %v1095, %v1113
        %1115 = vdwg.mxu0
        %1116 = vmatpush.bf16.msra.mxu0 %v924
        %1117 = vmatpush.bf16.msra.mxu0 %v923
        %1118 = vmatpush.bf16.msra.mxu0 %v922
        %1119 = vmatpush.bf16.msra.mxu0 %v921
        %1120 = vmatpush.bf16.msra.mxu0 %v920
        %1121 = vmatpush.bf16.msra.mxu0 %v919
        %1122 = vmatpush.bf16.msra.mxu0 %v918
        %1123 = vmatpush.bf16.msra.mxu0 %v917
        %1124 = vmatmul.bf16.gmra.mxu0 %v558
        %v1125 = vpop.f32.mrf.mxu0
        %v1126 = vadd.f32 %v1107, %v1125
        %v1127 = vpop.f32.mrf.mxu0
        %v1128 = vadd.f32 %v1109, %v1127
        %1129 = vmatmul.bf16.gmra.mxu0 %v567
        %v1130 = vpop.f32.mrf.mxu0
        %v1131 = vadd.f32 %v1112, %v1130
        %v1132 = vpop.f32.mrf.mxu0
        %v1133 = vadd.f32 %v1114, %v1132
        %1134 = vdwg.mxu0
        %1135 = vmatpush.bf16.msra.mxu0 %v932
        %1136 = vmatpush.bf16.msra.mxu0 %v931
        %1137 = vmatpush.bf16.msra.mxu0 %v930
        %1138 = vmatpush.bf16.msra.mxu0 %v929
        %1139 = vmatpush.bf16.msra.mxu0 %v928
        %1140 = vmatpush.bf16.msra.mxu0 %v927
        %1141 = vmatpush.bf16.msra.mxu0 %v926
        %1142 = vmatpush.bf16.msra.mxu0 %v925
        %1143 = vmatmul.bf16.gmra.mxu0 %v559
        %v1144 = vpop.f32.mrf.mxu0
        %v1145 = vadd.f32 %v1126, %v1144
        %v1146 = vpop.f32.mrf.mxu0
        %v1147 = vadd.f32 %v1128, %v1146
        %1148 = vmatmul.bf16.gmra.mxu0 %v568
        %v1149 = vpop.f32.mrf.mxu0
        %v1150 = vadd.f32 %v1131, %v1149
        %v1151 = vpop.f32.mrf.mxu0
        %v1152 = vadd.f32 %v1133, %v1151
        %1153 = vdwg.mxu0
        %1154 = vmatpush.bf16.msra.mxu0 %v940
        %1155 = vmatpush.bf16.msra.mxu0 %v939
        %1156 = vmatpush.bf16.msra.mxu0 %v938
        %1157 = vmatpush.bf16.msra.mxu0 %v937
        %1158 = vmatpush.bf16.msra.mxu0 %v936
        %1159 = vmatpush.bf16.msra.mxu0 %v935
        %1160 = vmatpush.bf16.msra.mxu0 %v934
        %1161 = vmatpush.bf16.msra.mxu0 %v933
        %1162 = vmatmul.bf16.gmra.mxu0 %v560
        %v1163 = vpop.f32.mrf.mxu0
        %v1164 = vadd.f32 %v1145, %v1163
        %v1165 = vpop.f32.mrf.mxu0
        %v1166 = vadd.f32 %v1147, %v1165
        %1167 = vmatmul.bf16.gmra.mxu0 %v569
        %v1168 = vpop.f32.mrf.mxu0
        %v1169 = vadd.f32 %v1150, %v1168
        %v1170 = vpop.f32.mrf.mxu0
        %v1171 = vadd.f32 %v1152, %v1170
        %1172 = vdwg.mxu0
        %1173 = vmatpush.bf16.msra.mxu0 %v948
        %1174 = vmatpush.bf16.msra.mxu0 %v947
        %1175 = vmatpush.bf16.msra.mxu0 %v946
        %1176 = vmatpush.bf16.msra.mxu0 %v945
        %1177 = vmatpush.bf16.msra.mxu0 %v944
        %1178 = vmatpush.bf16.msra.mxu0 %v943
        %1179 = vmatpush.bf16.msra.mxu0 %v942
        %1180 = vmatpush.bf16.msra.mxu0 %v941
        %1181 = vmatmul.bf16.gmra.mxu0 %v561
        %v1182 = vpop.f32.mrf.mxu0
        %v1183 = vadd.f32 %v1164, %v1182
        %v1184 = vpop.f32.mrf.mxu0
        %v1185 = vadd.f32 %v1166, %v1184
        %1186 = vmatmul.bf16.gmra.mxu0 %v570
        %v1187 = vpop.f32.mrf.mxu0
        %v1188 = vadd.f32 %v1169, %v1187
        %v1189 = vpop.f32.mrf.mxu0
        %v1190 = vadd.f32 %v1171, %v1189
        %1191 = vdwg.mxu0
        %v1192 = vadd.f32 %v329, %v1183
        %v1193 = vadd.f32 %v330, %v1185
        %v1194 = vadd.f32 %v331, %v1188
        %v1195 = vadd.f32 %v332, %v1190
        %1196 = vst [vmem:[#allocation2] sm:$0xff] %v1192
        %1197 = vst [vmem:[#allocation2 + $0x8] sm:$0xff] %v1193
        %1198 = vst [vmem:[#allocation2 + $0x10] sm:$0xff] %v1194
        %1199 = vst [vmem:[#allocation2 + $0x18] sm:$0xff] %v1195
        %p1200 = scmp.eq.s32.totalorder %s21, 2
        // Predicated region
        $region63: #{flownet_er_forward.17} parent=53 // pred_check
          %p1201 = pneg %p1200
        $region64: #{flownet_er_forward.17} parent=53 // pred_check_branch
          %1203 = sbr.rel (%p1201) target = $region66
        $region65: #{flownet_er_forward.17} parent=53 // pred_region
          %v1204 = vld [vmem:[#allocation2] sm:$0xff]
          %v1205 = vld [vmem:[#allocation2 + $0x8] sm:$0xff]
          %v1206 = vld [vmem:[#allocation2 + $0x10] sm:$0xff]
          %v1207 = vld [vmem:[#allocation2 + $0x18] sm:$0xff]
          %v1208 = vld [vmem:[%s311] sm:$0x1]
          %v1210 = vperm.slane %v1208, 0
          %v1212 = vadd.f32 %v1204, %v1210
          %v1213 = vadd.f32 %v1205, %v1210
          %v1214 = vadd.f32 %v1206, %v1210
          %v1215 = vadd.f32 %v1207, %v1210
          %1216 = vst [vmem:[%s319] sm:$0xff] %v1212
          %1217 = vst [vmem:[%s319 + $0x8] sm:$0xff] %v1213
          %1218 = vst [vmem:[%s319 + $0x10] sm:$0xff] %v1214
          %1219 = vst [vmem:[%s319 + $0x18] sm:$0xff] %v1215
        $region66: #{flownet_er_forward.17} parent=53 // pred_fallthru
          _
        %s1220 = smul.u32 4, %s19
        %p1221 = scmp.lt.s32.totalorder %s1220, 3
        %s1222 = scalar_select %p1221, %s1220, 3
        %p1223 = scmp.lt.s32.totalorder %s20, 0
        %s1224 = scalar_select %p1223, %s20, 0
        %s1225 = sadd.s32 %s1224, %s1222
        %s1226 = smul.addr %s1225, 8
        %s1227 = scalar_lea.vmem %s3, %s1226
        // Predicated region
        $region67: #{flownet_er_forward.17} parent=53 // pred_check
          %p1228 = pneg %p135
        $region68: #{flownet_er_forward.17} parent=53 // pred_check_branch
          %1230 = sbr.rel (%p1228) target = $region70
        $region69: #{flownet_er_forward.17} parent=53 // pred_region
          %s1231 = smul.u32 4, %s19
        $region70: #{flownet_er_forward.17} parent=53 // pred_fallthru
          _
        // Predicated region
        $region71: #{flownet_er_forward.17} parent=53 // pred_check
          %p1232 = pneg %p135
        $region72: #{flownet_er_forward.17} parent=53 // pred_check_branch
          %1234 = sbr.rel (%p1232) target = $region74
        $region73: #{flownet_er_forward.17} parent=53 // pred_region
          %s1235 = smul.u32 4, %s19
          %p1236 = scmp.lt.s32.totalorder %s1235, 3
          %s1237 = scalar_select %p1236, %s1235, 3
          %p1238 = scmp.lt.s32.totalorder %s20, 0
          %s1239 = scalar_select %p1238, %s20, 0
          %s1240 = sadd.s32 %s1239, %s1237
          %s1241 = smul.addr %s1240, 8
          %s1242 = scalar_lea.vmem %s3, %s1241
        $region74: #{flownet_er_forward.17} parent=53 // pred_fallthru
          _
      $region54: #{flownet_er_forward.17} parent=5 // pred_fallthru
        _
      %p1243 = scmp.le.s32.totalorder 2, %s9
      // Predicated region
      $region75: #{flownet_er_forward.17} parent=5 // pred_check
        %p1244 = pneg %p1243
      $region76: #{flownet_er_forward.17} parent=5 // pred_check_branch
        %1246 = sbr.rel (%p1244) target = $region78
      $region77: #{flownet_er_forward.17} parent=5 // pred_region
        %s1247 = ssub.s32 %s9, 2
      $region78: #{flownet_er_forward.17} parent=5 // pred_fallthru
        _
    $region6: #{flownet_er_forward.17} parent=1 // loop_footer
      %s13 = sadd.s32 1, %s9
    $region7: #{flownet_er_forward.17} parent=1 // loop_footer_branch
      %8 = sbr.rel target = $region3
    $region8: #{flownet_er_forward.17} parent=1 // loop_exit
      _

</llo_original>
